<compile_context>
chip_gen: v6e
topology: v6e:2x2x1
jax: 0.10.0
libtpu: 0.0.40
codegen_flags: <defaults>
</compile_context>

<pallas_src>
import numpy as np
import jax
import jax.numpy as jnp
from jax import lax
from jax.experimental import pallas as pl
from jax.experimental.pallas import tpu as pltpu


def _make_aspp_kernel(TH, W, Cin, Cout, Cpad, rates, rmax):
    """Fused ASPP kernel for one (batch, H-tile) grid step."""
    P = TH * W

    def kernel(xpad_ref, gbias_ref, w1_ref, b1_ref, w3_ref, b3_ref, wp_ref, out_ref):
        ht = pl.program_id(1)
        row0 = ht * TH + rmax          # top row of this tile in padded coordinates

        def tap(dr, dc):
            # shifted (TH, W, Cin) slab of the padded image -> (TH*W, Cin), bf16
            v = xpad_ref[0, pl.ds(row0 + dr, TH), pl.ds(rmax + dc, W), :]
            return v.reshape(P, Cin)

        def relu_project(pre, b, wk):
            # branch epilogue (BN scale already folded into the conv weight)
            f = jnp.maximum(pre + b, 0.0).astype(jnp.bfloat16)
            return jnp.dot(f, wk, preferred_element_type=jnp.float32)

        # ---- 1x1 conv branch ----
        y = jnp.dot(tap(0, 0), w1_ref[...], preferred_element_type=jnp.float32)
        acc = relu_project(y, b1_ref[...], wp_ref[0])

        # ---- dilated 3x3 branches: 9 shifted-tap matmuls each ----
        for ri, r in enumerate(rates):
            y = jnp.zeros((P, Cout), jnp.float32)
            for ki in range(3):
                for kj in range(3):
                    y = y + jnp.dot(tap((ki - 1) * r, (kj - 1) * r),
                                    w3_ref[ri, ki * 3 + kj],
                                    preferred_element_type=jnp.float32)
            acc = acc + relu_project(y, b3_ref[ri], wp_ref[1 + ri])

        # ---- global-pool contribution + projection BN bias (prefolded) + ReLU ----
        # (bilinear upsample of a 1x1 pooled map is an exact broadcast)
        out_ref[0] = jnp.maximum(acc + gbias_ref[0], 0.0).astype(out_ref.dtype)

    return kernel


def aspp_forward(x_nhwc, params, rates, tile_h=8):
    N, H, W, Cin = x_nhwc.shape
    Cout = params["w1"].shape[1]
    nr = len(rates)
    rmax = max(rates)
    TH = min(tile_h, H)
    assert H % TH == 0 and (TH * W) % 8 == 0
    P = TH * W
    Cpad = ((Cout + 127) // 128) * 128          # lane-dense projection/output width
    bf16 = jnp.bfloat16

    # zero-pad spatially by the max rate (covers every dilation) and cast to bf16
    xpad = jnp.pad(x_nhwc, ((0, 0), (rmax, rmax), (rmax, rmax), (0, 0))).astype(bf16)
    Hp, Wp = H + 2 * rmax, W + 2 * rmax

    wp = params["wp"]                                            # (Ctot, Cout)
    sp = params["sp"]                                            # (1, Cout)
    bp = params["bp"]                                            # (1, Cout)

    # ---- hoisted global-average-pool branch (tiny, plain JAX) ----
    gmean = jnp.mean(x_nhwc, axis=(1, 2))                        # (N, Cin)
    gfeat = jax.nn.relu(gmean @ params["wg"] * params["sg"] + params["bg"])
    gproj = gfeat @ wp[(nr + 1) * Cout:(nr + 2) * Cout, :]       # (N, Cout)
    grow = gproj * sp + bp                                       # fold sp, bp here
    gbias = jnp.pad(grow, ((0, 0), (0, Cpad - Cout)))[:, None, :]  # (N, 1, Cpad)

    # ---- branch conv weights with BN scale folded in, bf16 for the MXU ----
    w1 = (params["w1"] * params["s1"]).astype(bf16)              # (Cin, Cout)
    w3 = jnp.stack([
        (params["w3_hwio"][ri] * params["s3"][ri].reshape(1, 1, 1, Cout)
         ).reshape(9, Cin, Cout)
        for ri in range(nr)]).astype(bf16)                       # (nr, 9, Cin, Cout)
    b1 = params["b1"]                                            # (1, Cout)
    b3 = jnp.stack(params["b3"])                                 # (nr, 1, Cout)

    # ---- projection weight: per-branch slabs, sp folded into columns, lane-pad ----
    wp_main = (wp[:(nr + 1) * Cout, :].reshape(nr + 1, Cout, Cout)
               * sp.reshape(1, 1, Cout))
    wp_main = jnp.pad(wp_main, ((0, 0), (0, 0), (0, Cpad - Cout))).astype(bf16)

    inputs = [xpad, gbias, w1, b1, w3, b3, wp_main]

    def const_spec(arr):
        nd = arr.ndim
        return pl.BlockSpec(tuple(arr.shape), lambda n, t, _nd=nd: (0,) * _nd)

    in_specs = [
        # padded image: resident in VMEM across H-tiles, re-DMA'd only per batch
        pl.BlockSpec((1, Hp, Wp, Cin), lambda n, t: (n, 0, 0, 0)),
        pl.BlockSpec((1, 1, Cpad), lambda n, t: (n, 0, 0)),
    ] + [const_spec(a) for a in inputs[2:]]

    out_spec = pl.BlockSpec((1, P, Cpad), lambda n, t: (n, t, 0))

    kernel = _make_aspp_kernel(TH, W, Cin, Cout, Cpad, rates, rmax)

    out = pl.pallas_call(
        kernel,
        out_shape=jax.ShapeDtypeStruct((N, H * W, Cpad), jnp.float32),
        grid_spec=pltpu.PrefetchScalarGridSpec(
            num_scalar_prefetch=0,
            grid=(N, H // TH),
            in_specs=in_specs,
            out_specs=out_spec,
        ),
        compiler_params=pltpu.CompilerParams(
            dimension_semantics=("parallel", "parallel"),
            vmem_limit_bytes=48 * 1024 * 1024,
        ),
    )(*inputs)

    return out[:, :, :Cout].reshape(N, H, W, Cout)


def init_params(key, Cin, Cout, rates):
    nr = len(rates)
    Ctot = Cout * (nr + 2)
    eps = 1e-5
    keys = iter(jax.random.split(key, 2 * (nr + 3)))

    def conv_w(shape, fan_in):
        return jax.random.normal(next(keys), shape, jnp.float32) / np.sqrt(fan_in)

    def bn_fold():
        kg, kb, km, kv = jax.random.split(next(keys), 4)
        gamma = jax.random.uniform(kg, (1, Cout), jnp.float32, 0.5, 1.5)
        beta = 0.1 * jax.random.normal(kb, (1, Cout), jnp.float32)
        mean = 0.1 * jax.random.normal(km, (1, Cout), jnp.float32)
        var = jax.random.uniform(kv, (1, Cout), jnp.float32, 0.5, 1.5)
        scale = gamma * lax.rsqrt(var + eps)
        return scale, beta - mean * scale

    p = {}
    p["w1"] = conv_w((Cin, Cout), Cin)
    p["s1"], p["b1"] = bn_fold()

    p["w3_hwio"], p["s3"], p["b3"] = [], [], []
    for _ in rates:
        p["w3_hwio"].append(conv_w((3, 3, Cin, Cout), 9 * Cin))   # HWIO
        s, b = bn_fold()
        p["s3"].append(s)
        p["b3"].append(b)

    p["wg"] = conv_w((Cin, Cout), Cin)
    p["sg"], p["bg"] = bn_fold()

    p["wp"] = conv_w((Ctot, Cout), Ctot)
    p["sp"], p["bp"] = bn_fold()
    return p


def aspp_reference(x_nhwc, params, rates):
    """Pure-JAX f32 reference matching PyTorch ASPP (eval-mode BN) in NHWC."""
    N, H, W, Cin = x_nhwc.shape
    Cout = params["w1"].shape[1]
    relu = jax.nn.relu

    def bn(y, s, b):
        return y * s.reshape(1, 1, 1, -1) + b.reshape(1, 1, 1, -1)

    feats = [relu(bn(jnp.einsum("nhwc,cd->nhwd", x_nhwc, params["w1"]),
                     params["s1"], params["b1"]))]
    for ri, r in enumerate(rates):
        y = lax.conv_general_dilated(
            x_nhwc, params["w3_hwio"][ri], window_strides=(1, 1),
            padding=[(r, r), (r, r)], rhs_dilation=(r, r),
            dimension_numbers=("NHWC", "HWIO", "NHWC"))
        feats.append(relu(bn(y, params["s3"][ri], params["b3"][ri])))

    gmean = jnp.mean(x_nhwc, axis=(1, 2))                # (N, Cin)
    g = relu(gmean @ params["wg"] * params["sg"] + params["bg"])
    feats.append(jnp.broadcast_to(g[:, None, None, :], (N, H, W, Cout)))

    cat = jnp.concatenate(feats, axis=-1)
    out = relu(bn(jnp.einsum("nhwc,cd->nhwd", cat, params["wp"]),
                  params["sp"], params["bp"]))
    return out


if __name__ == "__main__":
    N, Cin, H, W = 2, 4, 16, 16
    Cout = 8
    rates = (1, 2, 3)

    key = jax.random.PRNGKey(0)
    kx, kp = jax.random.split(key)
    x_nchw = jax.random.normal(kx, (N, Cin, H, W), jnp.float32)  # PyTorch layout
    params = init_params(kp, Cin, Cout, rates)

    x_nhwc = jnp.transpose(x_nchw, (0, 2, 3, 1))
    out_nhwc = aspp_forward(x_nhwc, params, rates)
    out_nchw = jnp.transpose(out_nhwc, (0, 3, 1, 2))
    jax.block_until_ready(out_nchw)

    ref_nhwc = aspp_reference(x_nhwc, params, rates)
    # bf16 MXU operands with f32 accumulation -> loosen tolerance vs. f32 reference
    np.testing.assert_allclose(np.asarray(out_nhwc), np.asarray(ref_nhwc),
                               atol=5e-2, rtol=5e-2)
    print("KERNEL_OK")
</pallas_src>

<mosaic_0001>
module attributes {stable_mosaic.version = 11 : i64} {
  func.func @kernel(%arg0: i32, %arg1: i32, %arg2: memref<1x22x22x4xbf16, #tpu.memory_space<vmem>>, %arg3: memref<1x1x128xf32, #tpu.memory_space<vmem>>, %arg4: memref<4x8xbf16, #tpu.memory_space<vmem>>, %arg5: memref<1x8xf32, #tpu.memory_space<vmem>>, %arg6: memref<3x9x4x8xbf16, #tpu.memory_space<vmem>>, %arg7: memref<3x1x8xf32, #tpu.memory_space<vmem>>, %arg8: memref<4x8x128xbf16, #tpu.memory_space<vmem>>, %arg9: memref<1x128x128xf32, #tpu.memory_space<vmem>>) attributes {dimension_semantics = [#tpu.dimension_semantics<parallel>, #tpu.dimension_semantics<parallel>], iteration_bounds = array<i64: 2, 2>, scalar_prefetch = 0 : i64, scratch_operands = 0 : i64, tpu.core_type = #tpu.core_type<tc>, window_params = [{transform_indices = @transform_0, window_bounds = array<i64: 1, 22, 22, 4>}, {transform_indices = @transform_1, window_bounds = array<i64: 1, 1, 128>}, {pipeline_mode = #tpu.pipeline_mode<synchronous>, transform_indices = @transform_2, window_bounds = array<i64: 4, 8>}, {pipeline_mode = #tpu.pipeline_mode<synchronous>, transform_indices = @transform_3, window_bounds = array<i64: 1, 8>}, {pipeline_mode = #tpu.pipeline_mode<synchronous>, transform_indices = @transform_4, window_bounds = array<i64: 3, 9, 4, 8>}, {pipeline_mode = #tpu.pipeline_mode<synchronous>, transform_indices = @transform_5, window_bounds = array<i64: 3, 1, 8>}, {pipeline_mode = #tpu.pipeline_mode<synchronous>, transform_indices = @transform_6, window_bounds = array<i64: 4, 8, 128>}, {transform_indices = @transform_7, window_bounds = array<i64: 1, 128, 128>}]} {
    %c8_i32 = arith.constant 8 : i32
    %0 = arith.muli %arg1, %c8_i32 : i32
    %c3_i32 = arith.constant 3 : i32
    %1 = arith.addi %0, %c3_i32 : i32
    %c0_i32 = arith.constant 0 : i32
    %2 = arith.addi %1, %c0_i32 : i32
    %c0 = arith.constant 0 : index
    %3 = arith.index_cast %2 : i32 to index
    %c3 = arith.constant 3 : index
    %c0_0 = arith.constant 0 : index
    %4 = vector.load %arg2[%c0, %3, %c3, %c0_0] : memref<1x22x22x4xbf16, #tpu.memory_space<vmem>>, vector<1x8x16x4xbf16>
    %5 = vector.shape_cast %4 : vector<1x8x16x4xbf16> to vector<8x16x4xbf16>
    %6 = vector.shape_cast %5 : vector<8x16x4xbf16> to vector<128x4xbf16>
    %c0_1 = arith.constant 0 : index
    %c0_2 = arith.constant 0 : index
    %7 = vector.load %arg4[%c0_1, %c0_2] : memref<4x8xbf16, #tpu.memory_space<vmem>>, vector<4x8xbf16>
    %cst = arith.constant dense<0.000000e+00> : vector<128x8xf32>
    %8 = tpu.matmul %6, %7, %cst {dimension_numbers = #tpu.dot_dimension_numbers<[1], [0], [0], [1], [0, 0, 1, 1], [], []>} : vector<128x4xbf16>, vector<4x8xbf16>, vector<128x8xf32> -> vector<128x8xf32>
    %c0_3 = arith.constant 0 : index
    %c0_4 = arith.constant 0 : index
    %9 = vector.load %arg5[%c0_3, %c0_4] : memref<1x8xf32, #tpu.memory_space<vmem>>, vector<1x8xf32>
    %c0_5 = arith.constant 0 : index
    %c0_6 = arith.constant 0 : index
    %c0_7 = arith.constant 0 : index
    %10 = vector.load %arg8[%c0_5, %c0_6, %c0_7] : memref<4x8x128xbf16, #tpu.memory_space<vmem>>, vector<1x8x128xbf16>
    %11 = vector.shape_cast %10 : vector<1x8x128xbf16> to vector<8x128xbf16>
    %12 = vector.broadcast %9 : vector<1x8xf32> to vector<128x8xf32>
    %13 = arith.addf %8, %12 : vector<128x8xf32>
    %cst_8 = arith.constant 0.000000e+00 : f32
    %14 = vector.broadcast %cst_8 : f32 to vector<128x8xf32>
    %15 = arith.maximumf %13, %14 : vector<128x8xf32>
    %16 = arith.truncf %15 : vector<128x8xf32> to vector<128x8xbf16>
    %cst_9 = arith.constant dense<0.000000e+00> : vector<128x128xf32>
    %17 = tpu.matmul %16, %11, %cst_9 {dimension_numbers = #tpu.dot_dimension_numbers<[1], [0], [0], [1], [0, 0, 1, 1], [], []>} : vector<128x8xbf16>, vector<8x128xbf16>, vector<128x128xf32> -> vector<128x128xf32>
    %cst_10 = arith.constant 0.000000e+00 : f32
    %18 = vector.broadcast %cst_10 : f32 to vector<128x8xf32>
    %c-1_i32 = arith.constant -1 : i32
    %19 = arith.addi %1, %c-1_i32 : i32
    %c0_11 = arith.constant 0 : index
    %20 = arith.index_cast %19 : i32 to index
    %c2 = arith.constant 2 : index
    %c0_12 = arith.constant 0 : index
    %21 = vector.load %arg2[%c0_11, %20, %c2, %c0_12] : memref<1x22x22x4xbf16, #tpu.memory_space<vmem>>, vector<1x8x16x4xbf16>
    %22 = vector.shape_cast %21 : vector<1x8x16x4xbf16> to vector<8x16x4xbf16>
    %23 = vector.shape_cast %22 : vector<8x16x4xbf16> to vector<128x4xbf16>
    %c0_13 = arith.constant 0 : index
    %c0_14 = arith.constant 0 : index
    %c0_15 = arith.constant 0 : index
    %c0_16 = arith.constant 0 : index
    %24 = vector.load %arg6[%c0_13, %c0_14, %c0_15, %c0_16] : memref<3x9x4x8xbf16, #tpu.memory_space<vmem>>, vector<1x1x4x8xbf16>
    %25 = vector.shape_cast %24 : vector<1x1x4x8xbf16> to vector<4x8xbf16>
    %cst_17 = arith.constant dense<0.000000e+00> : vector<128x8xf32>
    %26 = tpu.matmul %23, %25, %cst_17 {dimension_numbers = #tpu.dot_dimension_numbers<[1], [0], [0], [1], [0, 0, 1, 1], [], []>} : vector<128x4xbf16>, vector<4x8xbf16>, vector<128x8xf32> -> vector<128x8xf32>
    %27 = arith.addf %18, %26 : vector<128x8xf32>
    %c-1_i32_18 = arith.constant -1 : i32
    %28 = arith.addi %1, %c-1_i32_18 : i32
    %c0_19 = arith.constant 0 : index
    %29 = arith.index_cast %28 : i32 to index
    %c3_20 = arith.constant 3 : index
    %c0_21 = arith.constant 0 : index
    %30 = vector.load %arg2[%c0_19, %29, %c3_20, %c0_21] : memref<1x22x22x4xbf16, #tpu.memory_space<vmem>>, vector<1x8x16x4xbf16>
    %31 = vector.shape_cast %30 : vector<1x8x16x4xbf16> to vector<8x16x4xbf16>
    %32 = vector.shape_cast %31 : vector<8x16x4xbf16> to vector<128x4xbf16>
    %c0_22 = arith.constant 0 : index
    %c1 = arith.constant 1 : index
    %c0_23 = arith.constant 0 : index
    %c0_24 = arith.constant 0 : index
    %33 = vector.load %arg6[%c0_22, %c1, %c0_23, %c0_24] : memref<3x9x4x8xbf16, #tpu.memory_space<vmem>>, vector<1x1x4x8xbf16>
    %34 = vector.shape_cast %33 : vector<1x1x4x8xbf16> to vector<4x8xbf16>
    %cst_25 = arith.constant dense<0.000000e+00> : vector<128x8xf32>
    %35 = tpu.matmul %32, %34, %cst_25 {dimension_numbers = #tpu.dot_dimension_numbers<[1], [0], [0], [1], [0, 0, 1, 1], [], []>} : vector<128x4xbf16>, vector<4x8xbf16>, vector<128x8xf32> -> vector<128x8xf32>
    %36 = arith.addf %27, %35 : vector<128x8xf32>
    %c-1_i32_26 = arith.constant -1 : i32
    %37 = arith.addi %1, %c-1_i32_26 : i32
    %c0_27 = arith.constant 0 : index
    %38 = arith.index_cast %37 : i32 to index
    %c4 = arith.constant 4 : index
    %c0_28 = arith.constant 0 : index
    %39 = vector.load %arg2[%c0_27, %38, %c4, %c0_28] : memref<1x22x22x4xbf16, #tpu.memory_space<vmem>>, vector<1x8x16x4xbf16>
    %40 = vector.shape_cast %39 : vector<1x8x16x4xbf16> to vector<8x16x4xbf16>
    %41 = vector.shape_cast %40 : vector<8x16x4xbf16> to vector<128x4xbf16>
    %c0_29 = arith.constant 0 : index
    %c2_30 = arith.constant 2 : index
    %c0_31 = arith.constant 0 : index
    %c0_32 = arith.constant 0 : index
    %42 = vector.load %arg6[%c0_29, %c2_30, %c0_31, %c0_32] : memref<3x9x4x8xbf16, #tpu.memory_space<vmem>>, vector<1x1x4x8xbf16>
    %43 = vector.shape_cast %42 : vector<1x1x4x8xbf16> to vector<4x8xbf16>
    %cst_33 = arith.constant dense<0.000000e+00> : vector<128x8xf32>
    %44 = tpu.matmul %41, %43, %cst_33 {dimension_numbers = #tpu.dot_dimension_numbers<[1], [0], [0], [1], [0, 0, 1, 1], [], []>} : vector<128x4xbf16>, vector<4x8xbf16>, vector<128x8xf32> -> vector<128x8xf32>
    %45 = arith.addf %36, %44 : vector<128x8xf32>
    %c0_i32_34 = arith.constant 0 : i32
    %46 = arith.addi %1, %c0_i32_34 : i32
    %c0_35 = arith.constant 0 : index
    %47 = arith.index_cast %46 : i32 to index
    %c2_36 = arith.constant 2 : index
    %c0_37 = arith.constant 0 : index
    %48 = vector.load %arg2[%c0_35, %47, %c2_36, %c0_37] : memref<1x22x22x4xbf16, #tpu.memory_space<vmem>>, vector<1x8x16x4xbf16>
    %49 = vector.shape_cast %48 : vector<1x8x16x4xbf16> to vector<8x16x4xbf16>
    %50 = vector.shape_cast %49 : vector<8x16x4xbf16> to vector<128x4xbf16>
    %c0_38 = arith.constant 0 : index
    %c3_39 = arith.constant 3 : index
    %c0_40 = arith.constant 0 : index
    %c0_41 = arith.constant 0 : index
    %51 = vector.load %arg6[%c0_38, %c3_39, %c0_40, %c0_41] : memref<3x9x4x8xbf16, #tpu.memory_space<vmem>>, vector<1x1x4x8xbf16>
    %52 = vector.shape_cast %51 : vector<1x1x4x8xbf16> to vector<4x8xbf16>
    %cst_42 = arith.constant dense<0.000000e+00> : vector<128x8xf32>
    %53 = tpu.matmul %50, %52, %cst_42 {dimension_numbers = #tpu.dot_dimension_numbers<[1], [0], [0], [1], [0, 0, 1, 1], [], []>} : vector<128x4xbf16>, vector<4x8xbf16>, vector<128x8xf32> -> vector<128x8xf32>
    %54 = arith.addf %45, %53 : vector<128x8xf32>
    %c0_i32_43 = arith.constant 0 : i32
    %55 = arith.addi %1, %c0_i32_43 : i32
    %c0_44 = arith.constant 0 : index
    %56 = arith.index_cast %55 : i32 to index
    %c3_45 = arith.constant 3 : index
    %c0_46 = arith.constant 0 : index
    %57 = vector.load %arg2[%c0_44, %56, %c3_45, %c0_46] : memref<1x22x22x4xbf16, #tpu.memory_space<vmem>>, vector<1x8x16x4xbf16>
    %58 = vector.shape_cast %57 : vector<1x8x16x4xbf16> to vector<8x16x4xbf16>
    %59 = vector.shape_cast %58 : vector<8x16x4xbf16> to vector<128x4xbf16>
    %c0_47 = arith.constant 0 : index
    %c4_48 = arith.constant 4 : index
    %c0_49 = arith.constant 0 : index
    %c0_50 = arith.constant 0 : index
    %60 = vector.load %arg6[%c0_47, %c4_48, %c0_49, %c0_50] : memref<3x9x4x8xbf16, #tpu.memory_space<vmem>>, vector<1x1x4x8xbf16>
    %61 = vector.shape_cast %60 : vector<1x1x4x8xbf16> to vector<4x8xbf16>
    %cst_51 = arith.constant dense<0.000000e+00> : vector<128x8xf32>
    %62 = tpu.matmul %59, %61, %cst_51 {dimension_numbers = #tpu.dot_dimension_numbers<[1], [0], [0], [1], [0, 0, 1, 1], [], []>} : vector<128x4xbf16>, vector<4x8xbf16>, vector<128x8xf32> -> vector<128x8xf32>
    %63 = arith.addf %54, %62 : vector<128x8xf32>
    %c0_i32_52 = arith.constant 0 : i32
    %64 = arith.addi %1, %c0_i32_52 : i32
    %c0_53 = arith.constant 0 : index
    %65 = arith.index_cast %64 : i32 to index
    %c4_54 = arith.constant 4 : index
    %c0_55 = arith.constant 0 : index
    %66 = vector.load %arg2[%c0_53, %65, %c4_54, %c0_55] : memref<1x22x22x4xbf16, #tpu.memory_space<vmem>>, vector<1x8x16x4xbf16>
    %67 = vector.shape_cast %66 : vector<1x8x16x4xbf16> to vector<8x16x4xbf16>
    %68 = vector.shape_cast %67 : vector<8x16x4xbf16> to vector<128x4xbf16>
    %c0_56 = arith.constant 0 : index
    %c5 = arith.constant 5 : index
    %c0_57 = arith.constant 0 : index
    %c0_58 = arith.constant 0 : index
    %69 = vector.load %arg6[%c0_56, %c5, %c0_57, %c0_58] : memref<3x9x4x8xbf16, #tpu.memory_space<vmem>>, vector<1x1x4x8xbf16>
    %70 = vector.shape_cast %69 : vector<1x1x4x8xbf16> to vector<4x8xbf16>
    %cst_59 = arith.constant dense<0.000000e+00> : vector<128x8xf32>
    %71 = tpu.matmul %68, %70, %cst_59 {dimension_numbers = #tpu.dot_dimension_numbers<[1], [0], [0], [1], [0, 0, 1, 1], [], []>} : vector<128x4xbf16>, vector<4x8xbf16>, vector<128x8xf32> -> vector<128x8xf32>
    %72 = arith.addf %63, %71 : vector<128x8xf32>
    %c1_i32 = arith.constant 1 : i32
    %73 = arith.addi %1, %c1_i32 : i32
    %c0_60 = arith.constant 0 : index
    %74 = arith.index_cast %73 : i32 to index
    %c2_61 = arith.constant 2 : index
    %c0_62 = arith.constant 0 : index
    %75 = vector.load %arg2[%c0_60, %74, %c2_61, %c0_62] : memref<1x22x22x4xbf16, #tpu.memory_space<vmem>>, vector<1x8x16x4xbf16>
    %76 = vector.shape_cast %75 : vector<1x8x16x4xbf16> to vector<8x16x4xbf16>
    %77 = vector.shape_cast %76 : vector<8x16x4xbf16> to vector<128x4xbf16>
    %c0_63 = arith.constant 0 : index
    %c6 = arith.constant 6 : index
    %c0_64 = arith.constant 0 : index
    %c0_65 = arith.constant 0 : index
    %78 = vector.load %arg6[%c0_63, %c6, %c0_64, %c0_65] : memref<3x9x4x8xbf16, #tpu.memory_space<vmem>>, vector<1x1x4x8xbf16>
    %79 = vector.shape_cast %78 : vector<1x1x4x8xbf16> to vector<4x8xbf16>
    %cst_66 = arith.constant dense<0.000000e+00> : vector<128x8xf32>
    %80 = tpu.matmul %77, %79, %cst_66 {dimension_numbers = #tpu.dot_dimension_numbers<[1], [0], [0], [1], [0, 0, 1, 1], [], []>} : vector<128x4xbf16>, vector<4x8xbf16>, vector<128x8xf32> -> vector<128x8xf32>
    %81 = arith.addf %72, %80 : vector<128x8xf32>
    %c1_i32_67 = arith.constant 1 : i32
    %82 = arith.addi %1, %c1_i32_67 : i32
    %c0_68 = arith.constant 0 : index
    %83 = arith.index_cast %82 : i32 to index
    %c3_69 = arith.constant 3 : index
    %c0_70 = arith.constant 0 : index
    %84 = vector.load %arg2[%c0_68, %83, %c3_69, %c0_70] : memref<1x22x22x4xbf16, #tpu.memory_space<vmem>>, vector<1x8x16x4xbf16>
    %85 = vector.shape_cast %84 : vector<1x8x16x4xbf16> to vector<8x16x4xbf16>
    %86 = vector.shape_cast %85 : vector<8x16x4xbf16> to vector<128x4xbf16>
    %c0_71 = arith.constant 0 : index
    %c7 = arith.constant 7 : index
    %c0_72 = arith.constant 0 : index
    %c0_73 = arith.constant 0 : index
    %87 = vector.load %arg6[%c0_71, %c7, %c0_72, %c0_73] : memref<3x9x4x8xbf16, #tpu.memory_space<vmem>>, vector<1x1x4x8xbf16>
    %88 = vector.shape_cast %87 : vector<1x1x4x8xbf16> to vector<4x8xbf16>
    %cst_74 = arith.constant dense<0.000000e+00> : vector<128x8xf32>
    %89 = tpu.matmul %86, %88, %cst_74 {dimension_numbers = #tpu.dot_dimension_numbers<[1], [0], [0], [1], [0, 0, 1, 1], [], []>} : vector<128x4xbf16>, vector<4x8xbf16>, vector<128x8xf32> -> vector<128x8xf32>
    %90 = arith.addf %81, %89 : vector<128x8xf32>
    %c1_i32_75 = arith.constant 1 : i32
    %91 = arith.addi %1, %c1_i32_75 : i32
    %c0_76 = arith.constant 0 : index
    %92 = arith.index_cast %91 : i32 to index
    %c4_77 = arith.constant 4 : index
    %c0_78 = arith.constant 0 : index
    %93 = vector.load %arg2[%c0_76, %92, %c4_77, %c0_78] : memref<1x22x22x4xbf16, #tpu.memory_space<vmem>>, vector<1x8x16x4xbf16>
    %94 = vector.shape_cast %93 : vector<1x8x16x4xbf16> to vector<8x16x4xbf16>
    %95 = vector.shape_cast %94 : vector<8x16x4xbf16> to vector<128x4xbf16>
    %c0_79 = arith.constant 0 : index
    %c8 = arith.constant 8 : index
    %c0_80 = arith.constant 0 : index
    %c0_81 = arith.constant 0 : index
    %96 = vector.load %arg6[%c0_79, %c8, %c0_80, %c0_81] : memref<3x9x4x8xbf16, #tpu.memory_space<vmem>>, vector<1x1x4x8xbf16>
    %97 = vector.shape_cast %96 : vector<1x1x4x8xbf16> to vector<4x8xbf16>
    %cst_82 = arith.constant dense<0.000000e+00> : vector<128x8xf32>
    %98 = tpu.matmul %95, %97, %cst_82 {dimension_numbers = #tpu.dot_dimension_numbers<[1], [0], [0], [1], [0, 0, 1, 1], [], []>} : vector<128x4xbf16>, vector<4x8xbf16>, vector<128x8xf32> -> vector<128x8xf32>
    %99 = arith.addf %90, %98 : vector<128x8xf32>
    %c0_83 = arith.constant 0 : index
    %c0_84 = arith.constant 0 : index
    %c0_85 = arith.constant 0 : index
    %100 = vector.load %arg7[%c0_83, %c0_84, %c0_85] : memref<3x1x8xf32, #tpu.memory_space<vmem>>, vector<1x1x8xf32>
    %101 = vector.shape_cast %100 : vector<1x1x8xf32> to vector<1x8xf32>
    %c1_86 = arith.constant 1 : index
    %c0_87 = arith.constant 0 : index
    %c0_88 = arith.constant 0 : index
    %102 = vector.load %arg8[%c1_86, %c0_87, %c0_88] : memref<4x8x128xbf16, #tpu.memory_space<vmem>>, vector<1x8x128xbf16>
    %103 = vector.shape_cast %102 : vector<1x8x128xbf16> to vector<8x128xbf16>
    %104 = vector.broadcast %101 : vector<1x8xf32> to vector<128x8xf32>
    %105 = arith.addf %99, %104 : vector<128x8xf32>
    %cst_89 = arith.constant 0.000000e+00 : f32
    %106 = vector.broadcast %cst_89 : f32 to vector<128x8xf32>
    %107 = arith.maximumf %105, %106 : vector<128x8xf32>
    %108 = arith.truncf %107 : vector<128x8xf32> to vector<128x8xbf16>
    %cst_90 = arith.constant dense<0.000000e+00> : vector<128x128xf32>
    %109 = tpu.matmul %108, %103, %cst_90 {dimension_numbers = #tpu.dot_dimension_numbers<[1], [0], [0], [1], [0, 0, 1, 1], [], []>} : vector<128x8xbf16>, vector<8x128xbf16>, vector<128x128xf32> -> vector<128x128xf32>
    %110 = arith.addf %17, %109 : vector<128x128xf32>
    %cst_91 = arith.constant 0.000000e+00 : f32
    %111 = vector.broadcast %cst_91 : f32 to vector<128x8xf32>
    %c-2_i32 = arith.constant -2 : i32
    %112 = arith.addi %1, %c-2_i32 : i32
    %c0_92 = arith.constant 0 : index
    %113 = arith.index_cast %112 : i32 to index
    %c1_93 = arith.constant 1 : index
    %c0_94 = arith.constant 0 : index
    %114 = vector.load %arg2[%c0_92, %113, %c1_93, %c0_94] : memref<1x22x22x4xbf16, #tpu.memory_space<vmem>>, vector<1x8x16x4xbf16>
    %115 = vector.shape_cast %114 : vector<1x8x16x4xbf16> to vector<8x16x4xbf16>
    %116 = vector.shape_cast %115 : vector<8x16x4xbf16> to vector<128x4xbf16>
    %c1_95 = arith.constant 1 : index
    %c0_96 = arith.constant 0 : index
    %c0_97 = arith.constant 0 : index
    %c0_98 = arith.constant 0 : index
    %117 = vector.load %arg6[%c1_95, %c0_96, %c0_97, %c0_98] : memref<3x9x4x8xbf16, #tpu.memory_space<vmem>>, vector<1x1x4x8xbf16>
    %118 = vector.shape_cast %117 : vector<1x1x4x8xbf16> to vector<4x8xbf16>
    %cst_99 = arith.constant dense<0.000000e+00> : vector<128x8xf32>
    %119 = tpu.matmul %116, %118, %cst_99 {dimension_numbers = #tpu.dot_dimension_numbers<[1], [0], [0], [1], [0, 0, 1, 1], [], []>} : vector<128x4xbf16>, vector<4x8xbf16>, vector<128x8xf32> -> vector<128x8xf32>
    %120 = arith.addf %111, %119 : vector<128x8xf32>
    %c-2_i32_100 = arith.constant -2 : i32
    %121 = arith.addi %1, %c-2_i32_100 : i32
    %c0_101 = arith.constant 0 : index
    %122 = arith.index_cast %121 : i32 to index
    %c3_102 = arith.constant 3 : index
    %c0_103 = arith.constant 0 : index
    %123 = vector.load %arg2[%c0_101, %122, %c3_102, %c0_103] : memref<1x22x22x4xbf16, #tpu.memory_space<vmem>>, vector<1x8x16x4xbf16>
    %124 = vector.shape_cast %123 : vector<1x8x16x4xbf16> to vector<8x16x4xbf16>
    %125 = vector.shape_cast %124 : vector<8x16x4xbf16> to vector<128x4xbf16>
    %c1_104 = arith.constant 1 : index
    %c1_105 = arith.constant 1 : index
    %c0_106 = arith.constant 0 : index
    %c0_107 = arith.constant 0 : index
    %126 = vector.load %arg6[%c1_104, %c1_105, %c0_106, %c0_107] : memref<3x9x4x8xbf16, #tpu.memory_space<vmem>>, vector<1x1x4x8xbf16>
    %127 = vector.shape_cast %126 : vector<1x1x4x8xbf16> to vector<4x8xbf16>
    %cst_108 = arith.constant dense<0.000000e+00> : vector<128x8xf32>
    %128 = tpu.matmul %125, %127, %cst_108 {dimension_numbers = #tpu.dot_dimension_numbers<[1], [0], [0], [1], [0, 0, 1, 1], [], []>} : vector<128x4xbf16>, vector<4x8xbf16>, vector<128x8xf32> -> vector<128x8xf32>
    %129 = arith.addf %120, %128 : vector<128x8xf32>
    %c-2_i32_109 = arith.constant -2 : i32
    %130 = arith.addi %1, %c-2_i32_109 : i32
    %c0_110 = arith.constant 0 : index
    %131 = arith.index_cast %130 : i32 to index
    %c5_111 = arith.constant 5 : index
    %c0_112 = arith.constant 0 : index
    %132 = vector.load %arg2[%c0_110, %131, %c5_111, %c0_112] : memref<1x22x22x4xbf16, #tpu.memory_space<vmem>>, vector<1x8x16x4xbf16>
    %133 = vector.shape_cast %132 : vector<1x8x16x4xbf16> to vector<8x16x4xbf16>
    %134 = vector.shape_cast %133 : vector<8x16x4xbf16> to vector<128x4xbf16>
    %c1_113 = arith.constant 1 : index
    %c2_114 = arith.constant 2 : index
    %c0_115 = arith.constant 0 : index
    %c0_116 = arith.constant 0 : index
    %135 = vector.load %arg6[%c1_113, %c2_114, %c0_115, %c0_116] : memref<3x9x4x8xbf16, #tpu.memory_space<vmem>>, vector<1x1x4x8xbf16>
    %136 = vector.shape_cast %135 : vector<1x1x4x8xbf16> to vector<4x8xbf16>
    %cst_117 = arith.constant dense<0.000000e+00> : vector<128x8xf32>
    %137 = tpu.matmul %134, %136, %cst_117 {dimension_numbers = #tpu.dot_dimension_numbers<[1], [0], [0], [1], [0, 0, 1, 1], [], []>} : vector<128x4xbf16>, vector<4x8xbf16>, vector<128x8xf32> -> vector<128x8xf32>
    %138 = arith.addf %129, %137 : vector<128x8xf32>
    %c0_i32_118 = arith.constant 0 : i32
    %139 = arith.addi %1, %c0_i32_118 : i32
    %c0_119 = arith.constant 0 : index
    %140 = arith.index_cast %139 : i32 to index
    %c1_120 = arith.constant 1 : index
    %c0_121 = arith.constant 0 : index
    %141 = vector.load %arg2[%c0_119, %140, %c1_120, %c0_121] : memref<1x22x22x4xbf16, #tpu.memory_space<vmem>>, vector<1x8x16x4xbf16>
    %142 = vector.shape_cast %141 : vector<1x8x16x4xbf16> to vector<8x16x4xbf16>
    %143 = vector.shape_cast %142 : vector<8x16x4xbf16> to vector<128x4xbf16>
    %c1_122 = arith.constant 1 : index
    %c3_123 = arith.constant 3 : index
    %c0_124 = arith.constant 0 : index
    %c0_125 = arith.constant 0 : index
    %144 = vector.load %arg6[%c1_122, %c3_123, %c0_124, %c0_125] : memref<3x9x4x8xbf16, #tpu.memory_space<vmem>>, vector<1x1x4x8xbf16>
    %145 = vector.shape_cast %144 : vector<1x1x4x8xbf16> to vector<4x8xbf16>
    %cst_126 = arith.constant dense<0.000000e+00> : vector<128x8xf32>
    %146 = tpu.matmul %143, %145, %cst_126 {dimension_numbers = #tpu.dot_dimension_numbers<[1], [0], [0], [1], [0, 0, 1, 1], [], []>} : vector<128x4xbf16>, vector<4x8xbf16>, vector<128x8xf32> -> vector<128x8xf32>
    %147 = arith.addf %138, %146 : vector<128x8xf32>
    %c0_i32_127 = arith.constant 0 : i32
    %148 = arith.addi %1, %c0_i32_127 : i32
    %c0_128 = arith.constant 0 : index
    %149 = arith.index_cast %148 : i32 to index
    %c3_129 = arith.constant 3 : index
    %c0_130 = arith.constant 0 : index
    %150 = vector.load %arg2[%c0_128, %149, %c3_129, %c0_130] : memref<1x22x22x4xbf16, #tpu.memory_space<vmem>>, vector<1x8x16x4xbf16>
    %151 = vector.shape_cast %150 : vector<1x8x16x4xbf16> to vector<8x16x4xbf16>
    %152 = vector.shape_cast %151 : vector<8x16x4xbf16> to vector<128x4xbf16>
    %c1_131 = arith.constant 1 : index
    %c4_132 = arith.constant 4 : index
    %c0_133 = arith.constant 0 : index
    %c0_134 = arith.constant 0 : index
    %153 = vector.load %arg6[%c1_131, %c4_132, %c0_133, %c0_134] : memref<3x9x4x8xbf16, #tpu.memory_space<vmem>>, vector<1x1x4x8xbf16>
    %154 = vector.shape_cast %153 : vector<1x1x4x8xbf16> to vector<4x8xbf16>
    %cst_135 = arith.constant dense<0.000000e+00> : vector<128x8xf32>
    %155 = tpu.matmul %152, %154, %cst_135 {dimension_numbers = #tpu.dot_dimension_numbers<[1], [0], [0], [1], [0, 0, 1, 1], [], []>} : vector<128x4xbf16>, vector<4x8xbf16>, vector<128x8xf32> -> vector<128x8xf32>
    %156 = arith.addf %147, %155 : vector<128x8xf32>
    %c0_i32_136 = arith.constant 0 : i32
    %157 = arith.addi %1, %c0_i32_136 : i32
    %c0_137 = arith.constant 0 : index
    %158 = arith.index_cast %157 : i32 to index
    %c5_138 = arith.constant 5 : index
    %c0_139 = arith.constant 0 : index
    %159 = vector.load %arg2[%c0_137, %158, %c5_138, %c0_139] : memref<1x22x22x4xbf16, #tpu.memory_space<vmem>>, vector<1x8x16x4xbf16>
    %160 = vector.shape_cast %159 : vector<1x8x16x4xbf16> to vector<8x16x4xbf16>
    %161 = vector.shape_cast %160 : vector<8x16x4xbf16> to vector<128x4xbf16>
    %c1_140 = arith.constant 1 : index
    %c5_141 = arith.constant 5 : index
    %c0_142 = arith.constant 0 : index
    %c0_143 = arith.constant 0 : index
    %162 = vector.load %arg6[%c1_140, %c5_141, %c0_142, %c0_143] : memref<3x9x4x8xbf16, #tpu.memory_space<vmem>>, vector<1x1x4x8xbf16>
    %163 = vector.shape_cast %162 : vector<1x1x4x8xbf16> to vector<4x8xbf16>
    %cst_144 = arith.constant dense<0.000000e+00> : vector<128x8xf32>
    %164 = tpu.matmul %161, %163, %cst_144 {dimension_numbers = #tpu.dot_dimension_numbers<[1], [0], [0], [1], [0, 0, 1, 1], [], []>} : vector<128x4xbf16>, vector<4x8xbf16>, vector<128x8xf32> -> vector<128x8xf32>
    %165 = arith.addf %156, %164 : vector<128x8xf32>
    %c2_i32 = arith.constant 2 : i32
    %166 = arith.addi %1, %c2_i32 : i32
    %c0_145 = arith.constant 0 : index
    %167 = arith.index_cast %166 : i32 to index
    %c1_146 = arith.constant 1 : index
    %c0_147 = arith.constant 0 : index
    %168 = vector.load %arg2[%c0_145, %167, %c1_146, %c0_147] : memref<1x22x22x4xbf16, #tpu.memory_space<vmem>>, vector<1x8x16x4xbf16>
    %169 = vector.shape_cast %168 : vector<1x8x16x4xbf16> to vector<8x16x4xbf16>
    %170 = vector.shape_cast %169 : vector<8x16x4xbf16> to vector<128x4xbf16>
    %c1_148 = arith.constant 1 : index
    %c6_149 = arith.constant 6 : index
    %c0_150 = arith.constant 0 : index
    %c0_151 = arith.constant 0 : index
    %171 = vector.load %arg6[%c1_148, %c6_149, %c0_150, %c0_151] : memref<3x9x4x8xbf16, #tpu.memory_space<vmem>>, vector<1x1x4x8xbf16>
    %172 = vector.shape_cast %171 : vector<1x1x4x8xbf16> to vector<4x8xbf16>
    %cst_152 = arith.constant dense<0.000000e+00> : vector<128x8xf32>
    %173 = tpu.matmul %170, %172, %cst_152 {dimension_numbers = #tpu.dot_dimension_numbers<[1], [0], [0], [1], [0, 0, 1, 1], [], []>} : vector<128x4xbf16>, vector<4x8xbf16>, vector<128x8xf32> -> vector<128x8xf32>
    %174 = arith.addf %165, %173 : vector<128x8xf32>
    %c2_i32_153 = arith.constant 2 : i32
    %175 = arith.addi %1, %c2_i32_153 : i32
    %c0_154 = arith.constant 0 : index
    %176 = arith.index_cast %175 : i32 to index
    %c3_155 = arith.constant 3 : index
    %c0_156 = arith.constant 0 : index
    %177 = vector.load %arg2[%c0_154, %176, %c3_155, %c0_156] : memref<1x22x22x4xbf16, #tpu.memory_space<vmem>>, vector<1x8x16x4xbf16>
    %178 = vector.shape_cast %177 : vector<1x8x16x4xbf16> to vector<8x16x4xbf16>
    %179 = vector.shape_cast %178 : vector<8x16x4xbf16> to vector<128x4xbf16>
    %c1_157 = arith.constant 1 : index
    %c7_158 = arith.constant 7 : index
    %c0_159 = arith.constant 0 : index
    %c0_160 = arith.constant 0 : index
    %180 = vector.load %arg6[%c1_157, %c7_158, %c0_159, %c0_160] : memref<3x9x4x8xbf16, #tpu.memory_space<vmem>>, vector<1x1x4x8xbf16>
    %181 = vector.shape_cast %180 : vector<1x1x4x8xbf16> to vector<4x8xbf16>
    %cst_161 = arith.constant dense<0.000000e+00> : vector<128x8xf32>
    %182 = tpu.matmul %179, %181, %cst_161 {dimension_numbers = #tpu.dot_dimension_numbers<[1], [0], [0], [1], [0, 0, 1, 1], [], []>} : vector<128x4xbf16>, vector<4x8xbf16>, vector<128x8xf32> -> vector<128x8xf32>
    %183 = arith.addf %174, %182 : vector<128x8xf32>
    %c2_i32_162 = arith.constant 2 : i32
    %184 = arith.addi %1, %c2_i32_162 : i32
    %c0_163 = arith.constant 0 : index
    %185 = arith.index_cast %184 : i32 to index
    %c5_164 = arith.constant 5 : index
    %c0_165 = arith.constant 0 : index
    %186 = vector.load %arg2[%c0_163, %185, %c5_164, %c0_165] : memref<1x22x22x4xbf16, #tpu.memory_space<vmem>>, vector<1x8x16x4xbf16>
    %187 = vector.shape_cast %186 : vector<1x8x16x4xbf16> to vector<8x16x4xbf16>
    %188 = vector.shape_cast %187 : vector<8x16x4xbf16> to vector<128x4xbf16>
    %c1_166 = arith.constant 1 : index
    %c8_167 = arith.constant 8 : index
    %c0_168 = arith.constant 0 : index
    %c0_169 = arith.constant 0 : index
    %189 = vector.load %arg6[%c1_166, %c8_167, %c0_168, %c0_169] : memref<3x9x4x8xbf16, #tpu.memory_space<vmem>>, vector<1x1x4x8xbf16>
    %190 = vector.shape_cast %189 : vector<1x1x4x8xbf16> to vector<4x8xbf16>
    %cst_170 = arith.constant dense<0.000000e+00> : vector<128x8xf32>
    %191 = tpu.matmul %188, %190, %cst_170 {dimension_numbers = #tpu.dot_dimension_numbers<[1], [0], [0], [1], [0, 0, 1, 1], [], []>} : vector<128x4xbf16>, vector<4x8xbf16>, vector<128x8xf32> -> vector<128x8xf32>
    %192 = arith.addf %183, %191 : vector<128x8xf32>
    %c1_171 = arith.constant 1 : index
    %c0_172 = arith.constant 0 : index
    %c0_173 = arith.constant 0 : index
    %193 = vector.load %arg7[%c1_171, %c0_172, %c0_173] : memref<3x1x8xf32, #tpu.memory_space<vmem>>, vector<1x1x8xf32>
    %194 = vector.shape_cast %193 : vector<1x1x8xf32> to vector<1x8xf32>
    %c2_174 = arith.constant 2 : index
    %c0_175 = arith.constant 0 : index
    %c0_176 = arith.constant 0 : index
    %195 = vector.load %arg8[%c2_174, %c0_175, %c0_176] : memref<4x8x128xbf16, #tpu.memory_space<vmem>>, vector<1x8x128xbf16>
    %196 = vector.shape_cast %195 : vector<1x8x128xbf16> to vector<8x128xbf16>
    %197 = vector.broadcast %194 : vector<1x8xf32> to vector<128x8xf32>
    %198 = arith.addf %192, %197 : vector<128x8xf32>
    %cst_177 = arith.constant 0.000000e+00 : f32
    %199 = vector.broadcast %cst_177 : f32 to vector<128x8xf32>
    %200 = arith.maximumf %198, %199 : vector<128x8xf32>
    %201 = arith.truncf %200 : vector<128x8xf32> to vector<128x8xbf16>
    %cst_178 = arith.constant dense<0.000000e+00> : vector<128x128xf32>
    %202 = tpu.matmul %201, %196, %cst_178 {dimension_numbers = #tpu.dot_dimension_numbers<[1], [0], [0], [1], [0, 0, 1, 1], [], []>} : vector<128x8xbf16>, vector<8x128xbf16>, vector<128x128xf32> -> vector<128x128xf32>
    %203 = arith.addf %110, %202 : vector<128x128xf32>
    %cst_179 = arith.constant 0.000000e+00 : f32
    %204 = vector.broadcast %cst_179 : f32 to vector<128x8xf32>
    %c-3_i32 = arith.constant -3 : i32
    %205 = arith.addi %1, %c-3_i32 : i32
    %c0_180 = arith.constant 0 : index
    %206 = arith.index_cast %205 : i32 to index
    %c0_181 = arith.constant 0 : index
    %c0_182 = arith.constant 0 : index
    %207 = vector.load %arg2[%c0_180, %206, %c0_181, %c0_182] : memref<1x22x22x4xbf16, #tpu.memory_space<vmem>>, vector<1x8x16x4xbf16>
    %208 = vector.shape_cast %207 : vector<1x8x16x4xbf16> to vector<8x16x4xbf16>
    %209 = vector.shape_cast %208 : vector<8x16x4xbf16> to vector<128x4xbf16>
    %c2_183 = arith.constant 2 : index
    %c0_184 = arith.constant 0 : index
    %c0_185 = arith.constant 0 : index
    %c0_186 = arith.constant 0 : index
    %210 = vector.load %arg6[%c2_183, %c0_184, %c0_185, %c0_186] : memref<3x9x4x8xbf16, #tpu.memory_space<vmem>>, vector<1x1x4x8xbf16>
    %211 = vector.shape_cast %210 : vector<1x1x4x8xbf16> to vector<4x8xbf16>
    %cst_187 = arith.constant dense<0.000000e+00> : vector<128x8xf32>
    %212 = tpu.matmul %209, %211, %cst_187 {dimension_numbers = #tpu.dot_dimension_numbers<[1], [0], [0], [1], [0, 0, 1, 1], [], []>} : vector<128x4xbf16>, vector<4x8xbf16>, vector<128x8xf32> -> vector<128x8xf32>
    %213 = arith.addf %204, %212 : vector<128x8xf32>
    %c-3_i32_188 = arith.constant -3 : i32
    %214 = arith.addi %1, %c-3_i32_188 : i32
    %c0_189 = arith.constant 0 : index
    %215 = arith.index_cast %214 : i32 to index
    %c3_190 = arith.constant 3 : index
    %c0_191 = arith.constant 0 : index
    %216 = vector.load %arg2[%c0_189, %215, %c3_190, %c0_191] : memref<1x22x22x4xbf16, #tpu.memory_space<vmem>>, vector<1x8x16x4xbf16>
    %217 = vector.shape_cast %216 : vector<1x8x16x4xbf16> to vector<8x16x4xbf16>
    %218 = vector.shape_cast %217 : vector<8x16x4xbf16> to vector<128x4xbf16>
    %c2_192 = arith.constant 2 : index
    %c1_193 = arith.constant 1 : index
    %c0_194 = arith.constant 0 : index
    %c0_195 = arith.constant 0 : index
    %219 = vector.load %arg6[%c2_192, %c1_193, %c0_194, %c0_195] : memref<3x9x4x8xbf16, #tpu.memory_space<vmem>>, vector<1x1x4x8xbf16>
    %220 = vector.shape_cast %219 : vector<1x1x4x8xbf16> to vector<4x8xbf16>
    %cst_196 = arith.constant dense<0.000000e+00> : vector<128x8xf32>
    %221 = tpu.matmul %218, %220, %cst_196 {dimension_numbers = #tpu.dot_dimension_numbers<[1], [0], [0], [1], [0, 0, 1, 1], [], []>} : vector<128x4xbf16>, vector<4x8xbf16>, vector<128x8xf32> -> vector<128x8xf32>
    %222 = arith.addf %213, %221 : vector<128x8xf32>
    %c-3_i32_197 = arith.constant -3 : i32
    %223 = arith.addi %1, %c-3_i32_197 : i32
    %c0_198 = arith.constant 0 : index
    %224 = arith.index_cast %223 : i32 to index
    %c6_199 = arith.constant 6 : index
    %c0_200 = arith.constant 0 : index
    %225 = vector.load %arg2[%c0_198, %224, %c6_199, %c0_200] : memref<1x22x22x4xbf16, #tpu.memory_space<vmem>>, vector<1x8x16x4xbf16>
    %226 = vector.shape_cast %225 : vector<1x8x16x4xbf16> to vector<8x16x4xbf16>
    %227 = vector.shape_cast %226 : vector<8x16x4xbf16> to vector<128x4xbf16>
    %c2_201 = arith.constant 2 : index
    %c2_202 = arith.constant 2 : index
    %c0_203 = arith.constant 0 : index
    %c0_204 = arith.constant 0 : index
    %228 = vector.load %arg6[%c2_201, %c2_202, %c0_203, %c0_204] : memref<3x9x4x8xbf16, #tpu.memory_space<vmem>>, vector<1x1x4x8xbf16>
    %229 = vector.shape_cast %228 : vector<1x1x4x8xbf16> to vector<4x8xbf16>
    %cst_205 = arith.constant dense<0.000000e+00> : vector<128x8xf32>
    %230 = tpu.matmul %227, %229, %cst_205 {dimension_numbers = #tpu.dot_dimension_numbers<[1], [0], [0], [1], [0, 0, 1, 1], [], []>} : vector<128x4xbf16>, vector<4x8xbf16>, vector<128x8xf32> -> vector<128x8xf32>
    %231 = arith.addf %222, %230 : vector<128x8xf32>
    %c0_i32_206 = arith.constant 0 : i32
    %232 = arith.addi %1, %c0_i32_206 : i32
    %c0_207 = arith.constant 0 : index
    %233 = arith.index_cast %232 : i32 to index
    %c0_208 = arith.constant 0 : index
    %c0_209 = arith.constant 0 : index
    %234 = vector.load %arg2[%c0_207, %233, %c0_208, %c0_209] : memref<1x22x22x4xbf16, #tpu.memory_space<vmem>>, vector<1x8x16x4xbf16>
    %235 = vector.shape_cast %234 : vector<1x8x16x4xbf16> to vector<8x16x4xbf16>
    %236 = vector.shape_cast %235 : vector<8x16x4xbf16> to vector<128x4xbf16>
    %c2_210 = arith.constant 2 : index
    %c3_211 = arith.constant 3 : index
    %c0_212 = arith.constant 0 : index
    %c0_213 = arith.constant 0 : index
    %237 = vector.load %arg6[%c2_210, %c3_211, %c0_212, %c0_213] : memref<3x9x4x8xbf16, #tpu.memory_space<vmem>>, vector<1x1x4x8xbf16>
    %238 = vector.shape_cast %237 : vector<1x1x4x8xbf16> to vector<4x8xbf16>
    %cst_214 = arith.constant dense<0.000000e+00> : vector<128x8xf32>
    %239 = tpu.matmul %236, %238, %cst_214 {dimension_numbers = #tpu.dot_dimension_numbers<[1], [0], [0], [1], [0, 0, 1, 1], [], []>} : vector<128x4xbf16>, vector<4x8xbf16>, vector<128x8xf32> -> vector<128x8xf32>
    %240 = arith.addf %231, %239 : vector<128x8xf32>
    %c0_i32_215 = arith.constant 0 : i32
    %241 = arith.addi %1, %c0_i32_215 : i32
    %c0_216 = arith.constant 0 : index
    %242 = arith.index_cast %241 : i32 to index
    %c3_217 = arith.constant 3 : index
    %c0_218 = arith.constant 0 : index
    %243 = vector.load %arg2[%c0_216, %242, %c3_217, %c0_218] : memref<1x22x22x4xbf16, #tpu.memory_space<vmem>>, vector<1x8x16x4xbf16>
    %244 = vector.shape_cast %243 : vector<1x8x16x4xbf16> to vector<8x16x4xbf16>
    %245 = vector.shape_cast %244 : vector<8x16x4xbf16> to vector<128x4xbf16>
    %c2_219 = arith.constant 2 : index
    %c4_220 = arith.constant 4 : index
    %c0_221 = arith.constant 0 : index
    %c0_222 = arith.constant 0 : index
    %246 = vector.load %arg6[%c2_219, %c4_220, %c0_221, %c0_222] : memref<3x9x4x8xbf16, #tpu.memory_space<vmem>>, vector<1x1x4x8xbf16>
    %247 = vector.shape_cast %246 : vector<1x1x4x8xbf16> to vector<4x8xbf16>
    %cst_223 = arith.constant dense<0.000000e+00> : vector<128x8xf32>
    %248 = tpu.matmul %245, %247, %cst_223 {dimension_numbers = #tpu.dot_dimension_numbers<[1], [0], [0], [1], [0, 0, 1, 1], [], []>} : vector<128x4xbf16>, vector<4x8xbf16>, vector<128x8xf32> -> vector<128x8xf32>
    %249 = arith.addf %240, %248 : vector<128x8xf32>
    %c0_i32_224 = arith.constant 0 : i32
    %250 = arith.addi %1, %c0_i32_224 : i32
    %c0_225 = arith.constant 0 : index
    %251 = arith.index_cast %250 : i32 to index
    %c6_226 = arith.constant 6 : index
    %c0_227 = arith.constant 0 : index
    %252 = vector.load %arg2[%c0_225, %251, %c6_226, %c0_227] : memref<1x22x22x4xbf16, #tpu.memory_space<vmem>>, vector<1x8x16x4xbf16>
    %253 = vector.shape_cast %252 : vector<1x8x16x4xbf16> to vector<8x16x4xbf16>
    %254 = vector.shape_cast %253 : vector<8x16x4xbf16> to vector<128x4xbf16>
    %c2_228 = arith.constant 2 : index
    %c5_229 = arith.constant 5 : index
    %c0_230 = arith.constant 0 : index
    %c0_231 = arith.constant 0 : index
    %255 = vector.load %arg6[%c2_228, %c5_229, %c0_230, %c0_231] : memref<3x9x4x8xbf16, #tpu.memory_space<vmem>>, vector<1x1x4x8xbf16>
    %256 = vector.shape_cast %255 : vector<1x1x4x8xbf16> to vector<4x8xbf16>
    %cst_232 = arith.constant dense<0.000000e+00> : vector<128x8xf32>
    %257 = tpu.matmul %254, %256, %cst_232 {dimension_numbers = #tpu.dot_dimension_numbers<[1], [0], [0], [1], [0, 0, 1, 1], [], []>} : vector<128x4xbf16>, vector<4x8xbf16>, vector<128x8xf32> -> vector<128x8xf32>
    %258 = arith.addf %249, %257 : vector<128x8xf32>
    %c3_i32_233 = arith.constant 3 : i32
    %259 = arith.addi %1, %c3_i32_233 : i32
    %c0_234 = arith.constant 0 : index
    %260 = arith.index_cast %259 : i32 to index
    %c0_235 = arith.constant 0 : index
    %c0_236 = arith.constant 0 : index
    %261 = vector.load %arg2[%c0_234, %260, %c0_235, %c0_236] : memref<1x22x22x4xbf16, #tpu.memory_space<vmem>>, vector<1x8x16x4xbf16>
    %262 = vector.shape_cast %261 : vector<1x8x16x4xbf16> to vector<8x16x4xbf16>
    %263 = vector.shape_cast %262 : vector<8x16x4xbf16> to vector<128x4xbf16>
    %c2_237 = arith.constant 2 : index
    %c6_238 = arith.constant 6 : index
    %c0_239 = arith.constant 0 : index
    %c0_240 = arith.constant 0 : index
    %264 = vector.load %arg6[%c2_237, %c6_238, %c0_239, %c0_240] : memref<3x9x4x8xbf16, #tpu.memory_space<vmem>>, vector<1x1x4x8xbf16>
    %265 = vector.shape_cast %264 : vector<1x1x4x8xbf16> to vector<4x8xbf16>
    %cst_241 = arith.constant dense<0.000000e+00> : vector<128x8xf32>
    %266 = tpu.matmul %263, %265, %cst_241 {dimension_numbers = #tpu.dot_dimension_numbers<[1], [0], [0], [1], [0, 0, 1, 1], [], []>} : vector<128x4xbf16>, vector<4x8xbf16>, vector<128x8xf32> -> vector<128x8xf32>
    %267 = arith.addf %258, %266 : vector<128x8xf32>
    %c3_i32_242 = arith.constant 3 : i32
    %268 = arith.addi %1, %c3_i32_242 : i32
    %c0_243 = arith.constant 0 : index
    %269 = arith.index_cast %268 : i32 to index
    %c3_244 = arith.constant 3 : index
    %c0_245 = arith.constant 0 : index
    %270 = vector.load %arg2[%c0_243, %269, %c3_244, %c0_245] : memref<1x22x22x4xbf16, #tpu.memory_space<vmem>>, vector<1x8x16x4xbf16>
    %271 = vector.shape_cast %270 : vector<1x8x16x4xbf16> to vector<8x16x4xbf16>
    %272 = vector.shape_cast %271 : vector<8x16x4xbf16> to vector<128x4xbf16>
    %c2_246 = arith.constant 2 : index
    %c7_247 = arith.constant 7 : index
    %c0_248 = arith.constant 0 : index
    %c0_249 = arith.constant 0 : index
    %273 = vector.load %arg6[%c2_246, %c7_247, %c0_248, %c0_249] : memref<3x9x4x8xbf16, #tpu.memory_space<vmem>>, vector<1x1x4x8xbf16>
    %274 = vector.shape_cast %273 : vector<1x1x4x8xbf16> to vector<4x8xbf16>
    %cst_250 = arith.constant dense<0.000000e+00> : vector<128x8xf32>
    %275 = tpu.matmul %272, %274, %cst_250 {dimension_numbers = #tpu.dot_dimension_numbers<[1], [0], [0], [1], [0, 0, 1, 1], [], []>} : vector<128x4xbf16>, vector<4x8xbf16>, vector<128x8xf32> -> vector<128x8xf32>
    %276 = arith.addf %267, %275 : vector<128x8xf32>
    %c3_i32_251 = arith.constant 3 : i32
    %277 = arith.addi %1, %c3_i32_251 : i32
    %c0_252 = arith.constant 0 : index
    %278 = arith.index_cast %277 : i32 to index
    %c6_253 = arith.constant 6 : index
    %c0_254 = arith.constant 0 : index
    %279 = vector.load %arg2[%c0_252, %278, %c6_253, %c0_254] : memref<1x22x22x4xbf16, #tpu.memory_space<vmem>>, vector<1x8x16x4xbf16>
    %280 = vector.shape_cast %279 : vector<1x8x16x4xbf16> to vector<8x16x4xbf16>
    %281 = vector.shape_cast %280 : vector<8x16x4xbf16> to vector<128x4xbf16>
    %c2_255 = arith.constant 2 : index
    %c8_256 = arith.constant 8 : index
    %c0_257 = arith.constant 0 : index
    %c0_258 = arith.constant 0 : index
    %282 = vector.load %arg6[%c2_255, %c8_256, %c0_257, %c0_258] : memref<3x9x4x8xbf16, #tpu.memory_space<vmem>>, vector<1x1x4x8xbf16>
    %283 = vector.shape_cast %282 : vector<1x1x4x8xbf16> to vector<4x8xbf16>
    %cst_259 = arith.constant dense<0.000000e+00> : vector<128x8xf32>
    %284 = tpu.matmul %281, %283, %cst_259 {dimension_numbers = #tpu.dot_dimension_numbers<[1], [0], [0], [1], [0, 0, 1, 1], [], []>} : vector<128x4xbf16>, vector<4x8xbf16>, vector<128x8xf32> -> vector<128x8xf32>
    %285 = arith.addf %276, %284 : vector<128x8xf32>
    %c2_260 = arith.constant 2 : index
    %c0_261 = arith.constant 0 : index
    %c0_262 = arith.constant 0 : index
    %286 = vector.load %arg7[%c2_260, %c0_261, %c0_262] : memref<3x1x8xf32, #tpu.memory_space<vmem>>, vector<1x1x8xf32>
    %287 = vector.shape_cast %286 : vector<1x1x8xf32> to vector<1x8xf32>
    %c3_263 = arith.constant 3 : index
    %c0_264 = arith.constant 0 : index
    %c0_265 = arith.constant 0 : index
    %288 = vector.load %arg8[%c3_263, %c0_264, %c0_265] : memref<4x8x128xbf16, #tpu.memory_space<vmem>>, vector<1x8x128xbf16>
    %289 = vector.shape_cast %288 : vector<1x8x128xbf16> to vector<8x128xbf16>
    %290 = vector.broadcast %287 : vector<1x8xf32> to vector<128x8xf32>
    %291 = arith.addf %285, %290 : vector<128x8xf32>
    %cst_266 = arith.constant 0.000000e+00 : f32
    %292 = vector.broadcast %cst_266 : f32 to vector<128x8xf32>
    %293 = arith.maximumf %291, %292 : vector<128x8xf32>
    %294 = arith.truncf %293 : vector<128x8xf32> to vector<128x8xbf16>
    %cst_267 = arith.constant dense<0.000000e+00> : vector<128x128xf32>
    %295 = tpu.matmul %294, %289, %cst_267 {dimension_numbers = #tpu.dot_dimension_numbers<[1], [0], [0], [1], [0, 0, 1, 1], [], []>} : vector<128x8xbf16>, vector<8x128xbf16>, vector<128x128xf32> -> vector<128x128xf32>
    %296 = arith.addf %203, %295 : vector<128x128xf32>
    %c0_268 = arith.constant 0 : index
    %c0_269 = arith.constant 0 : index
    %c0_270 = arith.constant 0 : index
    %297 = vector.load %arg3[%c0_268, %c0_269, %c0_270] : memref<1x1x128xf32, #tpu.memory_space<vmem>>, vector<1x1x128xf32>
    %298 = vector.shape_cast %297 : vector<1x1x128xf32> to vector<1x128xf32>
    %299 = vector.broadcast %298 : vector<1x128xf32> to vector<128x128xf32>
    %300 = arith.addf %296, %299 : vector<128x128xf32>
    %cst_271 = arith.constant 0.000000e+00 : f32
    %301 = vector.broadcast %cst_271 : f32 to vector<128x128xf32>
    %302 = arith.maximumf %300, %301 : vector<128x128xf32>
    %c0_272 = arith.constant 0 : index
    %c0_273 = arith.constant 0 : index
    %c0_274 = arith.constant 0 : index
    %303 = vector.load %arg9[%c0_272, %c0_273, %c0_274] : memref<1x128x128xf32, #tpu.memory_space<vmem>>, vector<1x128x128xf32>
    %304 = vector.shape_cast %303 : vector<1x128x128xf32> to vector<128x128xf32>
    %305 = vector.shape_cast %302 : vector<128x128xf32> to vector<1x128x128xf32>
    tpu.vector_store %arg9[%c0_272, %c0_273, %c0_274], %305 {strides = array<i32>} : memref<1x128x128xf32, #tpu.memory_space<vmem>>, vector<1x128x128xf32>,
    return
  }
  func.func @transform_0(%arg0: i32, %arg1: i32) -> (i32, i32, i32, i32) {
    %c0_i32 = arith.constant 0 : i32
    %c0_i32_0 = arith.constant 0 : i32
    %c0_i32_1 = arith.constant 0 : i32
    %c0_i32_2 = arith.constant 0 : i32
    return %arg0, %c0_i32, %c0_i32_0, %c0_i32_1 : i32, i32, i32, i32
  }
  func.func @transform_1(%arg0: i32, %arg1: i32) -> (i32, i32, i32) {
    %c0_i32 = arith.constant 0 : i32
    %c0_i32_0 = arith.constant 0 : i32
    %c0_i32_1 = arith.constant 0 : i32
    return %arg0, %c0_i32, %c0_i32_0 : i32, i32, i32
  }
  func.func @transform_2(%arg0: i32, %arg1: i32) -> (i32, i32) {
    %c0_i32 = arith.constant 0 : i32
    %c0_i32_0 = arith.constant 0 : i32
    %c0_i32_1 = arith.constant 0 : i32
    return %c0_i32, %c0_i32_0 : i32, i32
  }
  func.func @transform_3(%arg0: i32, %arg1: i32) -> (i32, i32) {
    %c0_i32 = arith.constant 0 : i32
    %c0_i32_0 = arith.constant 0 : i32
    %c0_i32_1 = arith.constant 0 : i32
    return %c0_i32, %c0_i32_0 : i32, i32
  }
  func.func @transform_4(%arg0: i32, %arg1: i32) -> (i32, i32, i32, i32) {
    %c0_i32 = arith.constant 0 : i32
    %c0_i32_0 = arith.constant 0 : i32
    %c0_i32_1 = arith.constant 0 : i32
    %c0_i32_2 = arith.constant 0 : i32
    %c0_i32_3 = arith.constant 0 : i32
    return %c0_i32, %c0_i32_0, %c0_i32_1, %c0_i32_2 : i32, i32, i32, i32
  }
  func.func @transform_5(%arg0: i32, %arg1: i32) -> (i32, i32, i32) {
    %c0_i32 = arith.constant 0 : i32
    %c0_i32_0 = arith.constant 0 : i32
    %c0_i32_1 = arith.constant 0 : i32
    %c0_i32_2 = arith.constant 0 : i32
    return %c0_i32, %c0_i32_0, %c0_i32_1 : i32, i32, i32
  }
  func.func @transform_6(%arg0: i32, %arg1: i32) -> (i32, i32, i32) {
    %c0_i32 = arith.constant 0 : i32
    %c0_i32_0 = arith.constant 0 : i32
    %c0_i32_1 = arith.constant 0 : i32
    %c0_i32_2 = arith.constant 0 : i32
    return %c0_i32, %c0_i32_0, %c0_i32_1 : i32, i32, i32
  }
  func.func @transform_7(%arg0: i32, %arg1: i32) -> (i32, i32, i32) {
    %c0_i32 = arith.constant 0 : i32
    %c0_i32_0 = arith.constant 0 : i32
    return %arg0, %arg1, %c0_i32 : i32, i32, i32
  }
}

</mosaic_0001>

<llo_original>
// kernel: tpu_custom_call.1
$region0: #{tpu_custom_call.1}
  #allocation0 [shape = 'u32[]', space=smem, size = 0x4, offset = 0x4, fixed_abs, tag = 'smem constant byte address 0x4 - core index']
  #allocation1 [shape = 'u32[144,128]{1,0:T(1,128)}', space=vmem, size = 0x12000, scoped, tag = 'internal scratch']
  %s0 = inlined_call_operand.vmem [shape: bf16[2,22,22,4], index: 0, kind: input, shape index: {}]
  %s1 = inlined_call_operand.vmem [shape: f32[2,1,128], index: 1, kind: input, shape index: {}]
  %s2 = inlined_call_operand.vmem [shape: bf16[4,8], index: 2, kind: input, shape index: {}]
  %s3 = inlined_call_operand.vmem [shape: f32[1,8], index: 3, kind: input, shape index: {}]
  %s4 = inlined_call_operand.vmem [shape: bf16[3,9,4,8], index: 4, kind: input, shape index: {}]
  %s5 = inlined_call_operand.vmem [shape: f32[3,1,8], index: 5, kind: input, shape index: {}]
  %s6 = inlined_call_operand.vmem [shape: bf16[4,8,128], index: 6, kind: input, shape index: {}]
  %s7 = inlined_call_operand.hbm [shape: f32[2,256,128], index: 7, kind: output, shape index: {}]
  %s8 = sld [smem:[#allocation0]]
  $region61: #{tpu_custom_call.1} parent=0
    _
  %s10 = ssub.s32 1, %s8
  %s11 = scalar_select 0, %s10, %s8
  $region1: #{tpu_custom_call.1} parent=0
    #allocation2 [shape = 'u8[131072]{0}', space=vmem, size = 0x20000, scoped, tag = 'output window, operand 0']
    #allocation3 [shape = 's32[2]{0}', space=sflag, size = 0x8, scoped, tag = 'scoped memory for tpu_custom_call.1']
    %12 = vsyncpa [#allocation3], 0
    %s13 = scalar_lea.sflag [#allocation3], 1
    %14 = vsyncpa %s13, 0
    loop: start=0, step=1, limit=6
    $region2: #{tpu_custom_call.1} parent=1 // loop_pre_header
      _
    $region3: #{tpu_custom_call.1} parent=1 // loop_header
      %s16 = sphi 0, %s20
      %p17 = scmp.ge.s32.totalorder %s16, 6
      %s23 = sphi 0, %s35
      %s24 = sphi 0, %s31
      %s25 = sphi 0, %s23
      %s26 = sphi 0, %s24
      %s27 = sphi 0, %s25
      %s28 = sphi 0, %s26
      %s38 = sphi 0, %s40
      %s41 = sphi 0, %s38
      %s42 = sphi 0, %s41
      %s58 = sphi 0, %s42
      %s64 = sphi 0, %s66
      %s67 = sphi 0, %s64
      %s68 = sphi 0, %s67
      %s84 = sphi 0, %s68
      %s88 = sphi 0, %s88
      %s90 = sphi 0, %s88
      %s91 = sphi 0, %s90
      %s105 = sphi 0, %s91
      %s109 = sphi 0, %s109
      %s111 = sphi 0, %s109
      %s112 = sphi 0, %s111
      %s126 = sphi 0, %s112
      %s130 = sphi 0, %s130
      %s132 = sphi 0, %s130
      %s133 = sphi 0, %s132
      %s147 = sphi 0, %s133
      %s151 = sphi 0, %s151
      %s153 = sphi 0, %s151
      %s154 = sphi 0, %s153
      %s168 = sphi 0, %s154
      %s172 = sphi 0, %s172
      %s174 = sphi 0, %s172
      %s175 = sphi 0, %s174
      %s189 = sphi 0, %s175
      %s197 = sphi 0, %s199
      %s200 = sphi 0, %s197
      %s201 = sphi 0, %s200
      %s217 = sphi 0, %s201
    $region4: #{tpu_custom_call.1} parent=1 // loop_header_branch
      %19 = sbr.rel (%p17) target = $region8
    $region5: #{tpu_custom_call.1} parent=1 // loop_body
      %s21 = ssub.s32 %s16, 1
      %s22 = ssub.s32 %s16, 2
      %s29 = sadd.s32 1, %s24
      %p30 = scmp.ge.s32.totalorder %s29, 2
      %s31 = scalar_select %p30, 0, %s29
      %s32 = sadd.s32 1, %s23
      %s33 = scalar_select %p30, %s32, %s23
      %p34 = scmp.ge.s32.totalorder %s33, 2
      %s35 = scalar_select %p34, 0, %s33
      %s36 = ssub.s32 %s23, %s35
      %p37 = scmp.eq.s32.totalorder %s36, 0
      %s39 = sadd.s32 %s38, 1
      %s40 = scalar_select %p37, %s38, %s39
      %p43 = pneg %p37
      %p44 = scmp.eq.s32.totalorder %s16, 3
      %p45 = por %p43, %p44
      %p46 = scmp.ne.s32.totalorder %s38, %s41
      %p47 = scmp.eq.s32.totalorder %s16, 0
      %p48 = por %p46, %p47
      %p49 = scmp.ne.s32.totalorder %s38, %s41
      %p50 = scmp.eq.s32.totalorder %s21, 3
      %p51 = por %p49, %p50
      %p52 = scmp.ne.s32.totalorder %s41, %s42
      %p53 = scmp.eq.s32.totalorder %s21, 0
      %p54 = por %p52, %p53
      %p55 = scmp.ne.s32.totalorder %s41, %s42
      %p56 = scmp.eq.s32.totalorder %s22, 3
      %p57 = por %p55, %p56
      %p59 = scmp.ne.s32.totalorder %s42, %s58
      %p60 = scmp.eq.s32.totalorder %s22, 0
      %p61 = por %p59, %p60
      %s62 = ssub.s32 %s23, %s35
      %p63 = scmp.eq.s32.totalorder %s62, 0
      %s65 = sadd.s32 %s64, 1
      %s66 = scalar_select %p63, %s64, %s65
      %p69 = pneg %p63
      %p70 = scmp.eq.s32.totalorder %s16, 3
      %p71 = por %p69, %p70
      %p72 = scmp.ne.s32.totalorder %s64, %s67
      %p73 = scmp.eq.s32.totalorder %s16, 0
      %p74 = por %p72, %p73
      %p75 = scmp.ne.s32.totalorder %s64, %s67
      %p76 = scmp.eq.s32.totalorder %s21, 3
      %p77 = por %p75, %p76
      %p78 = scmp.ne.s32.totalorder %s67, %s68
      %p79 = scmp.eq.s32.totalorder %s21, 0
      %p80 = por %p78, %p79
      %p81 = scmp.ne.s32.totalorder %s67, %s68
      %p82 = scmp.eq.s32.totalorder %s22, 3
      %p83 = por %p81, %p82
      %p85 = scmp.ne.s32.totalorder %s68, %s84
      %p86 = scmp.eq.s32.totalorder %s22, 0
      %p87 = por %p85, %p86
      %s89 = sadd.s32 %s88, 1
      %p92 = scmp.eq.s32.totalorder %s16, 3
      %p93 = scmp.ne.s32.totalorder %s88, %s90
      %p94 = scmp.eq.s32.totalorder %s16, 0
      %p95 = por %p93, %p94
      %p96 = scmp.ne.s32.totalorder %s88, %s90
      %p97 = scmp.eq.s32.totalorder %s21, 3
      %p98 = por %p96, %p97
      %p99 = scmp.ne.s32.totalorder %s90, %s91
      %p100 = scmp.eq.s32.totalorder %s21, 0
      %p101 = por %p99, %p100
      %p102 = scmp.ne.s32.totalorder %s90, %s91
      %p103 = scmp.eq.s32.totalorder %s22, 3
      %p104 = por %p102, %p103
      %p106 = scmp.ne.s32.totalorder %s91, %s105
      %p107 = scmp.eq.s32.totalorder %s22, 0
      %p108 = por %p106, %p107
      %s110 = sadd.s32 %s109, 1
      %p113 = scmp.eq.s32.totalorder %s16, 3
      %p114 = scmp.ne.s32.totalorder %s109, %s111
      %p115 = scmp.eq.s32.totalorder %s16, 0
      %p116 = por %p114, %p115
      %p117 = scmp.ne.s32.totalorder %s109, %s111
      %p118 = scmp.eq.s32.totalorder %s21, 3
      %p119 = por %p117, %p118
      %p120 = scmp.ne.s32.totalorder %s111, %s112
      %p121 = scmp.eq.s32.totalorder %s21, 0
      %p122 = por %p120, %p121
      %p123 = scmp.ne.s32.totalorder %s111, %s112
      %p124 = scmp.eq.s32.totalorder %s22, 3
      %p125 = por %p123, %p124
      %p127 = scmp.ne.s32.totalorder %s112, %s126
      %p128 = scmp.eq.s32.totalorder %s22, 0
      %p129 = por %p127, %p128
      %s131 = sadd.s32 %s130, 1
      %p134 = scmp.eq.s32.totalorder %s16, 3
      %p135 = scmp.ne.s32.totalorder %s130, %s132
      %p136 = scmp.eq.s32.totalorder %s16, 0
      %p137 = por %p135, %p136
      %p138 = scmp.ne.s32.totalorder %s130, %s132
      %p139 = scmp.eq.s32.totalorder %s21, 3
      %p140 = por %p138, %p139
      %p141 = scmp.ne.s32.totalorder %s132, %s133
      %p142 = scmp.eq.s32.totalorder %s21, 0
      %p143 = por %p141, %p142
      %p144 = scmp.ne.s32.totalorder %s132, %s133
      %p145 = scmp.eq.s32.totalorder %s22, 3
      %p146 = por %p144, %p145
      %p148 = scmp.ne.s32.totalorder %s133, %s147
      %p149 = scmp.eq.s32.totalorder %s22, 0
      %p150 = por %p148, %p149
      %s152 = sadd.s32 %s151, 1
      %p155 = scmp.eq.s32.totalorder %s16, 3
      %p156 = scmp.ne.s32.totalorder %s151, %s153
      %p157 = scmp.eq.s32.totalorder %s16, 0
      %p158 = por %p156, %p157
      %p159 = scmp.ne.s32.totalorder %s151, %s153
      %p160 = scmp.eq.s32.totalorder %s21, 3
      %p161 = por %p159, %p160
      %p162 = scmp.ne.s32.totalorder %s153, %s154
      %p163 = scmp.eq.s32.totalorder %s21, 0
      %p164 = por %p162, %p163
      %p165 = scmp.ne.s32.totalorder %s153, %s154
      %p166 = scmp.eq.s32.totalorder %s22, 3
      %p167 = por %p165, %p166
      %p169 = scmp.ne.s32.totalorder %s154, %s168
      %p170 = scmp.eq.s32.totalorder %s22, 0
      %p171 = por %p169, %p170
      %s173 = sadd.s32 %s172, 1
      %p176 = scmp.eq.s32.totalorder %s16, 3
      %p177 = scmp.ne.s32.totalorder %s172, %s174
      %p178 = scmp.eq.s32.totalorder %s16, 0
      %p179 = por %p177, %p178
      %p180 = scmp.ne.s32.totalorder %s172, %s174
      %p181 = scmp.eq.s32.totalorder %s21, 3
      %p182 = por %p180, %p181
      %p183 = scmp.ne.s32.totalorder %s174, %s175
      %p184 = scmp.eq.s32.totalorder %s21, 0
      %p185 = por %p183, %p184
      %p186 = scmp.ne.s32.totalorder %s174, %s175
      %p187 = scmp.eq.s32.totalorder %s22, 3
      %p188 = por %p186, %p187
      %p190 = scmp.ne.s32.totalorder %s175, %s189
      %p191 = scmp.eq.s32.totalorder %s22, 0
      %p192 = por %p190, %p191
      %s193 = ssub.s32 %s23, %s35
      %s194 = ssub.s32 %s24, %s31
      %s195 = sor.u32 %s193, %s194
      %p196 = scmp.eq.s32.totalorder %s195, 0
      %s198 = sadd.s32 %s197, 1
      %s199 = scalar_select %p196, %s197, %s198
      %p202 = pneg %p196
      %p203 = scmp.eq.s32.totalorder %s16, 3
      %p204 = por %p202, %p203
      %p205 = scmp.ne.s32.totalorder %s197, %s200
      %p206 = scmp.eq.s32.totalorder %s16, 0
      %p207 = por %p205, %p206
      %p208 = scmp.ne.s32.totalorder %s197, %s200
      %p209 = scmp.eq.s32.totalorder %s21, 3
      %p210 = por %p208, %p209
      %p211 = scmp.ne.s32.totalorder %s200, %s201
      %p212 = scmp.eq.s32.totalorder %s21, 0
      %p213 = por %p211, %p212
      %p214 = scmp.ne.s32.totalorder %s200, %s201
      %p215 = scmp.eq.s32.totalorder %s22, 3
      %p216 = por %p214, %p215
      %p218 = scmp.ne.s32.totalorder %s201, %s217
      %p219 = scmp.eq.s32.totalorder %s22, 0
      %p220 = por %p218, %p219
      %p221 = scmp.le.s32.totalorder 1, %s16
      %p222 = scmp.lt.s32.totalorder %s16, 5
      %p223 = pnand %p221, %p222
      %p224 = pneg %p223
      // Predicated region
      $region9: #{tpu_custom_call.1} parent=5 // pred_check
        _
      $region10: #{tpu_custom_call.1} parent=5 // pred_check_branch
        %226 = sbr.rel (%p223) target = $region12
      $region11: #{tpu_custom_call.1} parent=5 // pred_region
        %s227 = ssub.s32 %s16, 1
        // Predicated region
        $region13: #{tpu_custom_call.1} parent=11 // pred_check
          %p228 = pneg %p101
        $region14: #{tpu_custom_call.1} parent=11 // pred_check_branch
          %230 = sbr.rel (%p228) target = $region16
        $region15: #{tpu_custom_call.1} parent=11 // pred_region
          _
        $region16: #{tpu_custom_call.1} parent=11 // pred_fallthru
          _
        // Predicated region
        $region17: #{tpu_custom_call.1} parent=11 // pred_check
          %p231 = pneg %p122
        $region18: #{tpu_custom_call.1} parent=11 // pred_check_branch
          %233 = sbr.rel (%p231) target = $region20
        $region19: #{tpu_custom_call.1} parent=11 // pred_region
          _
        $region20: #{tpu_custom_call.1} parent=11 // pred_fallthru
          _
        // Predicated region
        $region21: #{tpu_custom_call.1} parent=11 // pred_check
          %p234 = pneg %p143
        $region22: #{tpu_custom_call.1} parent=11 // pred_check_branch
          %236 = sbr.rel (%p234) target = $region24
        $region23: #{tpu_custom_call.1} parent=11 // pred_region
          _
        $region24: #{tpu_custom_call.1} parent=11 // pred_fallthru
          _
        // Predicated region
        $region25: #{tpu_custom_call.1} parent=11 // pred_check
          %p237 = pneg %p164
        $region26: #{tpu_custom_call.1} parent=11 // pred_check_branch
          %239 = sbr.rel (%p237) target = $region28
        $region27: #{tpu_custom_call.1} parent=11 // pred_region
          _
        $region28: #{tpu_custom_call.1} parent=11 // pred_fallthru
          _
        // Predicated region
        $region29: #{tpu_custom_call.1} parent=11 // pred_check
          %p240 = pneg %p185
        $region30: #{tpu_custom_call.1} parent=11 // pred_check_branch
          %242 = sbr.rel (%p240) target = $region32
        $region31: #{tpu_custom_call.1} parent=11 // pred_region
          _
        $region32: #{tpu_custom_call.1} parent=11 // pred_fallthru
          _
      $region12: #{tpu_custom_call.1} parent=5 // pred_fallthru
        _
      %p243 = scmp.lt.s32.totalorder %s16, 4
      // Predicated region
      $region33: #{tpu_custom_call.1} parent=5 // pred_check
        %p244 = pneg %p243
      $region34: #{tpu_custom_call.1} parent=5 // pred_check_branch
        %246 = sbr.rel (%p244) target = $region36
      $region35: #{tpu_custom_call.1} parent=5 // pred_region
        // Predicated region
        $region37: #{tpu_custom_call.1} parent=35 // pred_check
          %p247 = pneg %p48
        $region38: #{tpu_custom_call.1} parent=35 // pred_check_branch
          %249 = sbr.rel (%p247) target = $region40
        $region39: #{tpu_custom_call.1} parent=35 // pred_region
          %p250 = scmp.lt.s32.totalorder %s23, 1
          %s251 = scalar_select %p250, %s23, 1
          %s252 = smul.addr %s251, 66
          %s253 = smul.addr %s252, 4
          %s254 = scalar_lea.vmem %s0, %s253
        $region40: #{tpu_custom_call.1} parent=35 // pred_fallthru
          _
        // Predicated region
        $region41: #{tpu_custom_call.1} parent=35 // pred_check
          %p255 = pneg %p74
        $region42: #{tpu_custom_call.1} parent=35 // pred_check_branch
          %257 = sbr.rel (%p255) target = $region44
        $region43: #{tpu_custom_call.1} parent=35 // pred_region
          %p258 = scmp.lt.s32.totalorder %s23, 1
          %s259 = scalar_select %p258, %s23, 1
          %s260 = scalar_lea.vmem %s1, %s259
        $region44: #{tpu_custom_call.1} parent=35 // pred_fallthru
          _
      $region36: #{tpu_custom_call.1} parent=5 // pred_fallthru
        _
      %p261 = scmp.le.s32.totalorder 1, %s16
      %p262 = scmp.lt.s32.totalorder %s16, 5
      %p263 = pnand %p261, %p262
      %p264 = pneg %p263
      // Predicated region
      $region45: #{tpu_custom_call.1} parent=5 // pred_check
        _
      $region46: #{tpu_custom_call.1} parent=5 // pred_check_branch
        %266 = sbr.rel (%p263) target = $region48
      $region47: #{tpu_custom_call.1} parent=5 // pred_region
        %s267 = ssub.s32 %s16, 1
        %p268 = scmp.lt.s32.totalorder %s25, 1
        %s269 = scalar_select %p268, %s25, 1
        %s270 = smul.addr %s269, 66
        %s271 = smul.addr %s270, 4
        %s272 = scalar_lea.vmem %s0, %s271
        %p273 = pneg %p54
        %p274 = pneg %p51
        %p275 = scmp.lt.s32.totalorder %s25, 1
        %s276 = scalar_select %p275, %s25, 1
        %s277 = scalar_lea.vmem %s1, %s276
        %p278 = pneg %p80
        %p279 = pneg %p77
        %p280 = pneg %p101
        %p281 = pneg %p98
        %p282 = pneg %p122
        %p283 = pneg %p119
        %p284 = pneg %p143
        %p285 = pneg %p140
        %p286 = pneg %p164
        %p287 = pneg %p161
        %p288 = pneg %p185
        %p289 = pneg %p182
        %p290 = pneg %p213
        %p291 = pneg %p210
        %s292 = sand.u32 %s200, 1
        %s293 = scalar_lea.sflag [#allocation3], %s292
        %s294 = sand.u32 %s200, 1
        %s295 = smul.addr %s294, 128
        %s296 = scalar_lea.vmem [#allocation2], %s295
        %p297 = scmp.lt.s32.totalorder %s25, 1
        %s298 = scalar_select %p297, %s25, 1
        %s299 = smul.addr %s298, 66
        %s300 = smul.addr %s299, 4
        %s301 = scalar_lea.vmem %s0, %s300
        %p302 = scmp.lt.s32.totalorder %s25, 1
        %s303 = scalar_select %p302, %s25, 1
        %s304 = scalar_lea.vmem %s1, %s303
        %s305 = smul.u32 16, %s26
        %s307 = smul.u32 %s26, 8
        %s308 = sadd.s32 %s307, 3
        %s309 = smul.u32 %s308, 3
        %s310 = smul.addr %s309, 4
        %s311 = scalar_lea.vmem %s301, %s310
        %v312 = vld [vmem:[%s311] sm:$0xe]
        %v313 = vld [vmem:[%s311 + $0x4] sm:$0xf]
        %v314 = vld [vmem:[%s311 + $0x8] sm:$0x3]
        %v315 = vld [vmem:[%s311 + $0xc] sm:$0xe]
        %v316 = vld [vmem:[%s311 + $0x10] sm:$0xf]
        %v317 = vld [vmem:[%s311 + $0x14] sm:$0x3]
        %v318 = vld [vmem:[%s311 + $0x18] sm:$0xe]
        %v319 = vld [vmem:[%s311 + $0x1c] sm:$0xf]
        %v320 = vld [vmem:[%s311 + $0x20] sm:$0x3]
        %v321 = vld [vmem:[%s311 + $0x24] sm:$0xe]
        %v322 = vld [vmem:[%s311 + $0x28] sm:$0xf]
        %v323 = vld [vmem:[%s311 + $0x2c] sm:$0x3]
        %v324 = vld [vmem:[%s311 + $0x30] sm:$0xe]
        %v325 = vld [vmem:[%s311 + $0x34] sm:$0xf]
        %v326 = vld [vmem:[%s311 + $0x38] sm:$0x3]
        %v327 = vld [vmem:[%s311 + $0x3c] sm:$0xe]
        %v328 = vld [vmem:[%s311 + $0x40] sm:$0xf]
        %v329 = vld [vmem:[%s311 + $0x44] sm:$0x3]
        %v330 = vld [vmem:[%s311 + $0x48] sm:$0xe]
        %v331 = vld [vmem:[%s311 + $0x4c] sm:$0xf]
        %v332 = vld [vmem:[%s311 + $0x50] sm:$0x3]
        %v333 = vld [vmem:[%s311 + $0x54] sm:$0xe]
        %v334 = vld [vmem:[%s311 + $0x58] sm:$0xf]
        %v335 = vld [vmem:[%s311 + $0x5c] sm:$0x3]
        %vm336 = vsmask.f32 2304
        %vm337 = vsmask.f32 6416
        %vm338 = vmor %vm336, %vm337
        %v340 = vshrl.u32 %v312, 16
        %v342 = vrot.slane %v340, 5
        %v343 = vshll.u32 %v312, 16
        %v345 = vrot.slane %v343, 6
        %v346 = vor.u32 %v342, %v345
        %v347 = vrot.slane %v346, 4
        %v349 = vshrl.u32 %v313, 16
        %v351 = vrot.slane %v349, 5
        %v352 = vshll.u32 %v313, 16
        %v354 = vrot.slane %v352, 6
        %v355 = vor.u32 %v351, %v354
        %v356 = vsel %vm338, %v347, %v355
        %v357 = vrot.slane %v355, 4
        %v359 = vshrl.u32 %v314, 16
        %v361 = vrot.slane %v359, 5
        %v362 = vshll.u32 %v314, 16
        %v364 = vrot.slane %v362, 6
        %v365 = vor.u32 %v361, %v364
        %v366 = vsel %vm338, %v357, %v365
        %v368 = vshrl.u32 %v315, 16
        %v370 = vrot.slane %v368, 5
        %v371 = vshll.u32 %v315, 16
        %v373 = vrot.slane %v371, 6
        %v374 = vor.u32 %v370, %v373
        %v375 = vrot.slane %v374, 4
        %v377 = vshrl.u32 %v316, 16
        %v379 = vrot.slane %v377, 5
        %v380 = vshll.u32 %v316, 16
        %v382 = vrot.slane %v380, 6
        %v383 = vor.u32 %v379, %v382
        %v384 = vsel %vm338, %v375, %v383
        %v385 = vrot.slane %v383, 4
        %v387 = vshrl.u32 %v317, 16
        %v389 = vrot.slane %v387, 5
        %v390 = vshll.u32 %v317, 16
        %v392 = vrot.slane %v390, 6
        %v393 = vor.u32 %v389, %v392
        %v394 = vsel %vm338, %v385, %v393
        %v396 = vshrl.u32 %v318, 16
        %v398 = vrot.slane %v396, 5
        %v399 = vshll.u32 %v318, 16
        %v401 = vrot.slane %v399, 6
        %v402 = vor.u32 %v398, %v401
        %v403 = vrot.slane %v402, 4
        %v405 = vshrl.u32 %v319, 16
        %v407 = vrot.slane %v405, 5
        %v408 = vshll.u32 %v319, 16
        %v410 = vrot.slane %v408, 6
        %v411 = vor.u32 %v407, %v410
        %v412 = vsel %vm338, %v403, %v411
        %v413 = vrot.slane %v411, 4
        %v415 = vshrl.u32 %v320, 16
        %v417 = vrot.slane %v415, 5
        %v418 = vshll.u32 %v320, 16
        %v420 = vrot.slane %v418, 6
        %v421 = vor.u32 %v417, %v420
        %v422 = vsel %vm338, %v413, %v421
        %v424 = vshrl.u32 %v321, 16
        %v426 = vrot.slane %v424, 5
        %v427 = vshll.u32 %v321, 16
        %v429 = vrot.slane %v427, 6
        %v430 = vor.u32 %v426, %v429
        %v431 = vrot.slane %v430, 4
        %v433 = vshrl.u32 %v322, 16
        %v435 = vrot.slane %v433, 5
        %v436 = vshll.u32 %v322, 16
        %v438 = vrot.slane %v436, 6
        %v439 = vor.u32 %v435, %v438
        %v440 = vsel %vm338, %v431, %v439
        %v441 = vrot.slane %v439, 4
        %v443 = vshrl.u32 %v323, 16
        %v445 = vrot.slane %v443, 5
        %v446 = vshll.u32 %v323, 16
        %v448 = vrot.slane %v446, 6
        %v449 = vor.u32 %v445, %v448
        %v450 = vsel %vm338, %v441, %v449
        %v452 = vshrl.u32 %v324, 16
        %v454 = vrot.slane %v452, 5
        %v455 = vshll.u32 %v324, 16
        %v457 = vrot.slane %v455, 6
        %v458 = vor.u32 %v454, %v457
        %v459 = vrot.slane %v458, 4
        %v461 = vshrl.u32 %v325, 16
        %v463 = vrot.slane %v461, 5
        %v464 = vshll.u32 %v325, 16
        %v466 = vrot.slane %v464, 6
        %v467 = vor.u32 %v463, %v466
        %v468 = vsel %vm338, %v459, %v467
        %v469 = vrot.slane %v467, 4
        %v471 = vshrl.u32 %v326, 16
        %v473 = vrot.slane %v471, 5
        %v474 = vshll.u32 %v326, 16
        %v476 = vrot.slane %v474, 6
        %v477 = vor.u32 %v473, %v476
        %v478 = vsel %vm338, %v469, %v477
        %v480 = vshrl.u32 %v327, 16
        %v482 = vrot.slane %v480, 5
        %v483 = vshll.u32 %v327, 16
        %v485 = vrot.slane %v483, 6
        %v486 = vor.u32 %v482, %v485
        %v487 = vrot.slane %v486, 4
        %v489 = vshrl.u32 %v328, 16
        %v491 = vrot.slane %v489, 5
        %v492 = vshll.u32 %v328, 16
        %v494 = vrot.slane %v492, 6
        %v495 = vor.u32 %v491, %v494
        %v496 = vsel %vm338, %v487, %v495
        %v497 = vrot.slane %v495, 4
        %v499 = vshrl.u32 %v329, 16
        %v501 = vrot.slane %v499, 5
        %v502 = vshll.u32 %v329, 16
        %v504 = vrot.slane %v502, 6
        %v505 = vor.u32 %v501, %v504
        %v506 = vsel %vm338, %v497, %v505
        %v508 = vshrl.u32 %v330, 16
        %v510 = vrot.slane %v508, 5
        %v511 = vshll.u32 %v330, 16
        %v513 = vrot.slane %v511, 6
        %v514 = vor.u32 %v510, %v513
        %v515 = vrot.slane %v514, 4
        %v517 = vshrl.u32 %v331, 16
        %v519 = vrot.slane %v517, 5
        %v520 = vshll.u32 %v331, 16
        %v522 = vrot.slane %v520, 6
        %v523 = vor.u32 %v519, %v522
        %v524 = vsel %vm338, %v515, %v523
        %v525 = vrot.slane %v523, 4
        %v527 = vshrl.u32 %v332, 16
        %v529 = vrot.slane %v527, 5
        %v530 = vshll.u32 %v332, 16
        %v532 = vrot.slane %v530, 6
        %v533 = vor.u32 %v529, %v532
        %v534 = vsel %vm338, %v525, %v533
        %v536 = vshrl.u32 %v333, 16
        %v538 = vrot.slane %v536, 5
        %v539 = vshll.u32 %v333, 16
        %v541 = vrot.slane %v539, 6
        %v542 = vor.u32 %v538, %v541
        %v543 = vrot.slane %v542, 4
        %v545 = vshrl.u32 %v334, 16
        %v547 = vrot.slane %v545, 5
        %v548 = vshll.u32 %v334, 16
        %v550 = vrot.slane %v548, 6
        %v551 = vor.u32 %v547, %v550
        %v552 = vsel %vm338, %v543, %v551
        %v553 = vrot.slane %v551, 4
        %v555 = vshrl.u32 %v335, 16
        %v557 = vrot.slane %v555, 5
        %v558 = vshll.u32 %v335, 16
        %v560 = vrot.slane %v558, 6
        %v561 = vor.u32 %v557, %v560
        %v562 = vsel %vm338, %v553, %v561
        %v563 = vld [vmem:[%s2] sm:$0x3]
        %v564 = vld [vmem:[%s3] sm:$0x1]
        %v565 = vld [vmem:[%s6] sm:$0xf]
        %v567 = vlaneseq
        %v568 = vshrl.u32 %v567, 7
        %v569 = vsub.s32 0, %v568
        %v570 = vrot.slane %v564, %v569
        %v572 = vunpack.c.l.b16 %v356
        %v573 = vunpack.c.l.b16 %v366
        %v574 = vunpack.c.l.b16 %v384
        %v575 = vunpack.c.l.b16 %v394
        %v576 = vunpack.c.l.b16 %v412
        %v577 = vunpack.c.l.b16 %v422
        %v578 = vunpack.c.l.b16 %v440
        %v579 = vunpack.c.l.b16 %v450
        %v580 = vunpack.c.l.b16 %v468
        %v581 = vunpack.c.l.b16 %v478
        %v582 = vunpack.c.l.b16 %v496
        %v583 = vunpack.c.l.b16 %v506
        %v584 = vunpack.c.l.b16 %v524
        %v585 = vunpack.c.l.b16 %v534
        %v586 = vunpack.c.l.b16 %v552
        %v587 = vunpack.c.l.b16 %v562
        %v588 = vpack.c.b16 %v573, %v572
        %v589 = vpack.c.b16 %v575, %v574
        %v590 = vpack.c.b16 %v577, %v576
        %v591 = vpack.c.b16 %v579, %v578
        %v592 = vpack.c.b16 %v581, %v580
        %v593 = vpack.c.b16 %v583, %v582
        %v594 = vpack.c.b16 %v585, %v584
        %v595 = vpack.c.b16 %v587, %v586
        %vm596 = vcmask 31744
        %v598 = vsel %vm596, %v588, 0
        %v601 = vsel %vm596, %v589, 0
        %v604 = vsel %vm596, %v590, 0
        %v607 = vsel %vm596, %v591, 0
        %v610 = vsel %vm596, %v592, 0
        %v613 = vsel %vm596, %v593, 0
        %v616 = vsel %vm596, %v594, 0
        %v619 = vsel %vm596, %v595, 0
        %vm621 = vcmask 1041408
        %v623 = vsel %vm621, %v563, 0
        %625 = vmatprep.subr.bf16.mxu0 0
        %626 = vmatpush1.bf16.msra.mxu0 0
        %627 = vmatprep.subr.bf16.mxu0 0
        %628 = vmatpush1.bf16.msra.mxu0 0
        %629 = vmatprep.subr.bf16.mxu0 0
        %630 = vmatpush1.bf16.msra.mxu0 0
        %631 = vmatprep.subr.bf16.mxu0 0
        %632 = vmatpush1.bf16.msra.mxu0 0
        %633 = vmatprep.subr.bf16.mxu0 0
        %634 = vmatpush1.bf16.msra.mxu0 0
        %635 = vmatprep.subr.bf16.mxu0 0
        %636 = vmatpush1.bf16.msra.mxu0 0
        %637 = vmatprep.subr.bf16.mxu0 0
        %638 = vmatpush1.bf16.msra.mxu0 0
        %639 = vmatprep.subr.bf16.mxu0 0
        %640 = vmatpush1.bf16.msra.mxu0 %v623
        %641 = vmatprep.subr.bf16.mxu0 0
        %642 = vmatpush2.bf16.msra.mxu0 0
        %643 = vmatprep.subr.bf16.mxu0 0
        %644 = vmatpush2.bf16.msra.mxu0 0
        %645 = vmatprep.subr.bf16.mxu0 0
        %646 = vmatpush2.bf16.msra.mxu0 0
        %647 = vmatprep.subr.bf16.mxu0 0
        %648 = vmatpush2.bf16.msra.mxu0 0
        %649 = vmatprep.subr.bf16.mxu0 0
        %650 = vmatpush2.bf16.msra.mxu0 0
        %651 = vmatprep.subr.bf16.mxu0 0
        %652 = vmatpush2.bf16.msra.mxu0 0
        %653 = vmatprep.subr.bf16.mxu0 0
        %654 = vmatpush2.bf16.msra.mxu0 0
        %655 = vmatprep.subr.bf16.mxu0 0
        %656 = vmatpush2.bf16.msra.mxu0 0
        %657 = vmatprep.mubr.bf16.mxu0 0
        %658 = vmatmul.mubr.bf16.gmra.mxu0 %v598
        %v659 = vpop.f32.mrf.mxu0
        %v660 = vadd.f32 %v570, %v659
        %v661 = vpop.f32.mrf.mxu0
        %v662 = vpop.f32.mrf.mxu0
        %v663 = vadd.f32 %v570, %v662
        %v664 = vpop.f32.mrf.mxu0
        %665 = vmatprep.mubr.bf16.mxu0 0
        %666 = vmatmul.mubr.bf16.gmra.mxu0 %v601
        %v667 = vpop.f32.mrf.mxu0
        %v668 = vadd.f32 %v570, %v667
        %v669 = vpop.f32.mrf.mxu0
        %v670 = vpop.f32.mrf.mxu0
        %v671 = vadd.f32 %v570, %v670
        %v672 = vpop.f32.mrf.mxu0
        %673 = vmatprep.mubr.bf16.mxu0 0
        %674 = vmatmul.mubr.bf16.gmra.mxu0 %v604
        %v675 = vpop.f32.mrf.mxu0
        %v676 = vadd.f32 %v570, %v675
        %v677 = vpop.f32.mrf.mxu0
        %v678 = vpop.f32.mrf.mxu0
        %v679 = vadd.f32 %v570, %v678
        %v680 = vpop.f32.mrf.mxu0
        %681 = vmatprep.mubr.bf16.mxu0 0
        %682 = vmatmul.mubr.bf16.gmra.mxu0 %v607
        %v683 = vpop.f32.mrf.mxu0
        %v684 = vadd.f32 %v570, %v683
        %v685 = vpop.f32.mrf.mxu0
        %v686 = vpop.f32.mrf.mxu0
        %v687 = vadd.f32 %v570, %v686
        %v688 = vpop.f32.mrf.mxu0
        %689 = vmatprep.mubr.bf16.mxu0 0
        %690 = vmatmul.mubr.bf16.gmra.mxu0 %v610
        %v691 = vpop.f32.mrf.mxu0
        %v692 = vadd.f32 %v570, %v691
        %v693 = vpop.f32.mrf.mxu0
        %v694 = vpop.f32.mrf.mxu0
        %v695 = vadd.f32 %v570, %v694
        %v696 = vpop.f32.mrf.mxu0
        %697 = vmatprep.mubr.bf16.mxu0 0
        %698 = vmatmul.mubr.bf16.gmra.mxu0 %v613
        %v699 = vpop.f32.mrf.mxu0
        %v700 = vadd.f32 %v570, %v699
        %v701 = vpop.f32.mrf.mxu0
        %v702 = vpop.f32.mrf.mxu0
        %v703 = vadd.f32 %v570, %v702
        %v704 = vpop.f32.mrf.mxu0
        %705 = vmatprep.mubr.bf16.mxu0 0
        %706 = vmatmul.mubr.bf16.gmra.mxu0 %v616
        %v707 = vpop.f32.mrf.mxu0
        %v708 = vadd.f32 %v570, %v707
        %v709 = vpop.f32.mrf.mxu0
        %v710 = vpop.f32.mrf.mxu0
        %v711 = vadd.f32 %v570, %v710
        %v712 = vpop.f32.mrf.mxu0
        %713 = vmatprep.mubr.bf16.mxu0 0
        %714 = vmatmul.mubr.bf16.gmra.mxu0 %v619
        %v715 = vpop.f32.mrf.mxu0
        %v716 = vadd.f32 %v570, %v715
        %v717 = vpop.f32.mrf.mxu0
        %v718 = vpop.f32.mrf.mxu0
        %v719 = vadd.f32 %v570, %v718
        %v720 = vpop.f32.mrf.mxu0
        %721 = vdwg.mxu0
        %v722 = vmax.f32 %v660, 0.0
        %v723 = vmax.f32 %v663, 0.0
        %v724 = vmax.f32 %v668, 0.0
        %v725 = vmax.f32 %v671, 0.0
        %v726 = vmax.f32 %v676, 0.0
        %v727 = vmax.f32 %v679, 0.0
        %v728 = vmax.f32 %v684, 0.0
        %v729 = vmax.f32 %v687, 0.0
        %v730 = vmax.f32 %v692, 0.0
        %v731 = vmax.f32 %v695, 0.0
        %v732 = vmax.f32 %v700, 0.0
        %v733 = vmax.f32 %v703, 0.0
        %v734 = vmax.f32 %v708, 0.0
        %v735 = vmax.f32 %v711, 0.0
        %v736 = vmax.f32 %v716, 0.0
        %v737 = vmax.f32 %v719, 0.0
        %v738 = vpack.c.bf16 %v723, %v722
        %v739 = vpack.c.bf16 %v725, %v724
        %v740 = vpack.c.bf16 %v727, %v726
        %v741 = vpack.c.bf16 %v729, %v728
        %v742 = vpack.c.bf16 %v731, %v730
        %v743 = vpack.c.bf16 %v733, %v732
        %v744 = vpack.c.bf16 %v735, %v734
        %v745 = vpack.c.bf16 %v737, %v736
        %s746 = sadd.s32 %s307, 2
        %s747 = smul.u32 %s746, 3
        %s748 = smul.addr %s747, 4
        %s749 = scalar_lea.vmem %s301, %s748
        %v750 = vld [vmem:[%s749] sm:$0xe]
        %v751 = vld [vmem:[%s749 + $0x4] sm:$0xf]
        %v752 = vld [vmem:[%s749 + $0x8] sm:$0x1]
        %v753 = vld [vmem:[%s749 + $0xc] sm:$0xe]
        %v754 = vld [vmem:[%s749 + $0x10] sm:$0xf]
        %v755 = vld [vmem:[%s749 + $0x14] sm:$0x1]
        %v756 = vld [vmem:[%s749 + $0x18] sm:$0xe]
        %v757 = vld [vmem:[%s749 + $0x1c] sm:$0xf]
        %v758 = vld [vmem:[%s749 + $0x20] sm:$0x1]
        %v759 = vld [vmem:[%s749 + $0x24] sm:$0xe]
        %v760 = vld [vmem:[%s749 + $0x28] sm:$0xf]
        %v761 = vld [vmem:[%s749 + $0x2c] sm:$0x1]
        %v762 = vld [vmem:[%s749 + $0x30] sm:$0xe]
        %v763 = vld [vmem:[%s749 + $0x34] sm:$0xf]
        %v764 = vld [vmem:[%s749 + $0x38] sm:$0x1]
        %v765 = vld [vmem:[%s749 + $0x3c] sm:$0xe]
        %v766 = vld [vmem:[%s749 + $0x40] sm:$0xf]
        %v767 = vld [vmem:[%s749 + $0x44] sm:$0x1]
        %v768 = vld [vmem:[%s749 + $0x48] sm:$0xe]
        %v769 = vld [vmem:[%s749 + $0x4c] sm:$0xf]
        %v770 = vld [vmem:[%s749 + $0x50] sm:$0x1]
        %v771 = vld [vmem:[%s749 + $0x54] sm:$0xe]
        %v772 = vld [vmem:[%s749 + $0x58] sm:$0xf]
        %v773 = vld [vmem:[%s749 + $0x5c] sm:$0x1]
        %vm798 = vcmask 1042432
        %vm799 = vcmask 1046532
        %vm800 = vmor %vm798, %vm799
        %v801 = vrot.slane %v750, 5
        %v802 = vrot.slane %v801, 4
        %v803 = vrot.slane %v751, 5
        %v804 = vsel %vm800, %v802, %v803
        %v805 = vrot.slane %v803, 4
        %v806 = vrot.slane %v752, 5
        %v807 = vsel %vm800, %v805, %v806
        %v808 = vrot.slane %v753, 5
        %v809 = vrot.slane %v808, 4
        %v810 = vrot.slane %v754, 5
        %v811 = vsel %vm800, %v809, %v810
        %v812 = vrot.slane %v810, 4
        %v813 = vrot.slane %v755, 5
        %v814 = vsel %vm800, %v812, %v813
        %v815 = vrot.slane %v756, 5
        %v816 = vrot.slane %v815, 4
        %v817 = vrot.slane %v757, 5
        %v818 = vsel %vm800, %v816, %v817
        %v819 = vrot.slane %v817, 4
        %v820 = vrot.slane %v758, 5
        %v821 = vsel %vm800, %v819, %v820
        %v822 = vrot.slane %v759, 5
        %v823 = vrot.slane %v822, 4
        %v824 = vrot.slane %v760, 5
        %v825 = vsel %vm800, %v823, %v824
        %v826 = vrot.slane %v824, 4
        %v827 = vrot.slane %v761, 5
        %v828 = vsel %vm800, %v826, %v827
        %v829 = vrot.slane %v762, 5
        %v830 = vrot.slane %v829, 4
        %v831 = vrot.slane %v763, 5
        %v832 = vsel %vm800, %v830, %v831
        %v833 = vrot.slane %v831, 4
        %v834 = vrot.slane %v764, 5
        %v835 = vsel %vm800, %v833, %v834
        %v836 = vrot.slane %v765, 5
        %v837 = vrot.slane %v836, 4
        %v838 = vrot.slane %v766, 5
        %v839 = vsel %vm800, %v837, %v838
        %v840 = vrot.slane %v838, 4
        %v841 = vrot.slane %v767, 5
        %v842 = vsel %vm800, %v840, %v841
        %v843 = vrot.slane %v768, 5
        %v844 = vrot.slane %v843, 4
        %v845 = vrot.slane %v769, 5
        %v846 = vsel %vm800, %v844, %v845
        %v847 = vrot.slane %v845, 4
        %v848 = vrot.slane %v770, 5
        %v849 = vsel %vm800, %v847, %v848
        %v850 = vrot.slane %v771, 5
        %v851 = vrot.slane %v850, 4
        %v852 = vrot.slane %v772, 5
        %v853 = vsel %vm800, %v851, %v852
        %v854 = vrot.slane %v852, 4
        %v855 = vrot.slane %v773, 5
        %v856 = vsel %vm800, %v854, %v855
        %v857 = vld [vmem:[%s4] sm:$0x3]
        %v858 = vld [vmem:[%s749 + $0x8] sm:$0x3]
        %v859 = vld [vmem:[%s749 + $0x14] sm:$0x3]
        %v860 = vld [vmem:[%s749 + $0x20] sm:$0x3]
        %v861 = vld [vmem:[%s749 + $0x2c] sm:$0x3]
        %v862 = vld [vmem:[%s749 + $0x38] sm:$0x3]
        %v863 = vld [vmem:[%s749 + $0x44] sm:$0x3]
        %v864 = vld [vmem:[%s749 + $0x50] sm:$0x3]
        %v865 = vld [vmem:[%s749 + $0x5c] sm:$0x3]
        %v867 = vshrl.u32 %v750, 16
        %v869 = vrot.slane %v867, 5
        %v870 = vshll.u32 %v750, 16
        %v872 = vrot.slane %v870, 6
        %v873 = vor.u32 %v869, %v872
        %v874 = vrot.slane %v873, 4
        %v876 = vshrl.u32 %v751, 16
        %v878 = vrot.slane %v876, 5
        %v879 = vshll.u32 %v751, 16
        %v881 = vrot.slane %v879, 6
        %v882 = vor.u32 %v878, %v881
        %v883 = vsel %vm338, %v874, %v882
        %v884 = vrot.slane %v882, 4
        %v886 = vshrl.u32 %v858, 16
        %v888 = vrot.slane %v886, 5
        %v889 = vshll.u32 %v858, 16
        %v891 = vrot.slane %v889, 6
        %v892 = vor.u32 %v888, %v891
        %v893 = vsel %vm338, %v884, %v892
        %v895 = vshrl.u32 %v753, 16
        %v897 = vrot.slane %v895, 5
        %v898 = vshll.u32 %v753, 16
        %v900 = vrot.slane %v898, 6
        %v901 = vor.u32 %v897, %v900
        %v902 = vrot.slane %v901, 4
        %v904 = vshrl.u32 %v754, 16
        %v906 = vrot.slane %v904, 5
        %v907 = vshll.u32 %v754, 16
        %v909 = vrot.slane %v907, 6
        %v910 = vor.u32 %v906, %v909
        %v911 = vsel %vm338, %v902, %v910
        %v912 = vrot.slane %v910, 4
        %v914 = vshrl.u32 %v859, 16
        %v916 = vrot.slane %v914, 5
        %v917 = vshll.u32 %v859, 16
        %v919 = vrot.slane %v917, 6
        %v920 = vor.u32 %v916, %v919
        %v921 = vsel %vm338, %v912, %v920
        %v923 = vshrl.u32 %v756, 16
        %v925 = vrot.slane %v923, 5
        %v926 = vshll.u32 %v756, 16
        %v928 = vrot.slane %v926, 6
        %v929 = vor.u32 %v925, %v928
        %v930 = vrot.slane %v929, 4
        %v932 = vshrl.u32 %v757, 16
        %v934 = vrot.slane %v932, 5
        %v935 = vshll.u32 %v757, 16
        %v937 = vrot.slane %v935, 6
        %v938 = vor.u32 %v934, %v937
        %v939 = vsel %vm338, %v930, %v938
        %v940 = vrot.slane %v938, 4
        %v942 = vshrl.u32 %v860, 16
        %v944 = vrot.slane %v942, 5
        %v945 = vshll.u32 %v860, 16
        %v947 = vrot.slane %v945, 6
        %v948 = vor.u32 %v944, %v947
        %v949 = vsel %vm338, %v940, %v948
        %v951 = vshrl.u32 %v759, 16
        %v953 = vrot.slane %v951, 5
        %v954 = vshll.u32 %v759, 16
        %v956 = vrot.slane %v954, 6
        %v957 = vor.u32 %v953, %v956
        %v958 = vrot.slane %v957, 4
        %v960 = vshrl.u32 %v760, 16
        %v962 = vrot.slane %v960, 5
        %v963 = vshll.u32 %v760, 16
        %v965 = vrot.slane %v963, 6
        %v966 = vor.u32 %v962, %v965
        %v967 = vsel %vm338, %v958, %v966
        %v968 = vrot.slane %v966, 4
        %v970 = vshrl.u32 %v861, 16
        %v972 = vrot.slane %v970, 5
        %v973 = vshll.u32 %v861, 16
        %v975 = vrot.slane %v973, 6
        %v976 = vor.u32 %v972, %v975
        %v977 = vsel %vm338, %v968, %v976
        %v979 = vshrl.u32 %v762, 16
        %v981 = vrot.slane %v979, 5
        %v982 = vshll.u32 %v762, 16
        %v984 = vrot.slane %v982, 6
        %v985 = vor.u32 %v981, %v984
        %v986 = vrot.slane %v985, 4
        %v988 = vshrl.u32 %v763, 16
        %v990 = vrot.slane %v988, 5
        %v991 = vshll.u32 %v763, 16
        %v993 = vrot.slane %v991, 6
        %v994 = vor.u32 %v990, %v993
        %v995 = vsel %vm338, %v986, %v994
        %v996 = vrot.slane %v994, 4
        %v998 = vshrl.u32 %v862, 16
        %v1000 = vrot.slane %v998, 5
        %v1001 = vshll.u32 %v862, 16
        %v1003 = vrot.slane %v1001, 6
        %v1004 = vor.u32 %v1000, %v1003
        %v1005 = vsel %vm338, %v996, %v1004
        %v1007 = vshrl.u32 %v765, 16
        %v1009 = vrot.slane %v1007, 5
        %v1010 = vshll.u32 %v765, 16
        %v1012 = vrot.slane %v1010, 6
        %v1013 = vor.u32 %v1009, %v1012
        %v1014 = vrot.slane %v1013, 4
        %v1016 = vshrl.u32 %v766, 16
        %v1018 = vrot.slane %v1016, 5
        %v1019 = vshll.u32 %v766, 16
        %v1021 = vrot.slane %v1019, 6
        %v1022 = vor.u32 %v1018, %v1021
        %v1023 = vsel %vm338, %v1014, %v1022
        %v1024 = vrot.slane %v1022, 4
        %v1026 = vshrl.u32 %v863, 16
        %v1028 = vrot.slane %v1026, 5
        %v1029 = vshll.u32 %v863, 16
        %v1031 = vrot.slane %v1029, 6
        %v1032 = vor.u32 %v1028, %v1031
        %v1033 = vsel %vm338, %v1024, %v1032
        %v1035 = vshrl.u32 %v768, 16
        %v1037 = vrot.slane %v1035, 5
        %v1038 = vshll.u32 %v768, 16
        %v1040 = vrot.slane %v1038, 6
        %v1041 = vor.u32 %v1037, %v1040
        %v1042 = vrot.slane %v1041, 4
        %v1044 = vshrl.u32 %v769, 16
        %v1046 = vrot.slane %v1044, 5
        %v1047 = vshll.u32 %v769, 16
        %v1049 = vrot.slane %v1047, 6
        %v1050 = vor.u32 %v1046, %v1049
        %v1051 = vsel %vm338, %v1042, %v1050
        %v1052 = vrot.slane %v1050, 4
        %v1054 = vshrl.u32 %v864, 16
        %v1056 = vrot.slane %v1054, 5
        %v1057 = vshll.u32 %v864, 16
        %v1059 = vrot.slane %v1057, 6
        %v1060 = vor.u32 %v1056, %v1059
        %v1061 = vsel %vm338, %v1052, %v1060
        %v1063 = vshrl.u32 %v771, 16
        %v1065 = vrot.slane %v1063, 5
        %v1066 = vshll.u32 %v771, 16
        %v1068 = vrot.slane %v1066, 6
        %v1069 = vor.u32 %v1065, %v1068
        %v1070 = vrot.slane %v1069, 4
        %v1072 = vshrl.u32 %v772, 16
        %v1074 = vrot.slane %v1072, 5
        %v1075 = vshll.u32 %v772, 16
        %v1077 = vrot.slane %v1075, 6
        %v1078 = vor.u32 %v1074, %v1077
        %v1079 = vsel %vm338, %v1070, %v1078
        %v1080 = vrot.slane %v1078, 4
        %v1082 = vshrl.u32 %v865, 16
        %v1084 = vrot.slane %v1082, 5
        %v1085 = vshll.u32 %v865, 16
        %v1087 = vrot.slane %v1085, 6
        %v1088 = vor.u32 %v1084, %v1087
        %v1089 = vsel %vm338, %v1080, %v1088
        %s1090 = scalar_lea.vmem %s4, 2
        %v1091 = vld [vmem:[%s1090] sm:$0x3]
        %v1092 = vunpack.c.l.b16 %v883
        %v1093 = vunpack.c.l.b16 %v893
        %v1094 = vunpack.c.l.b16 %v911
        %v1095 = vunpack.c.l.b16 %v921
        %v1096 = vunpack.c.l.b16 %v939
        %v1097 = vunpack.c.l.b16 %v949
        %v1098 = vunpack.c.l.b16 %v967
        %v1099 = vunpack.c.l.b16 %v977
        %v1100 = vunpack.c.l.b16 %v995
        %v1101 = vunpack.c.l.b16 %v1005
        %v1102 = vunpack.c.l.b16 %v1023
        %v1103 = vunpack.c.l.b16 %v1033
        %v1104 = vunpack.c.l.b16 %v1051
        %v1105 = vunpack.c.l.b16 %v1061
        %v1106 = vunpack.c.l.b16 %v1079
        %v1107 = vunpack.c.l.b16 %v1089
        %v1108 = vpack.c.b16 %v1093, %v1092
        %v1109 = vpack.c.b16 %v1095, %v1094
        %v1110 = vpack.c.b16 %v1097, %v1096
        %v1111 = vpack.c.b16 %v1099, %v1098
        %v1112 = vpack.c.b16 %v1101, %v1100
        %v1113 = vpack.c.b16 %v1103, %v1102
        %v1114 = vpack.c.b16 %v1105, %v1104
        %v1115 = vpack.c.b16 %v1107, %v1106
        %v1117 = vsel %vm596, %v1108, 0
        %v1120 = vsel %vm596, %v1109, 0
        %v1123 = vsel %vm596, %v1110, 0
        %v1126 = vsel %vm596, %v1111, 0
        %v1129 = vsel %vm596, %v1112, 0
        %v1132 = vsel %vm596, %v1113, 0
        %v1135 = vsel %vm596, %v1114, 0
        %v1138 = vsel %vm596, %v1115, 0
        %v1141 = vsel %vm621, %v1091, 0
        %1143 = vmatprep.subr.bf16.mxu0 0
        %1144 = vmatpush1.bf16.msra.mxu0 0
        %1145 = vmatprep.subr.bf16.mxu0 0
        %1146 = vmatpush1.bf16.msra.mxu0 0
        %1147 = vmatprep.subr.bf16.mxu0 0
        %1148 = vmatpush1.bf16.msra.mxu0 0
        %1149 = vmatprep.subr.bf16.mxu0 0
        %1150 = vmatpush1.bf16.msra.mxu0 0
        %1151 = vmatprep.subr.bf16.mxu0 0
        %1152 = vmatpush1.bf16.msra.mxu0 0
        %1153 = vmatprep.subr.bf16.mxu0 0
        %1154 = vmatpush1.bf16.msra.mxu0 0
        %1155 = vmatprep.subr.bf16.mxu0 0
        %1156 = vmatpush1.bf16.msra.mxu0 0
        %1157 = vmatprep.subr.bf16.mxu0 0
        %1158 = vmatpush1.bf16.msra.mxu0 %v1141
        %1159 = vmatprep.subr.bf16.mxu0 0
        %1160 = vmatpush2.bf16.msra.mxu0 0
        %1161 = vmatprep.subr.bf16.mxu0 0
        %1162 = vmatpush2.bf16.msra.mxu0 0
        %1163 = vmatprep.subr.bf16.mxu0 0
        %1164 = vmatpush2.bf16.msra.mxu0 0
        %1165 = vmatprep.subr.bf16.mxu0 0
        %1166 = vmatpush2.bf16.msra.mxu0 0
        %1167 = vmatprep.subr.bf16.mxu0 0
        %1168 = vmatpush2.bf16.msra.mxu0 0
        %1169 = vmatprep.subr.bf16.mxu0 0
        %1170 = vmatpush2.bf16.msra.mxu0 0
        %1171 = vmatprep.subr.bf16.mxu0 0
        %1172 = vmatpush2.bf16.msra.mxu0 0
        %1173 = vmatprep.subr.bf16.mxu0 0
        %1174 = vmatpush2.bf16.msra.mxu0 0
        %1175 = vmatprep.mubr.bf16.mxu0 0
        %1176 = vmatmul.mubr.bf16.gmra.mxu0 %v1117
        %v1177 = vpop.f32.mrf.mxu0
        %v1178 = vadd.f32 0.0, %v1177
        %v1179 = vpop.f32.mrf.mxu0
        %v1180 = vpop.f32.mrf.mxu0
        %v1181 = vadd.f32 0.0, %v1180
        %v1182 = vpop.f32.mrf.mxu0
        %1183 = vmatprep.mubr.bf16.mxu0 0
        %1184 = vmatmul.mubr.bf16.gmra.mxu0 %v1120
        %v1185 = vpop.f32.mrf.mxu0
        %v1186 = vadd.f32 0.0, %v1185
        %v1187 = vpop.f32.mrf.mxu0
        %v1188 = vpop.f32.mrf.mxu0
        %v1189 = vadd.f32 0.0, %v1188
        %v1190 = vpop.f32.mrf.mxu0
        %1191 = vmatprep.mubr.bf16.mxu0 0
        %1192 = vmatmul.mubr.bf16.gmra.mxu0 %v1123
        %v1193 = vpop.f32.mrf.mxu0
        %v1194 = vadd.f32 0.0, %v1193
        %v1195 = vpop.f32.mrf.mxu0
        %v1196 = vpop.f32.mrf.mxu0
        %v1197 = vadd.f32 0.0, %v1196
        %v1198 = vpop.f32.mrf.mxu0
        %1199 = vmatprep.mubr.bf16.mxu0 0
        %1200 = vmatmul.mubr.bf16.gmra.mxu0 %v1126
        %v1201 = vpop.f32.mrf.mxu0
        %v1202 = vadd.f32 0.0, %v1201
        %v1203 = vpop.f32.mrf.mxu0
        %v1204 = vpop.f32.mrf.mxu0
        %v1205 = vadd.f32 0.0, %v1204
        %v1206 = vpop.f32.mrf.mxu0
        %1207 = vmatprep.mubr.bf16.mxu0 0
        %1208 = vmatmul.mubr.bf16.gmra.mxu0 %v1129
        %v1209 = vpop.f32.mrf.mxu0
        %v1210 = vadd.f32 0.0, %v1209
        %v1211 = vpop.f32.mrf.mxu0
        %v1212 = vpop.f32.mrf.mxu0
        %v1213 = vadd.f32 0.0, %v1212
        %v1214 = vpop.f32.mrf.mxu0
        %1215 = vmatprep.mubr.bf16.mxu0 0
        %1216 = vmatmul.mubr.bf16.gmra.mxu0 %v1132
        %v1217 = vpop.f32.mrf.mxu0
        %v1218 = vadd.f32 0.0, %v1217
        %v1219 = vpop.f32.mrf.mxu0
        %v1220 = vpop.f32.mrf.mxu0
        %v1221 = vadd.f32 0.0, %v1220
        %v1222 = vpop.f32.mrf.mxu0
        %1223 = vmatprep.mubr.bf16.mxu0 0
        %1224 = vmatmul.mubr.bf16.gmra.mxu0 %v1135
        %v1225 = vpop.f32.mrf.mxu0
        %v1226 = vadd.f32 0.0, %v1225
        %v1227 = vpop.f32.mrf.mxu0
        %v1228 = vpop.f32.mrf.mxu0
        %v1229 = vadd.f32 0.0, %v1228
        %v1230 = vpop.f32.mrf.mxu0
        %1231 = vmatprep.mubr.bf16.mxu0 0
        %1232 = vmatmul.mubr.bf16.gmra.mxu0 %v1138
        %v1233 = vpop.f32.mrf.mxu0
        %v1234 = vadd.f32 0.0, %v1233
        %v1235 = vpop.f32.mrf.mxu0
        %v1236 = vpop.f32.mrf.mxu0
        %v1237 = vadd.f32 0.0, %v1236
        %v1238 = vpop.f32.mrf.mxu0
        %1239 = vdwg.mxu0
        %v1240 = vunpack.c.l.b16 %v804
        %v1241 = vunpack.c.l.b16 %v807
        %v1242 = vunpack.c.l.b16 %v811
        %v1243 = vunpack.c.l.b16 %v814
        %v1244 = vunpack.c.l.b16 %v818
        %v1245 = vunpack.c.l.b16 %v821
        %v1246 = vunpack.c.l.b16 %v825
        %v1247 = vunpack.c.l.b16 %v828
        %v1248 = vunpack.c.l.b16 %v832
        %v1249 = vunpack.c.l.b16 %v835
        %v1250 = vunpack.c.l.b16 %v839
        %v1251 = vunpack.c.l.b16 %v842
        %v1252 = vunpack.c.l.b16 %v846
        %v1253 = vunpack.c.l.b16 %v849
        %v1254 = vunpack.c.l.b16 %v853
        %v1255 = vunpack.c.l.b16 %v856
        %v1256 = vpack.c.b16 %v1241, %v1240
        %v1257 = vpack.c.b16 %v1243, %v1242
        %v1258 = vpack.c.b16 %v1245, %v1244
        %v1259 = vpack.c.b16 %v1247, %v1246
        %v1260 = vpack.c.b16 %v1249, %v1248
        %v1261 = vpack.c.b16 %v1251, %v1250
        %v1262 = vpack.c.b16 %v1253, %v1252
        %v1263 = vpack.c.b16 %v1255, %v1254
        %v1265 = vsel %vm596, %v1256, 0
        %v1268 = vsel %vm596, %v1257, 0
        %v1271 = vsel %vm596, %v1258, 0
        %v1274 = vsel %vm596, %v1259, 0
        %v1277 = vsel %vm596, %v1260, 0
        %v1280 = vsel %vm596, %v1261, 0
        %v1283 = vsel %vm596, %v1262, 0
        %v1286 = vsel %vm596, %v1263, 0
        %v1289 = vsel %vm621, %v857, 0
        %1291 = vmatprep.subr.bf16.mxu0 0
        %1292 = vmatpush1.bf16.msra.mxu0 0
        %1293 = vmatprep.subr.bf16.mxu0 0
        %1294 = vmatpush1.bf16.msra.mxu0 0
        %1295 = vmatprep.subr.bf16.mxu0 0
        %1296 = vmatpush1.bf16.msra.mxu0 0
        %1297 = vmatprep.subr.bf16.mxu0 0
        %1298 = vmatpush1.bf16.msra.mxu0 0
        %1299 = vmatprep.subr.bf16.mxu0 0
        %1300 = vmatpush1.bf16.msra.mxu0 0
        %1301 = vmatprep.subr.bf16.mxu0 0
        %1302 = vmatpush1.bf16.msra.mxu0 0
        %1303 = vmatprep.subr.bf16.mxu0 0
        %1304 = vmatpush1.bf16.msra.mxu0 0
        %1305 = vmatprep.subr.bf16.mxu0 0
        %1306 = vmatpush1.bf16.msra.mxu0 %v1289
        %1307 = vmatprep.subr.bf16.mxu0 0
        %1308 = vmatpush2.bf16.msra.mxu0 0
        %1309 = vmatprep.subr.bf16.mxu0 0
        %1310 = vmatpush2.bf16.msra.mxu0 0
        %1311 = vmatprep.subr.bf16.mxu0 0
        %1312 = vmatpush2.bf16.msra.mxu0 0
        %1313 = vmatprep.subr.bf16.mxu0 0
        %1314 = vmatpush2.bf16.msra.mxu0 0
        %1315 = vmatprep.subr.bf16.mxu0 0
        %1316 = vmatpush2.bf16.msra.mxu0 0
        %1317 = vmatprep.subr.bf16.mxu0 0
        %1318 = vmatpush2.bf16.msra.mxu0 0
        %1319 = vmatprep.subr.bf16.mxu0 0
        %1320 = vmatpush2.bf16.msra.mxu0 0
        %1321 = vmatprep.subr.bf16.mxu0 0
        %1322 = vmatpush2.bf16.msra.mxu0 0
        %1323 = vmatprep.mubr.bf16.mxu0 0
        %1324 = vmatmul.mubr.bf16.gmra.mxu0 %v1265
        %v1325 = vpop.f32.mrf.mxu0
        %v1326 = vadd.f32 %v1178, %v1325
        %v1327 = vpop.f32.mrf.mxu0
        %v1328 = vpop.f32.mrf.mxu0
        %v1329 = vadd.f32 %v1181, %v1328
        %v1330 = vpop.f32.mrf.mxu0
        %1331 = vmatprep.mubr.bf16.mxu0 0
        %1332 = vmatmul.mubr.bf16.gmra.mxu0 %v1268
        %v1333 = vpop.f32.mrf.mxu0
        %v1334 = vadd.f32 %v1186, %v1333
        %v1335 = vpop.f32.mrf.mxu0
        %v1336 = vpop.f32.mrf.mxu0
        %v1337 = vadd.f32 %v1189, %v1336
        %v1338 = vpop.f32.mrf.mxu0
        %1339 = vmatprep.mubr.bf16.mxu0 0
        %1340 = vmatmul.mubr.bf16.gmra.mxu0 %v1271
        %v1341 = vpop.f32.mrf.mxu0
        %v1342 = vadd.f32 %v1194, %v1341
        %v1343 = vpop.f32.mrf.mxu0
        %v1344 = vpop.f32.mrf.mxu0
        %v1345 = vadd.f32 %v1197, %v1344
        %v1346 = vpop.f32.mrf.mxu0
        %1347 = vmatprep.mubr.bf16.mxu0 0
        %1348 = vmatmul.mubr.bf16.gmra.mxu0 %v1274
        %v1349 = vpop.f32.mrf.mxu0
        %v1350 = vadd.f32 %v1202, %v1349
        %v1351 = vpop.f32.mrf.mxu0
        %v1352 = vpop.f32.mrf.mxu0
        %v1353 = vadd.f32 %v1205, %v1352
        %v1354 = vpop.f32.mrf.mxu0
        %1355 = vmatprep.mubr.bf16.mxu0 0
        %1356 = vmatmul.mubr.bf16.gmra.mxu0 %v1277
        %v1357 = vpop.f32.mrf.mxu0
        %v1358 = vadd.f32 %v1210, %v1357
        %v1359 = vpop.f32.mrf.mxu0
        %v1360 = vpop.f32.mrf.mxu0
        %v1361 = vadd.f32 %v1213, %v1360
        %v1362 = vpop.f32.mrf.mxu0
        %1363 = vmatprep.mubr.bf16.mxu0 0
        %1364 = vmatmul.mubr.bf16.gmra.mxu0 %v1280
        %v1365 = vpop.f32.mrf.mxu0
        %v1366 = vadd.f32 %v1218, %v1365
        %v1367 = vpop.f32.mrf.mxu0
        %v1368 = vpop.f32.mrf.mxu0
        %v1369 = vadd.f32 %v1221, %v1368
        %v1370 = vpop.f32.mrf.mxu0
        %1371 = vmatprep.mubr.bf16.mxu0 0
        %1372 = vmatmul.mubr.bf16.gmra.mxu0 %v1283
        %v1373 = vpop.f32.mrf.mxu0
        %v1374 = vadd.f32 %v1226, %v1373
        %v1375 = vpop.f32.mrf.mxu0
        %v1376 = vpop.f32.mrf.mxu0
        %v1377 = vadd.f32 %v1229, %v1376
        %v1378 = vpop.f32.mrf.mxu0
        %1379 = vmatprep.mubr.bf16.mxu0 0
        %1380 = vmatmul.mubr.bf16.gmra.mxu0 %v1286
        %v1381 = vpop.f32.mrf.mxu0
        %v1382 = vadd.f32 %v1234, %v1381
        %v1383 = vpop.f32.mrf.mxu0
        %v1384 = vpop.f32.mrf.mxu0
        %v1385 = vadd.f32 %v1237, %v1384
        %v1386 = vpop.f32.mrf.mxu0
        %1387 = vdwg.mxu0
        %v1388 = vld [vmem:[%s749] sm:$0xc]
        %v1389 = vld [vmem:[%s749 + $0xc] sm:$0xc]
        %v1390 = vld [vmem:[%s749 + $0x18] sm:$0xc]
        %v1391 = vld [vmem:[%s749 + $0x24] sm:$0xc]
        %v1392 = vld [vmem:[%s749 + $0x30] sm:$0xc]
        %v1393 = vld [vmem:[%s749 + $0x3c] sm:$0xc]
        %v1394 = vld [vmem:[%s749 + $0x48] sm:$0xc]
        %v1395 = vld [vmem:[%s749 + $0x54] sm:$0xc]
        %vm1412 = vcmask 1041408
        %vm1413 = vcmask 1045508
        %vm1414 = vmor %vm1412, %vm1413
        %v1415 = vrot.slane %v1388, 6
        %v1416 = vrot.slane %v1415, 4
        %v1417 = vrot.slane %v751, 6
        %v1418 = vsel %vm1414, %v1416, %v1417
        %v1419 = vrot.slane %v1417, 4
        %v1420 = vrot.slane %v858, 6
        %v1421 = vsel %vm1414, %v1419, %v1420
        %v1422 = vrot.slane %v1389, 6
        %v1423 = vrot.slane %v1422, 4
        %v1424 = vrot.slane %v754, 6
        %v1425 = vsel %vm1414, %v1423, %v1424
        %v1426 = vrot.slane %v1424, 4
        %v1427 = vrot.slane %v859, 6
        %v1428 = vsel %vm1414, %v1426, %v1427
        %v1429 = vrot.slane %v1390, 6
        %v1430 = vrot.slane %v1429, 4
        %v1431 = vrot.slane %v757, 6
        %v1432 = vsel %vm1414, %v1430, %v1431
        %v1433 = vrot.slane %v1431, 4
        %v1434 = vrot.slane %v860, 6
        %v1435 = vsel %vm1414, %v1433, %v1434
        %v1436 = vrot.slane %v1391, 6
        %v1437 = vrot.slane %v1436, 4
        %v1438 = vrot.slane %v760, 6
        %v1439 = vsel %vm1414, %v1437, %v1438
        %v1440 = vrot.slane %v1438, 4
        %v1441 = vrot.slane %v861, 6
        %v1442 = vsel %vm1414, %v1440, %v1441
        %v1443 = vrot.slane %v1392, 6
        %v1444 = vrot.slane %v1443, 4
        %v1445 = vrot.slane %v763, 6
        %v1446 = vsel %vm1414, %v1444, %v1445
        %v1447 = vrot.slane %v1445, 4
        %v1448 = vrot.slane %v862, 6
        %v1449 = vsel %vm1414, %v1447, %v1448
        %v1450 = vrot.slane %v1393, 6
        %v1451 = vrot.slane %v1450, 4
        %v1452 = vrot.slane %v766, 6
        %v1453 = vsel %vm1414, %v1451, %v1452
        %v1454 = vrot.slane %v1452, 4
        %v1455 = vrot.slane %v863, 6
        %v1456 = vsel %vm1414, %v1454, %v1455
        %v1457 = vrot.slane %v1394, 6
        %v1458 = vrot.slane %v1457, 4
        %v1459 = vrot.slane %v769, 6
        %v1460 = vsel %vm1414, %v1458, %v1459
        %v1461 = vrot.slane %v1459, 4
        %v1462 = vrot.slane %v864, 6
        %v1463 = vsel %vm1414, %v1461, %v1462
        %v1464 = vrot.slane %v1395, 6
        %v1465 = vrot.slane %v1464, 4
        %v1466 = vrot.slane %v772, 6
        %v1467 = vsel %vm1414, %v1465, %v1466
        %v1468 = vrot.slane %v1466, 4
        %v1469 = vrot.slane %v865, 6
        %v1470 = vsel %vm1414, %v1468, %v1469
        %s1471 = scalar_lea.vmem %s4, 4
        %v1472 = vld [vmem:[%s1471] sm:$0x3]
        %v1473 = vunpack.c.l.b16 %v1418
        %v1474 = vunpack.c.l.b16 %v1421
        %v1475 = vunpack.c.l.b16 %v1425
        %v1476 = vunpack.c.l.b16 %v1428
        %v1477 = vunpack.c.l.b16 %v1432
        %v1478 = vunpack.c.l.b16 %v1435
        %v1479 = vunpack.c.l.b16 %v1439
        %v1480 = vunpack.c.l.b16 %v1442
        %v1481 = vunpack.c.l.b16 %v1446
        %v1482 = vunpack.c.l.b16 %v1449
        %v1483 = vunpack.c.l.b16 %v1453
        %v1484 = vunpack.c.l.b16 %v1456
        %v1485 = vunpack.c.l.b16 %v1460
        %v1486 = vunpack.c.l.b16 %v1463
        %v1487 = vunpack.c.l.b16 %v1467
        %v1488 = vunpack.c.l.b16 %v1470
        %v1489 = vpack.c.b16 %v1474, %v1473
        %v1490 = vpack.c.b16 %v1476, %v1475
        %v1491 = vpack.c.b16 %v1478, %v1477
        %v1492 = vpack.c.b16 %v1480, %v1479
        %v1493 = vpack.c.b16 %v1482, %v1481
        %v1494 = vpack.c.b16 %v1484, %v1483
        %v1495 = vpack.c.b16 %v1486, %v1485
        %v1496 = vpack.c.b16 %v1488, %v1487
        %v1498 = vsel %vm596, %v1489, 0
        %v1501 = vsel %vm596, %v1490, 0
        %v1504 = vsel %vm596, %v1491, 0
        %v1507 = vsel %vm596, %v1492, 0
        %v1510 = vsel %vm596, %v1493, 0
        %v1513 = vsel %vm596, %v1494, 0
        %v1516 = vsel %vm596, %v1495, 0
        %v1519 = vsel %vm596, %v1496, 0
        %v1522 = vsel %vm621, %v1472, 0
        %1524 = vmatprep.subr.bf16.mxu0 0
        %1525 = vmatpush1.bf16.msra.mxu0 0
        %1526 = vmatprep.subr.bf16.mxu0 0
        %1527 = vmatpush1.bf16.msra.mxu0 0
        %1528 = vmatprep.subr.bf16.mxu0 0
        %1529 = vmatpush1.bf16.msra.mxu0 0
        %1530 = vmatprep.subr.bf16.mxu0 0
        %1531 = vmatpush1.bf16.msra.mxu0 0
        %1532 = vmatprep.subr.bf16.mxu0 0
        %1533 = vmatpush1.bf16.msra.mxu0 0
        %1534 = vmatprep.subr.bf16.mxu0 0
        %1535 = vmatpush1.bf16.msra.mxu0 0
        %1536 = vmatprep.subr.bf16.mxu0 0
        %1537 = vmatpush1.bf16.msra.mxu0 0
        %1538 = vmatprep.subr.bf16.mxu0 0
        %1539 = vmatpush1.bf16.msra.mxu0 %v1522
        %1540 = vmatprep.subr.bf16.mxu0 0
        %1541 = vmatpush2.bf16.msra.mxu0 0
        %1542 = vmatprep.subr.bf16.mxu0 0
        %1543 = vmatpush2.bf16.msra.mxu0 0
        %1544 = vmatprep.subr.bf16.mxu0 0
        %1545 = vmatpush2.bf16.msra.mxu0 0
        %1546 = vmatprep.subr.bf16.mxu0 0
        %1547 = vmatpush2.bf16.msra.mxu0 0
        %1548 = vmatprep.subr.bf16.mxu0 0
        %1549 = vmatpush2.bf16.msra.mxu0 0
        %1550 = vmatprep.subr.bf16.mxu0 0
        %1551 = vmatpush2.bf16.msra.mxu0 0
        %1552 = vmatprep.subr.bf16.mxu0 0
        %1553 = vmatpush2.bf16.msra.mxu0 0
        %1554 = vmatprep.subr.bf16.mxu0 0
        %1555 = vmatpush2.bf16.msra.mxu0 0
        %1556 = vmatprep.mubr.bf16.mxu0 0
        %1557 = vmatmul.mubr.bf16.gmra.mxu0 %v1498
        %v1558 = vpop.f32.mrf.mxu0
        %v1559 = vadd.f32 0.0, %v1558
        %v1560 = vpop.f32.mrf.mxu0
        %v1561 = vpop.f32.mrf.mxu0
        %v1562 = vadd.f32 0.0, %v1561
        %v1563 = vpop.f32.mrf.mxu0
        %1564 = vmatprep.mubr.bf16.mxu0 0
        %1565 = vmatmul.mubr.bf16.gmra.mxu0 %v1501
        %v1566 = vpop.f32.mrf.mxu0
        %v1567 = vadd.f32 0.0, %v1566
        %v1568 = vpop.f32.mrf.mxu0
        %v1569 = vpop.f32.mrf.mxu0
        %v1570 = vadd.f32 0.0, %v1569
        %v1571 = vpop.f32.mrf.mxu0
        %1572 = vmatprep.mubr.bf16.mxu0 0
        %1573 = vmatmul.mubr.bf16.gmra.mxu0 %v1504
        %v1574 = vpop.f32.mrf.mxu0
        %v1575 = vadd.f32 0.0, %v1574
        %v1576 = vpop.f32.mrf.mxu0
        %v1577 = vpop.f32.mrf.mxu0
        %v1578 = vadd.f32 0.0, %v1577
        %v1579 = vpop.f32.mrf.mxu0
        %1580 = vmatprep.mubr.bf16.mxu0 0
        %1581 = vmatmul.mubr.bf16.gmra.mxu0 %v1507
        %v1582 = vpop.f32.mrf.mxu0
        %v1583 = vadd.f32 0.0, %v1582
        %v1584 = vpop.f32.mrf.mxu0
        %v1585 = vpop.f32.mrf.mxu0
        %v1586 = vadd.f32 0.0, %v1585
        %v1587 = vpop.f32.mrf.mxu0
        %1588 = vmatprep.mubr.bf16.mxu0 0
        %1589 = vmatmul.mubr.bf16.gmra.mxu0 %v1510
        %v1590 = vpop.f32.mrf.mxu0
        %v1591 = vadd.f32 0.0, %v1590
        %v1592 = vpop.f32.mrf.mxu0
        %v1593 = vpop.f32.mrf.mxu0
        %v1594 = vadd.f32 0.0, %v1593
        %v1595 = vpop.f32.mrf.mxu0
        %1596 = vmatprep.mubr.bf16.mxu0 0
        %1597 = vmatmul.mubr.bf16.gmra.mxu0 %v1513
        %v1598 = vpop.f32.mrf.mxu0
        %v1599 = vadd.f32 0.0, %v1598
        %v1600 = vpop.f32.mrf.mxu0
        %v1601 = vpop.f32.mrf.mxu0
        %v1602 = vadd.f32 0.0, %v1601
        %v1603 = vpop.f32.mrf.mxu0
        %1604 = vmatprep.mubr.bf16.mxu0 0
        %1605 = vmatmul.mubr.bf16.gmra.mxu0 %v1516
        %v1606 = vpop.f32.mrf.mxu0
        %v1607 = vadd.f32 0.0, %v1606
        %v1608 = vpop.f32.mrf.mxu0
        %v1609 = vpop.f32.mrf.mxu0
        %v1610 = vadd.f32 0.0, %v1609
        %v1611 = vpop.f32.mrf.mxu0
        %1612 = vmatprep.mubr.bf16.mxu0 0
        %1613 = vmatmul.mubr.bf16.gmra.mxu0 %v1519
        %v1614 = vpop.f32.mrf.mxu0
        %v1615 = vadd.f32 0.0, %v1614
        %v1616 = vpop.f32.mrf.mxu0
        %v1617 = vpop.f32.mrf.mxu0
        %v1618 = vadd.f32 0.0, %v1617
        %v1619 = vpop.f32.mrf.mxu0
        %1620 = vdwg.mxu0
        %v1621 = vadd.f32 %v1326, %v1559
        %v1622 = vadd.f32 %v1329, %v1562
        %v1623 = vadd.f32 %v1334, %v1567
        %v1624 = vadd.f32 %v1337, %v1570
        %v1625 = vadd.f32 %v1342, %v1575
        %v1626 = vadd.f32 %v1345, %v1578
        %v1627 = vadd.f32 %v1350, %v1583
        %v1628 = vadd.f32 %v1353, %v1586
        %v1629 = vadd.f32 %v1358, %v1591
        %v1630 = vadd.f32 %v1361, %v1594
        %v1631 = vadd.f32 %v1366, %v1599
        %v1632 = vadd.f32 %v1369, %v1602
        %v1633 = vadd.f32 %v1374, %v1607
        %v1634 = vadd.f32 %v1377, %v1610
        %v1635 = vadd.f32 %v1382, %v1615
        %v1636 = vadd.f32 %v1385, %v1618
        %v1637 = vld [vmem:[%s311 + $0x8] sm:$0x1]
        %v1638 = vld [vmem:[%s311 + $0x14] sm:$0x1]
        %v1639 = vld [vmem:[%s311 + $0x20] sm:$0x1]
        %v1640 = vld [vmem:[%s311 + $0x2c] sm:$0x1]
        %v1641 = vld [vmem:[%s311 + $0x38] sm:$0x1]
        %v1642 = vld [vmem:[%s311 + $0x44] sm:$0x1]
        %v1643 = vld [vmem:[%s311 + $0x50] sm:$0x1]
        %v1644 = vld [vmem:[%s311 + $0x5c] sm:$0x1]
        %v1669 = vrot.slane %v312, 5
        %v1670 = vrot.slane %v1669, 4
        %v1671 = vrot.slane %v313, 5
        %v1672 = vsel %vm800, %v1670, %v1671
        %v1673 = vrot.slane %v1671, 4
        %v1674 = vrot.slane %v1637, 5
        %v1675 = vsel %vm800, %v1673, %v1674
        %v1676 = vrot.slane %v315, 5
        %v1677 = vrot.slane %v1676, 4
        %v1678 = vrot.slane %v316, 5
        %v1679 = vsel %vm800, %v1677, %v1678
        %v1680 = vrot.slane %v1678, 4
        %v1681 = vrot.slane %v1638, 5
        %v1682 = vsel %vm800, %v1680, %v1681
        %v1683 = vrot.slane %v318, 5
        %v1684 = vrot.slane %v1683, 4
        %v1685 = vrot.slane %v319, 5
        %v1686 = vsel %vm800, %v1684, %v1685
        %v1687 = vrot.slane %v1685, 4
        %v1688 = vrot.slane %v1639, 5
        %v1689 = vsel %vm800, %v1687, %v1688
        %v1690 = vrot.slane %v321, 5
        %v1691 = vrot.slane %v1690, 4
        %v1692 = vrot.slane %v322, 5
        %v1693 = vsel %vm800, %v1691, %v1692
        %v1694 = vrot.slane %v1692, 4
        %v1695 = vrot.slane %v1640, 5
        %v1696 = vsel %vm800, %v1694, %v1695
        %v1697 = vrot.slane %v324, 5
        %v1698 = vrot.slane %v1697, 4
        %v1699 = vrot.slane %v325, 5
        %v1700 = vsel %vm800, %v1698, %v1699
        %v1701 = vrot.slane %v1699, 4
        %v1702 = vrot.slane %v1641, 5
        %v1703 = vsel %vm800, %v1701, %v1702
        %v1704 = vrot.slane %v327, 5
        %v1705 = vrot.slane %v1704, 4
        %v1706 = vrot.slane %v328, 5
        %v1707 = vsel %vm800, %v1705, %v1706
        %v1708 = vrot.slane %v1706, 4
        %v1709 = vrot.slane %v1642, 5
        %v1710 = vsel %vm800, %v1708, %v1709
        %v1711 = vrot.slane %v330, 5
        %v1712 = vrot.slane %v1711, 4
        %v1713 = vrot.slane %v331, 5
        %v1714 = vsel %vm800, %v1712, %v1713
        %v1715 = vrot.slane %v1713, 4
        %v1716 = vrot.slane %v1643, 5
        %v1717 = vsel %vm800, %v1715, %v1716
        %v1718 = vrot.slane %v333, 5
        %v1719 = vrot.slane %v1718, 4
        %v1720 = vrot.slane %v334, 5
        %v1721 = vsel %vm800, %v1719, %v1720
        %v1722 = vrot.slane %v1720, 4
        %v1723 = vrot.slane %v1644, 5
        %v1724 = vsel %vm800, %v1722, %v1723
        %s1725 = scalar_lea.vmem %s4, 6
        %v1726 = vld [vmem:[%s1725] sm:$0x3]
        %v1727 = vunpack.c.l.b16 %v1672
        %v1728 = vunpack.c.l.b16 %v1675
        %v1729 = vunpack.c.l.b16 %v1679
        %v1730 = vunpack.c.l.b16 %v1682
        %v1731 = vunpack.c.l.b16 %v1686
        %v1732 = vunpack.c.l.b16 %v1689
        %v1733 = vunpack.c.l.b16 %v1693
        %v1734 = vunpack.c.l.b16 %v1696
        %v1735 = vunpack.c.l.b16 %v1700
        %v1736 = vunpack.c.l.b16 %v1703
        %v1737 = vunpack.c.l.b16 %v1707
        %v1738 = vunpack.c.l.b16 %v1710
        %v1739 = vunpack.c.l.b16 %v1714
        %v1740 = vunpack.c.l.b16 %v1717
        %v1741 = vunpack.c.l.b16 %v1721
        %v1742 = vunpack.c.l.b16 %v1724
        %v1743 = vpack.c.b16 %v1728, %v1727
        %v1744 = vpack.c.b16 %v1730, %v1729
        %v1745 = vpack.c.b16 %v1732, %v1731
        %v1746 = vpack.c.b16 %v1734, %v1733
        %v1747 = vpack.c.b16 %v1736, %v1735
        %v1748 = vpack.c.b16 %v1738, %v1737
        %v1749 = vpack.c.b16 %v1740, %v1739
        %v1750 = vpack.c.b16 %v1742, %v1741
        %v1752 = vsel %vm596, %v1743, 0
        %v1755 = vsel %vm596, %v1744, 0
        %v1758 = vsel %vm596, %v1745, 0
        %v1761 = vsel %vm596, %v1746, 0
        %v1764 = vsel %vm596, %v1747, 0
        %v1767 = vsel %vm596, %v1748, 0
        %v1770 = vsel %vm596, %v1749, 0
        %v1773 = vsel %vm596, %v1750, 0
        %v1776 = vsel %vm621, %v1726, 0
        %1778 = vmatprep.subr.bf16.mxu0 0
        %1779 = vmatpush1.bf16.msra.mxu0 0
        %1780 = vmatprep.subr.bf16.mxu0 0
        %1781 = vmatpush1.bf16.msra.mxu0 0
        %1782 = vmatprep.subr.bf16.mxu0 0
        %1783 = vmatpush1.bf16.msra.mxu0 0
        %1784 = vmatprep.subr.bf16.mxu0 0
        %1785 = vmatpush1.bf16.msra.mxu0 0
        %1786 = vmatprep.subr.bf16.mxu0 0
        %1787 = vmatpush1.bf16.msra.mxu0 0
        %1788 = vmatprep.subr.bf16.mxu0 0
        %1789 = vmatpush1.bf16.msra.mxu0 0
        %1790 = vmatprep.subr.bf16.mxu0 0
        %1791 = vmatpush1.bf16.msra.mxu0 0
        %1792 = vmatprep.subr.bf16.mxu0 0
        %1793 = vmatpush1.bf16.msra.mxu0 %v1776
        %1794 = vmatprep.subr.bf16.mxu0 0
        %1795 = vmatpush2.bf16.msra.mxu0 0
        %1796 = vmatprep.subr.bf16.mxu0 0
        %1797 = vmatpush2.bf16.msra.mxu0 0
        %1798 = vmatprep.subr.bf16.mxu0 0
        %1799 = vmatpush2.bf16.msra.mxu0 0
        %1800 = vmatprep.subr.bf16.mxu0 0
        %1801 = vmatpush2.bf16.msra.mxu0 0
        %1802 = vmatprep.subr.bf16.mxu0 0
        %1803 = vmatpush2.bf16.msra.mxu0 0
        %1804 = vmatprep.subr.bf16.mxu0 0
        %1805 = vmatpush2.bf16.msra.mxu0 0
        %1806 = vmatprep.subr.bf16.mxu0 0
        %1807 = vmatpush2.bf16.msra.mxu0 0
        %1808 = vmatprep.subr.bf16.mxu0 0
        %1809 = vmatpush2.bf16.msra.mxu0 0
        %1810 = vmatprep.mubr.bf16.mxu0 0
        %1811 = vmatmul.mubr.bf16.gmra.mxu0 %v1752
        %v1812 = vpop.f32.mrf.mxu0
        %v1813 = vadd.f32 0.0, %v1812
        %v1814 = vpop.f32.mrf.mxu0
        %v1815 = vpop.f32.mrf.mxu0
        %v1816 = vadd.f32 0.0, %v1815
        %v1817 = vpop.f32.mrf.mxu0
        %1818 = vmatprep.mubr.bf16.mxu0 0
        %1819 = vmatmul.mubr.bf16.gmra.mxu0 %v1755
        %v1820 = vpop.f32.mrf.mxu0
        %v1821 = vadd.f32 0.0, %v1820
        %v1822 = vpop.f32.mrf.mxu0
        %v1823 = vpop.f32.mrf.mxu0
        %v1824 = vadd.f32 0.0, %v1823
        %v1825 = vpop.f32.mrf.mxu0
        %1826 = vmatprep.mubr.bf16.mxu0 0
        %1827 = vmatmul.mubr.bf16.gmra.mxu0 %v1758
        %v1828 = vpop.f32.mrf.mxu0
        %v1829 = vadd.f32 0.0, %v1828
        %v1830 = vpop.f32.mrf.mxu0
        %v1831 = vpop.f32.mrf.mxu0
        %v1832 = vadd.f32 0.0, %v1831
        %v1833 = vpop.f32.mrf.mxu0
        %1834 = vmatprep.mubr.bf16.mxu0 0
        %1835 = vmatmul.mubr.bf16.gmra.mxu0 %v1761
        %v1836 = vpop.f32.mrf.mxu0
        %v1837 = vadd.f32 0.0, %v1836
        %v1838 = vpop.f32.mrf.mxu0
        %v1839 = vpop.f32.mrf.mxu0
        %v1840 = vadd.f32 0.0, %v1839
        %v1841 = vpop.f32.mrf.mxu0
        %1842 = vmatprep.mubr.bf16.mxu0 0
        %1843 = vmatmul.mubr.bf16.gmra.mxu0 %v1764
        %v1844 = vpop.f32.mrf.mxu0
        %v1845 = vadd.f32 0.0, %v1844
        %v1846 = vpop.f32.mrf.mxu0
        %v1847 = vpop.f32.mrf.mxu0
        %v1848 = vadd.f32 0.0, %v1847
        %v1849 = vpop.f32.mrf.mxu0
        %1850 = vmatprep.mubr.bf16.mxu0 0
        %1851 = vmatmul.mubr.bf16.gmra.mxu0 %v1767
        %v1852 = vpop.f32.mrf.mxu0
        %v1853 = vadd.f32 0.0, %v1852
        %v1854 = vpop.f32.mrf.mxu0
        %v1855 = vpop.f32.mrf.mxu0
        %v1856 = vadd.f32 0.0, %v1855
        %v1857 = vpop.f32.mrf.mxu0
        %1858 = vmatprep.mubr.bf16.mxu0 0
        %1859 = vmatmul.mubr.bf16.gmra.mxu0 %v1770
        %v1860 = vpop.f32.mrf.mxu0
        %v1861 = vadd.f32 0.0, %v1860
        %v1862 = vpop.f32.mrf.mxu0
        %v1863 = vpop.f32.mrf.mxu0
        %v1864 = vadd.f32 0.0, %v1863
        %v1865 = vpop.f32.mrf.mxu0
        %1866 = vmatprep.mubr.bf16.mxu0 0
        %1867 = vmatmul.mubr.bf16.gmra.mxu0 %v1773
        %v1868 = vpop.f32.mrf.mxu0
        %v1869 = vadd.f32 0.0, %v1868
        %v1870 = vpop.f32.mrf.mxu0
        %v1871 = vpop.f32.mrf.mxu0
        %v1872 = vadd.f32 0.0, %v1871
        %v1873 = vpop.f32.mrf.mxu0
        %1874 = vdwg.mxu0
        %v1875 = vadd.f32 %v1621, %v1813
        %v1876 = vadd.f32 %v1622, %v1816
        %v1877 = vadd.f32 %v1623, %v1821
        %v1878 = vadd.f32 %v1624, %v1824
        %v1879 = vadd.f32 %v1625, %v1829
        %v1880 = vadd.f32 %v1626, %v1832
        %v1881 = vadd.f32 %v1627, %v1837
        %v1882 = vadd.f32 %v1628, %v1840
        %v1883 = vadd.f32 %v1629, %v1845
        %v1884 = vadd.f32 %v1630, %v1848
        %v1885 = vadd.f32 %v1631, %v1853
        %v1886 = vadd.f32 %v1632, %v1856
        %v1887 = vadd.f32 %v1633, %v1861
        %v1888 = vadd.f32 %v1634, %v1864
        %v1889 = vadd.f32 %v1635, %v1869
        %v1890 = vadd.f32 %v1636, %v1872
        %s1891 = scalar_lea.vmem %s4, 8
        %v1892 = vld [vmem:[%s1891] sm:$0x3]
        %v1894 = vsel %vm621, %v1892, 0
        %1896 = vmatprep.subr.bf16.mxu0 0
        %1897 = vmatpush1.bf16.msra.mxu0 0
        %1898 = vmatprep.subr.bf16.mxu0 0
        %1899 = vmatpush1.bf16.msra.mxu0 0
        %1900 = vmatprep.subr.bf16.mxu0 0
        %1901 = vmatpush1.bf16.msra.mxu0 0
        %1902 = vmatprep.subr.bf16.mxu0 0
        %1903 = vmatpush1.bf16.msra.mxu0 0
        %1904 = vmatprep.subr.bf16.mxu0 0
        %1905 = vmatpush1.bf16.msra.mxu0 0
        %1906 = vmatprep.subr.bf16.mxu0 0
        %1907 = vmatpush1.bf16.msra.mxu0 0
        %1908 = vmatprep.subr.bf16.mxu0 0
        %1909 = vmatpush1.bf16.msra.mxu0 0
        %1910 = vmatprep.subr.bf16.mxu0 0
        %1911 = vmatpush1.bf16.msra.mxu0 %v1894
        %1912 = vmatprep.subr.bf16.mxu0 0
        %1913 = vmatpush2.bf16.msra.mxu0 0
        %1914 = vmatprep.subr.bf16.mxu0 0
        %1915 = vmatpush2.bf16.msra.mxu0 0
        %1916 = vmatprep.subr.bf16.mxu0 0
        %1917 = vmatpush2.bf16.msra.mxu0 0
        %1918 = vmatprep.subr.bf16.mxu0 0
        %1919 = vmatpush2.bf16.msra.mxu0 0
        %1920 = vmatprep.subr.bf16.mxu0 0
        %1921 = vmatpush2.bf16.msra.mxu0 0
        %1922 = vmatprep.subr.bf16.mxu0 0
        %1923 = vmatpush2.bf16.msra.mxu0 0
        %1924 = vmatprep.subr.bf16.mxu0 0
        %1925 = vmatpush2.bf16.msra.mxu0 0
        %1926 = vmatprep.subr.bf16.mxu0 0
        %1927 = vmatpush2.bf16.msra.mxu0 0
        %1928 = vmatprep.mubr.bf16.mxu0 0
        %1929 = vmatmul.mubr.bf16.gmra.mxu0 %v598
        %v1930 = vpop.f32.mrf.mxu0
        %v1931 = vadd.f32 0.0, %v1930
        %v1932 = vpop.f32.mrf.mxu0
        %v1933 = vpop.f32.mrf.mxu0
        %v1934 = vadd.f32 0.0, %v1933
        %v1935 = vpop.f32.mrf.mxu0
        %1936 = vmatprep.mubr.bf16.mxu0 0
        %1937 = vmatmul.mubr.bf16.gmra.mxu0 %v601
        %v1938 = vpop.f32.mrf.mxu0
        %v1939 = vadd.f32 0.0, %v1938
        %v1940 = vpop.f32.mrf.mxu0
        %v1941 = vpop.f32.mrf.mxu0
        %v1942 = vadd.f32 0.0, %v1941
        %v1943 = vpop.f32.mrf.mxu0
        %1944 = vmatprep.mubr.bf16.mxu0 0
        %1945 = vmatmul.mubr.bf16.gmra.mxu0 %v604
        %v1946 = vpop.f32.mrf.mxu0
        %v1947 = vadd.f32 0.0, %v1946
        %v1948 = vpop.f32.mrf.mxu0
        %v1949 = vpop.f32.mrf.mxu0
        %v1950 = vadd.f32 0.0, %v1949
        %v1951 = vpop.f32.mrf.mxu0
        %1952 = vmatprep.mubr.bf16.mxu0 0
        %1953 = vmatmul.mubr.bf16.gmra.mxu0 %v607
        %v1954 = vpop.f32.mrf.mxu0
        %v1955 = vadd.f32 0.0, %v1954
        %v1956 = vpop.f32.mrf.mxu0
        %v1957 = vpop.f32.mrf.mxu0
        %v1958 = vadd.f32 0.0, %v1957
        %v1959 = vpop.f32.mrf.mxu0
        %1960 = vmatprep.mubr.bf16.mxu0 0
        %1961 = vmatmul.mubr.bf16.gmra.mxu0 %v610
        %v1962 = vpop.f32.mrf.mxu0
        %v1963 = vadd.f32 0.0, %v1962
        %v1964 = vpop.f32.mrf.mxu0
        %v1965 = vpop.f32.mrf.mxu0
        %v1966 = vadd.f32 0.0, %v1965
        %v1967 = vpop.f32.mrf.mxu0
        %1968 = vmatprep.mubr.bf16.mxu0 0
        %1969 = vmatmul.mubr.bf16.gmra.mxu0 %v613
        %v1970 = vpop.f32.mrf.mxu0
        %v1971 = vadd.f32 0.0, %v1970
        %v1972 = vpop.f32.mrf.mxu0
        %v1973 = vpop.f32.mrf.mxu0
        %v1974 = vadd.f32 0.0, %v1973
        %v1975 = vpop.f32.mrf.mxu0
        %1976 = vmatprep.mubr.bf16.mxu0 0
        %1977 = vmatmul.mubr.bf16.gmra.mxu0 %v616
        %v1978 = vpop.f32.mrf.mxu0
        %v1979 = vadd.f32 0.0, %v1978
        %v1980 = vpop.f32.mrf.mxu0
        %v1981 = vpop.f32.mrf.mxu0
        %v1982 = vadd.f32 0.0, %v1981
        %v1983 = vpop.f32.mrf.mxu0
        %1984 = vmatprep.mubr.bf16.mxu0 0
        %1985 = vmatmul.mubr.bf16.gmra.mxu0 %v619
        %v1986 = vpop.f32.mrf.mxu0
        %v1987 = vadd.f32 0.0, %v1986
        %v1988 = vpop.f32.mrf.mxu0
        %v1989 = vpop.f32.mrf.mxu0
        %v1990 = vadd.f32 0.0, %v1989
        %v1991 = vpop.f32.mrf.mxu0
        %1992 = vdwg.mxu0
        %v1993 = vadd.f32 %v1875, %v1931
        %v1994 = vadd.f32 %v1876, %v1934
        %v1995 = vadd.f32 %v1877, %v1939
        %v1996 = vadd.f32 %v1878, %v1942
        %v1997 = vadd.f32 %v1879, %v1947
        %v1998 = vadd.f32 %v1880, %v1950
        %v1999 = vadd.f32 %v1881, %v1955
        %v2000 = vadd.f32 %v1882, %v1958
        %v2001 = vadd.f32 %v1883, %v1963
        %v2002 = vadd.f32 %v1884, %v1966
        %v2003 = vadd.f32 %v1885, %v1971
        %v2004 = vadd.f32 %v1886, %v1974
        %v2005 = vadd.f32 %v1887, %v1979
        %v2006 = vadd.f32 %v1888, %v1982
        %v2007 = vadd.f32 %v1889, %v1987
        %v2008 = vadd.f32 %v1890, %v1990
        %v2009 = vld [vmem:[%s311] sm:$0xc]
        %v2010 = vld [vmem:[%s311 + $0xc] sm:$0xc]
        %v2011 = vld [vmem:[%s311 + $0x18] sm:$0xc]
        %v2012 = vld [vmem:[%s311 + $0x24] sm:$0xc]
        %v2013 = vld [vmem:[%s311 + $0x30] sm:$0xc]
        %v2014 = vld [vmem:[%s311 + $0x3c] sm:$0xc]
        %v2015 = vld [vmem:[%s311 + $0x48] sm:$0xc]
        %v2016 = vld [vmem:[%s311 + $0x54] sm:$0xc]
        %v2033 = vrot.slane %v2009, 6
        %v2034 = vrot.slane %v2033, 4
        %v2035 = vrot.slane %v313, 6
        %v2036 = vsel %vm1414, %v2034, %v2035
        %v2037 = vrot.slane %v2035, 4
        %v2038 = vrot.slane %v314, 6
        %v2039 = vsel %vm1414, %v2037, %v2038
        %v2040 = vrot.slane %v2010, 6
        %v2041 = vrot.slane %v2040, 4
        %v2042 = vrot.slane %v316, 6
        %v2043 = vsel %vm1414, %v2041, %v2042
        %v2044 = vrot.slane %v2042, 4
        %v2045 = vrot.slane %v317, 6
        %v2046 = vsel %vm1414, %v2044, %v2045
        %v2047 = vrot.slane %v2011, 6
        %v2048 = vrot.slane %v2047, 4
        %v2049 = vrot.slane %v319, 6
        %v2050 = vsel %vm1414, %v2048, %v2049
        %v2051 = vrot.slane %v2049, 4
        %v2052 = vrot.slane %v320, 6
        %v2053 = vsel %vm1414, %v2051, %v2052
        %v2054 = vrot.slane %v2012, 6
        %v2055 = vrot.slane %v2054, 4
        %v2056 = vrot.slane %v322, 6
        %v2057 = vsel %vm1414, %v2055, %v2056
        %v2058 = vrot.slane %v2056, 4
        %v2059 = vrot.slane %v323, 6
        %v2060 = vsel %vm1414, %v2058, %v2059
        %v2061 = vrot.slane %v2013, 6
        %v2062 = vrot.slane %v2061, 4
        %v2063 = vrot.slane %v325, 6
        %v2064 = vsel %vm1414, %v2062, %v2063
        %v2065 = vrot.slane %v2063, 4
        %v2066 = vrot.slane %v326, 6
        %v2067 = vsel %vm1414, %v2065, %v2066
        %v2068 = vrot.slane %v2014, 6
        %v2069 = vrot.slane %v2068, 4
        %v2070 = vrot.slane %v328, 6
        %v2071 = vsel %vm1414, %v2069, %v2070
        %v2072 = vrot.slane %v2070, 4
        %v2073 = vrot.slane %v329, 6
        %v2074 = vsel %vm1414, %v2072, %v2073
        %v2075 = vrot.slane %v2015, 6
        %v2076 = vrot.slane %v2075, 4
        %v2077 = vrot.slane %v331, 6
        %v2078 = vsel %vm1414, %v2076, %v2077
        %v2079 = vrot.slane %v2077, 4
        %v2080 = vrot.slane %v332, 6
        %v2081 = vsel %vm1414, %v2079, %v2080
        %v2082 = vrot.slane %v2016, 6
        %v2083 = vrot.slane %v2082, 4
        %v2084 = vrot.slane %v334, 6
        %v2085 = vsel %vm1414, %v2083, %v2084
        %v2086 = vrot.slane %v2084, 4
        %v2087 = vrot.slane %v335, 6
        %v2088 = vsel %vm1414, %v2086, %v2087
        %s2089 = scalar_lea.vmem %s4, 10
        %v2090 = vld [vmem:[%s2089] sm:$0x3]
        %v2091 = vunpack.c.l.b16 %v2036
        %v2092 = vunpack.c.l.b16 %v2039
        %v2093 = vunpack.c.l.b16 %v2043
        %v2094 = vunpack.c.l.b16 %v2046
        %v2095 = vunpack.c.l.b16 %v2050
        %v2096 = vunpack.c.l.b16 %v2053
        %v2097 = vunpack.c.l.b16 %v2057
        %v2098 = vunpack.c.l.b16 %v2060
        %v2099 = vunpack.c.l.b16 %v2064
        %v2100 = vunpack.c.l.b16 %v2067
        %v2101 = vunpack.c.l.b16 %v2071
        %v2102 = vunpack.c.l.b16 %v2074
        %v2103 = vunpack.c.l.b16 %v2078
        %v2104 = vunpack.c.l.b16 %v2081
        %v2105 = vunpack.c.l.b16 %v2085
        %v2106 = vunpack.c.l.b16 %v2088
        %v2107 = vpack.c.b16 %v2092, %v2091
        %v2108 = vpack.c.b16 %v2094, %v2093
        %v2109 = vpack.c.b16 %v2096, %v2095
        %v2110 = vpack.c.b16 %v2098, %v2097
        %v2111 = vpack.c.b16 %v2100, %v2099
        %v2112 = vpack.c.b16 %v2102, %v2101
        %v2113 = vpack.c.b16 %v2104, %v2103
        %v2114 = vpack.c.b16 %v2106, %v2105
        %v2116 = vsel %vm596, %v2107, 0
        %v2119 = vsel %vm596, %v2108, 0
        %v2122 = vsel %vm596, %v2109, 0
        %v2125 = vsel %vm596, %v2110, 0
        %v2128 = vsel %vm596, %v2111, 0
        %v2131 = vsel %vm596, %v2112, 0
        %v2134 = vsel %vm596, %v2113, 0
        %v2137 = vsel %vm596, %v2114, 0
        %v2140 = vsel %vm621, %v2090, 0
        %2142 = vmatprep.subr.bf16.mxu0 0
        %2143 = vmatpush1.bf16.msra.mxu0 0
        %2144 = vmatprep.subr.bf16.mxu0 0
        %2145 = vmatpush1.bf16.msra.mxu0 0
        %2146 = vmatprep.subr.bf16.mxu0 0
        %2147 = vmatpush1.bf16.msra.mxu0 0
        %2148 = vmatprep.subr.bf16.mxu0 0
        %2149 = vmatpush1.bf16.msra.mxu0 0
        %2150 = vmatprep.subr.bf16.mxu0 0
        %2151 = vmatpush1.bf16.msra.mxu0 0
        %2152 = vmatprep.subr.bf16.mxu0 0
        %2153 = vmatpush1.bf16.msra.mxu0 0
        %2154 = vmatprep.subr.bf16.mxu0 0
        %2155 = vmatpush1.bf16.msra.mxu0 0
        %2156 = vmatprep.subr.bf16.mxu0 0
        %2157 = vmatpush1.bf16.msra.mxu0 %v2140
        %2158 = vmatprep.subr.bf16.mxu0 0
        %2159 = vmatpush2.bf16.msra.mxu0 0
        %2160 = vmatprep.subr.bf16.mxu0 0
        %2161 = vmatpush2.bf16.msra.mxu0 0
        %2162 = vmatprep.subr.bf16.mxu0 0
        %2163 = vmatpush2.bf16.msra.mxu0 0
        %2164 = vmatprep.subr.bf16.mxu0 0
        %2165 = vmatpush2.bf16.msra.mxu0 0
        %2166 = vmatprep.subr.bf16.mxu0 0
        %2167 = vmatpush2.bf16.msra.mxu0 0
        %2168 = vmatprep.subr.bf16.mxu0 0
        %2169 = vmatpush2.bf16.msra.mxu0 0
        %2170 = vmatprep.subr.bf16.mxu0 0
        %2171 = vmatpush2.bf16.msra.mxu0 0
        %2172 = vmatprep.subr.bf16.mxu0 0
        %2173 = vmatpush2.bf16.msra.mxu0 0
        %2174 = vmatprep.mubr.bf16.mxu0 0
        %2175 = vmatmul.mubr.bf16.gmra.mxu0 %v2116
        %v2176 = vpop.f32.mrf.mxu0
        %v2177 = vadd.f32 0.0, %v2176
        %v2178 = vpop.f32.mrf.mxu0
        %v2179 = vpop.f32.mrf.mxu0
        %v2180 = vadd.f32 0.0, %v2179
        %v2181 = vpop.f32.mrf.mxu0
        %2182 = vmatprep.mubr.bf16.mxu0 0
        %2183 = vmatmul.mubr.bf16.gmra.mxu0 %v2119
        %v2184 = vpop.f32.mrf.mxu0
        %v2185 = vadd.f32 0.0, %v2184
        %v2186 = vpop.f32.mrf.mxu0
        %v2187 = vpop.f32.mrf.mxu0
        %v2188 = vadd.f32 0.0, %v2187
        %v2189 = vpop.f32.mrf.mxu0
        %2190 = vmatprep.mubr.bf16.mxu0 0
        %2191 = vmatmul.mubr.bf16.gmra.mxu0 %v2122
        %v2192 = vpop.f32.mrf.mxu0
        %v2193 = vadd.f32 0.0, %v2192
        %v2194 = vpop.f32.mrf.mxu0
        %v2195 = vpop.f32.mrf.mxu0
        %v2196 = vadd.f32 0.0, %v2195
        %v2197 = vpop.f32.mrf.mxu0
        %2198 = vmatprep.mubr.bf16.mxu0 0
        %2199 = vmatmul.mubr.bf16.gmra.mxu0 %v2125
        %v2200 = vpop.f32.mrf.mxu0
        %v2201 = vadd.f32 0.0, %v2200
        %v2202 = vpop.f32.mrf.mxu0
        %v2203 = vpop.f32.mrf.mxu0
        %v2204 = vadd.f32 0.0, %v2203
        %v2205 = vpop.f32.mrf.mxu0
        %2206 = vmatprep.mubr.bf16.mxu0 0
        %2207 = vmatmul.mubr.bf16.gmra.mxu0 %v2128
        %v2208 = vpop.f32.mrf.mxu0
        %v2209 = vadd.f32 0.0, %v2208
        %v2210 = vpop.f32.mrf.mxu0
        %v2211 = vpop.f32.mrf.mxu0
        %v2212 = vadd.f32 0.0, %v2211
        %v2213 = vpop.f32.mrf.mxu0
        %2214 = vmatprep.mubr.bf16.mxu0 0
        %2215 = vmatmul.mubr.bf16.gmra.mxu0 %v2131
        %v2216 = vpop.f32.mrf.mxu0
        %v2217 = vadd.f32 0.0, %v2216
        %v2218 = vpop.f32.mrf.mxu0
        %v2219 = vpop.f32.mrf.mxu0
        %v2220 = vadd.f32 0.0, %v2219
        %v2221 = vpop.f32.mrf.mxu0
        %2222 = vmatprep.mubr.bf16.mxu0 0
        %2223 = vmatmul.mubr.bf16.gmra.mxu0 %v2134
        %v2224 = vpop.f32.mrf.mxu0
        %v2225 = vadd.f32 0.0, %v2224
        %v2226 = vpop.f32.mrf.mxu0
        %v2227 = vpop.f32.mrf.mxu0
        %v2228 = vadd.f32 0.0, %v2227
        %v2229 = vpop.f32.mrf.mxu0
        %2230 = vmatprep.mubr.bf16.mxu0 0
        %2231 = vmatmul.mubr.bf16.gmra.mxu0 %v2137
        %v2232 = vpop.f32.mrf.mxu0
        %v2233 = vadd.f32 0.0, %v2232
        %v2234 = vpop.f32.mrf.mxu0
        %v2235 = vpop.f32.mrf.mxu0
        %v2236 = vadd.f32 0.0, %v2235
        %v2237 = vpop.f32.mrf.mxu0
        %2238 = vdwg.mxu0
        %v2239 = vadd.f32 %v1993, %v2177
        %v2240 = vadd.f32 %v1994, %v2180
        %v2241 = vadd.f32 %v1995, %v2185
        %v2242 = vadd.f32 %v1996, %v2188
        %v2243 = vadd.f32 %v1997, %v2193
        %v2244 = vadd.f32 %v1998, %v2196
        %v2245 = vadd.f32 %v1999, %v2201
        %v2246 = vadd.f32 %v2000, %v2204
        %v2247 = vadd.f32 %v2001, %v2209
        %v2248 = vadd.f32 %v2002, %v2212
        %v2249 = vadd.f32 %v2003, %v2217
        %v2250 = vadd.f32 %v2004, %v2220
        %v2251 = vadd.f32 %v2005, %v2225
        %v2252 = vadd.f32 %v2006, %v2228
        %v2253 = vadd.f32 %v2007, %v2233
        %v2254 = vadd.f32 %v2008, %v2236
        %s2255 = sadd.s32 %s307, 4
        %s2256 = smul.u32 %s2255, 3
        %s2257 = smul.addr %s2256, 4
        %s2258 = scalar_lea.vmem %s301, %s2257
        %v2259 = vld [vmem:[%s2258] sm:$0xe]
        %v2260 = vld [vmem:[%s2258 + $0x4] sm:$0xf]
        %v2261 = vld [vmem:[%s2258 + $0x8] sm:$0x1]
        %v2262 = vld [vmem:[%s2258 + $0xc] sm:$0xe]
        %v2263 = vld [vmem:[%s2258 + $0x10] sm:$0xf]
        %v2264 = vld [vmem:[%s2258 + $0x14] sm:$0x1]
        %v2265 = vld [vmem:[%s2258 + $0x18] sm:$0xe]
        %v2266 = vld [vmem:[%s2258 + $0x1c] sm:$0xf]
        %v2267 = vld [vmem:[%s2258 + $0x20] sm:$0x1]
        %v2268 = vld [vmem:[%s2258 + $0x24] sm:$0xe]
        %v2269 = vld [vmem:[%s2258 + $0x28] sm:$0xf]
        %v2270 = vld [vmem:[%s2258 + $0x2c] sm:$0x1]
        %v2271 = vld [vmem:[%s2258 + $0x30] sm:$0xe]
        %v2272 = vld [vmem:[%s2258 + $0x34] sm:$0xf]
        %v2273 = vld [vmem:[%s2258 + $0x38] sm:$0x1]
        %v2274 = vld [vmem:[%s2258 + $0x3c] sm:$0xe]
        %v2275 = vld [vmem:[%s2258 + $0x40] sm:$0xf]
        %v2276 = vld [vmem:[%s2258 + $0x44] sm:$0x1]
        %v2277 = vld [vmem:[%s2258 + $0x48] sm:$0xe]
        %v2278 = vld [vmem:[%s2258 + $0x4c] sm:$0xf]
        %v2279 = vld [vmem:[%s2258 + $0x50] sm:$0x1]
        %v2280 = vld [vmem:[%s2258 + $0x54] sm:$0xe]
        %v2281 = vld [vmem:[%s2258 + $0x58] sm:$0xf]
        %v2282 = vld [vmem:[%s2258 + $0x5c] sm:$0x1]
        %v2307 = vrot.slane %v2259, 5
        %v2308 = vrot.slane %v2307, 4
        %v2309 = vrot.slane %v2260, 5
        %v2310 = vsel %vm800, %v2308, %v2309
        %v2311 = vrot.slane %v2309, 4
        %v2312 = vrot.slane %v2261, 5
        %v2313 = vsel %vm800, %v2311, %v2312
        %v2314 = vrot.slane %v2262, 5
        %v2315 = vrot.slane %v2314, 4
        %v2316 = vrot.slane %v2263, 5
        %v2317 = vsel %vm800, %v2315, %v2316
        %v2318 = vrot.slane %v2316, 4
        %v2319 = vrot.slane %v2264, 5
        %v2320 = vsel %vm800, %v2318, %v2319
        %v2321 = vrot.slane %v2265, 5
        %v2322 = vrot.slane %v2321, 4
        %v2323 = vrot.slane %v2266, 5
        %v2324 = vsel %vm800, %v2322, %v2323
        %v2325 = vrot.slane %v2323, 4
        %v2326 = vrot.slane %v2267, 5
        %v2327 = vsel %vm800, %v2325, %v2326
        %v2328 = vrot.slane %v2268, 5
        %v2329 = vrot.slane %v2328, 4
        %v2330 = vrot.slane %v2269, 5
        %v2331 = vsel %vm800, %v2329, %v2330
        %v2332 = vrot.slane %v2330, 4
        %v2333 = vrot.slane %v2270, 5
        %v2334 = vsel %vm800, %v2332, %v2333
        %v2335 = vrot.slane %v2271, 5
        %v2336 = vrot.slane %v2335, 4
        %v2337 = vrot.slane %v2272, 5
        %v2338 = vsel %vm800, %v2336, %v2337
        %v2339 = vrot.slane %v2337, 4
        %v2340 = vrot.slane %v2273, 5
        %v2341 = vsel %vm800, %v2339, %v2340
        %v2342 = vrot.slane %v2274, 5
        %v2343 = vrot.slane %v2342, 4
        %v2344 = vrot.slane %v2275, 5
        %v2345 = vsel %vm800, %v2343, %v2344
        %v2346 = vrot.slane %v2344, 4
        %v2347 = vrot.slane %v2276, 5
        %v2348 = vsel %vm800, %v2346, %v2347
        %v2349 = vrot.slane %v2277, 5
        %v2350 = vrot.slane %v2349, 4
        %v2351 = vrot.slane %v2278, 5
        %v2352 = vsel %vm800, %v2350, %v2351
        %v2353 = vrot.slane %v2351, 4
        %v2354 = vrot.slane %v2279, 5
        %v2355 = vsel %vm800, %v2353, %v2354
        %v2356 = vrot.slane %v2280, 5
        %v2357 = vrot.slane %v2356, 4
        %v2358 = vrot.slane %v2281, 5
        %v2359 = vsel %vm800, %v2357, %v2358
        %v2360 = vrot.slane %v2358, 4
        %v2361 = vrot.slane %v2282, 5
        %v2362 = vsel %vm800, %v2360, %v2361
        %s2363 = scalar_lea.vmem %s4, 12
        %v2364 = vld [vmem:[%s2363] sm:$0x3]
        %v2365 = vunpack.c.l.b16 %v2310
        %v2366 = vunpack.c.l.b16 %v2313
        %v2367 = vunpack.c.l.b16 %v2317
        %v2368 = vunpack.c.l.b16 %v2320
        %v2369 = vunpack.c.l.b16 %v2324
        %v2370 = vunpack.c.l.b16 %v2327
        %v2371 = vunpack.c.l.b16 %v2331
        %v2372 = vunpack.c.l.b16 %v2334
        %v2373 = vunpack.c.l.b16 %v2338
        %v2374 = vunpack.c.l.b16 %v2341
        %v2375 = vunpack.c.l.b16 %v2345
        %v2376 = vunpack.c.l.b16 %v2348
        %v2377 = vunpack.c.l.b16 %v2352
        %v2378 = vunpack.c.l.b16 %v2355
        %v2379 = vunpack.c.l.b16 %v2359
        %v2380 = vunpack.c.l.b16 %v2362
        %v2381 = vpack.c.b16 %v2366, %v2365
        %v2382 = vpack.c.b16 %v2368, %v2367
        %v2383 = vpack.c.b16 %v2370, %v2369
        %v2384 = vpack.c.b16 %v2372, %v2371
        %v2385 = vpack.c.b16 %v2374, %v2373
        %v2386 = vpack.c.b16 %v2376, %v2375
        %v2387 = vpack.c.b16 %v2378, %v2377
        %v2388 = vpack.c.b16 %v2380, %v2379
        %v2390 = vsel %vm596, %v2381, 0
        %v2393 = vsel %vm596, %v2382, 0
        %v2396 = vsel %vm596, %v2383, 0
        %v2399 = vsel %vm596, %v2384, 0
        %v2402 = vsel %vm596, %v2385, 0
        %v2405 = vsel %vm596, %v2386, 0
        %v2408 = vsel %vm596, %v2387, 0
        %v2411 = vsel %vm596, %v2388, 0
        %v2414 = vsel %vm621, %v2364, 0
        %2416 = vmatprep.subr.bf16.mxu0 0
        %2417 = vmatpush1.bf16.msra.mxu0 0
        %2418 = vmatprep.subr.bf16.mxu0 0
        %2419 = vmatpush1.bf16.msra.mxu0 0
        %2420 = vmatprep.subr.bf16.mxu0 0
        %2421 = vmatpush1.bf16.msra.mxu0 0
        %2422 = vmatprep.subr.bf16.mxu0 0
        %2423 = vmatpush1.bf16.msra.mxu0 0
        %2424 = vmatprep.subr.bf16.mxu0 0
        %2425 = vmatpush1.bf16.msra.mxu0 0
        %2426 = vmatprep.subr.bf16.mxu0 0
        %2427 = vmatpush1.bf16.msra.mxu0 0
        %2428 = vmatprep.subr.bf16.mxu0 0
        %2429 = vmatpush1.bf16.msra.mxu0 0
        %2430 = vmatprep.subr.bf16.mxu0 0
        %2431 = vmatpush1.bf16.msra.mxu0 %v2414
        %2432 = vmatprep.subr.bf16.mxu0 0
        %2433 = vmatpush2.bf16.msra.mxu0 0
        %2434 = vmatprep.subr.bf16.mxu0 0
        %2435 = vmatpush2.bf16.msra.mxu0 0
        %2436 = vmatprep.subr.bf16.mxu0 0
        %2437 = vmatpush2.bf16.msra.mxu0 0
        %2438 = vmatprep.subr.bf16.mxu0 0
        %2439 = vmatpush2.bf16.msra.mxu0 0
        %2440 = vmatprep.subr.bf16.mxu0 0
        %2441 = vmatpush2.bf16.msra.mxu0 0
        %2442 = vmatprep.subr.bf16.mxu0 0
        %2443 = vmatpush2.bf16.msra.mxu0 0
        %2444 = vmatprep.subr.bf16.mxu0 0
        %2445 = vmatpush2.bf16.msra.mxu0 0
        %2446 = vmatprep.subr.bf16.mxu0 0
        %2447 = vmatpush2.bf16.msra.mxu0 0
        %2448 = vmatprep.mubr.bf16.mxu0 0
        %2449 = vmatmul.mubr.bf16.gmra.mxu0 %v2390
        %v2450 = vpop.f32.mrf.mxu0
        %v2451 = vadd.f32 0.0, %v2450
        %v2452 = vpop.f32.mrf.mxu0
        %v2453 = vpop.f32.mrf.mxu0
        %v2454 = vadd.f32 0.0, %v2453
        %v2455 = vpop.f32.mrf.mxu0
        %2456 = vmatprep.mubr.bf16.mxu0 0
        %2457 = vmatmul.mubr.bf16.gmra.mxu0 %v2393
        %v2458 = vpop.f32.mrf.mxu0
        %v2459 = vadd.f32 0.0, %v2458
        %v2460 = vpop.f32.mrf.mxu0
        %v2461 = vpop.f32.mrf.mxu0
        %v2462 = vadd.f32 0.0, %v2461
        %v2463 = vpop.f32.mrf.mxu0
        %2464 = vmatprep.mubr.bf16.mxu0 0
        %2465 = vmatmul.mubr.bf16.gmra.mxu0 %v2396
        %v2466 = vpop.f32.mrf.mxu0
        %v2467 = vadd.f32 0.0, %v2466
        %v2468 = vpop.f32.mrf.mxu0
        %v2469 = vpop.f32.mrf.mxu0
        %v2470 = vadd.f32 0.0, %v2469
        %v2471 = vpop.f32.mrf.mxu0
        %2472 = vmatprep.mubr.bf16.mxu0 0
        %2473 = vmatmul.mubr.bf16.gmra.mxu0 %v2399
        %v2474 = vpop.f32.mrf.mxu0
        %v2475 = vadd.f32 0.0, %v2474
        %v2476 = vpop.f32.mrf.mxu0
        %v2477 = vpop.f32.mrf.mxu0
        %v2478 = vadd.f32 0.0, %v2477
        %v2479 = vpop.f32.mrf.mxu0
        %2480 = vmatprep.mubr.bf16.mxu0 0
        %2481 = vmatmul.mubr.bf16.gmra.mxu0 %v2402
        %v2482 = vpop.f32.mrf.mxu0
        %v2483 = vadd.f32 0.0, %v2482
        %v2484 = vpop.f32.mrf.mxu0
        %v2485 = vpop.f32.mrf.mxu0
        %v2486 = vadd.f32 0.0, %v2485
        %v2487 = vpop.f32.mrf.mxu0
        %2488 = vmatprep.mubr.bf16.mxu0 0
        %2489 = vmatmul.mubr.bf16.gmra.mxu0 %v2405
        %v2490 = vpop.f32.mrf.mxu0
        %v2491 = vadd.f32 0.0, %v2490
        %v2492 = vpop.f32.mrf.mxu0
        %v2493 = vpop.f32.mrf.mxu0
        %v2494 = vadd.f32 0.0, %v2493
        %v2495 = vpop.f32.mrf.mxu0
        %2496 = vmatprep.mubr.bf16.mxu0 0
        %2497 = vmatmul.mubr.bf16.gmra.mxu0 %v2408
        %v2498 = vpop.f32.mrf.mxu0
        %v2499 = vadd.f32 0.0, %v2498
        %v2500 = vpop.f32.mrf.mxu0
        %v2501 = vpop.f32.mrf.mxu0
        %v2502 = vadd.f32 0.0, %v2501
        %v2503 = vpop.f32.mrf.mxu0
        %2504 = vmatprep.mubr.bf16.mxu0 0
        %2505 = vmatmul.mubr.bf16.gmra.mxu0 %v2411
        %v2506 = vpop.f32.mrf.mxu0
        %v2507 = vadd.f32 0.0, %v2506
        %v2508 = vpop.f32.mrf.mxu0
        %v2509 = vpop.f32.mrf.mxu0
        %v2510 = vadd.f32 0.0, %v2509
        %v2511 = vpop.f32.mrf.mxu0
        %2512 = vdwg.mxu0
        %v2513 = vadd.f32 %v2239, %v2451
        %v2514 = vadd.f32 %v2240, %v2454
        %v2515 = vadd.f32 %v2241, %v2459
        %v2516 = vadd.f32 %v2242, %v2462
        %v2517 = vadd.f32 %v2243, %v2467
        %v2518 = vadd.f32 %v2244, %v2470
        %v2519 = vadd.f32 %v2245, %v2475
        %v2520 = vadd.f32 %v2246, %v2478
        %v2521 = vadd.f32 %v2247, %v2483
        %v2522 = vadd.f32 %v2248, %v2486
        %v2523 = vadd.f32 %v2249, %v2491
        %v2524 = vadd.f32 %v2250, %v2494
        %v2525 = vadd.f32 %v2251, %v2499
        %v2526 = vadd.f32 %v2252, %v2502
        %v2527 = vadd.f32 %v2253, %v2507
        %v2528 = vadd.f32 %v2254, %v2510
        %v2529 = vld [vmem:[%s2258 + $0x8] sm:$0x3]
        %v2530 = vld [vmem:[%s2258 + $0x14] sm:$0x3]
        %v2531 = vld [vmem:[%s2258 + $0x20] sm:$0x3]
        %v2532 = vld [vmem:[%s2258 + $0x2c] sm:$0x3]
        %v2533 = vld [vmem:[%s2258 + $0x38] sm:$0x3]
        %v2534 = vld [vmem:[%s2258 + $0x44] sm:$0x3]
        %v2535 = vld [vmem:[%s2258 + $0x50] sm:$0x3]
        %v2536 = vld [vmem:[%s2258 + $0x5c] sm:$0x3]
        %v2538 = vshrl.u32 %v2259, 16
        %v2540 = vrot.slane %v2538, 5
        %v2541 = vshll.u32 %v2259, 16
        %v2543 = vrot.slane %v2541, 6
        %v2544 = vor.u32 %v2540, %v2543
        %v2545 = vrot.slane %v2544, 4
        %v2547 = vshrl.u32 %v2260, 16
        %v2549 = vrot.slane %v2547, 5
        %v2550 = vshll.u32 %v2260, 16
        %v2552 = vrot.slane %v2550, 6
        %v2553 = vor.u32 %v2549, %v2552
        %v2554 = vsel %vm338, %v2545, %v2553
        %v2555 = vrot.slane %v2553, 4
        %v2557 = vshrl.u32 %v2529, 16
        %v2559 = vrot.slane %v2557, 5
        %v2560 = vshll.u32 %v2529, 16
        %v2562 = vrot.slane %v2560, 6
        %v2563 = vor.u32 %v2559, %v2562
        %v2564 = vsel %vm338, %v2555, %v2563
        %v2566 = vshrl.u32 %v2262, 16
        %v2568 = vrot.slane %v2566, 5
        %v2569 = vshll.u32 %v2262, 16
        %v2571 = vrot.slane %v2569, 6
        %v2572 = vor.u32 %v2568, %v2571
        %v2573 = vrot.slane %v2572, 4
        %v2575 = vshrl.u32 %v2263, 16
        %v2577 = vrot.slane %v2575, 5
        %v2578 = vshll.u32 %v2263, 16
        %v2580 = vrot.slane %v2578, 6
        %v2581 = vor.u32 %v2577, %v2580
        %v2582 = vsel %vm338, %v2573, %v2581
        %v2583 = vrot.slane %v2581, 4
        %v2585 = vshrl.u32 %v2530, 16
        %v2587 = vrot.slane %v2585, 5
        %v2588 = vshll.u32 %v2530, 16
        %v2590 = vrot.slane %v2588, 6
        %v2591 = vor.u32 %v2587, %v2590
        %v2592 = vsel %vm338, %v2583, %v2591
        %v2594 = vshrl.u32 %v2265, 16
        %v2596 = vrot.slane %v2594, 5
        %v2597 = vshll.u32 %v2265, 16
        %v2599 = vrot.slane %v2597, 6
        %v2600 = vor.u32 %v2596, %v2599
        %v2601 = vrot.slane %v2600, 4
        %v2603 = vshrl.u32 %v2266, 16
        %v2605 = vrot.slane %v2603, 5
        %v2606 = vshll.u32 %v2266, 16
        %v2608 = vrot.slane %v2606, 6
        %v2609 = vor.u32 %v2605, %v2608
        %v2610 = vsel %vm338, %v2601, %v2609
        %v2611 = vrot.slane %v2609, 4
        %v2613 = vshrl.u32 %v2531, 16
        %v2615 = vrot.slane %v2613, 5
        %v2616 = vshll.u32 %v2531, 16
        %v2618 = vrot.slane %v2616, 6
        %v2619 = vor.u32 %v2615, %v2618
        %v2620 = vsel %vm338, %v2611, %v2619
        %v2622 = vshrl.u32 %v2268, 16
        %v2624 = vrot.slane %v2622, 5
        %v2625 = vshll.u32 %v2268, 16
        %v2627 = vrot.slane %v2625, 6
        %v2628 = vor.u32 %v2624, %v2627
        %v2629 = vrot.slane %v2628, 4
        %v2631 = vshrl.u32 %v2269, 16
        %v2633 = vrot.slane %v2631, 5
        %v2634 = vshll.u32 %v2269, 16
        %v2636 = vrot.slane %v2634, 6
        %v2637 = vor.u32 %v2633, %v2636
        %v2638 = vsel %vm338, %v2629, %v2637
        %v2639 = vrot.slane %v2637, 4
        %v2641 = vshrl.u32 %v2532, 16
        %v2643 = vrot.slane %v2641, 5
        %v2644 = vshll.u32 %v2532, 16
        %v2646 = vrot.slane %v2644, 6
        %v2647 = vor.u32 %v2643, %v2646
        %v2648 = vsel %vm338, %v2639, %v2647
        %v2650 = vshrl.u32 %v2271, 16
        %v2652 = vrot.slane %v2650, 5
        %v2653 = vshll.u32 %v2271, 16
        %v2655 = vrot.slane %v2653, 6
        %v2656 = vor.u32 %v2652, %v2655
        %v2657 = vrot.slane %v2656, 4
        %v2659 = vshrl.u32 %v2272, 16
        %v2661 = vrot.slane %v2659, 5
        %v2662 = vshll.u32 %v2272, 16
        %v2664 = vrot.slane %v2662, 6
        %v2665 = vor.u32 %v2661, %v2664
        %v2666 = vsel %vm338, %v2657, %v2665
        %v2667 = vrot.slane %v2665, 4
        %v2669 = vshrl.u32 %v2533, 16
        %v2671 = vrot.slane %v2669, 5
        %v2672 = vshll.u32 %v2533, 16
        %v2674 = vrot.slane %v2672, 6
        %v2675 = vor.u32 %v2671, %v2674
        %v2676 = vsel %vm338, %v2667, %v2675
        %v2678 = vshrl.u32 %v2274, 16
        %v2680 = vrot.slane %v2678, 5
        %v2681 = vshll.u32 %v2274, 16
        %v2683 = vrot.slane %v2681, 6
        %v2684 = vor.u32 %v2680, %v2683
        %v2685 = vrot.slane %v2684, 4
        %v2687 = vshrl.u32 %v2275, 16
        %v2689 = vrot.slane %v2687, 5
        %v2690 = vshll.u32 %v2275, 16
        %v2692 = vrot.slane %v2690, 6
        %v2693 = vor.u32 %v2689, %v2692
        %v2694 = vsel %vm338, %v2685, %v2693
        %v2695 = vrot.slane %v2693, 4
        %v2697 = vshrl.u32 %v2534, 16
        %v2699 = vrot.slane %v2697, 5
        %v2700 = vshll.u32 %v2534, 16
        %v2702 = vrot.slane %v2700, 6
        %v2703 = vor.u32 %v2699, %v2702
        %v2704 = vsel %vm338, %v2695, %v2703
        %v2706 = vshrl.u32 %v2277, 16
        %v2708 = vrot.slane %v2706, 5
        %v2709 = vshll.u32 %v2277, 16
        %v2711 = vrot.slane %v2709, 6
        %v2712 = vor.u32 %v2708, %v2711
        %v2713 = vrot.slane %v2712, 4
        %v2715 = vshrl.u32 %v2278, 16
        %v2717 = vrot.slane %v2715, 5
        %v2718 = vshll.u32 %v2278, 16
        %v2720 = vrot.slane %v2718, 6
        %v2721 = vor.u32 %v2717, %v2720
        %v2722 = vsel %vm338, %v2713, %v2721
        %v2723 = vrot.slane %v2721, 4
        %v2725 = vshrl.u32 %v2535, 16
        %v2727 = vrot.slane %v2725, 5
        %v2728 = vshll.u32 %v2535, 16
        %v2730 = vrot.slane %v2728, 6
        %v2731 = vor.u32 %v2727, %v2730
        %v2732 = vsel %vm338, %v2723, %v2731
        %v2734 = vshrl.u32 %v2280, 16
        %v2736 = vrot.slane %v2734, 5
        %v2737 = vshll.u32 %v2280, 16
        %v2739 = vrot.slane %v2737, 6
        %v2740 = vor.u32 %v2736, %v2739
        %v2741 = vrot.slane %v2740, 4
        %v2743 = vshrl.u32 %v2281, 16
        %v2745 = vrot.slane %v2743, 5
        %v2746 = vshll.u32 %v2281, 16
        %v2748 = vrot.slane %v2746, 6
        %v2749 = vor.u32 %v2745, %v2748
        %v2750 = vsel %vm338, %v2741, %v2749
        %v2751 = vrot.slane %v2749, 4
        %v2753 = vshrl.u32 %v2536, 16
        %v2755 = vrot.slane %v2753, 5
        %v2756 = vshll.u32 %v2536, 16
        %v2758 = vrot.slane %v2756, 6
        %v2759 = vor.u32 %v2755, %v2758
        %v2760 = vsel %vm338, %v2751, %v2759
        %s2761 = scalar_lea.vmem %s4, 14
        %v2762 = vld [vmem:[%s2761] sm:$0x3]
        %v2763 = vunpack.c.l.b16 %v2554
        %v2764 = vunpack.c.l.b16 %v2564
        %v2765 = vunpack.c.l.b16 %v2582
        %v2766 = vunpack.c.l.b16 %v2592
        %v2767 = vunpack.c.l.b16 %v2610
        %v2768 = vunpack.c.l.b16 %v2620
        %v2769 = vunpack.c.l.b16 %v2638
        %v2770 = vunpack.c.l.b16 %v2648
        %v2771 = vunpack.c.l.b16 %v2666
        %v2772 = vunpack.c.l.b16 %v2676
        %v2773 = vunpack.c.l.b16 %v2694
        %v2774 = vunpack.c.l.b16 %v2704
        %v2775 = vunpack.c.l.b16 %v2722
        %v2776 = vunpack.c.l.b16 %v2732
        %v2777 = vunpack.c.l.b16 %v2750
        %v2778 = vunpack.c.l.b16 %v2760
        %v2779 = vpack.c.b16 %v2764, %v2763
        %v2780 = vpack.c.b16 %v2766, %v2765
        %v2781 = vpack.c.b16 %v2768, %v2767
        %v2782 = vpack.c.b16 %v2770, %v2769
        %v2783 = vpack.c.b16 %v2772, %v2771
        %v2784 = vpack.c.b16 %v2774, %v2773
        %v2785 = vpack.c.b16 %v2776, %v2775
        %v2786 = vpack.c.b16 %v2778, %v2777
        %v2788 = vsel %vm596, %v2779, 0
        %v2791 = vsel %vm596, %v2780, 0
        %v2794 = vsel %vm596, %v2781, 0
        %v2797 = vsel %vm596, %v2782, 0
        %v2800 = vsel %vm596, %v2783, 0
        %v2803 = vsel %vm596, %v2784, 0
        %v2806 = vsel %vm596, %v2785, 0
        %v2809 = vsel %vm596, %v2786, 0
        %v2812 = vsel %vm621, %v2762, 0
        %2814 = vmatprep.subr.bf16.mxu0 0
        %2815 = vmatpush1.bf16.msra.mxu0 0
        %2816 = vmatprep.subr.bf16.mxu0 0
        %2817 = vmatpush1.bf16.msra.mxu0 0
        %2818 = vmatprep.subr.bf16.mxu0 0
        %2819 = vmatpush1.bf16.msra.mxu0 0
        %2820 = vmatprep.subr.bf16.mxu0 0
        %2821 = vmatpush1.bf16.msra.mxu0 0
        %2822 = vmatprep.subr.bf16.mxu0 0
        %2823 = vmatpush1.bf16.msra.mxu0 0
        %2824 = vmatprep.subr.bf16.mxu0 0
        %2825 = vmatpush1.bf16.msra.mxu0 0
        %2826 = vmatprep.subr.bf16.mxu0 0
        %2827 = vmatpush1.bf16.msra.mxu0 0
        %2828 = vmatprep.subr.bf16.mxu0 0
        %2829 = vmatpush1.bf16.msra.mxu0 %v2812
        %2830 = vmatprep.subr.bf16.mxu0 0
        %2831 = vmatpush2.bf16.msra.mxu0 0
        %2832 = vmatprep.subr.bf16.mxu0 0
        %2833 = vmatpush2.bf16.msra.mxu0 0
        %2834 = vmatprep.subr.bf16.mxu0 0
        %2835 = vmatpush2.bf16.msra.mxu0 0
        %2836 = vmatprep.subr.bf16.mxu0 0
        %2837 = vmatpush2.bf16.msra.mxu0 0
        %2838 = vmatprep.subr.bf16.mxu0 0
        %2839 = vmatpush2.bf16.msra.mxu0 0
        %2840 = vmatprep.subr.bf16.mxu0 0
        %2841 = vmatpush2.bf16.msra.mxu0 0
        %2842 = vmatprep.subr.bf16.mxu0 0
        %2843 = vmatpush2.bf16.msra.mxu0 0
        %2844 = vmatprep.subr.bf16.mxu0 0
        %2845 = vmatpush2.bf16.msra.mxu0 0
        %2846 = vmatprep.mubr.bf16.mxu0 0
        %2847 = vmatmul.mubr.bf16.gmra.mxu0 %v2788
        %v2848 = vpop.f32.mrf.mxu0
        %v2849 = vadd.f32 0.0, %v2848
        %v2850 = vpop.f32.mrf.mxu0
        %v2851 = vpop.f32.mrf.mxu0
        %v2852 = vadd.f32 0.0, %v2851
        %v2853 = vpop.f32.mrf.mxu0
        %2854 = vmatprep.mubr.bf16.mxu0 0
        %2855 = vmatmul.mubr.bf16.gmra.mxu0 %v2791
        %v2856 = vpop.f32.mrf.mxu0
        %v2857 = vadd.f32 0.0, %v2856
        %v2858 = vpop.f32.mrf.mxu0
        %v2859 = vpop.f32.mrf.mxu0
        %v2860 = vadd.f32 0.0, %v2859
        %v2861 = vpop.f32.mrf.mxu0
        %2862 = vmatprep.mubr.bf16.mxu0 0
        %2863 = vmatmul.mubr.bf16.gmra.mxu0 %v2794
        %v2864 = vpop.f32.mrf.mxu0
        %v2865 = vadd.f32 0.0, %v2864
        %v2866 = vpop.f32.mrf.mxu0
        %v2867 = vpop.f32.mrf.mxu0
        %v2868 = vadd.f32 0.0, %v2867
        %v2869 = vpop.f32.mrf.mxu0
        %2870 = vmatprep.mubr.bf16.mxu0 0
        %2871 = vmatmul.mubr.bf16.gmra.mxu0 %v2797
        %v2872 = vpop.f32.mrf.mxu0
        %v2873 = vadd.f32 0.0, %v2872
        %v2874 = vpop.f32.mrf.mxu0
        %v2875 = vpop.f32.mrf.mxu0
        %v2876 = vadd.f32 0.0, %v2875
        %v2877 = vpop.f32.mrf.mxu0
        %2878 = vmatprep.mubr.bf16.mxu0 0
        %2879 = vmatmul.mubr.bf16.gmra.mxu0 %v2800
        %v2880 = vpop.f32.mrf.mxu0
        %v2881 = vadd.f32 0.0, %v2880
        %v2882 = vpop.f32.mrf.mxu0
        %v2883 = vpop.f32.mrf.mxu0
        %v2884 = vadd.f32 0.0, %v2883
        %v2885 = vpop.f32.mrf.mxu0
        %2886 = vmatprep.mubr.bf16.mxu0 0
        %2887 = vmatmul.mubr.bf16.gmra.mxu0 %v2803
        %v2888 = vpop.f32.mrf.mxu0
        %v2889 = vadd.f32 0.0, %v2888
        %v2890 = vpop.f32.mrf.mxu0
        %v2891 = vpop.f32.mrf.mxu0
        %v2892 = vadd.f32 0.0, %v2891
        %v2893 = vpop.f32.mrf.mxu0
        %2894 = vmatprep.mubr.bf16.mxu0 0
        %2895 = vmatmul.mubr.bf16.gmra.mxu0 %v2806
        %v2896 = vpop.f32.mrf.mxu0
        %v2897 = vadd.f32 0.0, %v2896
        %v2898 = vpop.f32.mrf.mxu0
        %v2899 = vpop.f32.mrf.mxu0
        %v2900 = vadd.f32 0.0, %v2899
        %v2901 = vpop.f32.mrf.mxu0
        %2902 = vmatprep.mubr.bf16.mxu0 0
        %2903 = vmatmul.mubr.bf16.gmra.mxu0 %v2809
        %v2904 = vpop.f32.mrf.mxu0
        %v2905 = vadd.f32 0.0, %v2904
        %v2906 = vpop.f32.mrf.mxu0
        %v2907 = vpop.f32.mrf.mxu0
        %v2908 = vadd.f32 0.0, %v2907
        %v2909 = vpop.f32.mrf.mxu0
        %2910 = vdwg.mxu0
        %v2911 = vadd.f32 %v2513, %v2849
        %v2912 = vadd.f32 %v2514, %v2852
        %v2913 = vadd.f32 %v2515, %v2857
        %v2914 = vadd.f32 %v2516, %v2860
        %v2915 = vadd.f32 %v2517, %v2865
        %v2916 = vadd.f32 %v2518, %v2868
        %v2917 = vadd.f32 %v2519, %v2873
        %v2918 = vadd.f32 %v2520, %v2876
        %v2919 = vadd.f32 %v2521, %v2881
        %v2920 = vadd.f32 %v2522, %v2884
        %v2921 = vadd.f32 %v2523, %v2889
        %v2922 = vadd.f32 %v2524, %v2892
        %v2923 = vadd.f32 %v2525, %v2897
        %v2924 = vadd.f32 %v2526, %v2900
        %v2925 = vadd.f32 %v2527, %v2905
        %v2926 = vadd.f32 %v2528, %v2908
        %v2927 = vld [vmem:[%s2258] sm:$0xc]
        %v2928 = vld [vmem:[%s2258 + $0xc] sm:$0xc]
        %v2929 = vld [vmem:[%s2258 + $0x18] sm:$0xc]
        %v2930 = vld [vmem:[%s2258 + $0x24] sm:$0xc]
        %v2931 = vld [vmem:[%s2258 + $0x30] sm:$0xc]
        %v2932 = vld [vmem:[%s2258 + $0x3c] sm:$0xc]
        %v2933 = vld [vmem:[%s2258 + $0x48] sm:$0xc]
        %v2934 = vld [vmem:[%s2258 + $0x54] sm:$0xc]
        %v2951 = vrot.slane %v2927, 6
        %v2952 = vrot.slane %v2951, 4
        %v2953 = vrot.slane %v2260, 6
        %v2954 = vsel %vm1414, %v2952, %v2953
        %v2955 = vrot.slane %v2953, 4
        %v2956 = vrot.slane %v2529, 6
        %v2957 = vsel %vm1414, %v2955, %v2956
        %v2958 = vrot.slane %v2928, 6
        %v2959 = vrot.slane %v2958, 4
        %v2960 = vrot.slane %v2263, 6
        %v2961 = vsel %vm1414, %v2959, %v2960
        %v2962 = vrot.slane %v2960, 4
        %v2963 = vrot.slane %v2530, 6
        %v2964 = vsel %vm1414, %v2962, %v2963
        %v2965 = vrot.slane %v2929, 6
        %v2966 = vrot.slane %v2965, 4
        %v2967 = vrot.slane %v2266, 6
        %v2968 = vsel %vm1414, %v2966, %v2967
        %v2969 = vrot.slane %v2967, 4
        %v2970 = vrot.slane %v2531, 6
        %v2971 = vsel %vm1414, %v2969, %v2970
        %v2972 = vrot.slane %v2930, 6
        %v2973 = vrot.slane %v2972, 4
        %v2974 = vrot.slane %v2269, 6
        %v2975 = vsel %vm1414, %v2973, %v2974
        %v2976 = vrot.slane %v2974, 4
        %v2977 = vrot.slane %v2532, 6
        %v2978 = vsel %vm1414, %v2976, %v2977
        %v2979 = vrot.slane %v2931, 6
        %v2980 = vrot.slane %v2979, 4
        %v2981 = vrot.slane %v2272, 6
        %v2982 = vsel %vm1414, %v2980, %v2981
        %v2983 = vrot.slane %v2981, 4
        %v2984 = vrot.slane %v2533, 6
        %v2985 = vsel %vm1414, %v2983, %v2984
        %v2986 = vrot.slane %v2932, 6
        %v2987 = vrot.slane %v2986, 4
        %v2988 = vrot.slane %v2275, 6
        %v2989 = vsel %vm1414, %v2987, %v2988
        %v2990 = vrot.slane %v2988, 4
        %v2991 = vrot.slane %v2534, 6
        %v2992 = vsel %vm1414, %v2990, %v2991
        %v2993 = vrot.slane %v2933, 6
        %v2994 = vrot.slane %v2993, 4
        %v2995 = vrot.slane %v2278, 6
        %v2996 = vsel %vm1414, %v2994, %v2995
        %v2997 = vrot.slane %v2995, 4
        %v2998 = vrot.slane %v2535, 6
        %v2999 = vsel %vm1414, %v2997, %v2998
        %v3000 = vrot.slane %v2934, 6
        %v3001 = vrot.slane %v3000, 4
        %v3002 = vrot.slane %v2281, 6
        %v3003 = vsel %vm1414, %v3001, %v3002
        %v3004 = vrot.slane %v3002, 4
        %v3005 = vrot.slane %v2536, 6
        %v3006 = vsel %vm1414, %v3004, %v3005
        %s3007 = scalar_lea.vmem %s4, 16
        %v3008 = vld [vmem:[%s3007] sm:$0x3]
        %v3009 = vunpack.c.l.b16 %v2954
        %v3010 = vunpack.c.l.b16 %v2957
        %v3011 = vunpack.c.l.b16 %v2961
        %v3012 = vunpack.c.l.b16 %v2964
        %v3013 = vunpack.c.l.b16 %v2968
        %v3014 = vunpack.c.l.b16 %v2971
        %v3015 = vunpack.c.l.b16 %v2975
        %v3016 = vunpack.c.l.b16 %v2978
        %v3017 = vunpack.c.l.b16 %v2982
        %v3018 = vunpack.c.l.b16 %v2985
        %v3019 = vunpack.c.l.b16 %v2989
        %v3020 = vunpack.c.l.b16 %v2992
        %v3021 = vunpack.c.l.b16 %v2996
        %v3022 = vunpack.c.l.b16 %v2999
        %v3023 = vunpack.c.l.b16 %v3003
        %v3024 = vunpack.c.l.b16 %v3006
        %v3025 = vpack.c.b16 %v3010, %v3009
        %v3026 = vpack.c.b16 %v3012, %v3011
        %v3027 = vpack.c.b16 %v3014, %v3013
        %v3028 = vpack.c.b16 %v3016, %v3015
        %v3029 = vpack.c.b16 %v3018, %v3017
        %v3030 = vpack.c.b16 %v3020, %v3019
        %v3031 = vpack.c.b16 %v3022, %v3021
        %v3032 = vpack.c.b16 %v3024, %v3023
        %v3034 = vsel %vm596, %v3025, 0
        %v3037 = vsel %vm596, %v3026, 0
        %v3040 = vsel %vm596, %v3027, 0
        %v3043 = vsel %vm596, %v3028, 0
        %v3046 = vsel %vm596, %v3029, 0
        %v3049 = vsel %vm596, %v3030, 0
        %v3052 = vsel %vm596, %v3031, 0
        %v3055 = vsel %vm596, %v3032, 0
        %v3058 = vsel %vm621, %v3008, 0
        %3060 = vmatprep.subr.bf16.mxu0 0
        %3061 = vmatpush1.bf16.msra.mxu0 0
        %3062 = vmatprep.subr.bf16.mxu0 0
        %3063 = vmatpush1.bf16.msra.mxu0 0
        %3064 = vmatprep.subr.bf16.mxu0 0
        %3065 = vmatpush1.bf16.msra.mxu0 0
        %3066 = vmatprep.subr.bf16.mxu0 0
        %3067 = vmatpush1.bf16.msra.mxu0 0
        %3068 = vmatprep.subr.bf16.mxu0 0
        %3069 = vmatpush1.bf16.msra.mxu0 0
        %3070 = vmatprep.subr.bf16.mxu0 0
        %3071 = vmatpush1.bf16.msra.mxu0 0
        %3072 = vmatprep.subr.bf16.mxu0 0
        %3073 = vmatpush1.bf16.msra.mxu0 0
        %3074 = vmatprep.subr.bf16.mxu0 0
        %3075 = vmatpush1.bf16.msra.mxu0 %v3058
        %3076 = vmatprep.subr.bf16.mxu0 0
        %3077 = vmatpush2.bf16.msra.mxu0 0
        %3078 = vmatprep.subr.bf16.mxu0 0
        %3079 = vmatpush2.bf16.msra.mxu0 0
        %3080 = vmatprep.subr.bf16.mxu0 0
        %3081 = vmatpush2.bf16.msra.mxu0 0
        %3082 = vmatprep.subr.bf16.mxu0 0
        %3083 = vmatpush2.bf16.msra.mxu0 0
        %3084 = vmatprep.subr.bf16.mxu0 0
        %3085 = vmatpush2.bf16.msra.mxu0 0
        %3086 = vmatprep.subr.bf16.mxu0 0
        %3087 = vmatpush2.bf16.msra.mxu0 0
        %3088 = vmatprep.subr.bf16.mxu0 0
        %3089 = vmatpush2.bf16.msra.mxu0 0
        %3090 = vmatprep.subr.bf16.mxu0 0
        %3091 = vmatpush2.bf16.msra.mxu0 0
        %3092 = vmatprep.mubr.bf16.mxu0 0
        %3093 = vmatmul.mubr.bf16.gmra.mxu0 %v3034
        %v3094 = vpop.f32.mrf.mxu0
        %v3095 = vadd.f32 0.0, %v3094
        %v3096 = vpop.f32.mrf.mxu0
        %v3097 = vpop.f32.mrf.mxu0
        %v3098 = vadd.f32 0.0, %v3097
        %v3099 = vpop.f32.mrf.mxu0
        %3100 = vmatprep.mubr.bf16.mxu0 0
        %3101 = vmatmul.mubr.bf16.gmra.mxu0 %v3037
        %v3102 = vpop.f32.mrf.mxu0
        %v3103 = vadd.f32 0.0, %v3102
        %v3104 = vpop.f32.mrf.mxu0
        %v3105 = vpop.f32.mrf.mxu0
        %v3106 = vadd.f32 0.0, %v3105
        %v3107 = vpop.f32.mrf.mxu0
        %3108 = vmatprep.mubr.bf16.mxu0 0
        %3109 = vmatmul.mubr.bf16.gmra.mxu0 %v3040
        %v3110 = vpop.f32.mrf.mxu0
        %v3111 = vadd.f32 0.0, %v3110
        %v3112 = vpop.f32.mrf.mxu0
        %v3113 = vpop.f32.mrf.mxu0
        %v3114 = vadd.f32 0.0, %v3113
        %v3115 = vpop.f32.mrf.mxu0
        %3116 = vmatprep.mubr.bf16.mxu0 0
        %3117 = vmatmul.mubr.bf16.gmra.mxu0 %v3043
        %v3118 = vpop.f32.mrf.mxu0
        %v3119 = vadd.f32 0.0, %v3118
        %v3120 = vpop.f32.mrf.mxu0
        %v3121 = vpop.f32.mrf.mxu0
        %v3122 = vadd.f32 0.0, %v3121
        %v3123 = vpop.f32.mrf.mxu0
        %3124 = vmatprep.mubr.bf16.mxu0 0
        %3125 = vmatmul.mubr.bf16.gmra.mxu0 %v3046
        %v3126 = vpop.f32.mrf.mxu0
        %v3127 = vadd.f32 0.0, %v3126
        %v3128 = vpop.f32.mrf.mxu0
        %v3129 = vpop.f32.mrf.mxu0
        %v3130 = vadd.f32 0.0, %v3129
        %v3131 = vpop.f32.mrf.mxu0
        %3132 = vmatprep.mubr.bf16.mxu0 0
        %3133 = vmatmul.mubr.bf16.gmra.mxu0 %v3049
        %v3134 = vpop.f32.mrf.mxu0
        %v3135 = vadd.f32 0.0, %v3134
        %v3136 = vpop.f32.mrf.mxu0
        %v3137 = vpop.f32.mrf.mxu0
        %v3138 = vadd.f32 0.0, %v3137
        %v3139 = vpop.f32.mrf.mxu0
        %3140 = vmatprep.mubr.bf16.mxu0 0
        %3141 = vmatmul.mubr.bf16.gmra.mxu0 %v3052
        %v3142 = vpop.f32.mrf.mxu0
        %v3143 = vadd.f32 0.0, %v3142
        %v3144 = vpop.f32.mrf.mxu0
        %v3145 = vpop.f32.mrf.mxu0
        %v3146 = vadd.f32 0.0, %v3145
        %v3147 = vpop.f32.mrf.mxu0
        %3148 = vmatprep.mubr.bf16.mxu0 0
        %3149 = vmatmul.mubr.bf16.gmra.mxu0 %v3055
        %v3150 = vpop.f32.mrf.mxu0
        %v3151 = vadd.f32 0.0, %v3150
        %v3152 = vpop.f32.mrf.mxu0
        %v3153 = vpop.f32.mrf.mxu0
        %v3154 = vadd.f32 0.0, %v3153
        %v3155 = vpop.f32.mrf.mxu0
        %3156 = vdwg.mxu0
        %v3157 = vadd.f32 %v2911, %v3095
        %v3158 = vadd.f32 %v2912, %v3098
        %v3159 = vadd.f32 %v2913, %v3103
        %v3160 = vadd.f32 %v2914, %v3106
        %v3161 = vadd.f32 %v2915, %v3111
        %v3162 = vadd.f32 %v2916, %v3114
        %v3163 = vadd.f32 %v2917, %v3119
        %v3164 = vadd.f32 %v2918, %v3122
        %v3165 = vadd.f32 %v2919, %v3127
        %v3166 = vadd.f32 %v2920, %v3130
        %v3167 = vadd.f32 %v2921, %v3135
        %v3168 = vadd.f32 %v2922, %v3138
        %v3169 = vadd.f32 %v2923, %v3143
        %v3170 = vadd.f32 %v2924, %v3146
        %v3171 = vadd.f32 %v2925, %v3151
        %v3172 = vadd.f32 %v2926, %v3154
        %v3173 = vld [vmem:[%s5] sm:$0x1]
        %s3174 = scalar_lea.vmem %s6, 4
        %v3175 = vld [vmem:[%s3174] sm:$0xf]
        %v3177 = vlaneseq
        %v3178 = vshrl.u32 %v3177, 7
        %v3179 = vsub.s32 0, %v3178
        %v3180 = vrot.slane %v3173, %v3179
        %v3182 = vadd.f32 %v3157, %v3180
        %v3183 = vadd.f32 %v3158, %v3180
        %v3184 = vadd.f32 %v3159, %v3180
        %v3185 = vadd.f32 %v3160, %v3180
        %v3186 = vadd.f32 %v3161, %v3180
        %v3187 = vadd.f32 %v3162, %v3180
        %v3188 = vadd.f32 %v3163, %v3180
        %v3189 = vadd.f32 %v3164, %v3180
        %v3190 = vadd.f32 %v3165, %v3180
        %v3191 = vadd.f32 %v3166, %v3180
        %v3192 = vadd.f32 %v3167, %v3180
        %v3193 = vadd.f32 %v3168, %v3180
        %v3194 = vadd.f32 %v3169, %v3180
        %v3195 = vadd.f32 %v3170, %v3180
        %v3196 = vadd.f32 %v3171, %v3180
        %v3197 = vadd.f32 %v3172, %v3180
        %v3198 = vmax.f32 %v3182, 0.0
        %v3199 = vmax.f32 %v3183, 0.0
        %v3200 = vmax.f32 %v3184, 0.0
        %v3201 = vmax.f32 %v3185, 0.0
        %v3202 = vmax.f32 %v3186, 0.0
        %v3203 = vmax.f32 %v3187, 0.0
        %v3204 = vmax.f32 %v3188, 0.0
        %v3205 = vmax.f32 %v3189, 0.0
        %v3206 = vmax.f32 %v3190, 0.0
        %v3207 = vmax.f32 %v3191, 0.0
        %v3208 = vmax.f32 %v3192, 0.0
        %v3209 = vmax.f32 %v3193, 0.0
        %v3210 = vmax.f32 %v3194, 0.0
        %v3211 = vmax.f32 %v3195, 0.0
        %v3212 = vmax.f32 %v3196, 0.0
        %v3213 = vmax.f32 %v3197, 0.0
        %v3214 = vpack.c.bf16 %v3199, %v3198
        %v3215 = vpack.c.bf16 %v3201, %v3200
        %v3216 = vpack.c.bf16 %v3203, %v3202
        %v3217 = vpack.c.bf16 %v3205, %v3204
        %v3218 = vpack.c.bf16 %v3207, %v3206
        %v3219 = vpack.c.bf16 %v3209, %v3208
        %v3220 = vpack.c.bf16 %v3211, %v3210
        %v3221 = vpack.c.bf16 %v3213, %v3212
        %vm3222 = vcmask 64512
        %v3224 = vsel %vm3222, %v3214, 0
        %v3227 = vsel %vm3222, %v3215, 0
        %v3230 = vsel %vm3222, %v3216, 0
        %v3233 = vsel %vm3222, %v3217, 0
        %v3236 = vsel %vm3222, %v3218, 0
        %v3239 = vsel %vm3222, %v3219, 0
        %v3242 = vsel %vm3222, %v3220, 0
        %v3245 = vsel %vm3222, %v3221, 0
        %vm3247 = vcmask 1043456
        %v3249 = vsel %vm3247, %v3175, 0
        %3251 = vmatprep.subr.bf16.mxu0 0
        %3252 = vmatpush1.bf16.msra.mxu0 0
        %3253 = vmatprep.subr.bf16.mxu0 0
        %3254 = vmatpush1.bf16.msra.mxu0 0
        %3255 = vmatprep.subr.bf16.mxu0 0
        %3256 = vmatpush1.bf16.msra.mxu0 0
        %3257 = vmatprep.subr.bf16.mxu0 0
        %3258 = vmatpush1.bf16.msra.mxu0 0
        %3259 = vmatprep.subr.bf16.mxu0 0
        %3260 = vmatpush1.bf16.msra.mxu0 0
        %3261 = vmatprep.subr.bf16.mxu0 0
        %3262 = vmatpush1.bf16.msra.mxu0 0
        %3263 = vmatprep.subr.bf16.mxu0 0
        %3264 = vmatpush1.bf16.msra.mxu0 0
        %3265 = vmatprep.subr.bf16.mxu0 0
        %3266 = vmatpush1.bf16.msra.mxu0 %v3249
        %3267 = vmatprep.subr.bf16.mxu0 0
        %3268 = vmatpush2.bf16.msra.mxu0 0
        %3269 = vmatprep.subr.bf16.mxu0 0
        %3270 = vmatpush2.bf16.msra.mxu0 0
        %3271 = vmatprep.subr.bf16.mxu0 0
        %3272 = vmatpush2.bf16.msra.mxu0 0
        %3273 = vmatprep.subr.bf16.mxu0 0
        %3274 = vmatpush2.bf16.msra.mxu0 0
        %3275 = vmatprep.subr.bf16.mxu0 0
        %3276 = vmatpush2.bf16.msra.mxu0 0
        %3277 = vmatprep.subr.bf16.mxu0 0
        %3278 = vmatpush2.bf16.msra.mxu0 0
        %3279 = vmatprep.subr.bf16.mxu0 0
        %3280 = vmatpush2.bf16.msra.mxu0 0
        %3281 = vmatprep.subr.bf16.mxu0 0
        %3282 = vmatpush2.bf16.msra.mxu0 0
        %3283 = vmatprep.mubr.bf16.mxu0 0
        %3284 = vmatmul.mubr.bf16.gmra.mxu0 %v3224
        %v3285 = vpop.f32.mrf.mxu0
        %v3286 = vadd.f32 0.0, %v3285
        %v3287 = vpop.f32.mrf.mxu0
        %v3288 = vpop.f32.mrf.mxu0
        %v3289 = vadd.f32 0.0, %v3288
        %v3290 = vpop.f32.mrf.mxu0
        %3291 = vmatprep.mubr.bf16.mxu0 0
        %3292 = vmatmul.mubr.bf16.gmra.mxu0 %v3227
        %v3293 = vpop.f32.mrf.mxu0
        %v3294 = vadd.f32 0.0, %v3293
        %v3295 = vpop.f32.mrf.mxu0
        %v3296 = vpop.f32.mrf.mxu0
        %v3297 = vadd.f32 0.0, %v3296
        %v3298 = vpop.f32.mrf.mxu0
        %3299 = vmatprep.mubr.bf16.mxu0 0
        %3300 = vmatmul.mubr.bf16.gmra.mxu0 %v3230
        %v3301 = vpop.f32.mrf.mxu0
        %v3302 = vadd.f32 0.0, %v3301
        %v3303 = vpop.f32.mrf.mxu0
        %v3304 = vpop.f32.mrf.mxu0
        %v3305 = vadd.f32 0.0, %v3304
        %v3306 = vpop.f32.mrf.mxu0
        %3307 = vmatprep.mubr.bf16.mxu0 0
        %3308 = vmatmul.mubr.bf16.gmra.mxu0 %v3233
        %v3309 = vpop.f32.mrf.mxu0
        %v3310 = vadd.f32 0.0, %v3309
        %v3311 = vpop.f32.mrf.mxu0
        %v3312 = vpop.f32.mrf.mxu0
        %v3313 = vadd.f32 0.0, %v3312
        %v3314 = vpop.f32.mrf.mxu0
        %3315 = vmatprep.mubr.bf16.mxu0 0
        %3316 = vmatmul.mubr.bf16.gmra.mxu0 %v3236
        %v3317 = vpop.f32.mrf.mxu0
        %v3318 = vadd.f32 0.0, %v3317
        %v3319 = vpop.f32.mrf.mxu0
        %v3320 = vpop.f32.mrf.mxu0
        %v3321 = vadd.f32 0.0, %v3320
        %v3322 = vpop.f32.mrf.mxu0
        %3323 = vmatprep.mubr.bf16.mxu0 0
        %3324 = vmatmul.mubr.bf16.gmra.mxu0 %v3239
        %v3325 = vpop.f32.mrf.mxu0
        %v3326 = vadd.f32 0.0, %v3325
        %v3327 = vpop.f32.mrf.mxu0
        %v3328 = vpop.f32.mrf.mxu0
        %v3329 = vadd.f32 0.0, %v3328
        %v3330 = vpop.f32.mrf.mxu0
        %3331 = vmatprep.mubr.bf16.mxu0 0
        %3332 = vmatmul.mubr.bf16.gmra.mxu0 %v3242
        %v3333 = vpop.f32.mrf.mxu0
        %v3334 = vadd.f32 0.0, %v3333
        %v3335 = vpop.f32.mrf.mxu0
        %v3336 = vpop.f32.mrf.mxu0
        %v3337 = vadd.f32 0.0, %v3336
        %v3338 = vpop.f32.mrf.mxu0
        %3339 = vmatprep.mubr.bf16.mxu0 0
        %3340 = vmatmul.mubr.bf16.gmra.mxu0 %v3245
        %v3341 = vpop.f32.mrf.mxu0
        %v3342 = vadd.f32 0.0, %v3341
        %v3343 = vpop.f32.mrf.mxu0
        %v3344 = vpop.f32.mrf.mxu0
        %v3345 = vadd.f32 0.0, %v3344
        %v3346 = vpop.f32.mrf.mxu0
        %3347 = vdwg.mxu0
        %v3349 = vsel %vm3222, %v738, 0
        %v3352 = vsel %vm3222, %v739, 0
        %v3355 = vsel %vm3222, %v740, 0
        %v3358 = vsel %vm3222, %v741, 0
        %v3361 = vsel %vm3222, %v742, 0
        %v3364 = vsel %vm3222, %v743, 0
        %v3367 = vsel %vm3222, %v744, 0
        %v3370 = vsel %vm3222, %v745, 0
        %v3373 = vsel %vm3247, %v565, 0
        %3375 = vmatprep.subr.bf16.mxu0 0
        %3376 = vmatpush1.bf16.msra.mxu0 0
        %3377 = vmatprep.subr.bf16.mxu0 0
        %3378 = vmatpush1.bf16.msra.mxu0 0
        %3379 = vmatprep.subr.bf16.mxu0 0
        %3380 = vmatpush1.bf16.msra.mxu0 0
        %3381 = vmatprep.subr.bf16.mxu0 0
        %3382 = vmatpush1.bf16.msra.mxu0 0
        %3383 = vmatprep.subr.bf16.mxu0 0
        %3384 = vmatpush1.bf16.msra.mxu0 0
        %3385 = vmatprep.subr.bf16.mxu0 0
        %3386 = vmatpush1.bf16.msra.mxu0 0
        %3387 = vmatprep.subr.bf16.mxu0 0
        %3388 = vmatpush1.bf16.msra.mxu0 0
        %3389 = vmatprep.subr.bf16.mxu0 0
        %3390 = vmatpush1.bf16.msra.mxu0 %v3373
        %3391 = vmatprep.subr.bf16.mxu0 0
        %3392 = vmatpush2.bf16.msra.mxu0 0
        %3393 = vmatprep.subr.bf16.mxu0 0
        %3394 = vmatpush2.bf16.msra.mxu0 0
        %3395 = vmatprep.subr.bf16.mxu0 0
        %3396 = vmatpush2.bf16.msra.mxu0 0
        %3397 = vmatprep.subr.bf16.mxu0 0
        %3398 = vmatpush2.bf16.msra.mxu0 0
        %3399 = vmatprep.subr.bf16.mxu0 0
        %3400 = vmatpush2.bf16.msra.mxu0 0
        %3401 = vmatprep.subr.bf16.mxu0 0
        %3402 = vmatpush2.bf16.msra.mxu0 0
        %3403 = vmatprep.subr.bf16.mxu0 0
        %3404 = vmatpush2.bf16.msra.mxu0 0
        %3405 = vmatprep.subr.bf16.mxu0 0
        %3406 = vmatpush2.bf16.msra.mxu0 0
        %3407 = vmatprep.mubr.bf16.mxu0 0
        %3408 = vmatmul.mubr.bf16.gmra.mxu0 %v3349
        %v3409 = vpop.f32.mrf.mxu0
        %v3410 = vadd.f32 %v3286, %v3409
        %v3411 = vpop.f32.mrf.mxu0
        %v3412 = vpop.f32.mrf.mxu0
        %v3413 = vadd.f32 %v3289, %v3412
        %v3414 = vpop.f32.mrf.mxu0
        %3415 = vmatprep.mubr.bf16.mxu0 0
        %3416 = vmatmul.mubr.bf16.gmra.mxu0 %v3352
        %v3417 = vpop.f32.mrf.mxu0
        %v3418 = vadd.f32 %v3294, %v3417
        %v3419 = vpop.f32.mrf.mxu0
        %v3420 = vpop.f32.mrf.mxu0
        %v3421 = vadd.f32 %v3297, %v3420
        %v3422 = vpop.f32.mrf.mxu0
        %3423 = vmatprep.mubr.bf16.mxu0 0
        %3424 = vmatmul.mubr.bf16.gmra.mxu0 %v3355
        %v3425 = vpop.f32.mrf.mxu0
        %v3426 = vadd.f32 %v3302, %v3425
        %v3427 = vpop.f32.mrf.mxu0
        %v3428 = vpop.f32.mrf.mxu0
        %v3429 = vadd.f32 %v3305, %v3428
        %v3430 = vpop.f32.mrf.mxu0
        %3431 = vmatprep.mubr.bf16.mxu0 0
        %3432 = vmatmul.mubr.bf16.gmra.mxu0 %v3358
        %v3433 = vpop.f32.mrf.mxu0
        %v3434 = vadd.f32 %v3310, %v3433
        %v3435 = vpop.f32.mrf.mxu0
        %v3436 = vpop.f32.mrf.mxu0
        %v3437 = vadd.f32 %v3313, %v3436
        %v3438 = vpop.f32.mrf.mxu0
        %3439 = vmatprep.mubr.bf16.mxu0 0
        %3440 = vmatmul.mubr.bf16.gmra.mxu0 %v3361
        %v3441 = vpop.f32.mrf.mxu0
        %v3442 = vadd.f32 %v3318, %v3441
        %v3443 = vpop.f32.mrf.mxu0
        %v3444 = vpop.f32.mrf.mxu0
        %v3445 = vadd.f32 %v3321, %v3444
        %v3446 = vpop.f32.mrf.mxu0
        %3447 = vmatprep.mubr.bf16.mxu0 0
        %3448 = vmatmul.mubr.bf16.gmra.mxu0 %v3364
        %v3449 = vpop.f32.mrf.mxu0
        %v3450 = vadd.f32 %v3326, %v3449
        %v3451 = vpop.f32.mrf.mxu0
        %v3452 = vpop.f32.mrf.mxu0
        %v3453 = vadd.f32 %v3329, %v3452
        %v3454 = vpop.f32.mrf.mxu0
        %3455 = vmatprep.mubr.bf16.mxu0 0
        %3456 = vmatmul.mubr.bf16.gmra.mxu0 %v3367
        %v3457 = vpop.f32.mrf.mxu0
        %v3458 = vadd.f32 %v3334, %v3457
        %v3459 = vpop.f32.mrf.mxu0
        %v3460 = vpop.f32.mrf.mxu0
        %v3461 = vadd.f32 %v3337, %v3460
        %v3462 = vpop.f32.mrf.mxu0
        %3463 = vmatprep.mubr.bf16.mxu0 0
        %3464 = vmatmul.mubr.bf16.gmra.mxu0 %v3370
        %v3465 = vpop.f32.mrf.mxu0
        %v3466 = vadd.f32 %v3342, %v3465
        %v3467 = vpop.f32.mrf.mxu0
        %v3468 = vpop.f32.mrf.mxu0
        %v3469 = vadd.f32 %v3345, %v3468
        %v3470 = vpop.f32.mrf.mxu0
        %3471 = vdwg.mxu0
        %s3472 = sadd.s32 %s307, 1
        %s3473 = smul.u32 %s3472, 3
        %s3474 = smul.addr %s3473, 4
        %s3475 = scalar_lea.vmem %s301, %s3474
        %v3476 = vld [vmem:[%s3475] sm:$0xf]
        %v3477 = vld [vmem:[%s3475 + $0x4] sm:$0xf]
        %v3478 = vld [vmem:[%s3475 + $0x8] sm:$0x1]
        %v3479 = vld [vmem:[%s3475 + $0xc] sm:$0xf]
        %v3480 = vld [vmem:[%s3475 + $0x10] sm:$0xf]
        %v3481 = vld [vmem:[%s3475 + $0x14] sm:$0x1]
        %v3482 = vld [vmem:[%s3475 + $0x18] sm:$0xf]
        %v3483 = vld [vmem:[%s3475 + $0x1c] sm:$0xf]
        %v3484 = vld [vmem:[%s3475 + $0x20] sm:$0x1]
        %v3485 = vld [vmem:[%s3475 + $0x24] sm:$0xf]
        %v3486 = vld [vmem:[%s3475 + $0x28] sm:$0xf]
        %v3487 = vld [vmem:[%s3475 + $0x2c] sm:$0x1]
        %v3488 = vld [vmem:[%s3475 + $0x30] sm:$0xf]
        %v3489 = vld [vmem:[%s3475 + $0x34] sm:$0xf]
        %v3490 = vld [vmem:[%s3475 + $0x38] sm:$0x1]
        %v3491 = vld [vmem:[%s3475 + $0x3c] sm:$0xf]
        %v3492 = vld [vmem:[%s3475 + $0x40] sm:$0xf]
        %v3493 = vld [vmem:[%s3475 + $0x44] sm:$0x1]
        %v3494 = vld [vmem:[%s3475 + $0x48] sm:$0xf]
        %v3495 = vld [vmem:[%s3475 + $0x4c] sm:$0xf]
        %v3496 = vld [vmem:[%s3475 + $0x50] sm:$0x1]
        %v3497 = vld [vmem:[%s3475 + $0x54] sm:$0xf]
        %v3498 = vld [vmem:[%s3475 + $0x58] sm:$0xf]
        %v3499 = vld [vmem:[%s3475 + $0x5c] sm:$0x1]
        %vm3500 = vsmask.f32 3328
        %vm3501 = vsmask.f32 7440
        %vm3502 = vmor %vm3500, %vm3501
        %v3504 = vshrl.u32 %v3476, 16
        %v3506 = vrot.slane %v3504, 4
        %v3507 = vshll.u32 %v3476, 16
        %v3509 = vrot.slane %v3507, 5
        %v3510 = vor.u32 %v3506, %v3509
        %v3511 = vrot.slane %v3510, 4
        %v3513 = vshll.u32 %v3477, 16
        %v3515 = vrot.slane %v3513, 5
        %v3516 = vsel %vm3502, %v3511, %v3515
        %v3517 = vshrl.u32 %v3477, 16
        %v3519 = vrot.slane %v3517, 4
        %v3520 = vor.u32 %v3519, %v3515
        %v3521 = vrot.slane %v3520, 4
        %v3523 = vshll.u32 %v3478, 16
        %v3525 = vrot.slane %v3523, 5
        %v3526 = vsel %vm3502, %v3521, %v3525
        %v3528 = vshrl.u32 %v3479, 16
        %v3530 = vrot.slane %v3528, 4
        %v3531 = vshll.u32 %v3479, 16
        %v3533 = vrot.slane %v3531, 5
        %v3534 = vor.u32 %v3530, %v3533
        %v3535 = vrot.slane %v3534, 4
        %v3537 = vshll.u32 %v3480, 16
        %v3539 = vrot.slane %v3537, 5
        %v3540 = vsel %vm3502, %v3535, %v3539
        %v3541 = vshrl.u32 %v3480, 16
        %v3543 = vrot.slane %v3541, 4
        %v3544 = vor.u32 %v3543, %v3539
        %v3545 = vrot.slane %v3544, 4
        %v3547 = vshll.u32 %v3481, 16
        %v3549 = vrot.slane %v3547, 5
        %v3550 = vsel %vm3502, %v3545, %v3549
        %v3552 = vshrl.u32 %v3482, 16
        %v3554 = vrot.slane %v3552, 4
        %v3555 = vshll.u32 %v3482, 16
        %v3557 = vrot.slane %v3555, 5
        %v3558 = vor.u32 %v3554, %v3557
        %v3559 = vrot.slane %v3558, 4
        %v3561 = vshll.u32 %v3483, 16
        %v3563 = vrot.slane %v3561, 5
        %v3564 = vsel %vm3502, %v3559, %v3563
        %v3565 = vshrl.u32 %v3483, 16
        %v3567 = vrot.slane %v3565, 4
        %v3568 = vor.u32 %v3567, %v3563
        %v3569 = vrot.slane %v3568, 4
        %v3571 = vshll.u32 %v3484, 16
        %v3573 = vrot.slane %v3571, 5
        %v3574 = vsel %vm3502, %v3569, %v3573
        %v3576 = vshrl.u32 %v3485, 16
        %v3578 = vrot.slane %v3576, 4
        %v3579 = vshll.u32 %v3485, 16
        %v3581 = vrot.slane %v3579, 5
        %v3582 = vor.u32 %v3578, %v3581
        %v3583 = vrot.slane %v3582, 4
        %v3585 = vshll.u32 %v3486, 16
        %v3587 = vrot.slane %v3585, 5
        %v3588 = vsel %vm3502, %v3583, %v3587
        %v3589 = vshrl.u32 %v3486, 16
        %v3591 = vrot.slane %v3589, 4
        %v3592 = vor.u32 %v3591, %v3587
        %v3593 = vrot.slane %v3592, 4
        %v3595 = vshll.u32 %v3487, 16
        %v3597 = vrot.slane %v3595, 5
        %v3598 = vsel %vm3502, %v3593, %v3597
        %v3600 = vshrl.u32 %v3488, 16
        %v3602 = vrot.slane %v3600, 4
        %v3603 = vshll.u32 %v3488, 16
        %v3605 = vrot.slane %v3603, 5
        %v3606 = vor.u32 %v3602, %v3605
        %v3607 = vrot.slane %v3606, 4
        %v3609 = vshll.u32 %v3489, 16
        %v3611 = vrot.slane %v3609, 5
        %v3612 = vsel %vm3502, %v3607, %v3611
        %v3613 = vshrl.u32 %v3489, 16
        %v3615 = vrot.slane %v3613, 4
        %v3616 = vor.u32 %v3615, %v3611
        %v3617 = vrot.slane %v3616, 4
        %v3619 = vshll.u32 %v3490, 16
        %v3621 = vrot.slane %v3619, 5
        %v3622 = vsel %vm3502, %v3617, %v3621
        %v3624 = vshrl.u32 %v3491, 16
        %v3626 = vrot.slane %v3624, 4
        %v3627 = vshll.u32 %v3491, 16
        %v3629 = vrot.slane %v3627, 5
        %v3630 = vor.u32 %v3626, %v3629
        %v3631 = vrot.slane %v3630, 4
        %v3633 = vshll.u32 %v3492, 16
        %v3635 = vrot.slane %v3633, 5
        %v3636 = vsel %vm3502, %v3631, %v3635
        %v3637 = vshrl.u32 %v3492, 16
        %v3639 = vrot.slane %v3637, 4
        %v3640 = vor.u32 %v3639, %v3635
        %v3641 = vrot.slane %v3640, 4
        %v3643 = vshll.u32 %v3493, 16
        %v3645 = vrot.slane %v3643, 5
        %v3646 = vsel %vm3502, %v3641, %v3645
        %v3648 = vshrl.u32 %v3494, 16
        %v3650 = vrot.slane %v3648, 4
        %v3651 = vshll.u32 %v3494, 16
        %v3653 = vrot.slane %v3651, 5
        %v3654 = vor.u32 %v3650, %v3653
        %v3655 = vrot.slane %v3654, 4
        %v3657 = vshll.u32 %v3495, 16
        %v3659 = vrot.slane %v3657, 5
        %v3660 = vsel %vm3502, %v3655, %v3659
        %v3661 = vshrl.u32 %v3495, 16
        %v3663 = vrot.slane %v3661, 4
        %v3664 = vor.u32 %v3663, %v3659
        %v3665 = vrot.slane %v3664, 4
        %v3667 = vshll.u32 %v3496, 16
        %v3669 = vrot.slane %v3667, 5
        %v3670 = vsel %vm3502, %v3665, %v3669
        %v3672 = vshrl.u32 %v3497, 16
        %v3674 = vrot.slane %v3672, 4
        %v3675 = vshll.u32 %v3497, 16
        %v3677 = vrot.slane %v3675, 5
        %v3678 = vor.u32 %v3674, %v3677
        %v3679 = vrot.slane %v3678, 4
        %v3681 = vshll.u32 %v3498, 16
        %v3683 = vrot.slane %v3681, 5
        %v3684 = vsel %vm3502, %v3679, %v3683
        %v3685 = vshrl.u32 %v3498, 16
        %v3687 = vrot.slane %v3685, 4
        %v3688 = vor.u32 %v3687, %v3683
        %v3689 = vrot.slane %v3688, 4
        %v3691 = vshll.u32 %v3499, 16
        %v3693 = vrot.slane %v3691, 5
        %v3694 = vsel %vm3502, %v3689, %v3693
        %s3695 = scalar_lea.vmem %s4, 18
        %v3696 = vld [vmem:[%s3695] sm:$0x3]
        %v3697 = vld [vmem:[%s3475] sm:$0xe]
        %v3698 = vld [vmem:[%s3475 + $0x8] sm:$0x3]
        %v3699 = vld [vmem:[%s3475 + $0xc] sm:$0xe]
        %v3700 = vld [vmem:[%s3475 + $0x14] sm:$0x3]
        %v3701 = vld [vmem:[%s3475 + $0x18] sm:$0xe]
        %v3702 = vld [vmem:[%s3475 + $0x20] sm:$0x3]
        %v3703 = vld [vmem:[%s3475 + $0x24] sm:$0xe]
        %v3704 = vld [vmem:[%s3475 + $0x2c] sm:$0x3]
        %v3705 = vld [vmem:[%s3475 + $0x30] sm:$0xe]
        %v3706 = vld [vmem:[%s3475 + $0x38] sm:$0x3]
        %v3707 = vld [vmem:[%s3475 + $0x3c] sm:$0xe]
        %v3708 = vld [vmem:[%s3475 + $0x44] sm:$0x3]
        %v3709 = vld [vmem:[%s3475 + $0x48] sm:$0xe]
        %v3710 = vld [vmem:[%s3475 + $0x50] sm:$0x3]
        %v3711 = vld [vmem:[%s3475 + $0x54] sm:$0xe]
        %v3712 = vld [vmem:[%s3475 + $0x5c] sm:$0x3]
        %v3714 = vshrl.u32 %v3697, 16
        %v3716 = vrot.slane %v3714, 5
        %v3717 = vshll.u32 %v3697, 16
        %v3719 = vrot.slane %v3717, 6
        %v3720 = vor.u32 %v3716, %v3719
        %v3721 = vrot.slane %v3720, 4
        %v3722 = vrot.slane %v3517, 5
        %v3723 = vrot.slane %v3513, 6
        %v3724 = vor.u32 %v3722, %v3723
        %v3725 = vsel %vm338, %v3721, %v3724
        %v3726 = vrot.slane %v3724, 4
        %v3728 = vshrl.u32 %v3698, 16
        %v3730 = vrot.slane %v3728, 5
        %v3731 = vshll.u32 %v3698, 16
        %v3733 = vrot.slane %v3731, 6
        %v3734 = vor.u32 %v3730, %v3733
        %v3735 = vsel %vm338, %v3726, %v3734
        %v3737 = vshrl.u32 %v3699, 16
        %v3739 = vrot.slane %v3737, 5
        %v3740 = vshll.u32 %v3699, 16
        %v3742 = vrot.slane %v3740, 6
        %v3743 = vor.u32 %v3739, %v3742
        %v3744 = vrot.slane %v3743, 4
        %v3745 = vrot.slane %v3541, 5
        %v3746 = vrot.slane %v3537, 6
        %v3747 = vor.u32 %v3745, %v3746
        %v3748 = vsel %vm338, %v3744, %v3747
        %v3749 = vrot.slane %v3747, 4
        %v3751 = vshrl.u32 %v3700, 16
        %v3753 = vrot.slane %v3751, 5
        %v3754 = vshll.u32 %v3700, 16
        %v3756 = vrot.slane %v3754, 6
        %v3757 = vor.u32 %v3753, %v3756
        %v3758 = vsel %vm338, %v3749, %v3757
        %v3760 = vshrl.u32 %v3701, 16
        %v3762 = vrot.slane %v3760, 5
        %v3763 = vshll.u32 %v3701, 16
        %v3765 = vrot.slane %v3763, 6
        %v3766 = vor.u32 %v3762, %v3765
        %v3767 = vrot.slane %v3766, 4
        %v3768 = vrot.slane %v3565, 5
        %v3769 = vrot.slane %v3561, 6
        %v3770 = vor.u32 %v3768, %v3769
        %v3771 = vsel %vm338, %v3767, %v3770
        %v3772 = vrot.slane %v3770, 4
        %v3774 = vshrl.u32 %v3702, 16
        %v3776 = vrot.slane %v3774, 5
        %v3777 = vshll.u32 %v3702, 16
        %v3779 = vrot.slane %v3777, 6
        %v3780 = vor.u32 %v3776, %v3779
        %v3781 = vsel %vm338, %v3772, %v3780
        %v3783 = vshrl.u32 %v3703, 16
        %v3785 = vrot.slane %v3783, 5
        %v3786 = vshll.u32 %v3703, 16
        %v3788 = vrot.slane %v3786, 6
        %v3789 = vor.u32 %v3785, %v3788
        %v3790 = vrot.slane %v3789, 4
        %v3791 = vrot.slane %v3589, 5
        %v3792 = vrot.slane %v3585, 6
        %v3793 = vor.u32 %v3791, %v3792
        %v3794 = vsel %vm338, %v3790, %v3793
        %v3795 = vrot.slane %v3793, 4
        %v3797 = vshrl.u32 %v3704, 16
        %v3799 = vrot.slane %v3797, 5
        %v3800 = vshll.u32 %v3704, 16
        %v3802 = vrot.slane %v3800, 6
        %v3803 = vor.u32 %v3799, %v3802
        %v3804 = vsel %vm338, %v3795, %v3803
        %v3806 = vshrl.u32 %v3705, 16
        %v3808 = vrot.slane %v3806, 5
        %v3809 = vshll.u32 %v3705, 16
        %v3811 = vrot.slane %v3809, 6
        %v3812 = vor.u32 %v3808, %v3811
        %v3813 = vrot.slane %v3812, 4
        %v3814 = vrot.slane %v3613, 5
        %v3815 = vrot.slane %v3609, 6
        %v3816 = vor.u32 %v3814, %v3815
        %v3817 = vsel %vm338, %v3813, %v3816
        %v3818 = vrot.slane %v3816, 4
        %v3820 = vshrl.u32 %v3706, 16
        %v3822 = vrot.slane %v3820, 5
        %v3823 = vshll.u32 %v3706, 16
        %v3825 = vrot.slane %v3823, 6
        %v3826 = vor.u32 %v3822, %v3825
        %v3827 = vsel %vm338, %v3818, %v3826
        %v3829 = vshrl.u32 %v3707, 16
        %v3831 = vrot.slane %v3829, 5
        %v3832 = vshll.u32 %v3707, 16
        %v3834 = vrot.slane %v3832, 6
        %v3835 = vor.u32 %v3831, %v3834
        %v3836 = vrot.slane %v3835, 4
        %v3837 = vrot.slane %v3637, 5
        %v3838 = vrot.slane %v3633, 6
        %v3839 = vor.u32 %v3837, %v3838
        %v3840 = vsel %vm338, %v3836, %v3839
        %v3841 = vrot.slane %v3839, 4
        %v3843 = vshrl.u32 %v3708, 16
        %v3845 = vrot.slane %v3843, 5
        %v3846 = vshll.u32 %v3708, 16
        %v3848 = vrot.slane %v3846, 6
        %v3849 = vor.u32 %v3845, %v3848
        %v3850 = vsel %vm338, %v3841, %v3849
        %v3852 = vshrl.u32 %v3709, 16
        %v3854 = vrot.slane %v3852, 5
        %v3855 = vshll.u32 %v3709, 16
        %v3857 = vrot.slane %v3855, 6
        %v3858 = vor.u32 %v3854, %v3857
        %v3859 = vrot.slane %v3858, 4
        %v3860 = vrot.slane %v3661, 5
        %v3861 = vrot.slane %v3657, 6
        %v3862 = vor.u32 %v3860, %v3861
        %v3863 = vsel %vm338, %v3859, %v3862
        %v3864 = vrot.slane %v3862, 4
        %v3866 = vshrl.u32 %v3710, 16
        %v3868 = vrot.slane %v3866, 5
        %v3869 = vshll.u32 %v3710, 16
        %v3871 = vrot.slane %v3869, 6
        %v3872 = vor.u32 %v3868, %v3871
        %v3873 = vsel %vm338, %v3864, %v3872
        %v3875 = vshrl.u32 %v3711, 16
        %v3877 = vrot.slane %v3875, 5
        %v3878 = vshll.u32 %v3711, 16
        %v3880 = vrot.slane %v3878, 6
        %v3881 = vor.u32 %v3877, %v3880
        %v3882 = vrot.slane %v3881, 4
        %v3883 = vrot.slane %v3685, 5
        %v3884 = vrot.slane %v3681, 6
        %v3885 = vor.u32 %v3883, %v3884
        %v3886 = vsel %vm338, %v3882, %v3885
        %v3887 = vrot.slane %v3885, 4
        %v3889 = vshrl.u32 %v3712, 16
        %v3891 = vrot.slane %v3889, 5
        %v3892 = vshll.u32 %v3712, 16
        %v3894 = vrot.slane %v3892, 6
        %v3895 = vor.u32 %v3891, %v3894
        %v3896 = vsel %vm338, %v3887, %v3895
        %s3897 = scalar_lea.vmem %s4, 20
        %v3898 = vld [vmem:[%s3897] sm:$0x3]
        %v3899 = vunpack.c.l.b16 %v3725
        %v3900 = vunpack.c.l.b16 %v3735
        %v3901 = vunpack.c.l.b16 %v3748
        %v3902 = vunpack.c.l.b16 %v3758
        %v3903 = vunpack.c.l.b16 %v3771
        %v3904 = vunpack.c.l.b16 %v3781
        %v3905 = vunpack.c.l.b16 %v3794
        %v3906 = vunpack.c.l.b16 %v3804
        %v3907 = vunpack.c.l.b16 %v3817
        %v3908 = vunpack.c.l.b16 %v3827
        %v3909 = vunpack.c.l.b16 %v3840
        %v3910 = vunpack.c.l.b16 %v3850
        %v3911 = vunpack.c.l.b16 %v3863
        %v3912 = vunpack.c.l.b16 %v3873
        %v3913 = vunpack.c.l.b16 %v3886
        %v3914 = vunpack.c.l.b16 %v3896
        %v3915 = vpack.c.b16 %v3900, %v3899
        %v3916 = vpack.c.b16 %v3902, %v3901
        %v3917 = vpack.c.b16 %v3904, %v3903
        %v3918 = vpack.c.b16 %v3906, %v3905
        %v3919 = vpack.c.b16 %v3908, %v3907
        %v3920 = vpack.c.b16 %v3910, %v3909
        %v3921 = vpack.c.b16 %v3912, %v3911
        %v3922 = vpack.c.b16 %v3914, %v3913
        %v3924 = vsel %vm596, %v3915, 0
        %v3927 = vsel %vm596, %v3916, 0
        %v3930 = vsel %vm596, %v3917, 0
        %v3933 = vsel %vm596, %v3918, 0
        %v3936 = vsel %vm596, %v3919, 0
        %v3939 = vsel %vm596, %v3920, 0
        %v3942 = vsel %vm596, %v3921, 0
        %v3945 = vsel %vm596, %v3922, 0
        %v3948 = vsel %vm621, %v3898, 0
        %3950 = vmatprep.subr.bf16.mxu0 0
        %3951 = vmatpush1.bf16.msra.mxu0 0
        %3952 = vmatprep.subr.bf16.mxu0 0
        %3953 = vmatpush1.bf16.msra.mxu0 0
        %3954 = vmatprep.subr.bf16.mxu0 0
        %3955 = vmatpush1.bf16.msra.mxu0 0
        %3956 = vmatprep.subr.bf16.mxu0 0
        %3957 = vmatpush1.bf16.msra.mxu0 0
        %3958 = vmatprep.subr.bf16.mxu0 0
        %3959 = vmatpush1.bf16.msra.mxu0 0
        %3960 = vmatprep.subr.bf16.mxu0 0
        %3961 = vmatpush1.bf16.msra.mxu0 0
        %3962 = vmatprep.subr.bf16.mxu0 0
        %3963 = vmatpush1.bf16.msra.mxu0 0
        %3964 = vmatprep.subr.bf16.mxu0 0
        %3965 = vmatpush1.bf16.msra.mxu0 %v3948
        %3966 = vmatprep.subr.bf16.mxu0 0
        %3967 = vmatpush2.bf16.msra.mxu0 0
        %3968 = vmatprep.subr.bf16.mxu0 0
        %3969 = vmatpush2.bf16.msra.mxu0 0
        %3970 = vmatprep.subr.bf16.mxu0 0
        %3971 = vmatpush2.bf16.msra.mxu0 0
        %3972 = vmatprep.subr.bf16.mxu0 0
        %3973 = vmatpush2.bf16.msra.mxu0 0
        %3974 = vmatprep.subr.bf16.mxu0 0
        %3975 = vmatpush2.bf16.msra.mxu0 0
        %3976 = vmatprep.subr.bf16.mxu0 0
        %3977 = vmatpush2.bf16.msra.mxu0 0
        %3978 = vmatprep.subr.bf16.mxu0 0
        %3979 = vmatpush2.bf16.msra.mxu0 0
        %3980 = vmatprep.subr.bf16.mxu0 0
        %3981 = vmatpush2.bf16.msra.mxu0 0
        %3982 = vmatprep.mubr.bf16.mxu0 0
        %3983 = vmatmul.mubr.bf16.gmra.mxu0 %v3924
        %v3984 = vpop.f32.mrf.mxu0
        %v3985 = vadd.f32 0.0, %v3984
        %v3986 = vpop.f32.mrf.mxu0
        %v3987 = vpop.f32.mrf.mxu0
        %v3988 = vadd.f32 0.0, %v3987
        %v3989 = vpop.f32.mrf.mxu0
        %3990 = vmatprep.mubr.bf16.mxu0 0
        %3991 = vmatmul.mubr.bf16.gmra.mxu0 %v3927
        %v3992 = vpop.f32.mrf.mxu0
        %v3993 = vadd.f32 0.0, %v3992
        %v3994 = vpop.f32.mrf.mxu0
        %v3995 = vpop.f32.mrf.mxu0
        %v3996 = vadd.f32 0.0, %v3995
        %v3997 = vpop.f32.mrf.mxu0
        %3998 = vmatprep.mubr.bf16.mxu0 0
        %3999 = vmatmul.mubr.bf16.gmra.mxu0 %v3930
        %v4000 = vpop.f32.mrf.mxu0
        %v4001 = vadd.f32 0.0, %v4000
        %v4002 = vpop.f32.mrf.mxu0
        %v4003 = vpop.f32.mrf.mxu0
        %v4004 = vadd.f32 0.0, %v4003
        %v4005 = vpop.f32.mrf.mxu0
        %4006 = vmatprep.mubr.bf16.mxu0 0
        %4007 = vmatmul.mubr.bf16.gmra.mxu0 %v3933
        %v4008 = vpop.f32.mrf.mxu0
        %v4009 = vadd.f32 0.0, %v4008
        %v4010 = vpop.f32.mrf.mxu0
        %v4011 = vpop.f32.mrf.mxu0
        %v4012 = vadd.f32 0.0, %v4011
        %v4013 = vpop.f32.mrf.mxu0
        %4014 = vmatprep.mubr.bf16.mxu0 0
        %4015 = vmatmul.mubr.bf16.gmra.mxu0 %v3936
        %v4016 = vpop.f32.mrf.mxu0
        %v4017 = vadd.f32 0.0, %v4016
        %v4018 = vpop.f32.mrf.mxu0
        %v4019 = vpop.f32.mrf.mxu0
        %v4020 = vadd.f32 0.0, %v4019
        %v4021 = vpop.f32.mrf.mxu0
        %4022 = vmatprep.mubr.bf16.mxu0 0
        %4023 = vmatmul.mubr.bf16.gmra.mxu0 %v3939
        %v4024 = vpop.f32.mrf.mxu0
        %v4025 = vadd.f32 0.0, %v4024
        %v4026 = vpop.f32.mrf.mxu0
        %v4027 = vpop.f32.mrf.mxu0
        %v4028 = vadd.f32 0.0, %v4027
        %v4029 = vpop.f32.mrf.mxu0
        %4030 = vmatprep.mubr.bf16.mxu0 0
        %4031 = vmatmul.mubr.bf16.gmra.mxu0 %v3942
        %v4032 = vpop.f32.mrf.mxu0
        %v4033 = vadd.f32 0.0, %v4032
        %v4034 = vpop.f32.mrf.mxu0
        %v4035 = vpop.f32.mrf.mxu0
        %v4036 = vadd.f32 0.0, %v4035
        %v4037 = vpop.f32.mrf.mxu0
        %4038 = vmatprep.mubr.bf16.mxu0 0
        %4039 = vmatmul.mubr.bf16.gmra.mxu0 %v3945
        %v4040 = vpop.f32.mrf.mxu0
        %v4041 = vadd.f32 0.0, %v4040
        %v4042 = vpop.f32.mrf.mxu0
        %v4043 = vpop.f32.mrf.mxu0
        %v4044 = vadd.f32 0.0, %v4043
        %v4045 = vpop.f32.mrf.mxu0
        %4046 = vdwg.mxu0
        %v4047 = vunpack.c.l.b16 %v3516
        %v4048 = vunpack.c.l.b16 %v3526
        %v4049 = vunpack.c.l.b16 %v3540
        %v4050 = vunpack.c.l.b16 %v3550
        %v4051 = vunpack.c.l.b16 %v3564
        %v4052 = vunpack.c.l.b16 %v3574
        %v4053 = vunpack.c.l.b16 %v3588
        %v4054 = vunpack.c.l.b16 %v3598
        %v4055 = vunpack.c.l.b16 %v3612
        %v4056 = vunpack.c.l.b16 %v3622
        %v4057 = vunpack.c.l.b16 %v3636
        %v4058 = vunpack.c.l.b16 %v3646
        %v4059 = vunpack.c.l.b16 %v3660
        %v4060 = vunpack.c.l.b16 %v3670
        %v4061 = vunpack.c.l.b16 %v3684
        %v4062 = vunpack.c.l.b16 %v3694
        %v4063 = vpack.c.b16 %v4048, %v4047
        %v4064 = vpack.c.b16 %v4050, %v4049
        %v4065 = vpack.c.b16 %v4052, %v4051
        %v4066 = vpack.c.b16 %v4054, %v4053
        %v4067 = vpack.c.b16 %v4056, %v4055
        %v4068 = vpack.c.b16 %v4058, %v4057
        %v4069 = vpack.c.b16 %v4060, %v4059
        %v4070 = vpack.c.b16 %v4062, %v4061
        %v4072 = vsel %vm596, %v4063, 0
        %v4075 = vsel %vm596, %v4064, 0
        %v4078 = vsel %vm596, %v4065, 0
        %v4081 = vsel %vm596, %v4066, 0
        %v4084 = vsel %vm596, %v4067, 0
        %v4087 = vsel %vm596, %v4068, 0
        %v4090 = vsel %vm596, %v4069, 0
        %v4093 = vsel %vm596, %v4070, 0
        %v4096 = vsel %vm621, %v3696, 0
        %4098 = vmatprep.subr.bf16.mxu0 0
        %4099 = vmatpush1.bf16.msra.mxu0 0
        %4100 = vmatprep.subr.bf16.mxu0 0
        %4101 = vmatpush1.bf16.msra.mxu0 0
        %4102 = vmatprep.subr.bf16.mxu0 0
        %4103 = vmatpush1.bf16.msra.mxu0 0
        %4104 = vmatprep.subr.bf16.mxu0 0
        %4105 = vmatpush1.bf16.msra.mxu0 0
        %4106 = vmatprep.subr.bf16.mxu0 0
        %4107 = vmatpush1.bf16.msra.mxu0 0
        %4108 = vmatprep.subr.bf16.mxu0 0
        %4109 = vmatpush1.bf16.msra.mxu0 0
        %4110 = vmatprep.subr.bf16.mxu0 0
        %4111 = vmatpush1.bf16.msra.mxu0 0
        %4112 = vmatprep.subr.bf16.mxu0 0
        %4113 = vmatpush1.bf16.msra.mxu0 %v4096
        %4114 = vmatprep.subr.bf16.mxu0 0
        %4115 = vmatpush2.bf16.msra.mxu0 0
        %4116 = vmatprep.subr.bf16.mxu0 0
        %4117 = vmatpush2.bf16.msra.mxu0 0
        %4118 = vmatprep.subr.bf16.mxu0 0
        %4119 = vmatpush2.bf16.msra.mxu0 0
        %4120 = vmatprep.subr.bf16.mxu0 0
        %4121 = vmatpush2.bf16.msra.mxu0 0
        %4122 = vmatprep.subr.bf16.mxu0 0
        %4123 = vmatpush2.bf16.msra.mxu0 0
        %4124 = vmatprep.subr.bf16.mxu0 0
        %4125 = vmatpush2.bf16.msra.mxu0 0
        %4126 = vmatprep.subr.bf16.mxu0 0
        %4127 = vmatpush2.bf16.msra.mxu0 0
        %4128 = vmatprep.subr.bf16.mxu0 0
        %4129 = vmatpush2.bf16.msra.mxu0 0
        %4130 = vmatprep.mubr.bf16.mxu0 0
        %4131 = vmatmul.mubr.bf16.gmra.mxu0 %v4072
        %v4132 = vpop.f32.mrf.mxu0
        %v4133 = vadd.f32 %v3985, %v4132
        %v4134 = vpop.f32.mrf.mxu0
        %v4135 = vpop.f32.mrf.mxu0
        %v4136 = vadd.f32 %v3988, %v4135
        %v4137 = vpop.f32.mrf.mxu0
        %4138 = vmatprep.mubr.bf16.mxu0 0
        %4139 = vmatmul.mubr.bf16.gmra.mxu0 %v4075
        %v4140 = vpop.f32.mrf.mxu0
        %v4141 = vadd.f32 %v3993, %v4140
        %v4142 = vpop.f32.mrf.mxu0
        %v4143 = vpop.f32.mrf.mxu0
        %v4144 = vadd.f32 %v3996, %v4143
        %v4145 = vpop.f32.mrf.mxu0
        %4146 = vmatprep.mubr.bf16.mxu0 0
        %4147 = vmatmul.mubr.bf16.gmra.mxu0 %v4078
        %v4148 = vpop.f32.mrf.mxu0
        %v4149 = vadd.f32 %v4001, %v4148
        %v4150 = vpop.f32.mrf.mxu0
        %v4151 = vpop.f32.mrf.mxu0
        %v4152 = vadd.f32 %v4004, %v4151
        %v4153 = vpop.f32.mrf.mxu0
        %4154 = vmatprep.mubr.bf16.mxu0 0
        %4155 = vmatmul.mubr.bf16.gmra.mxu0 %v4081
        %v4156 = vpop.f32.mrf.mxu0
        %v4157 = vadd.f32 %v4009, %v4156
        %v4158 = vpop.f32.mrf.mxu0
        %v4159 = vpop.f32.mrf.mxu0
        %v4160 = vadd.f32 %v4012, %v4159
        %v4161 = vpop.f32.mrf.mxu0
        %4162 = vmatprep.mubr.bf16.mxu0 0
        %4163 = vmatmul.mubr.bf16.gmra.mxu0 %v4084
        %v4164 = vpop.f32.mrf.mxu0
        %v4165 = vadd.f32 %v4017, %v4164
        %v4166 = vpop.f32.mrf.mxu0
        %v4167 = vpop.f32.mrf.mxu0
        %v4168 = vadd.f32 %v4020, %v4167
        %v4169 = vpop.f32.mrf.mxu0
        %4170 = vmatprep.mubr.bf16.mxu0 0
        %4171 = vmatmul.mubr.bf16.gmra.mxu0 %v4087
        %v4172 = vpop.f32.mrf.mxu0
        %v4173 = vadd.f32 %v4025, %v4172
        %v4174 = vpop.f32.mrf.mxu0
        %v4175 = vpop.f32.mrf.mxu0
        %v4176 = vadd.f32 %v4028, %v4175
        %v4177 = vpop.f32.mrf.mxu0
        %4178 = vmatprep.mubr.bf16.mxu0 0
        %4179 = vmatmul.mubr.bf16.gmra.mxu0 %v4090
        %v4180 = vpop.f32.mrf.mxu0
        %v4181 = vadd.f32 %v4033, %v4180
        %v4182 = vpop.f32.mrf.mxu0
        %v4183 = vpop.f32.mrf.mxu0
        %v4184 = vadd.f32 %v4036, %v4183
        %v4185 = vpop.f32.mrf.mxu0
        %4186 = vmatprep.mubr.bf16.mxu0 0
        %4187 = vmatmul.mubr.bf16.gmra.mxu0 %v4093
        %v4188 = vpop.f32.mrf.mxu0
        %v4189 = vadd.f32 %v4041, %v4188
        %v4190 = vpop.f32.mrf.mxu0
        %v4191 = vpop.f32.mrf.mxu0
        %v4192 = vadd.f32 %v4044, %v4191
        %v4193 = vpop.f32.mrf.mxu0
        %4194 = vdwg.mxu0
        %v4195 = vld [vmem:[%s3475] sm:$0xc]
        %v4196 = vld [vmem:[%s3475 + $0x8] sm:$0x7]
        %v4197 = vld [vmem:[%s3475 + $0xc] sm:$0xc]
        %v4198 = vld [vmem:[%s3475 + $0x14] sm:$0x7]
        %v4199 = vld [vmem:[%s3475 + $0x18] sm:$0xc]
        %v4200 = vld [vmem:[%s3475 + $0x20] sm:$0x7]
        %v4201 = vld [vmem:[%s3475 + $0x24] sm:$0xc]
        %v4202 = vld [vmem:[%s3475 + $0x2c] sm:$0x7]
        %v4203 = vld [vmem:[%s3475 + $0x30] sm:$0xc]
        %v4204 = vld [vmem:[%s3475 + $0x38] sm:$0x7]
        %v4205 = vld [vmem:[%s3475 + $0x3c] sm:$0xc]
        %v4206 = vld [vmem:[%s3475 + $0x44] sm:$0x7]
        %v4207 = vld [vmem:[%s3475 + $0x48] sm:$0xc]
        %v4208 = vld [vmem:[%s3475 + $0x50] sm:$0x7]
        %v4209 = vld [vmem:[%s3475 + $0x54] sm:$0xc]
        %v4210 = vld [vmem:[%s3475 + $0x5c] sm:$0x7]
        %vm4211 = vsmask.f32 1280
        %vm4212 = vsmask.f32 5392
        %vm4213 = vmor %vm4211, %vm4212
        %v4215 = vshrl.u32 %v4195, 16
        %v4217 = vrot.slane %v4215, 6
        %v4218 = vshll.u32 %v4195, 16
        %v4220 = vrot.slane %v4218, 7
        %v4221 = vor.u32 %v4217, %v4220
        %v4222 = vrot.slane %v4221, 4
        %v4223 = vrot.slane %v3517, 6
        %v4224 = vrot.slane %v3513, 7
        %v4225 = vor.u32 %v4223, %v4224
        %v4226 = vsel %vm4213, %v4222, %v4225
        %v4227 = vrot.slane %v4225, 4
        %v4229 = vshrl.u32 %v4196, 16
        %v4231 = vrot.slane %v4229, 6
        %v4232 = vshll.u32 %v4196, 16
        %v4234 = vrot.slane %v4232, 7
        %v4235 = vor.u32 %v4231, %v4234
        %v4236 = vsel %vm4213, %v4227, %v4235
        %v4238 = vshrl.u32 %v4197, 16
        %v4240 = vrot.slane %v4238, 6
        %v4241 = vshll.u32 %v4197, 16
        %v4243 = vrot.slane %v4241, 7
        %v4244 = vor.u32 %v4240, %v4243
        %v4245 = vrot.slane %v4244, 4
        %v4246 = vrot.slane %v3541, 6
        %v4247 = vrot.slane %v3537, 7
        %v4248 = vor.u32 %v4246, %v4247
        %v4249 = vsel %vm4213, %v4245, %v4248
        %v4250 = vrot.slane %v4248, 4
        %v4252 = vshrl.u32 %v4198, 16
        %v4254 = vrot.slane %v4252, 6
        %v4255 = vshll.u32 %v4198, 16
        %v4257 = vrot.slane %v4255, 7
        %v4258 = vor.u32 %v4254, %v4257
        %v4259 = vsel %vm4213, %v4250, %v4258
        %v4261 = vshrl.u32 %v4199, 16
        %v4263 = vrot.slane %v4261, 6
        %v4264 = vshll.u32 %v4199, 16
        %v4266 = vrot.slane %v4264, 7
        %v4267 = vor.u32 %v4263, %v4266
        %v4268 = vrot.slane %v4267, 4
        %v4269 = vrot.slane %v3565, 6
        %v4270 = vrot.slane %v3561, 7
        %v4271 = vor.u32 %v4269, %v4270
        %v4272 = vsel %vm4213, %v4268, %v4271
        %v4273 = vrot.slane %v4271, 4
        %v4275 = vshrl.u32 %v4200, 16
        %v4277 = vrot.slane %v4275, 6
        %v4278 = vshll.u32 %v4200, 16
        %v4280 = vrot.slane %v4278, 7
        %v4281 = vor.u32 %v4277, %v4280
        %v4282 = vsel %vm4213, %v4273, %v4281
        %v4284 = vshrl.u32 %v4201, 16
        %v4286 = vrot.slane %v4284, 6
        %v4287 = vshll.u32 %v4201, 16
        %v4289 = vrot.slane %v4287, 7
        %v4290 = vor.u32 %v4286, %v4289
        %v4291 = vrot.slane %v4290, 4
        %v4292 = vrot.slane %v3589, 6
        %v4293 = vrot.slane %v3585, 7
        %v4294 = vor.u32 %v4292, %v4293
        %v4295 = vsel %vm4213, %v4291, %v4294
        %v4296 = vrot.slane %v4294, 4
        %v4298 = vshrl.u32 %v4202, 16
        %v4300 = vrot.slane %v4298, 6
        %v4301 = vshll.u32 %v4202, 16
        %v4303 = vrot.slane %v4301, 7
        %v4304 = vor.u32 %v4300, %v4303
        %v4305 = vsel %vm4213, %v4296, %v4304
        %v4307 = vshrl.u32 %v4203, 16
        %v4309 = vrot.slane %v4307, 6
        %v4310 = vshll.u32 %v4203, 16
        %v4312 = vrot.slane %v4310, 7
        %v4313 = vor.u32 %v4309, %v4312
        %v4314 = vrot.slane %v4313, 4
        %v4315 = vrot.slane %v3613, 6
        %v4316 = vrot.slane %v3609, 7
        %v4317 = vor.u32 %v4315, %v4316
        %v4318 = vsel %vm4213, %v4314, %v4317
        %v4319 = vrot.slane %v4317, 4
        %v4321 = vshrl.u32 %v4204, 16
        %v4323 = vrot.slane %v4321, 6
        %v4324 = vshll.u32 %v4204, 16
        %v4326 = vrot.slane %v4324, 7
        %v4327 = vor.u32 %v4323, %v4326
        %v4328 = vsel %vm4213, %v4319, %v4327
        %v4330 = vshrl.u32 %v4205, 16
        %v4332 = vrot.slane %v4330, 6
        %v4333 = vshll.u32 %v4205, 16
        %v4335 = vrot.slane %v4333, 7
        %v4336 = vor.u32 %v4332, %v4335
        %v4337 = vrot.slane %v4336, 4
        %v4338 = vrot.slane %v3637, 6
        %v4339 = vrot.slane %v3633, 7
        %v4340 = vor.u32 %v4338, %v4339
        %v4341 = vsel %vm4213, %v4337, %v4340
        %v4342 = vrot.slane %v4340, 4
        %v4344 = vshrl.u32 %v4206, 16
        %v4346 = vrot.slane %v4344, 6
        %v4347 = vshll.u32 %v4206, 16
        %v4349 = vrot.slane %v4347, 7
        %v4350 = vor.u32 %v4346, %v4349
        %v4351 = vsel %vm4213, %v4342, %v4350
        %v4353 = vshrl.u32 %v4207, 16
        %v4355 = vrot.slane %v4353, 6
        %v4356 = vshll.u32 %v4207, 16
        %v4358 = vrot.slane %v4356, 7
        %v4359 = vor.u32 %v4355, %v4358
        %v4360 = vrot.slane %v4359, 4
        %v4361 = vrot.slane %v3661, 6
        %v4362 = vrot.slane %v3657, 7
        %v4363 = vor.u32 %v4361, %v4362
        %v4364 = vsel %vm4213, %v4360, %v4363
        %v4365 = vrot.slane %v4363, 4
        %v4367 = vshrl.u32 %v4208, 16
        %v4369 = vrot.slane %v4367, 6
        %v4370 = vshll.u32 %v4208, 16
        %v4372 = vrot.slane %v4370, 7
        %v4373 = vor.u32 %v4369, %v4372
        %v4374 = vsel %vm4213, %v4365, %v4373
        %v4376 = vshrl.u32 %v4209, 16
        %v4378 = vrot.slane %v4376, 6
        %v4379 = vshll.u32 %v4209, 16
        %v4381 = vrot.slane %v4379, 7
        %v4382 = vor.u32 %v4378, %v4381
        %v4383 = vrot.slane %v4382, 4
        %v4384 = vrot.slane %v3685, 6
        %v4385 = vrot.slane %v3681, 7
        %v4386 = vor.u32 %v4384, %v4385
        %v4387 = vsel %vm4213, %v4383, %v4386
        %v4388 = vrot.slane %v4386, 4
        %v4390 = vshrl.u32 %v4210, 16
        %v4392 = vrot.slane %v4390, 6
        %v4393 = vshll.u32 %v4210, 16
        %v4395 = vrot.slane %v4393, 7
        %v4396 = vor.u32 %v4392, %v4395
        %v4397 = vsel %vm4213, %v4388, %v4396
        %s4398 = scalar_lea.vmem %s4, 22
        %v4399 = vld [vmem:[%s4398] sm:$0x3]
        %v4400 = vunpack.c.l.b16 %v4226
        %v4401 = vunpack.c.l.b16 %v4236
        %v4402 = vunpack.c.l.b16 %v4249
        %v4403 = vunpack.c.l.b16 %v4259
        %v4404 = vunpack.c.l.b16 %v4272
        %v4405 = vunpack.c.l.b16 %v4282
        %v4406 = vunpack.c.l.b16 %v4295
        %v4407 = vunpack.c.l.b16 %v4305
        %v4408 = vunpack.c.l.b16 %v4318
        %v4409 = vunpack.c.l.b16 %v4328
        %v4410 = vunpack.c.l.b16 %v4341
        %v4411 = vunpack.c.l.b16 %v4351
        %v4412 = vunpack.c.l.b16 %v4364
        %v4413 = vunpack.c.l.b16 %v4374
        %v4414 = vunpack.c.l.b16 %v4387
        %v4415 = vunpack.c.l.b16 %v4397
        %v4416 = vpack.c.b16 %v4401, %v4400
        %v4417 = vpack.c.b16 %v4403, %v4402
        %v4418 = vpack.c.b16 %v4405, %v4404
        %v4419 = vpack.c.b16 %v4407, %v4406
        %v4420 = vpack.c.b16 %v4409, %v4408
        %v4421 = vpack.c.b16 %v4411, %v4410
        %v4422 = vpack.c.b16 %v4413, %v4412
        %v4423 = vpack.c.b16 %v4415, %v4414
        %v4425 = vsel %vm596, %v4416, 0
        %v4428 = vsel %vm596, %v4417, 0
        %v4431 = vsel %vm596, %v4418, 0
        %v4434 = vsel %vm596, %v4419, 0
        %v4437 = vsel %vm596, %v4420, 0
        %v4440 = vsel %vm596, %v4421, 0
        %v4443 = vsel %vm596, %v4422, 0
        %v4446 = vsel %vm596, %v4423, 0
        %v4449 = vsel %vm621, %v4399, 0
        %4451 = vmatprep.subr.bf16.mxu0 0
        %4452 = vmatpush1.bf16.msra.mxu0 0
        %4453 = vmatprep.subr.bf16.mxu0 0
        %4454 = vmatpush1.bf16.msra.mxu0 0
        %4455 = vmatprep.subr.bf16.mxu0 0
        %4456 = vmatpush1.bf16.msra.mxu0 0
        %4457 = vmatprep.subr.bf16.mxu0 0
        %4458 = vmatpush1.bf16.msra.mxu0 0
        %4459 = vmatprep.subr.bf16.mxu0 0
        %4460 = vmatpush1.bf16.msra.mxu0 0
        %4461 = vmatprep.subr.bf16.mxu0 0
        %4462 = vmatpush1.bf16.msra.mxu0 0
        %4463 = vmatprep.subr.bf16.mxu0 0
        %4464 = vmatpush1.bf16.msra.mxu0 0
        %4465 = vmatprep.subr.bf16.mxu0 0
        %4466 = vmatpush1.bf16.msra.mxu0 %v4449
        %4467 = vmatprep.subr.bf16.mxu0 0
        %4468 = vmatpush2.bf16.msra.mxu0 0
        %4469 = vmatprep.subr.bf16.mxu0 0
        %4470 = vmatpush2.bf16.msra.mxu0 0
        %4471 = vmatprep.subr.bf16.mxu0 0
        %4472 = vmatpush2.bf16.msra.mxu0 0
        %4473 = vmatprep.subr.bf16.mxu0 0
        %4474 = vmatpush2.bf16.msra.mxu0 0
        %4475 = vmatprep.subr.bf16.mxu0 0
        %4476 = vmatpush2.bf16.msra.mxu0 0
        %4477 = vmatprep.subr.bf16.mxu0 0
        %4478 = vmatpush2.bf16.msra.mxu0 0
        %4479 = vmatprep.subr.bf16.mxu0 0
        %4480 = vmatpush2.bf16.msra.mxu0 0
        %4481 = vmatprep.subr.bf16.mxu0 0
        %4482 = vmatpush2.bf16.msra.mxu0 0
        %4483 = vmatprep.mubr.bf16.mxu0 0
        %4484 = vmatmul.mubr.bf16.gmra.mxu0 %v4425
        %v4485 = vpop.f32.mrf.mxu0
        %v4486 = vadd.f32 0.0, %v4485
        %v4487 = vpop.f32.mrf.mxu0
        %v4488 = vpop.f32.mrf.mxu0
        %v4489 = vadd.f32 0.0, %v4488
        %v4490 = vpop.f32.mrf.mxu0
        %4491 = vmatprep.mubr.bf16.mxu0 0
        %4492 = vmatmul.mubr.bf16.gmra.mxu0 %v4428
        %v4493 = vpop.f32.mrf.mxu0
        %v4494 = vadd.f32 0.0, %v4493
        %v4495 = vpop.f32.mrf.mxu0
        %v4496 = vpop.f32.mrf.mxu0
        %v4497 = vadd.f32 0.0, %v4496
        %v4498 = vpop.f32.mrf.mxu0
        %4499 = vmatprep.mubr.bf16.mxu0 0
        %4500 = vmatmul.mubr.bf16.gmra.mxu0 %v4431
        %v4501 = vpop.f32.mrf.mxu0
        %v4502 = vadd.f32 0.0, %v4501
        %v4503 = vpop.f32.mrf.mxu0
        %v4504 = vpop.f32.mrf.mxu0
        %v4505 = vadd.f32 0.0, %v4504
        %v4506 = vpop.f32.mrf.mxu0
        %4507 = vmatprep.mubr.bf16.mxu0 0
        %4508 = vmatmul.mubr.bf16.gmra.mxu0 %v4434
        %v4509 = vpop.f32.mrf.mxu0
        %v4510 = vadd.f32 0.0, %v4509
        %v4511 = vpop.f32.mrf.mxu0
        %v4512 = vpop.f32.mrf.mxu0
        %v4513 = vadd.f32 0.0, %v4512
        %v4514 = vpop.f32.mrf.mxu0
        %4515 = vmatprep.mubr.bf16.mxu0 0
        %4516 = vmatmul.mubr.bf16.gmra.mxu0 %v4437
        %v4517 = vpop.f32.mrf.mxu0
        %v4518 = vadd.f32 0.0, %v4517
        %v4519 = vpop.f32.mrf.mxu0
        %v4520 = vpop.f32.mrf.mxu0
        %v4521 = vadd.f32 0.0, %v4520
        %v4522 = vpop.f32.mrf.mxu0
        %4523 = vmatprep.mubr.bf16.mxu0 0
        %4524 = vmatmul.mubr.bf16.gmra.mxu0 %v4440
        %v4525 = vpop.f32.mrf.mxu0
        %v4526 = vadd.f32 0.0, %v4525
        %v4527 = vpop.f32.mrf.mxu0
        %v4528 = vpop.f32.mrf.mxu0
        %v4529 = vadd.f32 0.0, %v4528
        %v4530 = vpop.f32.mrf.mxu0
        %4531 = vmatprep.mubr.bf16.mxu0 0
        %4532 = vmatmul.mubr.bf16.gmra.mxu0 %v4443
        %v4533 = vpop.f32.mrf.mxu0
        %v4534 = vadd.f32 0.0, %v4533
        %v4535 = vpop.f32.mrf.mxu0
        %v4536 = vpop.f32.mrf.mxu0
        %v4537 = vadd.f32 0.0, %v4536
        %v4538 = vpop.f32.mrf.mxu0
        %4539 = vmatprep.mubr.bf16.mxu0 0
        %4540 = vmatmul.mubr.bf16.gmra.mxu0 %v4446
        %v4541 = vpop.f32.mrf.mxu0
        %v4542 = vadd.f32 0.0, %v4541
        %v4543 = vpop.f32.mrf.mxu0
        %v4544 = vpop.f32.mrf.mxu0
        %v4545 = vadd.f32 0.0, %v4544
        %v4546 = vpop.f32.mrf.mxu0
        %4547 = vdwg.mxu0
        %v4548 = vadd.f32 %v4133, %v4486
        %v4549 = vadd.f32 %v4136, %v4489
        %v4550 = vadd.f32 %v4141, %v4494
        %v4551 = vadd.f32 %v4144, %v4497
        %v4552 = vadd.f32 %v4149, %v4502
        %v4553 = vadd.f32 %v4152, %v4505
        %v4554 = vadd.f32 %v4157, %v4510
        %v4555 = vadd.f32 %v4160, %v4513
        %v4556 = vadd.f32 %v4165, %v4518
        %v4557 = vadd.f32 %v4168, %v4521
        %v4558 = vadd.f32 %v4173, %v4526
        %v4559 = vadd.f32 %v4176, %v4529
        %v4560 = vadd.f32 %v4181, %v4534
        %v4561 = vadd.f32 %v4184, %v4537
        %v4562 = vadd.f32 %v4189, %v4542
        %v4563 = vadd.f32 %v4192, %v4545
        %v4564 = vld [vmem:[%s311] sm:$0xf]
        %v4565 = vld [vmem:[%s311 + $0xc] sm:$0xf]
        %v4566 = vld [vmem:[%s311 + $0x18] sm:$0xf]
        %v4567 = vld [vmem:[%s311 + $0x24] sm:$0xf]
        %v4568 = vld [vmem:[%s311 + $0x30] sm:$0xf]
        %v4569 = vld [vmem:[%s311 + $0x3c] sm:$0xf]
        %v4570 = vld [vmem:[%s311 + $0x48] sm:$0xf]
        %v4571 = vld [vmem:[%s311 + $0x54] sm:$0xf]
        %v4573 = vshrl.u32 %v4564, 16
        %v4575 = vrot.slane %v4573, 4
        %v4576 = vshll.u32 %v4564, 16
        %v4578 = vrot.slane %v4576, 5
        %v4579 = vor.u32 %v4575, %v4578
        %v4580 = vrot.slane %v4579, 4
        %v4581 = vrot.slane %v352, 5
        %v4582 = vsel %vm3502, %v4580, %v4581
        %v4583 = vrot.slane %v349, 4
        %v4584 = vor.u32 %v4583, %v4581
        %v4585 = vrot.slane %v4584, 4
        %v4587 = vshll.u32 %v1637, 16
        %v4589 = vrot.slane %v4587, 5
        %v4590 = vsel %vm3502, %v4585, %v4589
        %v4592 = vshrl.u32 %v4565, 16
        %v4594 = vrot.slane %v4592, 4
        %v4595 = vshll.u32 %v4565, 16
        %v4597 = vrot.slane %v4595, 5
        %v4598 = vor.u32 %v4594, %v4597
        %v4599 = vrot.slane %v4598, 4
        %v4600 = vrot.slane %v380, 5
        %v4601 = vsel %vm3502, %v4599, %v4600
        %v4602 = vrot.slane %v377, 4
        %v4603 = vor.u32 %v4602, %v4600
        %v4604 = vrot.slane %v4603, 4
        %v4606 = vshll.u32 %v1638, 16
        %v4608 = vrot.slane %v4606, 5
        %v4609 = vsel %vm3502, %v4604, %v4608
        %v4611 = vshrl.u32 %v4566, 16
        %v4613 = vrot.slane %v4611, 4
        %v4614 = vshll.u32 %v4566, 16
        %v4616 = vrot.slane %v4614, 5
        %v4617 = vor.u32 %v4613, %v4616
        %v4618 = vrot.slane %v4617, 4
        %v4619 = vrot.slane %v408, 5
        %v4620 = vsel %vm3502, %v4618, %v4619
        %v4621 = vrot.slane %v405, 4
        %v4622 = vor.u32 %v4621, %v4619
        %v4623 = vrot.slane %v4622, 4
        %v4625 = vshll.u32 %v1639, 16
        %v4627 = vrot.slane %v4625, 5
        %v4628 = vsel %vm3502, %v4623, %v4627
        %v4630 = vshrl.u32 %v4567, 16
        %v4632 = vrot.slane %v4630, 4
        %v4633 = vshll.u32 %v4567, 16
        %v4635 = vrot.slane %v4633, 5
        %v4636 = vor.u32 %v4632, %v4635
        %v4637 = vrot.slane %v4636, 4
        %v4638 = vrot.slane %v436, 5
        %v4639 = vsel %vm3502, %v4637, %v4638
        %v4640 = vrot.slane %v433, 4
        %v4641 = vor.u32 %v4640, %v4638
        %v4642 = vrot.slane %v4641, 4
        %v4644 = vshll.u32 %v1640, 16
        %v4646 = vrot.slane %v4644, 5
        %v4647 = vsel %vm3502, %v4642, %v4646
        %v4649 = vshrl.u32 %v4568, 16
        %v4651 = vrot.slane %v4649, 4
        %v4652 = vshll.u32 %v4568, 16
        %v4654 = vrot.slane %v4652, 5
        %v4655 = vor.u32 %v4651, %v4654
        %v4656 = vrot.slane %v4655, 4
        %v4657 = vrot.slane %v464, 5
        %v4658 = vsel %vm3502, %v4656, %v4657
        %v4659 = vrot.slane %v461, 4
        %v4660 = vor.u32 %v4659, %v4657
        %v4661 = vrot.slane %v4660, 4
        %v4663 = vshll.u32 %v1641, 16
        %v4665 = vrot.slane %v4663, 5
        %v4666 = vsel %vm3502, %v4661, %v4665
        %v4668 = vshrl.u32 %v4569, 16
        %v4670 = vrot.slane %v4668, 4
        %v4671 = vshll.u32 %v4569, 16
        %v4673 = vrot.slane %v4671, 5
        %v4674 = vor.u32 %v4670, %v4673
        %v4675 = vrot.slane %v4674, 4
        %v4676 = vrot.slane %v492, 5
        %v4677 = vsel %vm3502, %v4675, %v4676
        %v4678 = vrot.slane %v489, 4
        %v4679 = vor.u32 %v4678, %v4676
        %v4680 = vrot.slane %v4679, 4
        %v4682 = vshll.u32 %v1642, 16
        %v4684 = vrot.slane %v4682, 5
        %v4685 = vsel %vm3502, %v4680, %v4684
        %v4687 = vshrl.u32 %v4570, 16
        %v4689 = vrot.slane %v4687, 4
        %v4690 = vshll.u32 %v4570, 16
        %v4692 = vrot.slane %v4690, 5
        %v4693 = vor.u32 %v4689, %v4692
        %v4694 = vrot.slane %v4693, 4
        %v4695 = vrot.slane %v520, 5
        %v4696 = vsel %vm3502, %v4694, %v4695
        %v4697 = vrot.slane %v517, 4
        %v4698 = vor.u32 %v4697, %v4695
        %v4699 = vrot.slane %v4698, 4
        %v4701 = vshll.u32 %v1643, 16
        %v4703 = vrot.slane %v4701, 5
        %v4704 = vsel %vm3502, %v4699, %v4703
        %v4706 = vshrl.u32 %v4571, 16
        %v4708 = vrot.slane %v4706, 4
        %v4709 = vshll.u32 %v4571, 16
        %v4711 = vrot.slane %v4709, 5
        %v4712 = vor.u32 %v4708, %v4711
        %v4713 = vrot.slane %v4712, 4
        %v4714 = vrot.slane %v548, 5
        %v4715 = vsel %vm3502, %v4713, %v4714
        %v4716 = vrot.slane %v545, 4
        %v4717 = vor.u32 %v4716, %v4714
        %v4718 = vrot.slane %v4717, 4
        %v4720 = vshll.u32 %v1644, 16
        %v4722 = vrot.slane %v4720, 5
        %v4723 = vsel %vm3502, %v4718, %v4722
        %s4724 = scalar_lea.vmem %s4, 24
        %v4725 = vld [vmem:[%s4724] sm:$0x3]
        %v4726 = vunpack.c.l.b16 %v4582
        %v4727 = vunpack.c.l.b16 %v4590
        %v4728 = vunpack.c.l.b16 %v4601
        %v4729 = vunpack.c.l.b16 %v4609
        %v4730 = vunpack.c.l.b16 %v4620
        %v4731 = vunpack.c.l.b16 %v4628
        %v4732 = vunpack.c.l.b16 %v4639
        %v4733 = vunpack.c.l.b16 %v4647
        %v4734 = vunpack.c.l.b16 %v4658
        %v4735 = vunpack.c.l.b16 %v4666
        %v4736 = vunpack.c.l.b16 %v4677
        %v4737 = vunpack.c.l.b16 %v4685
        %v4738 = vunpack.c.l.b16 %v4696
        %v4739 = vunpack.c.l.b16 %v4704
        %v4740 = vunpack.c.l.b16 %v4715
        %v4741 = vunpack.c.l.b16 %v4723
        %v4742 = vpack.c.b16 %v4727, %v4726
        %v4743 = vpack.c.b16 %v4729, %v4728
        %v4744 = vpack.c.b16 %v4731, %v4730
        %v4745 = vpack.c.b16 %v4733, %v4732
        %v4746 = vpack.c.b16 %v4735, %v4734
        %v4747 = vpack.c.b16 %v4737, %v4736
        %v4748 = vpack.c.b16 %v4739, %v4738
        %v4749 = vpack.c.b16 %v4741, %v4740
        %v4751 = vsel %vm596, %v4742, 0
        %v4754 = vsel %vm596, %v4743, 0
        %v4757 = vsel %vm596, %v4744, 0
        %v4760 = vsel %vm596, %v4745, 0
        %v4763 = vsel %vm596, %v4746, 0
        %v4766 = vsel %vm596, %v4747, 0
        %v4769 = vsel %vm596, %v4748, 0
        %v4772 = vsel %vm596, %v4749, 0
        %v4775 = vsel %vm621, %v4725, 0
        %4777 = vmatprep.subr.bf16.mxu0 0
        %4778 = vmatpush1.bf16.msra.mxu0 0
        %4779 = vmatprep.subr.bf16.mxu0 0
        %4780 = vmatpush1.bf16.msra.mxu0 0
        %4781 = vmatprep.subr.bf16.mxu0 0
        %4782 = vmatpush1.bf16.msra.mxu0 0
        %4783 = vmatprep.subr.bf16.mxu0 0
        %4784 = vmatpush1.bf16.msra.mxu0 0
        %4785 = vmatprep.subr.bf16.mxu0 0
        %4786 = vmatpush1.bf16.msra.mxu0 0
        %4787 = vmatprep.subr.bf16.mxu0 0
        %4788 = vmatpush1.bf16.msra.mxu0 0
        %4789 = vmatprep.subr.bf16.mxu0 0
        %4790 = vmatpush1.bf16.msra.mxu0 0
        %4791 = vmatprep.subr.bf16.mxu0 0
        %4792 = vmatpush1.bf16.msra.mxu0 %v4775
        %4793 = vmatprep.subr.bf16.mxu0 0
        %4794 = vmatpush2.bf16.msra.mxu0 0
        %4795 = vmatprep.subr.bf16.mxu0 0
        %4796 = vmatpush2.bf16.msra.mxu0 0
        %4797 = vmatprep.subr.bf16.mxu0 0
        %4798 = vmatpush2.bf16.msra.mxu0 0
        %4799 = vmatprep.subr.bf16.mxu0 0
        %4800 = vmatpush2.bf16.msra.mxu0 0
        %4801 = vmatprep.subr.bf16.mxu0 0
        %4802 = vmatpush2.bf16.msra.mxu0 0
        %4803 = vmatprep.subr.bf16.mxu0 0
        %4804 = vmatpush2.bf16.msra.mxu0 0
        %4805 = vmatprep.subr.bf16.mxu0 0
        %4806 = vmatpush2.bf16.msra.mxu0 0
        %4807 = vmatprep.subr.bf16.mxu0 0
        %4808 = vmatpush2.bf16.msra.mxu0 0
        %4809 = vmatprep.mubr.bf16.mxu0 0
        %4810 = vmatmul.mubr.bf16.gmra.mxu0 %v4751
        %v4811 = vpop.f32.mrf.mxu0
        %v4812 = vadd.f32 0.0, %v4811
        %v4813 = vpop.f32.mrf.mxu0
        %v4814 = vpop.f32.mrf.mxu0
        %v4815 = vadd.f32 0.0, %v4814
        %v4816 = vpop.f32.mrf.mxu0
        %4817 = vmatprep.mubr.bf16.mxu0 0
        %4818 = vmatmul.mubr.bf16.gmra.mxu0 %v4754
        %v4819 = vpop.f32.mrf.mxu0
        %v4820 = vadd.f32 0.0, %v4819
        %v4821 = vpop.f32.mrf.mxu0
        %v4822 = vpop.f32.mrf.mxu0
        %v4823 = vadd.f32 0.0, %v4822
        %v4824 = vpop.f32.mrf.mxu0
        %4825 = vmatprep.mubr.bf16.mxu0 0
        %4826 = vmatmul.mubr.bf16.gmra.mxu0 %v4757
        %v4827 = vpop.f32.mrf.mxu0
        %v4828 = vadd.f32 0.0, %v4827
        %v4829 = vpop.f32.mrf.mxu0
        %v4830 = vpop.f32.mrf.mxu0
        %v4831 = vadd.f32 0.0, %v4830
        %v4832 = vpop.f32.mrf.mxu0
        %4833 = vmatprep.mubr.bf16.mxu0 0
        %4834 = vmatmul.mubr.bf16.gmra.mxu0 %v4760
        %v4835 = vpop.f32.mrf.mxu0
        %v4836 = vadd.f32 0.0, %v4835
        %v4837 = vpop.f32.mrf.mxu0
        %v4838 = vpop.f32.mrf.mxu0
        %v4839 = vadd.f32 0.0, %v4838
        %v4840 = vpop.f32.mrf.mxu0
        %4841 = vmatprep.mubr.bf16.mxu0 0
        %4842 = vmatmul.mubr.bf16.gmra.mxu0 %v4763
        %v4843 = vpop.f32.mrf.mxu0
        %v4844 = vadd.f32 0.0, %v4843
        %v4845 = vpop.f32.mrf.mxu0
        %v4846 = vpop.f32.mrf.mxu0
        %v4847 = vadd.f32 0.0, %v4846
        %v4848 = vpop.f32.mrf.mxu0
        %4849 = vmatprep.mubr.bf16.mxu0 0
        %4850 = vmatmul.mubr.bf16.gmra.mxu0 %v4766
        %v4851 = vpop.f32.mrf.mxu0
        %v4852 = vadd.f32 0.0, %v4851
        %v4853 = vpop.f32.mrf.mxu0
        %v4854 = vpop.f32.mrf.mxu0
        %v4855 = vadd.f32 0.0, %v4854
        %v4856 = vpop.f32.mrf.mxu0
        %4857 = vmatprep.mubr.bf16.mxu0 0
        %4858 = vmatmul.mubr.bf16.gmra.mxu0 %v4769
        %v4859 = vpop.f32.mrf.mxu0
        %v4860 = vadd.f32 0.0, %v4859
        %v4861 = vpop.f32.mrf.mxu0
        %v4862 = vpop.f32.mrf.mxu0
        %v4863 = vadd.f32 0.0, %v4862
        %v4864 = vpop.f32.mrf.mxu0
        %4865 = vmatprep.mubr.bf16.mxu0 0
        %4866 = vmatmul.mubr.bf16.gmra.mxu0 %v4772
        %v4867 = vpop.f32.mrf.mxu0
        %v4868 = vadd.f32 0.0, %v4867
        %v4869 = vpop.f32.mrf.mxu0
        %v4870 = vpop.f32.mrf.mxu0
        %v4871 = vadd.f32 0.0, %v4870
        %v4872 = vpop.f32.mrf.mxu0
        %4873 = vdwg.mxu0
        %v4874 = vadd.f32 %v4548, %v4812
        %v4875 = vadd.f32 %v4549, %v4815
        %v4876 = vadd.f32 %v4550, %v4820
        %v4877 = vadd.f32 %v4551, %v4823
        %v4878 = vadd.f32 %v4552, %v4828
        %v4879 = vadd.f32 %v4553, %v4831
        %v4880 = vadd.f32 %v4554, %v4836
        %v4881 = vadd.f32 %v4555, %v4839
        %v4882 = vadd.f32 %v4556, %v4844
        %v4883 = vadd.f32 %v4557, %v4847
        %v4884 = vadd.f32 %v4558, %v4852
        %v4885 = vadd.f32 %v4559, %v4855
        %v4886 = vadd.f32 %v4560, %v4860
        %v4887 = vadd.f32 %v4561, %v4863
        %v4888 = vadd.f32 %v4562, %v4868
        %v4889 = vadd.f32 %v4563, %v4871
        %s4890 = scalar_lea.vmem %s4, 26
        %v4891 = vld [vmem:[%s4890] sm:$0x3]
        %v4893 = vsel %vm621, %v4891, 0
        %4895 = vmatprep.subr.bf16.mxu0 0
        %4896 = vmatpush1.bf16.msra.mxu0 0
        %4897 = vmatprep.subr.bf16.mxu0 0
        %4898 = vmatpush1.bf16.msra.mxu0 0
        %4899 = vmatprep.subr.bf16.mxu0 0
        %4900 = vmatpush1.bf16.msra.mxu0 0
        %4901 = vmatprep.subr.bf16.mxu0 0
        %4902 = vmatpush1.bf16.msra.mxu0 0
        %4903 = vmatprep.subr.bf16.mxu0 0
        %4904 = vmatpush1.bf16.msra.mxu0 0
        %4905 = vmatprep.subr.bf16.mxu0 0
        %4906 = vmatpush1.bf16.msra.mxu0 0
        %4907 = vmatprep.subr.bf16.mxu0 0
        %4908 = vmatpush1.bf16.msra.mxu0 0
        %4909 = vmatprep.subr.bf16.mxu0 0
        %4910 = vmatpush1.bf16.msra.mxu0 %v4893
        %4911 = vmatprep.subr.bf16.mxu0 0
        %4912 = vmatpush2.bf16.msra.mxu0 0
        %4913 = vmatprep.subr.bf16.mxu0 0
        %4914 = vmatpush2.bf16.msra.mxu0 0
        %4915 = vmatprep.subr.bf16.mxu0 0
        %4916 = vmatpush2.bf16.msra.mxu0 0
        %4917 = vmatprep.subr.bf16.mxu0 0
        %4918 = vmatpush2.bf16.msra.mxu0 0
        %4919 = vmatprep.subr.bf16.mxu0 0
        %4920 = vmatpush2.bf16.msra.mxu0 0
        %4921 = vmatprep.subr.bf16.mxu0 0
        %4922 = vmatpush2.bf16.msra.mxu0 0
        %4923 = vmatprep.subr.bf16.mxu0 0
        %4924 = vmatpush2.bf16.msra.mxu0 0
        %4925 = vmatprep.subr.bf16.mxu0 0
        %4926 = vmatpush2.bf16.msra.mxu0 0
        %4927 = vmatprep.mubr.bf16.mxu0 0
        %4928 = vmatmul.mubr.bf16.gmra.mxu0 %v598
        %v4929 = vpop.f32.mrf.mxu0
        %v4930 = vadd.f32 0.0, %v4929
        %v4931 = vpop.f32.mrf.mxu0
        %v4932 = vpop.f32.mrf.mxu0
        %v4933 = vadd.f32 0.0, %v4932
        %v4934 = vpop.f32.mrf.mxu0
        %4935 = vmatprep.mubr.bf16.mxu0 0
        %4936 = vmatmul.mubr.bf16.gmra.mxu0 %v601
        %v4937 = vpop.f32.mrf.mxu0
        %v4938 = vadd.f32 0.0, %v4937
        %v4939 = vpop.f32.mrf.mxu0
        %v4940 = vpop.f32.mrf.mxu0
        %v4941 = vadd.f32 0.0, %v4940
        %v4942 = vpop.f32.mrf.mxu0
        %4943 = vmatprep.mubr.bf16.mxu0 0
        %4944 = vmatmul.mubr.bf16.gmra.mxu0 %v604
        %v4945 = vpop.f32.mrf.mxu0
        %v4946 = vadd.f32 0.0, %v4945
        %v4947 = vpop.f32.mrf.mxu0
        %v4948 = vpop.f32.mrf.mxu0
        %v4949 = vadd.f32 0.0, %v4948
        %v4950 = vpop.f32.mrf.mxu0
        %4951 = vmatprep.mubr.bf16.mxu0 0
        %4952 = vmatmul.mubr.bf16.gmra.mxu0 %v607
        %v4953 = vpop.f32.mrf.mxu0
        %v4954 = vadd.f32 0.0, %v4953
        %v4955 = vpop.f32.mrf.mxu0
        %v4956 = vpop.f32.mrf.mxu0
        %v4957 = vadd.f32 0.0, %v4956
        %v4958 = vpop.f32.mrf.mxu0
        %4959 = vmatprep.mubr.bf16.mxu0 0
        %4960 = vmatmul.mubr.bf16.gmra.mxu0 %v610
        %v4961 = vpop.f32.mrf.mxu0
        %v4962 = vadd.f32 0.0, %v4961
        %v4963 = vpop.f32.mrf.mxu0
        %v4964 = vpop.f32.mrf.mxu0
        %v4965 = vadd.f32 0.0, %v4964
        %v4966 = vpop.f32.mrf.mxu0
        %4967 = vmatprep.mubr.bf16.mxu0 0
        %4968 = vmatmul.mubr.bf16.gmra.mxu0 %v613
        %v4969 = vpop.f32.mrf.mxu0
        %v4970 = vadd.f32 0.0, %v4969
        %v4971 = vpop.f32.mrf.mxu0
        %v4972 = vpop.f32.mrf.mxu0
        %v4973 = vadd.f32 0.0, %v4972
        %v4974 = vpop.f32.mrf.mxu0
        %4975 = vmatprep.mubr.bf16.mxu0 0
        %4976 = vmatmul.mubr.bf16.gmra.mxu0 %v616
        %v4977 = vpop.f32.mrf.mxu0
        %v4978 = vadd.f32 0.0, %v4977
        %v4979 = vpop.f32.mrf.mxu0
        %v4980 = vpop.f32.mrf.mxu0
        %v4981 = vadd.f32 0.0, %v4980
        %v4982 = vpop.f32.mrf.mxu0
        %4983 = vmatprep.mubr.bf16.mxu0 0
        %4984 = vmatmul.mubr.bf16.gmra.mxu0 %v619
        %v4985 = vpop.f32.mrf.mxu0
        %v4986 = vadd.f32 0.0, %v4985
        %v4987 = vpop.f32.mrf.mxu0
        %v4988 = vpop.f32.mrf.mxu0
        %v4989 = vadd.f32 0.0, %v4988
        %v4990 = vpop.f32.mrf.mxu0
        %4991 = vdwg.mxu0
        %v4992 = vadd.f32 %v4874, %v4930
        %v4993 = vadd.f32 %v4875, %v4933
        %v4994 = vadd.f32 %v4876, %v4938
        %v4995 = vadd.f32 %v4877, %v4941
        %v4996 = vadd.f32 %v4878, %v4946
        %v4997 = vadd.f32 %v4879, %v4949
        %v4998 = vadd.f32 %v4880, %v4954
        %v4999 = vadd.f32 %v4881, %v4957
        %v5000 = vadd.f32 %v4882, %v4962
        %v5001 = vadd.f32 %v4883, %v4965
        %v5002 = vadd.f32 %v4884, %v4970
        %v5003 = vadd.f32 %v4885, %v4973
        %v5004 = vadd.f32 %v4886, %v4978
        %v5005 = vadd.f32 %v4887, %v4981
        %v5006 = vadd.f32 %v4888, %v4986
        %v5007 = vadd.f32 %v4889, %v4989
        %v5008 = vld [vmem:[%s311 + $0x8] sm:$0x7]
        %v5009 = vld [vmem:[%s311 + $0x14] sm:$0x7]
        %v5010 = vld [vmem:[%s311 + $0x20] sm:$0x7]
        %v5011 = vld [vmem:[%s311 + $0x2c] sm:$0x7]
        %v5012 = vld [vmem:[%s311 + $0x38] sm:$0x7]
        %v5013 = vld [vmem:[%s311 + $0x44] sm:$0x7]
        %v5014 = vld [vmem:[%s311 + $0x50] sm:$0x7]
        %v5015 = vld [vmem:[%s311 + $0x5c] sm:$0x7]
        %v5017 = vshrl.u32 %v2009, 16
        %v5019 = vrot.slane %v5017, 6
        %v5020 = vshll.u32 %v2009, 16
        %v5022 = vrot.slane %v5020, 7
        %v5023 = vor.u32 %v5019, %v5022
        %v5024 = vrot.slane %v5023, 4
        %v5025 = vrot.slane %v349, 6
        %v5026 = vrot.slane %v352, 7
        %v5027 = vor.u32 %v5025, %v5026
        %v5028 = vsel %vm4213, %v5024, %v5027
        %v5029 = vrot.slane %v5027, 4
        %v5031 = vshrl.u32 %v5008, 16
        %v5033 = vrot.slane %v5031, 6
        %v5034 = vshll.u32 %v5008, 16
        %v5036 = vrot.slane %v5034, 7
        %v5037 = vor.u32 %v5033, %v5036
        %v5038 = vsel %vm4213, %v5029, %v5037
        %v5040 = vshrl.u32 %v2010, 16
        %v5042 = vrot.slane %v5040, 6
        %v5043 = vshll.u32 %v2010, 16
        %v5045 = vrot.slane %v5043, 7
        %v5046 = vor.u32 %v5042, %v5045
        %v5047 = vrot.slane %v5046, 4
        %v5048 = vrot.slane %v377, 6
        %v5049 = vrot.slane %v380, 7
        %v5050 = vor.u32 %v5048, %v5049
        %v5051 = vsel %vm4213, %v5047, %v5050
        %v5052 = vrot.slane %v5050, 4
        %v5054 = vshrl.u32 %v5009, 16
        %v5056 = vrot.slane %v5054, 6
        %v5057 = vshll.u32 %v5009, 16
        %v5059 = vrot.slane %v5057, 7
        %v5060 = vor.u32 %v5056, %v5059
        %v5061 = vsel %vm4213, %v5052, %v5060
        %v5063 = vshrl.u32 %v2011, 16
        %v5065 = vrot.slane %v5063, 6
        %v5066 = vshll.u32 %v2011, 16
        %v5068 = vrot.slane %v5066, 7
        %v5069 = vor.u32 %v5065, %v5068
        %v5070 = vrot.slane %v5069, 4
        %v5071 = vrot.slane %v405, 6
        %v5072 = vrot.slane %v408, 7
        %v5073 = vor.u32 %v5071, %v5072
        %v5074 = vsel %vm4213, %v5070, %v5073
        %v5075 = vrot.slane %v5073, 4
        %v5077 = vshrl.u32 %v5010, 16
        %v5079 = vrot.slane %v5077, 6
        %v5080 = vshll.u32 %v5010, 16
        %v5082 = vrot.slane %v5080, 7
        %v5083 = vor.u32 %v5079, %v5082
        %v5084 = vsel %vm4213, %v5075, %v5083
        %v5086 = vshrl.u32 %v2012, 16
        %v5088 = vrot.slane %v5086, 6
        %v5089 = vshll.u32 %v2012, 16
        %v5091 = vrot.slane %v5089, 7
        %v5092 = vor.u32 %v5088, %v5091
        %v5093 = vrot.slane %v5092, 4
        %v5094 = vrot.slane %v433, 6
        %v5095 = vrot.slane %v436, 7
        %v5096 = vor.u32 %v5094, %v5095
        %v5097 = vsel %vm4213, %v5093, %v5096
        %v5098 = vrot.slane %v5096, 4
        %v5100 = vshrl.u32 %v5011, 16
        %v5102 = vrot.slane %v5100, 6
        %v5103 = vshll.u32 %v5011, 16
        %v5105 = vrot.slane %v5103, 7
        %v5106 = vor.u32 %v5102, %v5105
        %v5107 = vsel %vm4213, %v5098, %v5106
        %v5109 = vshrl.u32 %v2013, 16
        %v5111 = vrot.slane %v5109, 6
        %v5112 = vshll.u32 %v2013, 16
        %v5114 = vrot.slane %v5112, 7
        %v5115 = vor.u32 %v5111, %v5114
        %v5116 = vrot.slane %v5115, 4
        %v5117 = vrot.slane %v461, 6
        %v5118 = vrot.slane %v464, 7
        %v5119 = vor.u32 %v5117, %v5118
        %v5120 = vsel %vm4213, %v5116, %v5119
        %v5121 = vrot.slane %v5119, 4
        %v5123 = vshrl.u32 %v5012, 16
        %v5125 = vrot.slane %v5123, 6
        %v5126 = vshll.u32 %v5012, 16
        %v5128 = vrot.slane %v5126, 7
        %v5129 = vor.u32 %v5125, %v5128
        %v5130 = vsel %vm4213, %v5121, %v5129
        %v5132 = vshrl.u32 %v2014, 16
        %v5134 = vrot.slane %v5132, 6
        %v5135 = vshll.u32 %v2014, 16
        %v5137 = vrot.slane %v5135, 7
        %v5138 = vor.u32 %v5134, %v5137
        %v5139 = vrot.slane %v5138, 4
        %v5140 = vrot.slane %v489, 6
        %v5141 = vrot.slane %v492, 7
        %v5142 = vor.u32 %v5140, %v5141
        %v5143 = vsel %vm4213, %v5139, %v5142
        %v5144 = vrot.slane %v5142, 4
        %v5146 = vshrl.u32 %v5013, 16
        %v5148 = vrot.slane %v5146, 6
        %v5149 = vshll.u32 %v5013, 16
        %v5151 = vrot.slane %v5149, 7
        %v5152 = vor.u32 %v5148, %v5151
        %v5153 = vsel %vm4213, %v5144, %v5152
        %v5155 = vshrl.u32 %v2015, 16
        %v5157 = vrot.slane %v5155, 6
        %v5158 = vshll.u32 %v2015, 16
        %v5160 = vrot.slane %v5158, 7
        %v5161 = vor.u32 %v5157, %v5160
        %v5162 = vrot.slane %v5161, 4
        %v5163 = vrot.slane %v517, 6
        %v5164 = vrot.slane %v520, 7
        %v5165 = vor.u32 %v5163, %v5164
        %v5166 = vsel %vm4213, %v5162, %v5165
        %v5167 = vrot.slane %v5165, 4
        %v5169 = vshrl.u32 %v5014, 16
        %v5171 = vrot.slane %v5169, 6
        %v5172 = vshll.u32 %v5014, 16
        %v5174 = vrot.slane %v5172, 7
        %v5175 = vor.u32 %v5171, %v5174
        %v5176 = vsel %vm4213, %v5167, %v5175
        %v5178 = vshrl.u32 %v2016, 16
        %v5180 = vrot.slane %v5178, 6
        %v5181 = vshll.u32 %v2016, 16
        %v5183 = vrot.slane %v5181, 7
        %v5184 = vor.u32 %v5180, %v5183
        %v5185 = vrot.slane %v5184, 4
        %v5186 = vrot.slane %v545, 6
        %v5187 = vrot.slane %v548, 7
        %v5188 = vor.u32 %v5186, %v5187
        %v5189 = vsel %vm4213, %v5185, %v5188
        %v5190 = vrot.slane %v5188, 4
        %v5192 = vshrl.u32 %v5015, 16
        %v5194 = vrot.slane %v5192, 6
        %v5195 = vshll.u32 %v5015, 16
        %v5197 = vrot.slane %v5195, 7
        %v5198 = vor.u32 %v5194, %v5197
        %v5199 = vsel %vm4213, %v5190, %v5198
        %s5200 = scalar_lea.vmem %s4, 28
        %v5201 = vld [vmem:[%s5200] sm:$0x3]
        %v5202 = vunpack.c.l.b16 %v5028
        %v5203 = vunpack.c.l.b16 %v5038
        %v5204 = vunpack.c.l.b16 %v5051
        %v5205 = vunpack.c.l.b16 %v5061
        %v5206 = vunpack.c.l.b16 %v5074
        %v5207 = vunpack.c.l.b16 %v5084
        %v5208 = vunpack.c.l.b16 %v5097
        %v5209 = vunpack.c.l.b16 %v5107
        %v5210 = vunpack.c.l.b16 %v5120
        %v5211 = vunpack.c.l.b16 %v5130
        %v5212 = vunpack.c.l.b16 %v5143
        %v5213 = vunpack.c.l.b16 %v5153
        %v5214 = vunpack.c.l.b16 %v5166
        %v5215 = vunpack.c.l.b16 %v5176
        %v5216 = vunpack.c.l.b16 %v5189
        %v5217 = vunpack.c.l.b16 %v5199
        %v5218 = vpack.c.b16 %v5203, %v5202
        %v5219 = vpack.c.b16 %v5205, %v5204
        %v5220 = vpack.c.b16 %v5207, %v5206
        %v5221 = vpack.c.b16 %v5209, %v5208
        %v5222 = vpack.c.b16 %v5211, %v5210
        %v5223 = vpack.c.b16 %v5213, %v5212
        %v5224 = vpack.c.b16 %v5215, %v5214
        %v5225 = vpack.c.b16 %v5217, %v5216
        %v5227 = vsel %vm596, %v5218, 0
        %v5230 = vsel %vm596, %v5219, 0
        %v5233 = vsel %vm596, %v5220, 0
        %v5236 = vsel %vm596, %v5221, 0
        %v5239 = vsel %vm596, %v5222, 0
        %v5242 = vsel %vm596, %v5223, 0
        %v5245 = vsel %vm596, %v5224, 0
        %v5248 = vsel %vm596, %v5225, 0
        %v5251 = vsel %vm621, %v5201, 0
        %5253 = vmatprep.subr.bf16.mxu0 0
        %5254 = vmatpush1.bf16.msra.mxu0 0
        %5255 = vmatprep.subr.bf16.mxu0 0
        %5256 = vmatpush1.bf16.msra.mxu0 0
        %5257 = vmatprep.subr.bf16.mxu0 0
        %5258 = vmatpush1.bf16.msra.mxu0 0
        %5259 = vmatprep.subr.bf16.mxu0 0
        %5260 = vmatpush1.bf16.msra.mxu0 0
        %5261 = vmatprep.subr.bf16.mxu0 0
        %5262 = vmatpush1.bf16.msra.mxu0 0
        %5263 = vmatprep.subr.bf16.mxu0 0
        %5264 = vmatpush1.bf16.msra.mxu0 0
        %5265 = vmatprep.subr.bf16.mxu0 0
        %5266 = vmatpush1.bf16.msra.mxu0 0
        %5267 = vmatprep.subr.bf16.mxu0 0
        %5268 = vmatpush1.bf16.msra.mxu0 %v5251
        %5269 = vmatprep.subr.bf16.mxu0 0
        %5270 = vmatpush2.bf16.msra.mxu0 0
        %5271 = vmatprep.subr.bf16.mxu0 0
        %5272 = vmatpush2.bf16.msra.mxu0 0
        %5273 = vmatprep.subr.bf16.mxu0 0
        %5274 = vmatpush2.bf16.msra.mxu0 0
        %5275 = vmatprep.subr.bf16.mxu0 0
        %5276 = vmatpush2.bf16.msra.mxu0 0
        %5277 = vmatprep.subr.bf16.mxu0 0
        %5278 = vmatpush2.bf16.msra.mxu0 0
        %5279 = vmatprep.subr.bf16.mxu0 0
        %5280 = vmatpush2.bf16.msra.mxu0 0
        %5281 = vmatprep.subr.bf16.mxu0 0
        %5282 = vmatpush2.bf16.msra.mxu0 0
        %5283 = vmatprep.subr.bf16.mxu0 0
        %5284 = vmatpush2.bf16.msra.mxu0 0
        %5285 = vmatprep.mubr.bf16.mxu0 0
        %5286 = vmatmul.mubr.bf16.gmra.mxu0 %v5227
        %v5287 = vpop.f32.mrf.mxu0
        %v5288 = vadd.f32 0.0, %v5287
        %v5289 = vpop.f32.mrf.mxu0
        %v5290 = vpop.f32.mrf.mxu0
        %v5291 = vadd.f32 0.0, %v5290
        %v5292 = vpop.f32.mrf.mxu0
        %5293 = vmatprep.mubr.bf16.mxu0 0
        %5294 = vmatmul.mubr.bf16.gmra.mxu0 %v5230
        %v5295 = vpop.f32.mrf.mxu0
        %v5296 = vadd.f32 0.0, %v5295
        %v5297 = vpop.f32.mrf.mxu0
        %v5298 = vpop.f32.mrf.mxu0
        %v5299 = vadd.f32 0.0, %v5298
        %v5300 = vpop.f32.mrf.mxu0
        %5301 = vmatprep.mubr.bf16.mxu0 0
        %5302 = vmatmul.mubr.bf16.gmra.mxu0 %v5233
        %v5303 = vpop.f32.mrf.mxu0
        %v5304 = vadd.f32 0.0, %v5303
        %v5305 = vpop.f32.mrf.mxu0
        %v5306 = vpop.f32.mrf.mxu0
        %v5307 = vadd.f32 0.0, %v5306
        %v5308 = vpop.f32.mrf.mxu0
        %5309 = vmatprep.mubr.bf16.mxu0 0
        %5310 = vmatmul.mubr.bf16.gmra.mxu0 %v5236
        %v5311 = vpop.f32.mrf.mxu0
        %v5312 = vadd.f32 0.0, %v5311
        %v5313 = vpop.f32.mrf.mxu0
        %v5314 = vpop.f32.mrf.mxu0
        %v5315 = vadd.f32 0.0, %v5314
        %v5316 = vpop.f32.mrf.mxu0
        %5317 = vmatprep.mubr.bf16.mxu0 0
        %5318 = vmatmul.mubr.bf16.gmra.mxu0 %v5239
        %v5319 = vpop.f32.mrf.mxu0
        %v5320 = vadd.f32 0.0, %v5319
        %v5321 = vpop.f32.mrf.mxu0
        %v5322 = vpop.f32.mrf.mxu0
        %v5323 = vadd.f32 0.0, %v5322
        %v5324 = vpop.f32.mrf.mxu0
        %5325 = vmatprep.mubr.bf16.mxu0 0
        %5326 = vmatmul.mubr.bf16.gmra.mxu0 %v5242
        %v5327 = vpop.f32.mrf.mxu0
        %v5328 = vadd.f32 0.0, %v5327
        %v5329 = vpop.f32.mrf.mxu0
        %v5330 = vpop.f32.mrf.mxu0
        %v5331 = vadd.f32 0.0, %v5330
        %v5332 = vpop.f32.mrf.mxu0
        %5333 = vmatprep.mubr.bf16.mxu0 0
        %5334 = vmatmul.mubr.bf16.gmra.mxu0 %v5245
        %v5335 = vpop.f32.mrf.mxu0
        %v5336 = vadd.f32 0.0, %v5335
        %v5337 = vpop.f32.mrf.mxu0
        %v5338 = vpop.f32.mrf.mxu0
        %v5339 = vadd.f32 0.0, %v5338
        %v5340 = vpop.f32.mrf.mxu0
        %5341 = vmatprep.mubr.bf16.mxu0 0
        %5342 = vmatmul.mubr.bf16.gmra.mxu0 %v5248
        %v5343 = vpop.f32.mrf.mxu0
        %v5344 = vadd.f32 0.0, %v5343
        %v5345 = vpop.f32.mrf.mxu0
        %v5346 = vpop.f32.mrf.mxu0
        %v5347 = vadd.f32 0.0, %v5346
        %v5348 = vpop.f32.mrf.mxu0
        %5349 = vdwg.mxu0
        %v5350 = vadd.f32 %v4992, %v5288
        %v5351 = vadd.f32 %v4993, %v5291
        %v5352 = vadd.f32 %v4994, %v5296
        %v5353 = vadd.f32 %v4995, %v5299
        %v5354 = vadd.f32 %v4996, %v5304
        %v5355 = vadd.f32 %v4997, %v5307
        %v5356 = vadd.f32 %v4998, %v5312
        %v5357 = vadd.f32 %v4999, %v5315
        %v5358 = vadd.f32 %v5000, %v5320
        %v5359 = vadd.f32 %v5001, %v5323
        %v5360 = vadd.f32 %v5002, %v5328
        %v5361 = vadd.f32 %v5003, %v5331
        %v5362 = vadd.f32 %v5004, %v5336
        %v5363 = vadd.f32 %v5005, %v5339
        %v5364 = vadd.f32 %v5006, %v5344
        %v5365 = vadd.f32 %v5007, %v5347
        %s5366 = sadd.s32 %s307, 5
        %s5367 = smul.u32 %s5366, 3
        %s5368 = smul.addr %s5367, 4
        %s5369 = scalar_lea.vmem %s301, %s5368
        %v5370 = vld [vmem:[%s5369] sm:$0xf]
        %v5371 = vld [vmem:[%s5369 + $0x4] sm:$0xf]
        %v5372 = vld [vmem:[%s5369 + $0x8] sm:$0x1]
        %v5373 = vld [vmem:[%s5369 + $0xc] sm:$0xf]
        %v5374 = vld [vmem:[%s5369 + $0x10] sm:$0xf]
        %v5375 = vld [vmem:[%s5369 + $0x14] sm:$0x1]
        %v5376 = vld [vmem:[%s5369 + $0x18] sm:$0xf]
        %v5377 = vld [vmem:[%s5369 + $0x1c] sm:$0xf]
        %v5378 = vld [vmem:[%s5369 + $0x20] sm:$0x1]
        %v5379 = vld [vmem:[%s5369 + $0x24] sm:$0xf]
        %v5380 = vld [vmem:[%s5369 + $0x28] sm:$0xf]
        %v5381 = vld [vmem:[%s5369 + $0x2c] sm:$0x1]
        %v5382 = vld [vmem:[%s5369 + $0x30] sm:$0xf]
        %v5383 = vld [vmem:[%s5369 + $0x34] sm:$0xf]
        %v5384 = vld [vmem:[%s5369 + $0x38] sm:$0x1]
        %v5385 = vld [vmem:[%s5369 + $0x3c] sm:$0xf]
        %v5386 = vld [vmem:[%s5369 + $0x40] sm:$0xf]
        %v5387 = vld [vmem:[%s5369 + $0x44] sm:$0x1]
        %v5388 = vld [vmem:[%s5369 + $0x48] sm:$0xf]
        %v5389 = vld [vmem:[%s5369 + $0x4c] sm:$0xf]
        %v5390 = vld [vmem:[%s5369 + $0x50] sm:$0x1]
        %v5391 = vld [vmem:[%s5369 + $0x54] sm:$0xf]
        %v5392 = vld [vmem:[%s5369 + $0x58] sm:$0xf]
        %v5393 = vld [vmem:[%s5369 + $0x5c] sm:$0x1]
        %v5395 = vshrl.u32 %v5370, 16
        %v5397 = vrot.slane %v5395, 4
        %v5398 = vshll.u32 %v5370, 16
        %v5400 = vrot.slane %v5398, 5
        %v5401 = vor.u32 %v5397, %v5400
        %v5402 = vrot.slane %v5401, 4
        %v5404 = vshll.u32 %v5371, 16
        %v5406 = vrot.slane %v5404, 5
        %v5407 = vsel %vm3502, %v5402, %v5406
        %v5408 = vshrl.u32 %v5371, 16
        %v5410 = vrot.slane %v5408, 4
        %v5411 = vor.u32 %v5410, %v5406
        %v5412 = vrot.slane %v5411, 4
        %v5414 = vshll.u32 %v5372, 16
        %v5416 = vrot.slane %v5414, 5
        %v5417 = vsel %vm3502, %v5412, %v5416
        %v5419 = vshrl.u32 %v5373, 16
        %v5421 = vrot.slane %v5419, 4
        %v5422 = vshll.u32 %v5373, 16
        %v5424 = vrot.slane %v5422, 5
        %v5425 = vor.u32 %v5421, %v5424
        %v5426 = vrot.slane %v5425, 4
        %v5428 = vshll.u32 %v5374, 16
        %v5430 = vrot.slane %v5428, 5
        %v5431 = vsel %vm3502, %v5426, %v5430
        %v5432 = vshrl.u32 %v5374, 16
        %v5434 = vrot.slane %v5432, 4
        %v5435 = vor.u32 %v5434, %v5430
        %v5436 = vrot.slane %v5435, 4
        %v5438 = vshll.u32 %v5375, 16
        %v5440 = vrot.slane %v5438, 5
        %v5441 = vsel %vm3502, %v5436, %v5440
        %v5443 = vshrl.u32 %v5376, 16
        %v5445 = vrot.slane %v5443, 4
        %v5446 = vshll.u32 %v5376, 16
        %v5448 = vrot.slane %v5446, 5
        %v5449 = vor.u32 %v5445, %v5448
        %v5450 = vrot.slane %v5449, 4
        %v5452 = vshll.u32 %v5377, 16
        %v5454 = vrot.slane %v5452, 5
        %v5455 = vsel %vm3502, %v5450, %v5454
        %v5456 = vshrl.u32 %v5377, 16
        %v5458 = vrot.slane %v5456, 4
        %v5459 = vor.u32 %v5458, %v5454
        %v5460 = vrot.slane %v5459, 4
        %v5462 = vshll.u32 %v5378, 16
        %v5464 = vrot.slane %v5462, 5
        %v5465 = vsel %vm3502, %v5460, %v5464
        %v5467 = vshrl.u32 %v5379, 16
        %v5469 = vrot.slane %v5467, 4
        %v5470 = vshll.u32 %v5379, 16
        %v5472 = vrot.slane %v5470, 5
        %v5473 = vor.u32 %v5469, %v5472
        %v5474 = vrot.slane %v5473, 4
        %v5476 = vshll.u32 %v5380, 16
        %v5478 = vrot.slane %v5476, 5
        %v5479 = vsel %vm3502, %v5474, %v5478
        %v5480 = vshrl.u32 %v5380, 16
        %v5482 = vrot.slane %v5480, 4
        %v5483 = vor.u32 %v5482, %v5478
        %v5484 = vrot.slane %v5483, 4
        %v5486 = vshll.u32 %v5381, 16
        %v5488 = vrot.slane %v5486, 5
        %v5489 = vsel %vm3502, %v5484, %v5488
        %v5491 = vshrl.u32 %v5382, 16
        %v5493 = vrot.slane %v5491, 4
        %v5494 = vshll.u32 %v5382, 16
        %v5496 = vrot.slane %v5494, 5
        %v5497 = vor.u32 %v5493, %v5496
        %v5498 = vrot.slane %v5497, 4
        %v5500 = vshll.u32 %v5383, 16
        %v5502 = vrot.slane %v5500, 5
        %v5503 = vsel %vm3502, %v5498, %v5502
        %v5504 = vshrl.u32 %v5383, 16
        %v5506 = vrot.slane %v5504, 4
        %v5507 = vor.u32 %v5506, %v5502
        %v5508 = vrot.slane %v5507, 4
        %v5510 = vshll.u32 %v5384, 16
        %v5512 = vrot.slane %v5510, 5
        %v5513 = vsel %vm3502, %v5508, %v5512
        %v5515 = vshrl.u32 %v5385, 16
        %v5517 = vrot.slane %v5515, 4
        %v5518 = vshll.u32 %v5385, 16
        %v5520 = vrot.slane %v5518, 5
        %v5521 = vor.u32 %v5517, %v5520
        %v5522 = vrot.slane %v5521, 4
        %v5524 = vshll.u32 %v5386, 16
        %v5526 = vrot.slane %v5524, 5
        %v5527 = vsel %vm3502, %v5522, %v5526
        %v5528 = vshrl.u32 %v5386, 16
        %v5530 = vrot.slane %v5528, 4
        %v5531 = vor.u32 %v5530, %v5526
        %v5532 = vrot.slane %v5531, 4
        %v5534 = vshll.u32 %v5387, 16
        %v5536 = vrot.slane %v5534, 5
        %v5537 = vsel %vm3502, %v5532, %v5536
        %v5539 = vshrl.u32 %v5388, 16
        %v5541 = vrot.slane %v5539, 4
        %v5542 = vshll.u32 %v5388, 16
        %v5544 = vrot.slane %v5542, 5
        %v5545 = vor.u32 %v5541, %v5544
        %v5546 = vrot.slane %v5545, 4
        %v5548 = vshll.u32 %v5389, 16
        %v5550 = vrot.slane %v5548, 5
        %v5551 = vsel %vm3502, %v5546, %v5550
        %v5552 = vshrl.u32 %v5389, 16
        %v5554 = vrot.slane %v5552, 4
        %v5555 = vor.u32 %v5554, %v5550
        %v5556 = vrot.slane %v5555, 4
        %v5558 = vshll.u32 %v5390, 16
        %v5560 = vrot.slane %v5558, 5
        %v5561 = vsel %vm3502, %v5556, %v5560
        %v5563 = vshrl.u32 %v5391, 16
        %v5565 = vrot.slane %v5563, 4
        %v5566 = vshll.u32 %v5391, 16
        %v5568 = vrot.slane %v5566, 5
        %v5569 = vor.u32 %v5565, %v5568
        %v5570 = vrot.slane %v5569, 4
        %v5572 = vshll.u32 %v5392, 16
        %v5574 = vrot.slane %v5572, 5
        %v5575 = vsel %vm3502, %v5570, %v5574
        %v5576 = vshrl.u32 %v5392, 16
        %v5578 = vrot.slane %v5576, 4
        %v5579 = vor.u32 %v5578, %v5574
        %v5580 = vrot.slane %v5579, 4
        %v5582 = vshll.u32 %v5393, 16
        %v5584 = vrot.slane %v5582, 5
        %v5585 = vsel %vm3502, %v5580, %v5584
        %s5586 = scalar_lea.vmem %s4, 30
        %v5587 = vld [vmem:[%s5586] sm:$0x3]
        %v5588 = vunpack.c.l.b16 %v5407
        %v5589 = vunpack.c.l.b16 %v5417
        %v5590 = vunpack.c.l.b16 %v5431
        %v5591 = vunpack.c.l.b16 %v5441
        %v5592 = vunpack.c.l.b16 %v5455
        %v5593 = vunpack.c.l.b16 %v5465
        %v5594 = vunpack.c.l.b16 %v5479
        %v5595 = vunpack.c.l.b16 %v5489
        %v5596 = vunpack.c.l.b16 %v5503
        %v5597 = vunpack.c.l.b16 %v5513
        %v5598 = vunpack.c.l.b16 %v5527
        %v5599 = vunpack.c.l.b16 %v5537
        %v5600 = vunpack.c.l.b16 %v5551
        %v5601 = vunpack.c.l.b16 %v5561
        %v5602 = vunpack.c.l.b16 %v5575
        %v5603 = vunpack.c.l.b16 %v5585
        %v5604 = vpack.c.b16 %v5589, %v5588
        %v5605 = vpack.c.b16 %v5591, %v5590
        %v5606 = vpack.c.b16 %v5593, %v5592
        %v5607 = vpack.c.b16 %v5595, %v5594
        %v5608 = vpack.c.b16 %v5597, %v5596
        %v5609 = vpack.c.b16 %v5599, %v5598
        %v5610 = vpack.c.b16 %v5601, %v5600
        %v5611 = vpack.c.b16 %v5603, %v5602
        %v5613 = vsel %vm596, %v5604, 0
        %v5616 = vsel %vm596, %v5605, 0
        %v5619 = vsel %vm596, %v5606, 0
        %v5622 = vsel %vm596, %v5607, 0
        %v5625 = vsel %vm596, %v5608, 0
        %v5628 = vsel %vm596, %v5609, 0
        %v5631 = vsel %vm596, %v5610, 0
        %v5634 = vsel %vm596, %v5611, 0
        %v5637 = vsel %vm621, %v5587, 0
        %5639 = vmatprep.subr.bf16.mxu0 0
        %5640 = vmatpush1.bf16.msra.mxu0 0
        %5641 = vmatprep.subr.bf16.mxu0 0
        %5642 = vmatpush1.bf16.msra.mxu0 0
        %5643 = vmatprep.subr.bf16.mxu0 0
        %5644 = vmatpush1.bf16.msra.mxu0 0
        %5645 = vmatprep.subr.bf16.mxu0 0
        %5646 = vmatpush1.bf16.msra.mxu0 0
        %5647 = vmatprep.subr.bf16.mxu0 0
        %5648 = vmatpush1.bf16.msra.mxu0 0
        %5649 = vmatprep.subr.bf16.mxu0 0
        %5650 = vmatpush1.bf16.msra.mxu0 0
        %5651 = vmatprep.subr.bf16.mxu0 0
        %5652 = vmatpush1.bf16.msra.mxu0 0
        %5653 = vmatprep.subr.bf16.mxu0 0
        %5654 = vmatpush1.bf16.msra.mxu0 %v5637
        %5655 = vmatprep.subr.bf16.mxu0 0
        %5656 = vmatpush2.bf16.msra.mxu0 0
        %5657 = vmatprep.subr.bf16.mxu0 0
        %5658 = vmatpush2.bf16.msra.mxu0 0
        %5659 = vmatprep.subr.bf16.mxu0 0
        %5660 = vmatpush2.bf16.msra.mxu0 0
        %5661 = vmatprep.subr.bf16.mxu0 0
        %5662 = vmatpush2.bf16.msra.mxu0 0
        %5663 = vmatprep.subr.bf16.mxu0 0
        %5664 = vmatpush2.bf16.msra.mxu0 0
        %5665 = vmatprep.subr.bf16.mxu0 0
        %5666 = vmatpush2.bf16.msra.mxu0 0
        %5667 = vmatprep.subr.bf16.mxu0 0
        %5668 = vmatpush2.bf16.msra.mxu0 0
        %5669 = vmatprep.subr.bf16.mxu0 0
        %5670 = vmatpush2.bf16.msra.mxu0 0
        %5671 = vmatprep.mubr.bf16.mxu0 0
        %5672 = vmatmul.mubr.bf16.gmra.mxu0 %v5613
        %v5673 = vpop.f32.mrf.mxu0
        %v5674 = vadd.f32 0.0, %v5673
        %v5675 = vpop.f32.mrf.mxu0
        %v5676 = vpop.f32.mrf.mxu0
        %v5677 = vadd.f32 0.0, %v5676
        %v5678 = vpop.f32.mrf.mxu0
        %5679 = vmatprep.mubr.bf16.mxu0 0
        %5680 = vmatmul.mubr.bf16.gmra.mxu0 %v5616
        %v5681 = vpop.f32.mrf.mxu0
        %v5682 = vadd.f32 0.0, %v5681
        %v5683 = vpop.f32.mrf.mxu0
        %v5684 = vpop.f32.mrf.mxu0
        %v5685 = vadd.f32 0.0, %v5684
        %v5686 = vpop.f32.mrf.mxu0
        %5687 = vmatprep.mubr.bf16.mxu0 0
        %5688 = vmatmul.mubr.bf16.gmra.mxu0 %v5619
        %v5689 = vpop.f32.mrf.mxu0
        %v5690 = vadd.f32 0.0, %v5689
        %v5691 = vpop.f32.mrf.mxu0
        %v5692 = vpop.f32.mrf.mxu0
        %v5693 = vadd.f32 0.0, %v5692
        %v5694 = vpop.f32.mrf.mxu0
        %5695 = vmatprep.mubr.bf16.mxu0 0
        %5696 = vmatmul.mubr.bf16.gmra.mxu0 %v5622
        %v5697 = vpop.f32.mrf.mxu0
        %v5698 = vadd.f32 0.0, %v5697
        %v5699 = vpop.f32.mrf.mxu0
        %v5700 = vpop.f32.mrf.mxu0
        %v5701 = vadd.f32 0.0, %v5700
        %v5702 = vpop.f32.mrf.mxu0
        %5703 = vmatprep.mubr.bf16.mxu0 0
        %5704 = vmatmul.mubr.bf16.gmra.mxu0 %v5625
        %v5705 = vpop.f32.mrf.mxu0
        %v5706 = vadd.f32 0.0, %v5705
        %v5707 = vpop.f32.mrf.mxu0
        %v5708 = vpop.f32.mrf.mxu0
        %v5709 = vadd.f32 0.0, %v5708
        %v5710 = vpop.f32.mrf.mxu0
        %5711 = vmatprep.mubr.bf16.mxu0 0
        %5712 = vmatmul.mubr.bf16.gmra.mxu0 %v5628
        %v5713 = vpop.f32.mrf.mxu0
        %v5714 = vadd.f32 0.0, %v5713
        %v5715 = vpop.f32.mrf.mxu0
        %v5716 = vpop.f32.mrf.mxu0
        %v5717 = vadd.f32 0.0, %v5716
        %v5718 = vpop.f32.mrf.mxu0
        %5719 = vmatprep.mubr.bf16.mxu0 0
        %5720 = vmatmul.mubr.bf16.gmra.mxu0 %v5631
        %v5721 = vpop.f32.mrf.mxu0
        %v5722 = vadd.f32 0.0, %v5721
        %v5723 = vpop.f32.mrf.mxu0
        %v5724 = vpop.f32.mrf.mxu0
        %v5725 = vadd.f32 0.0, %v5724
        %v5726 = vpop.f32.mrf.mxu0
        %5727 = vmatprep.mubr.bf16.mxu0 0
        %5728 = vmatmul.mubr.bf16.gmra.mxu0 %v5634
        %v5729 = vpop.f32.mrf.mxu0
        %v5730 = vadd.f32 0.0, %v5729
        %v5731 = vpop.f32.mrf.mxu0
        %v5732 = vpop.f32.mrf.mxu0
        %v5733 = vadd.f32 0.0, %v5732
        %v5734 = vpop.f32.mrf.mxu0
        %5735 = vdwg.mxu0
        %v5736 = vadd.f32 %v5350, %v5674
        %v5737 = vadd.f32 %v5351, %v5677
        %v5738 = vadd.f32 %v5352, %v5682
        %v5739 = vadd.f32 %v5353, %v5685
        %v5740 = vadd.f32 %v5354, %v5690
        %v5741 = vadd.f32 %v5355, %v5693
        %v5742 = vadd.f32 %v5356, %v5698
        %v5743 = vadd.f32 %v5357, %v5701
        %v5744 = vadd.f32 %v5358, %v5706
        %v5745 = vadd.f32 %v5359, %v5709
        %v5746 = vadd.f32 %v5360, %v5714
        %v5747 = vadd.f32 %v5361, %v5717
        %v5748 = vadd.f32 %v5362, %v5722
        %v5749 = vadd.f32 %v5363, %v5725
        %v5750 = vadd.f32 %v5364, %v5730
        %v5751 = vadd.f32 %v5365, %v5733
        %v5752 = vld [vmem:[%s5369] sm:$0xe]
        %v5753 = vld [vmem:[%s5369 + $0x8] sm:$0x3]
        %v5754 = vld [vmem:[%s5369 + $0xc] sm:$0xe]
        %v5755 = vld [vmem:[%s5369 + $0x14] sm:$0x3]
        %v5756 = vld [vmem:[%s5369 + $0x18] sm:$0xe]
        %v5757 = vld [vmem:[%s5369 + $0x20] sm:$0x3]
        %v5758 = vld [vmem:[%s5369 + $0x24] sm:$0xe]
        %v5759 = vld [vmem:[%s5369 + $0x2c] sm:$0x3]
        %v5760 = vld [vmem:[%s5369 + $0x30] sm:$0xe]
        %v5761 = vld [vmem:[%s5369 + $0x38] sm:$0x3]
        %v5762 = vld [vmem:[%s5369 + $0x3c] sm:$0xe]
        %v5763 = vld [vmem:[%s5369 + $0x44] sm:$0x3]
        %v5764 = vld [vmem:[%s5369 + $0x48] sm:$0xe]
        %v5765 = vld [vmem:[%s5369 + $0x50] sm:$0x3]
        %v5766 = vld [vmem:[%s5369 + $0x54] sm:$0xe]
        %v5767 = vld [vmem:[%s5369 + $0x5c] sm:$0x3]
        %v5769 = vshrl.u32 %v5752, 16
        %v5771 = vrot.slane %v5769, 5
        %v5772 = vshll.u32 %v5752, 16
        %v5774 = vrot.slane %v5772, 6
        %v5775 = vor.u32 %v5771, %v5774
        %v5776 = vrot.slane %v5775, 4
        %v5777 = vrot.slane %v5408, 5
        %v5778 = vrot.slane %v5404, 6
        %v5779 = vor.u32 %v5777, %v5778
        %v5780 = vsel %vm338, %v5776, %v5779
        %v5781 = vrot.slane %v5779, 4
        %v5783 = vshrl.u32 %v5753, 16
        %v5785 = vrot.slane %v5783, 5
        %v5786 = vshll.u32 %v5753, 16
        %v5788 = vrot.slane %v5786, 6
        %v5789 = vor.u32 %v5785, %v5788
        %v5790 = vsel %vm338, %v5781, %v5789
        %v5792 = vshrl.u32 %v5754, 16
        %v5794 = vrot.slane %v5792, 5
        %v5795 = vshll.u32 %v5754, 16
        %v5797 = vrot.slane %v5795, 6
        %v5798 = vor.u32 %v5794, %v5797
        %v5799 = vrot.slane %v5798, 4
        %v5800 = vrot.slane %v5432, 5
        %v5801 = vrot.slane %v5428, 6
        %v5802 = vor.u32 %v5800, %v5801
        %v5803 = vsel %vm338, %v5799, %v5802
        %v5804 = vrot.slane %v5802, 4
        %v5806 = vshrl.u32 %v5755, 16
        %v5808 = vrot.slane %v5806, 5
        %v5809 = vshll.u32 %v5755, 16
        %v5811 = vrot.slane %v5809, 6
        %v5812 = vor.u32 %v5808, %v5811
        %v5813 = vsel %vm338, %v5804, %v5812
        %v5815 = vshrl.u32 %v5756, 16
        %v5817 = vrot.slane %v5815, 5
        %v5818 = vshll.u32 %v5756, 16
        %v5820 = vrot.slane %v5818, 6
        %v5821 = vor.u32 %v5817, %v5820
        %v5822 = vrot.slane %v5821, 4
        %v5823 = vrot.slane %v5456, 5
        %v5824 = vrot.slane %v5452, 6
        %v5825 = vor.u32 %v5823, %v5824
        %v5826 = vsel %vm338, %v5822, %v5825
        %v5827 = vrot.slane %v5825, 4
        %v5829 = vshrl.u32 %v5757, 16
        %v5831 = vrot.slane %v5829, 5
        %v5832 = vshll.u32 %v5757, 16
        %v5834 = vrot.slane %v5832, 6
        %v5835 = vor.u32 %v5831, %v5834
        %v5836 = vsel %vm338, %v5827, %v5835
        %v5838 = vshrl.u32 %v5758, 16
        %v5840 = vrot.slane %v5838, 5
        %v5841 = vshll.u32 %v5758, 16
        %v5843 = vrot.slane %v5841, 6
        %v5844 = vor.u32 %v5840, %v5843
        %v5845 = vrot.slane %v5844, 4
        %v5846 = vrot.slane %v5480, 5
        %v5847 = vrot.slane %v5476, 6
        %v5848 = vor.u32 %v5846, %v5847
        %v5849 = vsel %vm338, %v5845, %v5848
        %v5850 = vrot.slane %v5848, 4
        %v5852 = vshrl.u32 %v5759, 16
        %v5854 = vrot.slane %v5852, 5
        %v5855 = vshll.u32 %v5759, 16
        %v5857 = vrot.slane %v5855, 6
        %v5858 = vor.u32 %v5854, %v5857
        %v5859 = vsel %vm338, %v5850, %v5858
        %v5861 = vshrl.u32 %v5760, 16
        %v5863 = vrot.slane %v5861, 5
        %v5864 = vshll.u32 %v5760, 16
        %v5866 = vrot.slane %v5864, 6
        %v5867 = vor.u32 %v5863, %v5866
        %v5868 = vrot.slane %v5867, 4
        %v5869 = vrot.slane %v5504, 5
        %v5870 = vrot.slane %v5500, 6
        %v5871 = vor.u32 %v5869, %v5870
        %v5872 = vsel %vm338, %v5868, %v5871
        %v5873 = vrot.slane %v5871, 4
        %v5875 = vshrl.u32 %v5761, 16
        %v5877 = vrot.slane %v5875, 5
        %v5878 = vshll.u32 %v5761, 16
        %v5880 = vrot.slane %v5878, 6
        %v5881 = vor.u32 %v5877, %v5880
        %v5882 = vsel %vm338, %v5873, %v5881
        %v5884 = vshrl.u32 %v5762, 16
        %v5886 = vrot.slane %v5884, 5
        %v5887 = vshll.u32 %v5762, 16
        %v5889 = vrot.slane %v5887, 6
        %v5890 = vor.u32 %v5886, %v5889
        %v5891 = vrot.slane %v5890, 4
        %v5892 = vrot.slane %v5528, 5
        %v5893 = vrot.slane %v5524, 6
        %v5894 = vor.u32 %v5892, %v5893
        %v5895 = vsel %vm338, %v5891, %v5894
        %v5896 = vrot.slane %v5894, 4
        %v5898 = vshrl.u32 %v5763, 16
        %v5900 = vrot.slane %v5898, 5
        %v5901 = vshll.u32 %v5763, 16
        %v5903 = vrot.slane %v5901, 6
        %v5904 = vor.u32 %v5900, %v5903
        %v5905 = vsel %vm338, %v5896, %v5904
        %v5907 = vshrl.u32 %v5764, 16
        %v5909 = vrot.slane %v5907, 5
        %v5910 = vshll.u32 %v5764, 16
        %v5912 = vrot.slane %v5910, 6
        %v5913 = vor.u32 %v5909, %v5912
        %v5914 = vrot.slane %v5913, 4
        %v5915 = vrot.slane %v5552, 5
        %v5916 = vrot.slane %v5548, 6
        %v5917 = vor.u32 %v5915, %v5916
        %v5918 = vsel %vm338, %v5914, %v5917
        %v5919 = vrot.slane %v5917, 4
        %v5921 = vshrl.u32 %v5765, 16
        %v5923 = vrot.slane %v5921, 5
        %v5924 = vshll.u32 %v5765, 16
        %v5926 = vrot.slane %v5924, 6
        %v5927 = vor.u32 %v5923, %v5926
        %v5928 = vsel %vm338, %v5919, %v5927
        %v5930 = vshrl.u32 %v5766, 16
        %v5932 = vrot.slane %v5930, 5
        %v5933 = vshll.u32 %v5766, 16
        %v5935 = vrot.slane %v5933, 6
        %v5936 = vor.u32 %v5932, %v5935
        %v5937 = vrot.slane %v5936, 4
        %v5938 = vrot.slane %v5576, 5
        %v5939 = vrot.slane %v5572, 6
        %v5940 = vor.u32 %v5938, %v5939
        %v5941 = vsel %vm338, %v5937, %v5940
        %v5942 = vrot.slane %v5940, 4
        %v5944 = vshrl.u32 %v5767, 16
        %v5946 = vrot.slane %v5944, 5
        %v5947 = vshll.u32 %v5767, 16
        %v5949 = vrot.slane %v5947, 6
        %v5950 = vor.u32 %v5946, %v5949
        %v5951 = vsel %vm338, %v5942, %v5950
        %s5952 = scalar_lea.vmem %s4, 32
        %v5953 = vld [vmem:[%s5952] sm:$0x3]
        %v5954 = vunpack.c.l.b16 %v5780
        %v5955 = vunpack.c.l.b16 %v5790
        %v5956 = vunpack.c.l.b16 %v5803
        %v5957 = vunpack.c.l.b16 %v5813
        %v5958 = vunpack.c.l.b16 %v5826
        %v5959 = vunpack.c.l.b16 %v5836
        %v5960 = vunpack.c.l.b16 %v5849
        %v5961 = vunpack.c.l.b16 %v5859
        %v5962 = vunpack.c.l.b16 %v5872
        %v5963 = vunpack.c.l.b16 %v5882
        %v5964 = vunpack.c.l.b16 %v5895
        %v5965 = vunpack.c.l.b16 %v5905
        %v5966 = vunpack.c.l.b16 %v5918
        %v5967 = vunpack.c.l.b16 %v5928
        %v5968 = vunpack.c.l.b16 %v5941
        %v5969 = vunpack.c.l.b16 %v5951
        %v5970 = vpack.c.b16 %v5955, %v5954
        %v5971 = vpack.c.b16 %v5957, %v5956
        %v5972 = vpack.c.b16 %v5959, %v5958
        %v5973 = vpack.c.b16 %v5961, %v5960
        %v5974 = vpack.c.b16 %v5963, %v5962
        %v5975 = vpack.c.b16 %v5965, %v5964
        %v5976 = vpack.c.b16 %v5967, %v5966
        %v5977 = vpack.c.b16 %v5969, %v5968
        %v5979 = vsel %vm596, %v5970, 0
        %v5982 = vsel %vm596, %v5971, 0
        %v5985 = vsel %vm596, %v5972, 0
        %v5988 = vsel %vm596, %v5973, 0
        %v5991 = vsel %vm596, %v5974, 0
        %v5994 = vsel %vm596, %v5975, 0
        %v5997 = vsel %vm596, %v5976, 0
        %v6000 = vsel %vm596, %v5977, 0
        %v6003 = vsel %vm621, %v5953, 0
        %6005 = vmatprep.subr.bf16.mxu0 0
        %6006 = vmatpush1.bf16.msra.mxu0 0
        %6007 = vmatprep.subr.bf16.mxu0 0
        %6008 = vmatpush1.bf16.msra.mxu0 0
        %6009 = vmatprep.subr.bf16.mxu0 0
        %6010 = vmatpush1.bf16.msra.mxu0 0
        %6011 = vmatprep.subr.bf16.mxu0 0
        %6012 = vmatpush1.bf16.msra.mxu0 0
        %6013 = vmatprep.subr.bf16.mxu0 0
        %6014 = vmatpush1.bf16.msra.mxu0 0
        %6015 = vmatprep.subr.bf16.mxu0 0
        %6016 = vmatpush1.bf16.msra.mxu0 0
        %6017 = vmatprep.subr.bf16.mxu0 0
        %6018 = vmatpush1.bf16.msra.mxu0 0
        %6019 = vmatprep.subr.bf16.mxu0 0
        %6020 = vmatpush1.bf16.msra.mxu0 %v6003
        %6021 = vmatprep.subr.bf16.mxu0 0
        %6022 = vmatpush2.bf16.msra.mxu0 0
        %6023 = vmatprep.subr.bf16.mxu0 0
        %6024 = vmatpush2.bf16.msra.mxu0 0
        %6025 = vmatprep.subr.bf16.mxu0 0
        %6026 = vmatpush2.bf16.msra.mxu0 0
        %6027 = vmatprep.subr.bf16.mxu0 0
        %6028 = vmatpush2.bf16.msra.mxu0 0
        %6029 = vmatprep.subr.bf16.mxu0 0
        %6030 = vmatpush2.bf16.msra.mxu0 0
        %6031 = vmatprep.subr.bf16.mxu0 0
        %6032 = vmatpush2.bf16.msra.mxu0 0
        %6033 = vmatprep.subr.bf16.mxu0 0
        %6034 = vmatpush2.bf16.msra.mxu0 0
        %6035 = vmatprep.subr.bf16.mxu0 0
        %6036 = vmatpush2.bf16.msra.mxu0 0
        %6037 = vmatprep.mubr.bf16.mxu0 0
        %6038 = vmatmul.mubr.bf16.gmra.mxu0 %v5979
        %v6039 = vpop.f32.mrf.mxu0
        %v6040 = vadd.f32 0.0, %v6039
        %v6041 = vpop.f32.mrf.mxu0
        %v6042 = vpop.f32.mrf.mxu0
        %v6043 = vadd.f32 0.0, %v6042
        %v6044 = vpop.f32.mrf.mxu0
        %6045 = vmatprep.mubr.bf16.mxu0 0
        %6046 = vmatmul.mubr.bf16.gmra.mxu0 %v5982
        %v6047 = vpop.f32.mrf.mxu0
        %v6048 = vadd.f32 0.0, %v6047
        %v6049 = vpop.f32.mrf.mxu0
        %v6050 = vpop.f32.mrf.mxu0
        %v6051 = vadd.f32 0.0, %v6050
        %v6052 = vpop.f32.mrf.mxu0
        %6053 = vmatprep.mubr.bf16.mxu0 0
        %6054 = vmatmul.mubr.bf16.gmra.mxu0 %v5985
        %v6055 = vpop.f32.mrf.mxu0
        %v6056 = vadd.f32 0.0, %v6055
        %v6057 = vpop.f32.mrf.mxu0
        %v6058 = vpop.f32.mrf.mxu0
        %v6059 = vadd.f32 0.0, %v6058
        %v6060 = vpop.f32.mrf.mxu0
        %6061 = vmatprep.mubr.bf16.mxu0 0
        %6062 = vmatmul.mubr.bf16.gmra.mxu0 %v5988
        %v6063 = vpop.f32.mrf.mxu0
        %v6064 = vadd.f32 0.0, %v6063
        %v6065 = vpop.f32.mrf.mxu0
        %v6066 = vpop.f32.mrf.mxu0
        %v6067 = vadd.f32 0.0, %v6066
        %v6068 = vpop.f32.mrf.mxu0
        %6069 = vmatprep.mubr.bf16.mxu0 0
        %6070 = vmatmul.mubr.bf16.gmra.mxu0 %v5991
        %v6071 = vpop.f32.mrf.mxu0
        %v6072 = vadd.f32 0.0, %v6071
        %v6073 = vpop.f32.mrf.mxu0
        %v6074 = vpop.f32.mrf.mxu0
        %v6075 = vadd.f32 0.0, %v6074
        %v6076 = vpop.f32.mrf.mxu0
        %6077 = vmatprep.mubr.bf16.mxu0 0
        %6078 = vmatmul.mubr.bf16.gmra.mxu0 %v5994
        %v6079 = vpop.f32.mrf.mxu0
        %v6080 = vadd.f32 0.0, %v6079
        %v6081 = vpop.f32.mrf.mxu0
        %v6082 = vpop.f32.mrf.mxu0
        %v6083 = vadd.f32 0.0, %v6082
        %v6084 = vpop.f32.mrf.mxu0
        %6085 = vmatprep.mubr.bf16.mxu0 0
        %6086 = vmatmul.mubr.bf16.gmra.mxu0 %v5997
        %v6087 = vpop.f32.mrf.mxu0
        %v6088 = vadd.f32 0.0, %v6087
        %v6089 = vpop.f32.mrf.mxu0
        %v6090 = vpop.f32.mrf.mxu0
        %v6091 = vadd.f32 0.0, %v6090
        %v6092 = vpop.f32.mrf.mxu0
        %6093 = vmatprep.mubr.bf16.mxu0 0
        %6094 = vmatmul.mubr.bf16.gmra.mxu0 %v6000
        %v6095 = vpop.f32.mrf.mxu0
        %v6096 = vadd.f32 0.0, %v6095
        %v6097 = vpop.f32.mrf.mxu0
        %v6098 = vpop.f32.mrf.mxu0
        %v6099 = vadd.f32 0.0, %v6098
        %v6100 = vpop.f32.mrf.mxu0
        %6101 = vdwg.mxu0
        %v6102 = vadd.f32 %v5736, %v6040
        %v6103 = vadd.f32 %v5737, %v6043
        %v6104 = vadd.f32 %v5738, %v6048
        %v6105 = vadd.f32 %v5739, %v6051
        %v6106 = vadd.f32 %v5740, %v6056
        %v6107 = vadd.f32 %v5741, %v6059
        %v6108 = vadd.f32 %v5742, %v6064
        %v6109 = vadd.f32 %v5743, %v6067
        %v6110 = vadd.f32 %v5744, %v6072
        %v6111 = vadd.f32 %v5745, %v6075
        %v6112 = vadd.f32 %v5746, %v6080
        %v6113 = vadd.f32 %v5747, %v6083
        %v6114 = vadd.f32 %v5748, %v6088
        %v6115 = vadd.f32 %v5749, %v6091
        %v6116 = vadd.f32 %v5750, %v6096
        %v6117 = vadd.f32 %v5751, %v6099
        %v6118 = vld [vmem:[%s5369] sm:$0xc]
        %v6119 = vld [vmem:[%s5369 + $0x8] sm:$0x7]
        %v6120 = vld [vmem:[%s5369 + $0xc] sm:$0xc]
        %v6121 = vld [vmem:[%s5369 + $0x14] sm:$0x7]
        %v6122 = vld [vmem:[%s5369 + $0x18] sm:$0xc]
        %v6123 = vld [vmem:[%s5369 + $0x20] sm:$0x7]
        %v6124 = vld [vmem:[%s5369 + $0x24] sm:$0xc]
        %v6125 = vld [vmem:[%s5369 + $0x2c] sm:$0x7]
        %v6126 = vld [vmem:[%s5369 + $0x30] sm:$0xc]
        %v6127 = vld [vmem:[%s5369 + $0x38] sm:$0x7]
        %v6128 = vld [vmem:[%s5369 + $0x3c] sm:$0xc]
        %v6129 = vld [vmem:[%s5369 + $0x44] sm:$0x7]
        %v6130 = vld [vmem:[%s5369 + $0x48] sm:$0xc]
        %v6131 = vld [vmem:[%s5369 + $0x50] sm:$0x7]
        %v6132 = vld [vmem:[%s5369 + $0x54] sm:$0xc]
        %v6133 = vld [vmem:[%s5369 + $0x5c] sm:$0x7]
        %v6135 = vshrl.u32 %v6118, 16
        %v6137 = vrot.slane %v6135, 6
        %v6138 = vshll.u32 %v6118, 16
        %v6140 = vrot.slane %v6138, 7
        %v6141 = vor.u32 %v6137, %v6140
        %v6142 = vrot.slane %v6141, 4
        %v6143 = vrot.slane %v5408, 6
        %v6144 = vrot.slane %v5404, 7
        %v6145 = vor.u32 %v6143, %v6144
        %v6146 = vsel %vm4213, %v6142, %v6145
        %v6147 = vrot.slane %v6145, 4
        %v6149 = vshrl.u32 %v6119, 16
        %v6151 = vrot.slane %v6149, 6
        %v6152 = vshll.u32 %v6119, 16
        %v6154 = vrot.slane %v6152, 7
        %v6155 = vor.u32 %v6151, %v6154
        %v6156 = vsel %vm4213, %v6147, %v6155
        %v6158 = vshrl.u32 %v6120, 16
        %v6160 = vrot.slane %v6158, 6
        %v6161 = vshll.u32 %v6120, 16
        %v6163 = vrot.slane %v6161, 7
        %v6164 = vor.u32 %v6160, %v6163
        %v6165 = vrot.slane %v6164, 4
        %v6166 = vrot.slane %v5432, 6
        %v6167 = vrot.slane %v5428, 7
        %v6168 = vor.u32 %v6166, %v6167
        %v6169 = vsel %vm4213, %v6165, %v6168
        %v6170 = vrot.slane %v6168, 4
        %v6172 = vshrl.u32 %v6121, 16
        %v6174 = vrot.slane %v6172, 6
        %v6175 = vshll.u32 %v6121, 16
        %v6177 = vrot.slane %v6175, 7
        %v6178 = vor.u32 %v6174, %v6177
        %v6179 = vsel %vm4213, %v6170, %v6178
        %v6181 = vshrl.u32 %v6122, 16
        %v6183 = vrot.slane %v6181, 6
        %v6184 = vshll.u32 %v6122, 16
        %v6186 = vrot.slane %v6184, 7
        %v6187 = vor.u32 %v6183, %v6186
        %v6188 = vrot.slane %v6187, 4
        %v6189 = vrot.slane %v5456, 6
        %v6190 = vrot.slane %v5452, 7
        %v6191 = vor.u32 %v6189, %v6190
        %v6192 = vsel %vm4213, %v6188, %v6191
        %v6193 = vrot.slane %v6191, 4
        %v6195 = vshrl.u32 %v6123, 16
        %v6197 = vrot.slane %v6195, 6
        %v6198 = vshll.u32 %v6123, 16
        %v6200 = vrot.slane %v6198, 7
        %v6201 = vor.u32 %v6197, %v6200
        %v6202 = vsel %vm4213, %v6193, %v6201
        %v6204 = vshrl.u32 %v6124, 16
        %v6206 = vrot.slane %v6204, 6
        %v6207 = vshll.u32 %v6124, 16
        %v6209 = vrot.slane %v6207, 7
        %v6210 = vor.u32 %v6206, %v6209
        %v6211 = vrot.slane %v6210, 4
        %v6212 = vrot.slane %v5480, 6
        %v6213 = vrot.slane %v5476, 7
        %v6214 = vor.u32 %v6212, %v6213
        %v6215 = vsel %vm4213, %v6211, %v6214
        %v6216 = vrot.slane %v6214, 4
        %v6218 = vshrl.u32 %v6125, 16
        %v6220 = vrot.slane %v6218, 6
        %v6221 = vshll.u32 %v6125, 16
        %v6223 = vrot.slane %v6221, 7
        %v6224 = vor.u32 %v6220, %v6223
        %v6225 = vsel %vm4213, %v6216, %v6224
        %v6227 = vshrl.u32 %v6126, 16
        %v6229 = vrot.slane %v6227, 6
        %v6230 = vshll.u32 %v6126, 16
        %v6232 = vrot.slane %v6230, 7
        %v6233 = vor.u32 %v6229, %v6232
        %v6234 = vrot.slane %v6233, 4
        %v6235 = vrot.slane %v5504, 6
        %v6236 = vrot.slane %v5500, 7
        %v6237 = vor.u32 %v6235, %v6236
        %v6238 = vsel %vm4213, %v6234, %v6237
        %v6239 = vrot.slane %v6237, 4
        %v6241 = vshrl.u32 %v6127, 16
        %v6243 = vrot.slane %v6241, 6
        %v6244 = vshll.u32 %v6127, 16
        %v6246 = vrot.slane %v6244, 7
        %v6247 = vor.u32 %v6243, %v6246
        %v6248 = vsel %vm4213, %v6239, %v6247
        %v6250 = vshrl.u32 %v6128, 16
        %v6252 = vrot.slane %v6250, 6
        %v6253 = vshll.u32 %v6128, 16
        %v6255 = vrot.slane %v6253, 7
        %v6256 = vor.u32 %v6252, %v6255
        %v6257 = vrot.slane %v6256, 4
        %v6258 = vrot.slane %v5528, 6
        %v6259 = vrot.slane %v5524, 7
        %v6260 = vor.u32 %v6258, %v6259
        %v6261 = vsel %vm4213, %v6257, %v6260
        %v6262 = vrot.slane %v6260, 4
        %v6264 = vshrl.u32 %v6129, 16
        %v6266 = vrot.slane %v6264, 6
        %v6267 = vshll.u32 %v6129, 16
        %v6269 = vrot.slane %v6267, 7
        %v6270 = vor.u32 %v6266, %v6269
        %v6271 = vsel %vm4213, %v6262, %v6270
        %v6273 = vshrl.u32 %v6130, 16
        %v6275 = vrot.slane %v6273, 6
        %v6276 = vshll.u32 %v6130, 16
        %v6278 = vrot.slane %v6276, 7
        %v6279 = vor.u32 %v6275, %v6278
        %v6280 = vrot.slane %v6279, 4
        %v6281 = vrot.slane %v5552, 6
        %v6282 = vrot.slane %v5548, 7
        %v6283 = vor.u32 %v6281, %v6282
        %v6284 = vsel %vm4213, %v6280, %v6283
        %v6285 = vrot.slane %v6283, 4
        %v6287 = vshrl.u32 %v6131, 16
        %v6289 = vrot.slane %v6287, 6
        %v6290 = vshll.u32 %v6131, 16
        %v6292 = vrot.slane %v6290, 7
        %v6293 = vor.u32 %v6289, %v6292
        %v6294 = vsel %vm4213, %v6285, %v6293
        %v6296 = vshrl.u32 %v6132, 16
        %v6298 = vrot.slane %v6296, 6
        %v6299 = vshll.u32 %v6132, 16
        %v6301 = vrot.slane %v6299, 7
        %v6302 = vor.u32 %v6298, %v6301
        %v6303 = vrot.slane %v6302, 4
        %v6304 = vrot.slane %v5576, 6
        %v6305 = vrot.slane %v5572, 7
        %v6306 = vor.u32 %v6304, %v6305
        %v6307 = vsel %vm4213, %v6303, %v6306
        %v6308 = vrot.slane %v6306, 4
        %v6310 = vshrl.u32 %v6133, 16
        %v6312 = vrot.slane %v6310, 6
        %v6313 = vshll.u32 %v6133, 16
        %v6315 = vrot.slane %v6313, 7
        %v6316 = vor.u32 %v6312, %v6315
        %v6317 = vsel %vm4213, %v6308, %v6316
        %s6318 = scalar_lea.vmem %s4, 34
        %v6319 = vld [vmem:[%s6318] sm:$0x3]
        %v6320 = vunpack.c.l.b16 %v6146
        %v6321 = vunpack.c.l.b16 %v6156
        %v6322 = vunpack.c.l.b16 %v6169
        %v6323 = vunpack.c.l.b16 %v6179
        %v6324 = vunpack.c.l.b16 %v6192
        %v6325 = vunpack.c.l.b16 %v6202
        %v6326 = vunpack.c.l.b16 %v6215
        %v6327 = vunpack.c.l.b16 %v6225
        %v6328 = vunpack.c.l.b16 %v6238
        %v6329 = vunpack.c.l.b16 %v6248
        %v6330 = vunpack.c.l.b16 %v6261
        %v6331 = vunpack.c.l.b16 %v6271
        %v6332 = vunpack.c.l.b16 %v6284
        %v6333 = vunpack.c.l.b16 %v6294
        %v6334 = vunpack.c.l.b16 %v6307
        %v6335 = vunpack.c.l.b16 %v6317
        %v6336 = vpack.c.b16 %v6321, %v6320
        %v6337 = vpack.c.b16 %v6323, %v6322
        %v6338 = vpack.c.b16 %v6325, %v6324
        %v6339 = vpack.c.b16 %v6327, %v6326
        %v6340 = vpack.c.b16 %v6329, %v6328
        %v6341 = vpack.c.b16 %v6331, %v6330
        %v6342 = vpack.c.b16 %v6333, %v6332
        %v6343 = vpack.c.b16 %v6335, %v6334
        %v6345 = vsel %vm596, %v6336, 0
        %v6348 = vsel %vm596, %v6337, 0
        %v6351 = vsel %vm596, %v6338, 0
        %v6354 = vsel %vm596, %v6339, 0
        %v6357 = vsel %vm596, %v6340, 0
        %v6360 = vsel %vm596, %v6341, 0
        %v6363 = vsel %vm596, %v6342, 0
        %v6366 = vsel %vm596, %v6343, 0
        %v6369 = vsel %vm621, %v6319, 0
        %6371 = vmatprep.subr.bf16.mxu0 0
        %6372 = vmatpush1.bf16.msra.mxu0 0
        %6373 = vmatprep.subr.bf16.mxu0 0
        %6374 = vmatpush1.bf16.msra.mxu0 0
        %6375 = vmatprep.subr.bf16.mxu0 0
        %6376 = vmatpush1.bf16.msra.mxu0 0
        %6377 = vmatprep.subr.bf16.mxu0 0
        %6378 = vmatpush1.bf16.msra.mxu0 0
        %6379 = vmatprep.subr.bf16.mxu0 0
        %6380 = vmatpush1.bf16.msra.mxu0 0
        %6381 = vmatprep.subr.bf16.mxu0 0
        %6382 = vmatpush1.bf16.msra.mxu0 0
        %6383 = vmatprep.subr.bf16.mxu0 0
        %6384 = vmatpush1.bf16.msra.mxu0 0
        %6385 = vmatprep.subr.bf16.mxu0 0
        %6386 = vmatpush1.bf16.msra.mxu0 %v6369
        %6387 = vmatprep.subr.bf16.mxu0 0
        %6388 = vmatpush2.bf16.msra.mxu0 0
        %6389 = vmatprep.subr.bf16.mxu0 0
        %6390 = vmatpush2.bf16.msra.mxu0 0
        %6391 = vmatprep.subr.bf16.mxu0 0
        %6392 = vmatpush2.bf16.msra.mxu0 0
        %6393 = vmatprep.subr.bf16.mxu0 0
        %6394 = vmatpush2.bf16.msra.mxu0 0
        %6395 = vmatprep.subr.bf16.mxu0 0
        %6396 = vmatpush2.bf16.msra.mxu0 0
        %6397 = vmatprep.subr.bf16.mxu0 0
        %6398 = vmatpush2.bf16.msra.mxu0 0
        %6399 = vmatprep.subr.bf16.mxu0 0
        %6400 = vmatpush2.bf16.msra.mxu0 0
        %6401 = vmatprep.subr.bf16.mxu0 0
        %6402 = vmatpush2.bf16.msra.mxu0 0
        %6403 = vmatprep.mubr.bf16.mxu0 0
        %6404 = vmatmul.mubr.bf16.gmra.mxu0 %v6345
        %v6405 = vpop.f32.mrf.mxu0
        %v6406 = vadd.f32 0.0, %v6405
        %v6407 = vpop.f32.mrf.mxu0
        %v6408 = vpop.f32.mrf.mxu0
        %v6409 = vadd.f32 0.0, %v6408
        %v6410 = vpop.f32.mrf.mxu0
        %6411 = vmatprep.mubr.bf16.mxu0 0
        %6412 = vmatmul.mubr.bf16.gmra.mxu0 %v6348
        %v6413 = vpop.f32.mrf.mxu0
        %v6414 = vadd.f32 0.0, %v6413
        %v6415 = vpop.f32.mrf.mxu0
        %v6416 = vpop.f32.mrf.mxu0
        %v6417 = vadd.f32 0.0, %v6416
        %v6418 = vpop.f32.mrf.mxu0
        %6419 = vmatprep.mubr.bf16.mxu0 0
        %6420 = vmatmul.mubr.bf16.gmra.mxu0 %v6351
        %v6421 = vpop.f32.mrf.mxu0
        %v6422 = vadd.f32 0.0, %v6421
        %v6423 = vpop.f32.mrf.mxu0
        %v6424 = vpop.f32.mrf.mxu0
        %v6425 = vadd.f32 0.0, %v6424
        %v6426 = vpop.f32.mrf.mxu0
        %6427 = vmatprep.mubr.bf16.mxu0 0
        %6428 = vmatmul.mubr.bf16.gmra.mxu0 %v6354
        %v6429 = vpop.f32.mrf.mxu0
        %v6430 = vadd.f32 0.0, %v6429
        %v6431 = vpop.f32.mrf.mxu0
        %v6432 = vpop.f32.mrf.mxu0
        %v6433 = vadd.f32 0.0, %v6432
        %v6434 = vpop.f32.mrf.mxu0
        %6435 = vmatprep.mubr.bf16.mxu0 0
        %6436 = vmatmul.mubr.bf16.gmra.mxu0 %v6357
        %v6437 = vpop.f32.mrf.mxu0
        %v6438 = vadd.f32 0.0, %v6437
        %v6439 = vpop.f32.mrf.mxu0
        %v6440 = vpop.f32.mrf.mxu0
        %v6441 = vadd.f32 0.0, %v6440
        %v6442 = vpop.f32.mrf.mxu0
        %6443 = vmatprep.mubr.bf16.mxu0 0
        %6444 = vmatmul.mubr.bf16.gmra.mxu0 %v6360
        %v6445 = vpop.f32.mrf.mxu0
        %v6446 = vadd.f32 0.0, %v6445
        %v6447 = vpop.f32.mrf.mxu0
        %v6448 = vpop.f32.mrf.mxu0
        %v6449 = vadd.f32 0.0, %v6448
        %v6450 = vpop.f32.mrf.mxu0
        %6451 = vmatprep.mubr.bf16.mxu0 0
        %6452 = vmatmul.mubr.bf16.gmra.mxu0 %v6363
        %v6453 = vpop.f32.mrf.mxu0
        %v6454 = vadd.f32 0.0, %v6453
        %v6455 = vpop.f32.mrf.mxu0
        %v6456 = vpop.f32.mrf.mxu0
        %v6457 = vadd.f32 0.0, %v6456
        %v6458 = vpop.f32.mrf.mxu0
        %6459 = vmatprep.mubr.bf16.mxu0 0
        %6460 = vmatmul.mubr.bf16.gmra.mxu0 %v6366
        %v6461 = vpop.f32.mrf.mxu0
        %v6462 = vadd.f32 0.0, %v6461
        %v6463 = vpop.f32.mrf.mxu0
        %v6464 = vpop.f32.mrf.mxu0
        %v6465 = vadd.f32 0.0, %v6464
        %v6466 = vpop.f32.mrf.mxu0
        %6467 = vdwg.mxu0
        %v6468 = vadd.f32 %v6102, %v6406
        %v6469 = vadd.f32 %v6103, %v6409
        %v6470 = vadd.f32 %v6104, %v6414
        %v6471 = vadd.f32 %v6105, %v6417
        %v6472 = vadd.f32 %v6106, %v6422
        %v6473 = vadd.f32 %v6107, %v6425
        %v6474 = vadd.f32 %v6108, %v6430
        %v6475 = vadd.f32 %v6109, %v6433
        %v6476 = vadd.f32 %v6110, %v6438
        %v6477 = vadd.f32 %v6111, %v6441
        %v6478 = vadd.f32 %v6112, %v6446
        %v6479 = vadd.f32 %v6113, %v6449
        %v6480 = vadd.f32 %v6114, %v6454
        %v6481 = vadd.f32 %v6115, %v6457
        %v6482 = vadd.f32 %v6116, %v6462
        %v6483 = vadd.f32 %v6117, %v6465
        %s6484 = scalar_lea.vmem %s5, 1
        %v6485 = vld [vmem:[%s6484] sm:$0x1]
        %s6486 = scalar_lea.vmem %s6, 8
        %v6487 = vld [vmem:[%s6486] sm:$0xf]
        %v6489 = vlaneseq
        %v6490 = vshrl.u32 %v6489, 7
        %v6491 = vsub.s32 0, %v6490
        %v6492 = vrot.slane %v6485, %v6491
        %v6494 = vadd.f32 %v6468, %v6492
        %v6495 = vadd.f32 %v6469, %v6492
        %v6496 = vadd.f32 %v6470, %v6492
        %v6497 = vadd.f32 %v6471, %v6492
        %v6498 = vadd.f32 %v6472, %v6492
        %v6499 = vadd.f32 %v6473, %v6492
        %v6500 = vadd.f32 %v6474, %v6492
        %v6501 = vadd.f32 %v6475, %v6492
        %v6502 = vadd.f32 %v6476, %v6492
        %v6503 = vadd.f32 %v6477, %v6492
        %v6504 = vadd.f32 %v6478, %v6492
        %v6505 = vadd.f32 %v6479, %v6492
        %v6506 = vadd.f32 %v6480, %v6492
        %v6507 = vadd.f32 %v6481, %v6492
        %v6508 = vadd.f32 %v6482, %v6492
        %v6509 = vadd.f32 %v6483, %v6492
        %v6510 = vmax.f32 %v6494, 0.0
        %v6511 = vmax.f32 %v6495, 0.0
        %v6512 = vmax.f32 %v6496, 0.0
        %v6513 = vmax.f32 %v6497, 0.0
        %v6514 = vmax.f32 %v6498, 0.0
        %v6515 = vmax.f32 %v6499, 0.0
        %v6516 = vmax.f32 %v6500, 0.0
        %v6517 = vmax.f32 %v6501, 0.0
        %v6518 = vmax.f32 %v6502, 0.0
        %v6519 = vmax.f32 %v6503, 0.0
        %v6520 = vmax.f32 %v6504, 0.0
        %v6521 = vmax.f32 %v6505, 0.0
        %v6522 = vmax.f32 %v6506, 0.0
        %v6523 = vmax.f32 %v6507, 0.0
        %v6524 = vmax.f32 %v6508, 0.0
        %v6525 = vmax.f32 %v6509, 0.0
        %v6526 = vpack.c.bf16 %v6511, %v6510
        %v6527 = vpack.c.bf16 %v6513, %v6512
        %v6528 = vpack.c.bf16 %v6515, %v6514
        %v6529 = vpack.c.bf16 %v6517, %v6516
        %v6530 = vpack.c.bf16 %v6519, %v6518
        %v6531 = vpack.c.bf16 %v6521, %v6520
        %v6532 = vpack.c.bf16 %v6523, %v6522
        %v6533 = vpack.c.bf16 %v6525, %v6524
        %v6535 = vsel %vm3222, %v6526, 0
        %v6538 = vsel %vm3222, %v6527, 0
        %v6541 = vsel %vm3222, %v6528, 0
        %v6544 = vsel %vm3222, %v6529, 0
        %v6547 = vsel %vm3222, %v6530, 0
        %v6550 = vsel %vm3222, %v6531, 0
        %v6553 = vsel %vm3222, %v6532, 0
        %v6556 = vsel %vm3222, %v6533, 0
        %v6559 = vsel %vm3247, %v6487, 0
        %6561 = vmatprep.subr.bf16.mxu0 0
        %6562 = vmatpush1.bf16.msra.mxu0 0
        %6563 = vmatprep.subr.bf16.mxu0 0
        %6564 = vmatpush1.bf16.msra.mxu0 0
        %6565 = vmatprep.subr.bf16.mxu0 0
        %6566 = vmatpush1.bf16.msra.mxu0 0
        %6567 = vmatprep.subr.bf16.mxu0 0
        %6568 = vmatpush1.bf16.msra.mxu0 0
        %6569 = vmatprep.subr.bf16.mxu0 0
        %6570 = vmatpush1.bf16.msra.mxu0 0
        %6571 = vmatprep.subr.bf16.mxu0 0
        %6572 = vmatpush1.bf16.msra.mxu0 0
        %6573 = vmatprep.subr.bf16.mxu0 0
        %6574 = vmatpush1.bf16.msra.mxu0 0
        %6575 = vmatprep.subr.bf16.mxu0 0
        %6576 = vmatpush1.bf16.msra.mxu0 %v6559
        %6577 = vmatprep.subr.bf16.mxu0 0
        %6578 = vmatpush2.bf16.msra.mxu0 0
        %6579 = vmatprep.subr.bf16.mxu0 0
        %6580 = vmatpush2.bf16.msra.mxu0 0
        %6581 = vmatprep.subr.bf16.mxu0 0
        %6582 = vmatpush2.bf16.msra.mxu0 0
        %6583 = vmatprep.subr.bf16.mxu0 0
        %6584 = vmatpush2.bf16.msra.mxu0 0
        %6585 = vmatprep.subr.bf16.mxu0 0
        %6586 = vmatpush2.bf16.msra.mxu0 0
        %6587 = vmatprep.subr.bf16.mxu0 0
        %6588 = vmatpush2.bf16.msra.mxu0 0
        %6589 = vmatprep.subr.bf16.mxu0 0
        %6590 = vmatpush2.bf16.msra.mxu0 0
        %6591 = vmatprep.subr.bf16.mxu0 0
        %6592 = vmatpush2.bf16.msra.mxu0 0
        %6593 = vmatprep.mubr.bf16.mxu0 0
        %6594 = vmatmul.mubr.bf16.gmra.mxu0 %v6535
        %v6595 = vpop.f32.mrf.mxu0
        %v6596 = vadd.f32 0.0, %v6595
        %v6597 = vpop.f32.mrf.mxu0
        %v6598 = vpop.f32.mrf.mxu0
        %v6599 = vadd.f32 0.0, %v6598
        %v6600 = vpop.f32.mrf.mxu0
        %6601 = vmatprep.mubr.bf16.mxu0 0
        %6602 = vmatmul.mubr.bf16.gmra.mxu0 %v6538
        %v6603 = vpop.f32.mrf.mxu0
        %v6604 = vadd.f32 0.0, %v6603
        %v6605 = vpop.f32.mrf.mxu0
        %v6606 = vpop.f32.mrf.mxu0
        %v6607 = vadd.f32 0.0, %v6606
        %v6608 = vpop.f32.mrf.mxu0
        %6609 = vmatprep.mubr.bf16.mxu0 0
        %6610 = vmatmul.mubr.bf16.gmra.mxu0 %v6541
        %v6611 = vpop.f32.mrf.mxu0
        %v6612 = vadd.f32 0.0, %v6611
        %v6613 = vpop.f32.mrf.mxu0
        %v6614 = vpop.f32.mrf.mxu0
        %v6615 = vadd.f32 0.0, %v6614
        %v6616 = vpop.f32.mrf.mxu0
        %6617 = vmatprep.mubr.bf16.mxu0 0
        %6618 = vmatmul.mubr.bf16.gmra.mxu0 %v6544
        %v6619 = vpop.f32.mrf.mxu0
        %v6620 = vadd.f32 0.0, %v6619
        %v6621 = vpop.f32.mrf.mxu0
        %v6622 = vpop.f32.mrf.mxu0
        %v6623 = vadd.f32 0.0, %v6622
        %v6624 = vpop.f32.mrf.mxu0
        %6625 = vmatprep.mubr.bf16.mxu0 0
        %6626 = vmatmul.mubr.bf16.gmra.mxu0 %v6547
        %v6627 = vpop.f32.mrf.mxu0
        %v6628 = vadd.f32 0.0, %v6627
        %v6629 = vpop.f32.mrf.mxu0
        %v6630 = vpop.f32.mrf.mxu0
        %v6631 = vadd.f32 0.0, %v6630
        %v6632 = vpop.f32.mrf.mxu0
        %6633 = vmatprep.mubr.bf16.mxu0 0
        %6634 = vmatmul.mubr.bf16.gmra.mxu0 %v6550
        %v6635 = vpop.f32.mrf.mxu0
        %v6636 = vadd.f32 0.0, %v6635
        %v6637 = vpop.f32.mrf.mxu0
        %v6638 = vpop.f32.mrf.mxu0
        %v6639 = vadd.f32 0.0, %v6638
        %v6640 = vpop.f32.mrf.mxu0
        %6641 = vmatprep.mubr.bf16.mxu0 0
        %6642 = vmatmul.mubr.bf16.gmra.mxu0 %v6553
        %v6643 = vpop.f32.mrf.mxu0
        %v6644 = vadd.f32 0.0, %v6643
        %v6645 = vpop.f32.mrf.mxu0
        %v6646 = vpop.f32.mrf.mxu0
        %v6647 = vadd.f32 0.0, %v6646
        %v6648 = vpop.f32.mrf.mxu0
        %6649 = vmatprep.mubr.bf16.mxu0 0
        %6650 = vmatmul.mubr.bf16.gmra.mxu0 %v6556
        %v6651 = vpop.f32.mrf.mxu0
        %v6652 = vadd.f32 0.0, %v6651
        %v6653 = vpop.f32.mrf.mxu0
        %v6654 = vpop.f32.mrf.mxu0
        %v6655 = vadd.f32 0.0, %v6654
        %v6656 = vpop.f32.mrf.mxu0
        %6657 = vdwg.mxu0
        %v6658 = vadd.f32 %v3410, %v6596
        %v6659 = vadd.f32 %v3413, %v6599
        %v6660 = vadd.f32 %v3418, %v6604
        %v6661 = vadd.f32 %v3421, %v6607
        %v6662 = vadd.f32 %v3426, %v6612
        %v6663 = vadd.f32 %v3429, %v6615
        %v6664 = vadd.f32 %v3434, %v6620
        %v6665 = vadd.f32 %v3437, %v6623
        %v6666 = vadd.f32 %v3442, %v6628
        %v6667 = vadd.f32 %v3445, %v6631
        %v6668 = vadd.f32 %v3450, %v6636
        %v6669 = vadd.f32 %v3453, %v6639
        %v6670 = vadd.f32 %v3458, %v6644
        %v6671 = vadd.f32 %v3461, %v6647
        %v6672 = vadd.f32 %v3466, %v6652
        %v6673 = vadd.f32 %v3469, %v6655
        %s6674 = smul.u32 %s307, 3
        %s6675 = smul.addr %s6674, 4
        %s6676 = scalar_lea.vmem %s301, %s6675
        %v6677 = vld [vmem:[%s6676] sm:$0xf]
        %v6678 = vld [vmem:[%s6676 + $0x4] sm:$0xf]
        %v6679 = vld [vmem:[%s6676 + $0xc] sm:$0xf]
        %v6680 = vld [vmem:[%s6676 + $0x10] sm:$0xf]
        %v6681 = vld [vmem:[%s6676 + $0x18] sm:$0xf]
        %v6682 = vld [vmem:[%s6676 + $0x1c] sm:$0xf]
        %v6683 = vld [vmem:[%s6676 + $0x24] sm:$0xf]
        %v6684 = vld [vmem:[%s6676 + $0x28] sm:$0xf]
        %v6685 = vld [vmem:[%s6676 + $0x30] sm:$0xf]
        %v6686 = vld [vmem:[%s6676 + $0x34] sm:$0xf]
        %v6687 = vld [vmem:[%s6676 + $0x3c] sm:$0xf]
        %v6688 = vld [vmem:[%s6676 + $0x40] sm:$0xf]
        %v6689 = vld [vmem:[%s6676 + $0x48] sm:$0xf]
        %v6690 = vld [vmem:[%s6676 + $0x4c] sm:$0xf]
        %v6691 = vld [vmem:[%s6676 + $0x54] sm:$0xf]
        %v6692 = vld [vmem:[%s6676 + $0x58] sm:$0xf]
        %s6693 = scalar_lea.vmem %s4, 36
        %v6694 = vld [vmem:[%s6693] sm:$0x3]
        %v6695 = vld [vmem:[%s6676] sm:$0xe]
        %v6696 = vld [vmem:[%s6676 + $0x8] sm:$0x3]
        %v6697 = vld [vmem:[%s6676 + $0xc] sm:$0xe]
        %v6698 = vld [vmem:[%s6676 + $0x14] sm:$0x3]
        %v6699 = vld [vmem:[%s6676 + $0x18] sm:$0xe]
        %v6700 = vld [vmem:[%s6676 + $0x20] sm:$0x3]
        %v6701 = vld [vmem:[%s6676 + $0x24] sm:$0xe]
        %v6702 = vld [vmem:[%s6676 + $0x2c] sm:$0x3]
        %v6703 = vld [vmem:[%s6676 + $0x30] sm:$0xe]
        %v6704 = vld [vmem:[%s6676 + $0x38] sm:$0x3]
        %v6705 = vld [vmem:[%s6676 + $0x3c] sm:$0xe]
        %v6706 = vld [vmem:[%s6676 + $0x44] sm:$0x3]
        %v6707 = vld [vmem:[%s6676 + $0x48] sm:$0xe]
        %v6708 = vld [vmem:[%s6676 + $0x50] sm:$0x3]
        %v6709 = vld [vmem:[%s6676 + $0x54] sm:$0xe]
        %v6710 = vld [vmem:[%s6676 + $0x5c] sm:$0x3]
        %v6712 = vshrl.u32 %v6695, 16
        %v6714 = vrot.slane %v6712, 5
        %v6715 = vshll.u32 %v6695, 16
        %v6717 = vrot.slane %v6715, 6
        %v6718 = vor.u32 %v6714, %v6717
        %v6719 = vrot.slane %v6718, 4
        %v6721 = vshrl.u32 %v6678, 16
        %v6723 = vrot.slane %v6721, 5
        %v6724 = vshll.u32 %v6678, 16
        %v6726 = vrot.slane %v6724, 6
        %v6727 = vor.u32 %v6723, %v6726
        %v6728 = vsel %vm338, %v6719, %v6727
        %v6729 = vrot.slane %v6727, 4
        %v6731 = vshrl.u32 %v6696, 16
        %v6733 = vrot.slane %v6731, 5
        %v6734 = vshll.u32 %v6696, 16
        %v6736 = vrot.slane %v6734, 6
        %v6737 = vor.u32 %v6733, %v6736
        %v6738 = vsel %vm338, %v6729, %v6737
        %v6740 = vshrl.u32 %v6697, 16
        %v6742 = vrot.slane %v6740, 5
        %v6743 = vshll.u32 %v6697, 16
        %v6745 = vrot.slane %v6743, 6
        %v6746 = vor.u32 %v6742, %v6745
        %v6747 = vrot.slane %v6746, 4
        %v6749 = vshrl.u32 %v6680, 16
        %v6751 = vrot.slane %v6749, 5
        %v6752 = vshll.u32 %v6680, 16
        %v6754 = vrot.slane %v6752, 6
        %v6755 = vor.u32 %v6751, %v6754
        %v6756 = vsel %vm338, %v6747, %v6755
        %v6757 = vrot.slane %v6755, 4
        %v6759 = vshrl.u32 %v6698, 16
        %v6761 = vrot.slane %v6759, 5
        %v6762 = vshll.u32 %v6698, 16
        %v6764 = vrot.slane %v6762, 6
        %v6765 = vor.u32 %v6761, %v6764
        %v6766 = vsel %vm338, %v6757, %v6765
        %v6768 = vshrl.u32 %v6699, 16
        %v6770 = vrot.slane %v6768, 5
        %v6771 = vshll.u32 %v6699, 16
        %v6773 = vrot.slane %v6771, 6
        %v6774 = vor.u32 %v6770, %v6773
        %v6775 = vrot.slane %v6774, 4
        %v6777 = vshrl.u32 %v6682, 16
        %v6779 = vrot.slane %v6777, 5
        %v6780 = vshll.u32 %v6682, 16
        %v6782 = vrot.slane %v6780, 6
        %v6783 = vor.u32 %v6779, %v6782
        %v6784 = vsel %vm338, %v6775, %v6783
        %v6785 = vrot.slane %v6783, 4
        %v6787 = vshrl.u32 %v6700, 16
        %v6789 = vrot.slane %v6787, 5
        %v6790 = vshll.u32 %v6700, 16
        %v6792 = vrot.slane %v6790, 6
        %v6793 = vor.u32 %v6789, %v6792
        %v6794 = vsel %vm338, %v6785, %v6793
        %v6796 = vshrl.u32 %v6701, 16
        %v6798 = vrot.slane %v6796, 5
        %v6799 = vshll.u32 %v6701, 16
        %v6801 = vrot.slane %v6799, 6
        %v6802 = vor.u32 %v6798, %v6801
        %v6803 = vrot.slane %v6802, 4
        %v6805 = vshrl.u32 %v6684, 16
        %v6807 = vrot.slane %v6805, 5
        %v6808 = vshll.u32 %v6684, 16
        %v6810 = vrot.slane %v6808, 6
        %v6811 = vor.u32 %v6807, %v6810
        %v6812 = vsel %vm338, %v6803, %v6811
        %v6813 = vrot.slane %v6811, 4
        %v6815 = vshrl.u32 %v6702, 16
        %v6817 = vrot.slane %v6815, 5
        %v6818 = vshll.u32 %v6702, 16
        %v6820 = vrot.slane %v6818, 6
        %v6821 = vor.u32 %v6817, %v6820
        %v6822 = vsel %vm338, %v6813, %v6821
        %v6824 = vshrl.u32 %v6703, 16
        %v6826 = vrot.slane %v6824, 5
        %v6827 = vshll.u32 %v6703, 16
        %v6829 = vrot.slane %v6827, 6
        %v6830 = vor.u32 %v6826, %v6829
        %v6831 = vrot.slane %v6830, 4
        %v6833 = vshrl.u32 %v6686, 16
        %v6835 = vrot.slane %v6833, 5
        %v6836 = vshll.u32 %v6686, 16
        %v6838 = vrot.slane %v6836, 6
        %v6839 = vor.u32 %v6835, %v6838
        %v6840 = vsel %vm338, %v6831, %v6839
        %v6841 = vrot.slane %v6839, 4
        %v6843 = vshrl.u32 %v6704, 16
        %v6845 = vrot.slane %v6843, 5
        %v6846 = vshll.u32 %v6704, 16
        %v6848 = vrot.slane %v6846, 6
        %v6849 = vor.u32 %v6845, %v6848
        %v6850 = vsel %vm338, %v6841, %v6849
        %v6852 = vshrl.u32 %v6705, 16
        %v6854 = vrot.slane %v6852, 5
        %v6855 = vshll.u32 %v6705, 16
        %v6857 = vrot.slane %v6855, 6
        %v6858 = vor.u32 %v6854, %v6857
        %v6859 = vrot.slane %v6858, 4
        %v6861 = vshrl.u32 %v6688, 16
        %v6863 = vrot.slane %v6861, 5
        %v6864 = vshll.u32 %v6688, 16
        %v6866 = vrot.slane %v6864, 6
        %v6867 = vor.u32 %v6863, %v6866
        %v6868 = vsel %vm338, %v6859, %v6867
        %v6869 = vrot.slane %v6867, 4
        %v6871 = vshrl.u32 %v6706, 16
        %v6873 = vrot.slane %v6871, 5
        %v6874 = vshll.u32 %v6706, 16
        %v6876 = vrot.slane %v6874, 6
        %v6877 = vor.u32 %v6873, %v6876
        %v6878 = vsel %vm338, %v6869, %v6877
        %v6880 = vshrl.u32 %v6707, 16
        %v6882 = vrot.slane %v6880, 5
        %v6883 = vshll.u32 %v6707, 16
        %v6885 = vrot.slane %v6883, 6
        %v6886 = vor.u32 %v6882, %v6885
        %v6887 = vrot.slane %v6886, 4
        %v6889 = vshrl.u32 %v6690, 16
        %v6891 = vrot.slane %v6889, 5
        %v6892 = vshll.u32 %v6690, 16
        %v6894 = vrot.slane %v6892, 6
        %v6895 = vor.u32 %v6891, %v6894
        %v6896 = vsel %vm338, %v6887, %v6895
        %v6897 = vrot.slane %v6895, 4
        %v6899 = vshrl.u32 %v6708, 16
        %v6901 = vrot.slane %v6899, 5
        %v6902 = vshll.u32 %v6708, 16
        %v6904 = vrot.slane %v6902, 6
        %v6905 = vor.u32 %v6901, %v6904
        %v6906 = vsel %vm338, %v6897, %v6905
        %v6908 = vshrl.u32 %v6709, 16
        %v6910 = vrot.slane %v6908, 5
        %v6911 = vshll.u32 %v6709, 16
        %v6913 = vrot.slane %v6911, 6
        %v6914 = vor.u32 %v6910, %v6913
        %v6915 = vrot.slane %v6914, 4
        %v6917 = vshrl.u32 %v6692, 16
        %v6919 = vrot.slane %v6917, 5
        %v6920 = vshll.u32 %v6692, 16
        %v6922 = vrot.slane %v6920, 6
        %v6923 = vor.u32 %v6919, %v6922
        %v6924 = vsel %vm338, %v6915, %v6923
        %v6925 = vrot.slane %v6923, 4
        %v6927 = vshrl.u32 %v6710, 16
        %v6929 = vrot.slane %v6927, 5
        %v6930 = vshll.u32 %v6710, 16
        %v6932 = vrot.slane %v6930, 6
        %v6933 = vor.u32 %v6929, %v6932
        %v6934 = vsel %vm338, %v6925, %v6933
        %s6935 = scalar_lea.vmem %s4, 38
        %v6936 = vld [vmem:[%s6935] sm:$0x3]
        %v6937 = vunpack.c.l.b16 %v6728
        %v6938 = vunpack.c.l.b16 %v6738
        %v6939 = vunpack.c.l.b16 %v6756
        %v6940 = vunpack.c.l.b16 %v6766
        %v6941 = vunpack.c.l.b16 %v6784
        %v6942 = vunpack.c.l.b16 %v6794
        %v6943 = vunpack.c.l.b16 %v6812
        %v6944 = vunpack.c.l.b16 %v6822
        %v6945 = vunpack.c.l.b16 %v6840
        %v6946 = vunpack.c.l.b16 %v6850
        %v6947 = vunpack.c.l.b16 %v6868
        %v6948 = vunpack.c.l.b16 %v6878
        %v6949 = vunpack.c.l.b16 %v6896
        %v6950 = vunpack.c.l.b16 %v6906
        %v6951 = vunpack.c.l.b16 %v6924
        %v6952 = vunpack.c.l.b16 %v6934
        %v6953 = vpack.c.b16 %v6938, %v6937
        %v6954 = vpack.c.b16 %v6940, %v6939
        %v6955 = vpack.c.b16 %v6942, %v6941
        %v6956 = vpack.c.b16 %v6944, %v6943
        %v6957 = vpack.c.b16 %v6946, %v6945
        %v6958 = vpack.c.b16 %v6948, %v6947
        %v6959 = vpack.c.b16 %v6950, %v6949
        %v6960 = vpack.c.b16 %v6952, %v6951
        %v6962 = vsel %vm596, %v6953, 0
        %v6965 = vsel %vm596, %v6954, 0
        %v6968 = vsel %vm596, %v6955, 0
        %v6971 = vsel %vm596, %v6956, 0
        %v6974 = vsel %vm596, %v6957, 0
        %v6977 = vsel %vm596, %v6958, 0
        %v6980 = vsel %vm596, %v6959, 0
        %v6983 = vsel %vm596, %v6960, 0
        %v6986 = vsel %vm621, %v6936, 0
        %6988 = vmatprep.subr.bf16.mxu0 0
        %6989 = vmatpush1.bf16.msra.mxu0 0
        %6990 = vmatprep.subr.bf16.mxu0 0
        %6991 = vmatpush1.bf16.msra.mxu0 0
        %6992 = vmatprep.subr.bf16.mxu0 0
        %6993 = vmatpush1.bf16.msra.mxu0 0
        %6994 = vmatprep.subr.bf16.mxu0 0
        %6995 = vmatpush1.bf16.msra.mxu0 0
        %6996 = vmatprep.subr.bf16.mxu0 0
        %6997 = vmatpush1.bf16.msra.mxu0 0
        %6998 = vmatprep.subr.bf16.mxu0 0
        %6999 = vmatpush1.bf16.msra.mxu0 0
        %7000 = vmatprep.subr.bf16.mxu0 0
        %7001 = vmatpush1.bf16.msra.mxu0 0
        %7002 = vmatprep.subr.bf16.mxu0 0
        %7003 = vmatpush1.bf16.msra.mxu0 %v6986
        %7004 = vmatprep.subr.bf16.mxu0 0
        %7005 = vmatpush2.bf16.msra.mxu0 0
        %7006 = vmatprep.subr.bf16.mxu0 0
        %7007 = vmatpush2.bf16.msra.mxu0 0
        %7008 = vmatprep.subr.bf16.mxu0 0
        %7009 = vmatpush2.bf16.msra.mxu0 0
        %7010 = vmatprep.subr.bf16.mxu0 0
        %7011 = vmatpush2.bf16.msra.mxu0 0
        %7012 = vmatprep.subr.bf16.mxu0 0
        %7013 = vmatpush2.bf16.msra.mxu0 0
        %7014 = vmatprep.subr.bf16.mxu0 0
        %7015 = vmatpush2.bf16.msra.mxu0 0
        %7016 = vmatprep.subr.bf16.mxu0 0
        %7017 = vmatpush2.bf16.msra.mxu0 0
        %7018 = vmatprep.subr.bf16.mxu0 0
        %7019 = vmatpush2.bf16.msra.mxu0 0
        %7020 = vmatprep.mubr.bf16.mxu0 0
        %7021 = vmatmul.mubr.bf16.gmra.mxu0 %v6962
        %v7022 = vpop.f32.mrf.mxu0
        %v7023 = vadd.f32 0.0, %v7022
        %v7024 = vpop.f32.mrf.mxu0
        %v7025 = vpop.f32.mrf.mxu0
        %v7026 = vadd.f32 0.0, %v7025
        %v7027 = vpop.f32.mrf.mxu0
        %7028 = vmatprep.mubr.bf16.mxu0 0
        %7029 = vmatmul.mubr.bf16.gmra.mxu0 %v6965
        %v7030 = vpop.f32.mrf.mxu0
        %v7031 = vadd.f32 0.0, %v7030
        %v7032 = vpop.f32.mrf.mxu0
        %v7033 = vpop.f32.mrf.mxu0
        %v7034 = vadd.f32 0.0, %v7033
        %v7035 = vpop.f32.mrf.mxu0
        %7036 = vmatprep.mubr.bf16.mxu0 0
        %7037 = vmatmul.mubr.bf16.gmra.mxu0 %v6968
        %v7038 = vpop.f32.mrf.mxu0
        %v7039 = vadd.f32 0.0, %v7038
        %v7040 = vpop.f32.mrf.mxu0
        %v7041 = vpop.f32.mrf.mxu0
        %v7042 = vadd.f32 0.0, %v7041
        %v7043 = vpop.f32.mrf.mxu0
        %7044 = vmatprep.mubr.bf16.mxu0 0
        %7045 = vmatmul.mubr.bf16.gmra.mxu0 %v6971
        %v7046 = vpop.f32.mrf.mxu0
        %v7047 = vadd.f32 0.0, %v7046
        %v7048 = vpop.f32.mrf.mxu0
        %v7049 = vpop.f32.mrf.mxu0
        %v7050 = vadd.f32 0.0, %v7049
        %v7051 = vpop.f32.mrf.mxu0
        %7052 = vmatprep.mubr.bf16.mxu0 0
        %7053 = vmatmul.mubr.bf16.gmra.mxu0 %v6974
        %v7054 = vpop.f32.mrf.mxu0
        %v7055 = vadd.f32 0.0, %v7054
        %v7056 = vpop.f32.mrf.mxu0
        %v7057 = vpop.f32.mrf.mxu0
        %v7058 = vadd.f32 0.0, %v7057
        %v7059 = vpop.f32.mrf.mxu0
        %7060 = vmatprep.mubr.bf16.mxu0 0
        %7061 = vmatmul.mubr.bf16.gmra.mxu0 %v6977
        %v7062 = vpop.f32.mrf.mxu0
        %v7063 = vadd.f32 0.0, %v7062
        %v7064 = vpop.f32.mrf.mxu0
        %v7065 = vpop.f32.mrf.mxu0
        %v7066 = vadd.f32 0.0, %v7065
        %v7067 = vpop.f32.mrf.mxu0
        %7068 = vmatprep.mubr.bf16.mxu0 0
        %7069 = vmatmul.mubr.bf16.gmra.mxu0 %v6980
        %v7070 = vpop.f32.mrf.mxu0
        %v7071 = vadd.f32 0.0, %v7070
        %v7072 = vpop.f32.mrf.mxu0
        %v7073 = vpop.f32.mrf.mxu0
        %v7074 = vadd.f32 0.0, %v7073
        %v7075 = vpop.f32.mrf.mxu0
        %7076 = vmatprep.mubr.bf16.mxu0 0
        %7077 = vmatmul.mubr.bf16.gmra.mxu0 %v6983
        %v7078 = vpop.f32.mrf.mxu0
        %v7079 = vadd.f32 0.0, %v7078
        %v7080 = vpop.f32.mrf.mxu0
        %v7081 = vpop.f32.mrf.mxu0
        %v7082 = vadd.f32 0.0, %v7081
        %v7083 = vpop.f32.mrf.mxu0
        %7084 = vdwg.mxu0
        %v7101 = vunpack.c.l.b16 %v6677
        %v7102 = vunpack.c.l.b16 %v6678
        %v7103 = vunpack.c.l.b16 %v6679
        %v7104 = vunpack.c.l.b16 %v6680
        %v7105 = vunpack.c.l.b16 %v6681
        %v7106 = vunpack.c.l.b16 %v6682
        %v7107 = vunpack.c.l.b16 %v6683
        %v7108 = vunpack.c.l.b16 %v6684
        %v7109 = vunpack.c.l.b16 %v6685
        %v7110 = vunpack.c.l.b16 %v6686
        %v7111 = vunpack.c.l.b16 %v6687
        %v7112 = vunpack.c.l.b16 %v6688
        %v7113 = vunpack.c.l.b16 %v6689
        %v7114 = vunpack.c.l.b16 %v6690
        %v7115 = vunpack.c.l.b16 %v6691
        %v7116 = vunpack.c.l.b16 %v6692
        %v7117 = vpack.c.b16 %v7102, %v7101
        %v7118 = vpack.c.b16 %v7104, %v7103
        %v7119 = vpack.c.b16 %v7106, %v7105
        %v7120 = vpack.c.b16 %v7108, %v7107
        %v7121 = vpack.c.b16 %v7110, %v7109
        %v7122 = vpack.c.b16 %v7112, %v7111
        %v7123 = vpack.c.b16 %v7114, %v7113
        %v7124 = vpack.c.b16 %v7116, %v7115
        %v7126 = vsel %vm596, %v7117, 0
        %v7129 = vsel %vm596, %v7118, 0
        %v7132 = vsel %vm596, %v7119, 0
        %v7135 = vsel %vm596, %v7120, 0
        %v7138 = vsel %vm596, %v7121, 0
        %v7141 = vsel %vm596, %v7122, 0
        %v7144 = vsel %vm596, %v7123, 0
        %v7147 = vsel %vm596, %v7124, 0
        %v7150 = vsel %vm621, %v6694, 0
        %7152 = vmatprep.subr.bf16.mxu0 0
        %7153 = vmatpush1.bf16.msra.mxu0 0
        %7154 = vmatprep.subr.bf16.mxu0 0
        %7155 = vmatpush1.bf16.msra.mxu0 0
        %7156 = vmatprep.subr.bf16.mxu0 0
        %7157 = vmatpush1.bf16.msra.mxu0 0
        %7158 = vmatprep.subr.bf16.mxu0 0
        %7159 = vmatpush1.bf16.msra.mxu0 0
        %7160 = vmatprep.subr.bf16.mxu0 0
        %7161 = vmatpush1.bf16.msra.mxu0 0
        %7162 = vmatprep.subr.bf16.mxu0 0
        %7163 = vmatpush1.bf16.msra.mxu0 0
        %7164 = vmatprep.subr.bf16.mxu0 0
        %7165 = vmatpush1.bf16.msra.mxu0 0
        %7166 = vmatprep.subr.bf16.mxu0 0
        %7167 = vmatpush1.bf16.msra.mxu0 %v7150
        %7168 = vmatprep.subr.bf16.mxu0 0
        %7169 = vmatpush2.bf16.msra.mxu0 0
        %7170 = vmatprep.subr.bf16.mxu0 0
        %7171 = vmatpush2.bf16.msra.mxu0 0
        %7172 = vmatprep.subr.bf16.mxu0 0
        %7173 = vmatpush2.bf16.msra.mxu0 0
        %7174 = vmatprep.subr.bf16.mxu0 0
        %7175 = vmatpush2.bf16.msra.mxu0 0
        %7176 = vmatprep.subr.bf16.mxu0 0
        %7177 = vmatpush2.bf16.msra.mxu0 0
        %7178 = vmatprep.subr.bf16.mxu0 0
        %7179 = vmatpush2.bf16.msra.mxu0 0
        %7180 = vmatprep.subr.bf16.mxu0 0
        %7181 = vmatpush2.bf16.msra.mxu0 0
        %7182 = vmatprep.subr.bf16.mxu0 0
        %7183 = vmatpush2.bf16.msra.mxu0 0
        %7184 = vmatprep.mubr.bf16.mxu0 0
        %7185 = vmatmul.mubr.bf16.gmra.mxu0 %v7126
        %v7186 = vpop.f32.mrf.mxu0
        %v7187 = vadd.f32 %v7023, %v7186
        %v7188 = vpop.f32.mrf.mxu0
        %v7189 = vpop.f32.mrf.mxu0
        %v7190 = vadd.f32 %v7026, %v7189
        %v7191 = vpop.f32.mrf.mxu0
        %7192 = vmatprep.mubr.bf16.mxu0 0
        %7193 = vmatmul.mubr.bf16.gmra.mxu0 %v7129
        %v7194 = vpop.f32.mrf.mxu0
        %v7195 = vadd.f32 %v7031, %v7194
        %v7196 = vpop.f32.mrf.mxu0
        %v7197 = vpop.f32.mrf.mxu0
        %v7198 = vadd.f32 %v7034, %v7197
        %v7199 = vpop.f32.mrf.mxu0
        %7200 = vmatprep.mubr.bf16.mxu0 0
        %7201 = vmatmul.mubr.bf16.gmra.mxu0 %v7132
        %v7202 = vpop.f32.mrf.mxu0
        %v7203 = vadd.f32 %v7039, %v7202
        %v7204 = vpop.f32.mrf.mxu0
        %v7205 = vpop.f32.mrf.mxu0
        %v7206 = vadd.f32 %v7042, %v7205
        %v7207 = vpop.f32.mrf.mxu0
        %7208 = vmatprep.mubr.bf16.mxu0 0
        %7209 = vmatmul.mubr.bf16.gmra.mxu0 %v7135
        %v7210 = vpop.f32.mrf.mxu0
        %v7211 = vadd.f32 %v7047, %v7210
        %v7212 = vpop.f32.mrf.mxu0
        %v7213 = vpop.f32.mrf.mxu0
        %v7214 = vadd.f32 %v7050, %v7213
        %v7215 = vpop.f32.mrf.mxu0
        %7216 = vmatprep.mubr.bf16.mxu0 0
        %7217 = vmatmul.mubr.bf16.gmra.mxu0 %v7138
        %v7218 = vpop.f32.mrf.mxu0
        %v7219 = vadd.f32 %v7055, %v7218
        %v7220 = vpop.f32.mrf.mxu0
        %v7221 = vpop.f32.mrf.mxu0
        %v7222 = vadd.f32 %v7058, %v7221
        %v7223 = vpop.f32.mrf.mxu0
        %7224 = vmatprep.mubr.bf16.mxu0 0
        %7225 = vmatmul.mubr.bf16.gmra.mxu0 %v7141
        %v7226 = vpop.f32.mrf.mxu0
        %v7227 = vadd.f32 %v7063, %v7226
        %v7228 = vpop.f32.mrf.mxu0
        %v7229 = vpop.f32.mrf.mxu0
        %v7230 = vadd.f32 %v7066, %v7229
        %v7231 = vpop.f32.mrf.mxu0
        %7232 = vmatprep.mubr.bf16.mxu0 0
        %7233 = vmatmul.mubr.bf16.gmra.mxu0 %v7144
        %v7234 = vpop.f32.mrf.mxu0
        %v7235 = vadd.f32 %v7071, %v7234
        %v7236 = vpop.f32.mrf.mxu0
        %v7237 = vpop.f32.mrf.mxu0
        %v7238 = vadd.f32 %v7074, %v7237
        %v7239 = vpop.f32.mrf.mxu0
        %7240 = vmatprep.mubr.bf16.mxu0 0
        %7241 = vmatmul.mubr.bf16.gmra.mxu0 %v7147
        %v7242 = vpop.f32.mrf.mxu0
        %v7243 = vadd.f32 %v7079, %v7242
        %v7244 = vpop.f32.mrf.mxu0
        %v7245 = vpop.f32.mrf.mxu0
        %v7246 = vadd.f32 %v7082, %v7245
        %v7247 = vpop.f32.mrf.mxu0
        %7248 = vdwg.mxu0
        %v7249 = vld [vmem:[%s6676] sm:$0x8]
        %v7250 = vld [vmem:[%s6676 + $0x8] sm:$0x7]
        %v7251 = vld [vmem:[%s6676 + $0xc] sm:$0x8]
        %v7252 = vld [vmem:[%s6676 + $0x14] sm:$0x7]
        %v7253 = vld [vmem:[%s6676 + $0x18] sm:$0x8]
        %v7254 = vld [vmem:[%s6676 + $0x20] sm:$0x7]
        %v7255 = vld [vmem:[%s6676 + $0x24] sm:$0x8]
        %v7256 = vld [vmem:[%s6676 + $0x2c] sm:$0x7]
        %v7257 = vld [vmem:[%s6676 + $0x30] sm:$0x8]
        %v7258 = vld [vmem:[%s6676 + $0x38] sm:$0x7]
        %v7259 = vld [vmem:[%s6676 + $0x3c] sm:$0x8]
        %v7260 = vld [vmem:[%s6676 + $0x44] sm:$0x7]
        %v7261 = vld [vmem:[%s6676 + $0x48] sm:$0x8]
        %v7262 = vld [vmem:[%s6676 + $0x50] sm:$0x7]
        %v7263 = vld [vmem:[%s6676 + $0x54] sm:$0x8]
        %v7264 = vld [vmem:[%s6676 + $0x5c] sm:$0x7]
        %vm7281 = vcmask 1040384
        %vm7282 = vcmask 1044484
        %vm7283 = vmor %vm7281, %vm7282
        %v7284 = vrot.slane %v7249, 7
        %v7285 = vrot.slane %v7284, 4
        %v7286 = vrot.slane %v6678, 7
        %v7287 = vsel %vm7283, %v7285, %v7286
        %v7288 = vrot.slane %v7286, 4
        %v7289 = vrot.slane %v7250, 7
        %v7290 = vsel %vm7283, %v7288, %v7289
        %v7291 = vrot.slane %v7251, 7
        %v7292 = vrot.slane %v7291, 4
        %v7293 = vrot.slane %v6680, 7
        %v7294 = vsel %vm7283, %v7292, %v7293
        %v7295 = vrot.slane %v7293, 4
        %v7296 = vrot.slane %v7252, 7
        %v7297 = vsel %vm7283, %v7295, %v7296
        %v7298 = vrot.slane %v7253, 7
        %v7299 = vrot.slane %v7298, 4
        %v7300 = vrot.slane %v6682, 7
        %v7301 = vsel %vm7283, %v7299, %v7300
        %v7302 = vrot.slane %v7300, 4
        %v7303 = vrot.slane %v7254, 7
        %v7304 = vsel %vm7283, %v7302, %v7303
        %v7305 = vrot.slane %v7255, 7
        %v7306 = vrot.slane %v7305, 4
        %v7307 = vrot.slane %v6684, 7
        %v7308 = vsel %vm7283, %v7306, %v7307
        %v7309 = vrot.slane %v7307, 4
        %v7310 = vrot.slane %v7256, 7
        %v7311 = vsel %vm7283, %v7309, %v7310
        %v7312 = vrot.slane %v7257, 7
        %v7313 = vrot.slane %v7312, 4
        %v7314 = vrot.slane %v6686, 7
        %v7315 = vsel %vm7283, %v7313, %v7314
        %v7316 = vrot.slane %v7314, 4
        %v7317 = vrot.slane %v7258, 7
        %v7318 = vsel %vm7283, %v7316, %v7317
        %v7319 = vrot.slane %v7259, 7
        %v7320 = vrot.slane %v7319, 4
        %v7321 = vrot.slane %v6688, 7
        %v7322 = vsel %vm7283, %v7320, %v7321
        %v7323 = vrot.slane %v7321, 4
        %v7324 = vrot.slane %v7260, 7
        %v7325 = vsel %vm7283, %v7323, %v7324
        %v7326 = vrot.slane %v7261, 7
        %v7327 = vrot.slane %v7326, 4
        %v7328 = vrot.slane %v6690, 7
        %v7329 = vsel %vm7283, %v7327, %v7328
        %v7330 = vrot.slane %v7328, 4
        %v7331 = vrot.slane %v7262, 7
        %v7332 = vsel %vm7283, %v7330, %v7331
        %v7333 = vrot.slane %v7263, 7
        %v7334 = vrot.slane %v7333, 4
        %v7335 = vrot.slane %v6692, 7
        %v7336 = vsel %vm7283, %v7334, %v7335
        %v7337 = vrot.slane %v7335, 4
        %v7338 = vrot.slane %v7264, 7
        %v7339 = vsel %vm7283, %v7337, %v7338
        %s7340 = scalar_lea.vmem %s4, 40
        %v7341 = vld [vmem:[%s7340] sm:$0x3]
        %v7342 = vunpack.c.l.b16 %v7287
        %v7343 = vunpack.c.l.b16 %v7290
        %v7344 = vunpack.c.l.b16 %v7294
        %v7345 = vunpack.c.l.b16 %v7297
        %v7346 = vunpack.c.l.b16 %v7301
        %v7347 = vunpack.c.l.b16 %v7304
        %v7348 = vunpack.c.l.b16 %v7308
        %v7349 = vunpack.c.l.b16 %v7311
        %v7350 = vunpack.c.l.b16 %v7315
        %v7351 = vunpack.c.l.b16 %v7318
        %v7352 = vunpack.c.l.b16 %v7322
        %v7353 = vunpack.c.l.b16 %v7325
        %v7354 = vunpack.c.l.b16 %v7329
        %v7355 = vunpack.c.l.b16 %v7332
        %v7356 = vunpack.c.l.b16 %v7336
        %v7357 = vunpack.c.l.b16 %v7339
        %v7358 = vpack.c.b16 %v7343, %v7342
        %v7359 = vpack.c.b16 %v7345, %v7344
        %v7360 = vpack.c.b16 %v7347, %v7346
        %v7361 = vpack.c.b16 %v7349, %v7348
        %v7362 = vpack.c.b16 %v7351, %v7350
        %v7363 = vpack.c.b16 %v7353, %v7352
        %v7364 = vpack.c.b16 %v7355, %v7354
        %v7365 = vpack.c.b16 %v7357, %v7356
        %v7367 = vsel %vm596, %v7358, 0
        %v7370 = vsel %vm596, %v7359, 0
        %v7373 = vsel %vm596, %v7360, 0
        %v7376 = vsel %vm596, %v7361, 0
        %v7379 = vsel %vm596, %v7362, 0
        %v7382 = vsel %vm596, %v7363, 0
        %v7385 = vsel %vm596, %v7364, 0
        %v7388 = vsel %vm596, %v7365, 0
        %v7391 = vsel %vm621, %v7341, 0
        %7393 = vmatprep.subr.bf16.mxu0 0
        %7394 = vmatpush1.bf16.msra.mxu0 0
        %7395 = vmatprep.subr.bf16.mxu0 0
        %7396 = vmatpush1.bf16.msra.mxu0 0
        %7397 = vmatprep.subr.bf16.mxu0 0
        %7398 = vmatpush1.bf16.msra.mxu0 0
        %7399 = vmatprep.subr.bf16.mxu0 0
        %7400 = vmatpush1.bf16.msra.mxu0 0
        %7401 = vmatprep.subr.bf16.mxu0 0
        %7402 = vmatpush1.bf16.msra.mxu0 0
        %7403 = vmatprep.subr.bf16.mxu0 0
        %7404 = vmatpush1.bf16.msra.mxu0 0
        %7405 = vmatprep.subr.bf16.mxu0 0
        %7406 = vmatpush1.bf16.msra.mxu0 0
        %7407 = vmatprep.subr.bf16.mxu0 0
        %7408 = vmatpush1.bf16.msra.mxu0 %v7391
        %7409 = vmatprep.subr.bf16.mxu0 0
        %7410 = vmatpush2.bf16.msra.mxu0 0
        %7411 = vmatprep.subr.bf16.mxu0 0
        %7412 = vmatpush2.bf16.msra.mxu0 0
        %7413 = vmatprep.subr.bf16.mxu0 0
        %7414 = vmatpush2.bf16.msra.mxu0 0
        %7415 = vmatprep.subr.bf16.mxu0 0
        %7416 = vmatpush2.bf16.msra.mxu0 0
        %7417 = vmatprep.subr.bf16.mxu0 0
        %7418 = vmatpush2.bf16.msra.mxu0 0
        %7419 = vmatprep.subr.bf16.mxu0 0
        %7420 = vmatpush2.bf16.msra.mxu0 0
        %7421 = vmatprep.subr.bf16.mxu0 0
        %7422 = vmatpush2.bf16.msra.mxu0 0
        %7423 = vmatprep.subr.bf16.mxu0 0
        %7424 = vmatpush2.bf16.msra.mxu0 0
        %7425 = vmatprep.mubr.bf16.mxu0 0
        %7426 = vmatmul.mubr.bf16.gmra.mxu0 %v7367
        %v7427 = vpop.f32.mrf.mxu0
        %v7428 = vadd.f32 0.0, %v7427
        %v7429 = vpop.f32.mrf.mxu0
        %v7430 = vpop.f32.mrf.mxu0
        %v7431 = vadd.f32 0.0, %v7430
        %v7432 = vpop.f32.mrf.mxu0
        %7433 = vmatprep.mubr.bf16.mxu0 0
        %7434 = vmatmul.mubr.bf16.gmra.mxu0 %v7370
        %v7435 = vpop.f32.mrf.mxu0
        %v7436 = vadd.f32 0.0, %v7435
        %v7437 = vpop.f32.mrf.mxu0
        %v7438 = vpop.f32.mrf.mxu0
        %v7439 = vadd.f32 0.0, %v7438
        %v7440 = vpop.f32.mrf.mxu0
        %7441 = vmatprep.mubr.bf16.mxu0 0
        %7442 = vmatmul.mubr.bf16.gmra.mxu0 %v7373
        %v7443 = vpop.f32.mrf.mxu0
        %v7444 = vadd.f32 0.0, %v7443
        %v7445 = vpop.f32.mrf.mxu0
        %v7446 = vpop.f32.mrf.mxu0
        %v7447 = vadd.f32 0.0, %v7446
        %v7448 = vpop.f32.mrf.mxu0
        %7449 = vmatprep.mubr.bf16.mxu0 0
        %7450 = vmatmul.mubr.bf16.gmra.mxu0 %v7376
        %v7451 = vpop.f32.mrf.mxu0
        %v7452 = vadd.f32 0.0, %v7451
        %v7453 = vpop.f32.mrf.mxu0
        %v7454 = vpop.f32.mrf.mxu0
        %v7455 = vadd.f32 0.0, %v7454
        %v7456 = vpop.f32.mrf.mxu0
        %7457 = vmatprep.mubr.bf16.mxu0 0
        %7458 = vmatmul.mubr.bf16.gmra.mxu0 %v7379
        %v7459 = vpop.f32.mrf.mxu0
        %v7460 = vadd.f32 0.0, %v7459
        %v7461 = vpop.f32.mrf.mxu0
        %v7462 = vpop.f32.mrf.mxu0
        %v7463 = vadd.f32 0.0, %v7462
        %v7464 = vpop.f32.mrf.mxu0
        %7465 = vmatprep.mubr.bf16.mxu0 0
        %7466 = vmatmul.mubr.bf16.gmra.mxu0 %v7382
        %v7467 = vpop.f32.mrf.mxu0
        %v7468 = vadd.f32 0.0, %v7467
        %v7469 = vpop.f32.mrf.mxu0
        %v7470 = vpop.f32.mrf.mxu0
        %v7471 = vadd.f32 0.0, %v7470
        %v7472 = vpop.f32.mrf.mxu0
        %7473 = vmatprep.mubr.bf16.mxu0 0
        %7474 = vmatmul.mubr.bf16.gmra.mxu0 %v7385
        %v7475 = vpop.f32.mrf.mxu0
        %v7476 = vadd.f32 0.0, %v7475
        %v7477 = vpop.f32.mrf.mxu0
        %v7478 = vpop.f32.mrf.mxu0
        %v7479 = vadd.f32 0.0, %v7478
        %v7480 = vpop.f32.mrf.mxu0
        %7481 = vmatprep.mubr.bf16.mxu0 0
        %7482 = vmatmul.mubr.bf16.gmra.mxu0 %v7388
        %v7483 = vpop.f32.mrf.mxu0
        %v7484 = vadd.f32 0.0, %v7483
        %v7485 = vpop.f32.mrf.mxu0
        %v7486 = vpop.f32.mrf.mxu0
        %v7487 = vadd.f32 0.0, %v7486
        %v7488 = vpop.f32.mrf.mxu0
        %7489 = vdwg.mxu0
        %v7490 = vadd.f32 %v7187, %v7428
        %v7491 = vadd.f32 %v7190, %v7431
        %v7492 = vadd.f32 %v7195, %v7436
        %v7493 = vadd.f32 %v7198, %v7439
        %v7494 = vadd.f32 %v7203, %v7444
        %v7495 = vadd.f32 %v7206, %v7447
        %v7496 = vadd.f32 %v7211, %v7452
        %v7497 = vadd.f32 %v7214, %v7455
        %v7498 = vadd.f32 %v7219, %v7460
        %v7499 = vadd.f32 %v7222, %v7463
        %v7500 = vadd.f32 %v7227, %v7468
        %v7501 = vadd.f32 %v7230, %v7471
        %v7502 = vadd.f32 %v7235, %v7476
        %v7503 = vadd.f32 %v7238, %v7479
        %v7504 = vadd.f32 %v7243, %v7484
        %v7505 = vadd.f32 %v7246, %v7487
        %v7506 = vld [vmem:[%s311] sm:$0xf]
        %v7507 = vld [vmem:[%s311 + $0x4] sm:$0xf]
        %v7508 = vld [vmem:[%s311 + $0xc] sm:$0xf]
        %v7509 = vld [vmem:[%s311 + $0x10] sm:$0xf]
        %v7510 = vld [vmem:[%s311 + $0x18] sm:$0xf]
        %v7511 = vld [vmem:[%s311 + $0x1c] sm:$0xf]
        %v7512 = vld [vmem:[%s311 + $0x24] sm:$0xf]
        %v7513 = vld [vmem:[%s311 + $0x28] sm:$0xf]
        %v7514 = vld [vmem:[%s311 + $0x30] sm:$0xf]
        %v7515 = vld [vmem:[%s311 + $0x34] sm:$0xf]
        %v7516 = vld [vmem:[%s311 + $0x3c] sm:$0xf]
        %v7517 = vld [vmem:[%s311 + $0x40] sm:$0xf]
        %v7518 = vld [vmem:[%s311 + $0x48] sm:$0xf]
        %v7519 = vld [vmem:[%s311 + $0x4c] sm:$0xf]
        %v7520 = vld [vmem:[%s311 + $0x54] sm:$0xf]
        %v7521 = vld [vmem:[%s311 + $0x58] sm:$0xf]
        %s7522 = scalar_lea.vmem %s4, 42
        %v7523 = vld [vmem:[%s7522] sm:$0x3]
        %v7540 = vunpack.c.l.b16 %v7506
        %v7541 = vunpack.c.l.b16 %v7507
        %v7542 = vunpack.c.l.b16 %v7508
        %v7543 = vunpack.c.l.b16 %v7509
        %v7544 = vunpack.c.l.b16 %v7510
        %v7545 = vunpack.c.l.b16 %v7511
        %v7546 = vunpack.c.l.b16 %v7512
        %v7547 = vunpack.c.l.b16 %v7513
        %v7548 = vunpack.c.l.b16 %v7514
        %v7549 = vunpack.c.l.b16 %v7515
        %v7550 = vunpack.c.l.b16 %v7516
        %v7551 = vunpack.c.l.b16 %v7517
        %v7552 = vunpack.c.l.b16 %v7518
        %v7553 = vunpack.c.l.b16 %v7519
        %v7554 = vunpack.c.l.b16 %v7520
        %v7555 = vunpack.c.l.b16 %v7521
        %v7556 = vpack.c.b16 %v7541, %v7540
        %v7557 = vpack.c.b16 %v7543, %v7542
        %v7558 = vpack.c.b16 %v7545, %v7544
        %v7559 = vpack.c.b16 %v7547, %v7546
        %v7560 = vpack.c.b16 %v7549, %v7548
        %v7561 = vpack.c.b16 %v7551, %v7550
        %v7562 = vpack.c.b16 %v7553, %v7552
        %v7563 = vpack.c.b16 %v7555, %v7554
        %v7565 = vsel %vm596, %v7556, 0
        %v7568 = vsel %vm596, %v7557, 0
        %v7571 = vsel %vm596, %v7558, 0
        %v7574 = vsel %vm596, %v7559, 0
        %v7577 = vsel %vm596, %v7560, 0
        %v7580 = vsel %vm596, %v7561, 0
        %v7583 = vsel %vm596, %v7562, 0
        %v7586 = vsel %vm596, %v7563, 0
        %v7589 = vsel %vm621, %v7523, 0
        %7591 = vmatprep.subr.bf16.mxu0 0
        %7592 = vmatpush1.bf16.msra.mxu0 0
        %7593 = vmatprep.subr.bf16.mxu0 0
        %7594 = vmatpush1.bf16.msra.mxu0 0
        %7595 = vmatprep.subr.bf16.mxu0 0
        %7596 = vmatpush1.bf16.msra.mxu0 0
        %7597 = vmatprep.subr.bf16.mxu0 0
        %7598 = vmatpush1.bf16.msra.mxu0 0
        %7599 = vmatprep.subr.bf16.mxu0 0
        %7600 = vmatpush1.bf16.msra.mxu0 0
        %7601 = vmatprep.subr.bf16.mxu0 0
        %7602 = vmatpush1.bf16.msra.mxu0 0
        %7603 = vmatprep.subr.bf16.mxu0 0
        %7604 = vmatpush1.bf16.msra.mxu0 0
        %7605 = vmatprep.subr.bf16.mxu0 0
        %7606 = vmatpush1.bf16.msra.mxu0 %v7589
        %7607 = vmatprep.subr.bf16.mxu0 0
        %7608 = vmatpush2.bf16.msra.mxu0 0
        %7609 = vmatprep.subr.bf16.mxu0 0
        %7610 = vmatpush2.bf16.msra.mxu0 0
        %7611 = vmatprep.subr.bf16.mxu0 0
        %7612 = vmatpush2.bf16.msra.mxu0 0
        %7613 = vmatprep.subr.bf16.mxu0 0
        %7614 = vmatpush2.bf16.msra.mxu0 0
        %7615 = vmatprep.subr.bf16.mxu0 0
        %7616 = vmatpush2.bf16.msra.mxu0 0
        %7617 = vmatprep.subr.bf16.mxu0 0
        %7618 = vmatpush2.bf16.msra.mxu0 0
        %7619 = vmatprep.subr.bf16.mxu0 0
        %7620 = vmatpush2.bf16.msra.mxu0 0
        %7621 = vmatprep.subr.bf16.mxu0 0
        %7622 = vmatpush2.bf16.msra.mxu0 0
        %7623 = vmatprep.mubr.bf16.mxu0 0
        %7624 = vmatmul.mubr.bf16.gmra.mxu0 %v7565
        %v7625 = vpop.f32.mrf.mxu0
        %v7626 = vadd.f32 0.0, %v7625
        %v7627 = vpop.f32.mrf.mxu0
        %v7628 = vpop.f32.mrf.mxu0
        %v7629 = vadd.f32 0.0, %v7628
        %v7630 = vpop.f32.mrf.mxu0
        %7631 = vmatprep.mubr.bf16.mxu0 0
        %7632 = vmatmul.mubr.bf16.gmra.mxu0 %v7568
        %v7633 = vpop.f32.mrf.mxu0
        %v7634 = vadd.f32 0.0, %v7633
        %v7635 = vpop.f32.mrf.mxu0
        %v7636 = vpop.f32.mrf.mxu0
        %v7637 = vadd.f32 0.0, %v7636
        %v7638 = vpop.f32.mrf.mxu0
        %7639 = vmatprep.mubr.bf16.mxu0 0
        %7640 = vmatmul.mubr.bf16.gmra.mxu0 %v7571
        %v7641 = vpop.f32.mrf.mxu0
        %v7642 = vadd.f32 0.0, %v7641
        %v7643 = vpop.f32.mrf.mxu0
        %v7644 = vpop.f32.mrf.mxu0
        %v7645 = vadd.f32 0.0, %v7644
        %v7646 = vpop.f32.mrf.mxu0
        %7647 = vmatprep.mubr.bf16.mxu0 0
        %7648 = vmatmul.mubr.bf16.gmra.mxu0 %v7574
        %v7649 = vpop.f32.mrf.mxu0
        %v7650 = vadd.f32 0.0, %v7649
        %v7651 = vpop.f32.mrf.mxu0
        %v7652 = vpop.f32.mrf.mxu0
        %v7653 = vadd.f32 0.0, %v7652
        %v7654 = vpop.f32.mrf.mxu0
        %7655 = vmatprep.mubr.bf16.mxu0 0
        %7656 = vmatmul.mubr.bf16.gmra.mxu0 %v7577
        %v7657 = vpop.f32.mrf.mxu0
        %v7658 = vadd.f32 0.0, %v7657
        %v7659 = vpop.f32.mrf.mxu0
        %v7660 = vpop.f32.mrf.mxu0
        %v7661 = vadd.f32 0.0, %v7660
        %v7662 = vpop.f32.mrf.mxu0
        %7663 = vmatprep.mubr.bf16.mxu0 0
        %7664 = vmatmul.mubr.bf16.gmra.mxu0 %v7580
        %v7665 = vpop.f32.mrf.mxu0
        %v7666 = vadd.f32 0.0, %v7665
        %v7667 = vpop.f32.mrf.mxu0
        %v7668 = vpop.f32.mrf.mxu0
        %v7669 = vadd.f32 0.0, %v7668
        %v7670 = vpop.f32.mrf.mxu0
        %7671 = vmatprep.mubr.bf16.mxu0 0
        %7672 = vmatmul.mubr.bf16.gmra.mxu0 %v7583
        %v7673 = vpop.f32.mrf.mxu0
        %v7674 = vadd.f32 0.0, %v7673
        %v7675 = vpop.f32.mrf.mxu0
        %v7676 = vpop.f32.mrf.mxu0
        %v7677 = vadd.f32 0.0, %v7676
        %v7678 = vpop.f32.mrf.mxu0
        %7679 = vmatprep.mubr.bf16.mxu0 0
        %7680 = vmatmul.mubr.bf16.gmra.mxu0 %v7586
        %v7681 = vpop.f32.mrf.mxu0
        %v7682 = vadd.f32 0.0, %v7681
        %v7683 = vpop.f32.mrf.mxu0
        %v7684 = vpop.f32.mrf.mxu0
        %v7685 = vadd.f32 0.0, %v7684
        %v7686 = vpop.f32.mrf.mxu0
        %7687 = vdwg.mxu0
        %v7688 = vadd.f32 %v7490, %v7626
        %v7689 = vadd.f32 %v7491, %v7629
        %v7690 = vadd.f32 %v7492, %v7634
        %v7691 = vadd.f32 %v7493, %v7637
        %v7692 = vadd.f32 %v7494, %v7642
        %v7693 = vadd.f32 %v7495, %v7645
        %v7694 = vadd.f32 %v7496, %v7650
        %v7695 = vadd.f32 %v7497, %v7653
        %v7696 = vadd.f32 %v7498, %v7658
        %v7697 = vadd.f32 %v7499, %v7661
        %v7698 = vadd.f32 %v7500, %v7666
        %v7699 = vadd.f32 %v7501, %v7669
        %v7700 = vadd.f32 %v7502, %v7674
        %v7701 = vadd.f32 %v7503, %v7677
        %v7702 = vadd.f32 %v7504, %v7682
        %v7703 = vadd.f32 %v7505, %v7685
        %s7704 = scalar_lea.vmem %s4, 44
        %v7705 = vld [vmem:[%s7704] sm:$0x3]
        %v7707 = vsel %vm621, %v7705, 0
        %7709 = vmatprep.subr.bf16.mxu0 0
        %7710 = vmatpush1.bf16.msra.mxu0 0
        %7711 = vmatprep.subr.bf16.mxu0 0
        %7712 = vmatpush1.bf16.msra.mxu0 0
        %7713 = vmatprep.subr.bf16.mxu0 0
        %7714 = vmatpush1.bf16.msra.mxu0 0
        %7715 = vmatprep.subr.bf16.mxu0 0
        %7716 = vmatpush1.bf16.msra.mxu0 0
        %7717 = vmatprep.subr.bf16.mxu0 0
        %7718 = vmatpush1.bf16.msra.mxu0 0
        %7719 = vmatprep.subr.bf16.mxu0 0
        %7720 = vmatpush1.bf16.msra.mxu0 0
        %7721 = vmatprep.subr.bf16.mxu0 0
        %7722 = vmatpush1.bf16.msra.mxu0 0
        %7723 = vmatprep.subr.bf16.mxu0 0
        %7724 = vmatpush1.bf16.msra.mxu0 %v7707
        %7725 = vmatprep.subr.bf16.mxu0 0
        %7726 = vmatpush2.bf16.msra.mxu0 0
        %7727 = vmatprep.subr.bf16.mxu0 0
        %7728 = vmatpush2.bf16.msra.mxu0 0
        %7729 = vmatprep.subr.bf16.mxu0 0
        %7730 = vmatpush2.bf16.msra.mxu0 0
        %7731 = vmatprep.subr.bf16.mxu0 0
        %7732 = vmatpush2.bf16.msra.mxu0 0
        %7733 = vmatprep.subr.bf16.mxu0 0
        %7734 = vmatpush2.bf16.msra.mxu0 0
        %7735 = vmatprep.subr.bf16.mxu0 0
        %7736 = vmatpush2.bf16.msra.mxu0 0
        %7737 = vmatprep.subr.bf16.mxu0 0
        %7738 = vmatpush2.bf16.msra.mxu0 0
        %7739 = vmatprep.subr.bf16.mxu0 0
        %7740 = vmatpush2.bf16.msra.mxu0 0
        %7741 = vmatprep.mubr.bf16.mxu0 0
        %7742 = vmatmul.mubr.bf16.gmra.mxu0 %v598
        %v7743 = vpop.f32.mrf.mxu0
        %v7744 = vadd.f32 0.0, %v7743
        %v7745 = vpop.f32.mrf.mxu0
        %v7746 = vpop.f32.mrf.mxu0
        %v7747 = vadd.f32 0.0, %v7746
        %v7748 = vpop.f32.mrf.mxu0
        %7749 = vmatprep.mubr.bf16.mxu0 0
        %7750 = vmatmul.mubr.bf16.gmra.mxu0 %v601
        %v7751 = vpop.f32.mrf.mxu0
        %v7752 = vadd.f32 0.0, %v7751
        %v7753 = vpop.f32.mrf.mxu0
        %v7754 = vpop.f32.mrf.mxu0
        %v7755 = vadd.f32 0.0, %v7754
        %v7756 = vpop.f32.mrf.mxu0
        %7757 = vmatprep.mubr.bf16.mxu0 0
        %7758 = vmatmul.mubr.bf16.gmra.mxu0 %v604
        %v7759 = vpop.f32.mrf.mxu0
        %v7760 = vadd.f32 0.0, %v7759
        %v7761 = vpop.f32.mrf.mxu0
        %v7762 = vpop.f32.mrf.mxu0
        %v7763 = vadd.f32 0.0, %v7762
        %v7764 = vpop.f32.mrf.mxu0
        %7765 = vmatprep.mubr.bf16.mxu0 0
        %7766 = vmatmul.mubr.bf16.gmra.mxu0 %v607
        %v7767 = vpop.f32.mrf.mxu0
        %v7768 = vadd.f32 0.0, %v7767
        %v7769 = vpop.f32.mrf.mxu0
        %v7770 = vpop.f32.mrf.mxu0
        %v7771 = vadd.f32 0.0, %v7770
        %v7772 = vpop.f32.mrf.mxu0
        %7773 = vmatprep.mubr.bf16.mxu0 0
        %7774 = vmatmul.mubr.bf16.gmra.mxu0 %v610
        %v7775 = vpop.f32.mrf.mxu0
        %v7776 = vadd.f32 0.0, %v7775
        %v7777 = vpop.f32.mrf.mxu0
        %v7778 = vpop.f32.mrf.mxu0
        %v7779 = vadd.f32 0.0, %v7778
        %v7780 = vpop.f32.mrf.mxu0
        %7781 = vmatprep.mubr.bf16.mxu0 0
        %7782 = vmatmul.mubr.bf16.gmra.mxu0 %v613
        %v7783 = vpop.f32.mrf.mxu0
        %v7784 = vadd.f32 0.0, %v7783
        %v7785 = vpop.f32.mrf.mxu0
        %v7786 = vpop.f32.mrf.mxu0
        %v7787 = vadd.f32 0.0, %v7786
        %v7788 = vpop.f32.mrf.mxu0
        %7789 = vmatprep.mubr.bf16.mxu0 0
        %7790 = vmatmul.mubr.bf16.gmra.mxu0 %v616
        %v7791 = vpop.f32.mrf.mxu0
        %v7792 = vadd.f32 0.0, %v7791
        %v7793 = vpop.f32.mrf.mxu0
        %v7794 = vpop.f32.mrf.mxu0
        %v7795 = vadd.f32 0.0, %v7794
        %v7796 = vpop.f32.mrf.mxu0
        %7797 = vmatprep.mubr.bf16.mxu0 0
        %7798 = vmatmul.mubr.bf16.gmra.mxu0 %v619
        %v7799 = vpop.f32.mrf.mxu0
        %v7800 = vadd.f32 0.0, %v7799
        %v7801 = vpop.f32.mrf.mxu0
        %v7802 = vpop.f32.mrf.mxu0
        %v7803 = vadd.f32 0.0, %v7802
        %v7804 = vpop.f32.mrf.mxu0
        %7805 = vdwg.mxu0
        %v7806 = vadd.f32 %v7688, %v7744
        %v7807 = vadd.f32 %v7689, %v7747
        %v7808 = vadd.f32 %v7690, %v7752
        %v7809 = vadd.f32 %v7691, %v7755
        %v7810 = vadd.f32 %v7692, %v7760
        %v7811 = vadd.f32 %v7693, %v7763
        %v7812 = vadd.f32 %v7694, %v7768
        %v7813 = vadd.f32 %v7695, %v7771
        %v7814 = vadd.f32 %v7696, %v7776
        %v7815 = vadd.f32 %v7697, %v7779
        %v7816 = vadd.f32 %v7698, %v7784
        %v7817 = vadd.f32 %v7699, %v7787
        %v7818 = vadd.f32 %v7700, %v7792
        %v7819 = vadd.f32 %v7701, %v7795
        %v7820 = vadd.f32 %v7702, %v7800
        %v7821 = vadd.f32 %v7703, %v7803
        %v7822 = vld [vmem:[%s311] sm:$0x8]
        %v7823 = vld [vmem:[%s311 + $0xc] sm:$0x8]
        %v7824 = vld [vmem:[%s311 + $0x18] sm:$0x8]
        %v7825 = vld [vmem:[%s311 + $0x24] sm:$0x8]
        %v7826 = vld [vmem:[%s311 + $0x30] sm:$0x8]
        %v7827 = vld [vmem:[%s311 + $0x3c] sm:$0x8]
        %v7828 = vld [vmem:[%s311 + $0x48] sm:$0x8]
        %v7829 = vld [vmem:[%s311 + $0x54] sm:$0x8]
        %v7846 = vrot.slane %v7822, 7
        %v7847 = vrot.slane %v7846, 4
        %v7848 = vrot.slane %v313, 7
        %v7849 = vsel %vm7283, %v7847, %v7848
        %v7850 = vrot.slane %v7848, 4
        %v7851 = vrot.slane %v5008, 7
        %v7852 = vsel %vm7283, %v7850, %v7851
        %v7853 = vrot.slane %v7823, 7
        %v7854 = vrot.slane %v7853, 4
        %v7855 = vrot.slane %v316, 7
        %v7856 = vsel %vm7283, %v7854, %v7855
        %v7857 = vrot.slane %v7855, 4
        %v7858 = vrot.slane %v5009, 7
        %v7859 = vsel %vm7283, %v7857, %v7858
        %v7860 = vrot.slane %v7824, 7
        %v7861 = vrot.slane %v7860, 4
        %v7862 = vrot.slane %v319, 7
        %v7863 = vsel %vm7283, %v7861, %v7862
        %v7864 = vrot.slane %v7862, 4
        %v7865 = vrot.slane %v5010, 7
        %v7866 = vsel %vm7283, %v7864, %v7865
        %v7867 = vrot.slane %v7825, 7
        %v7868 = vrot.slane %v7867, 4
        %v7869 = vrot.slane %v322, 7
        %v7870 = vsel %vm7283, %v7868, %v7869
        %v7871 = vrot.slane %v7869, 4
        %v7872 = vrot.slane %v5011, 7
        %v7873 = vsel %vm7283, %v7871, %v7872
        %v7874 = vrot.slane %v7826, 7
        %v7875 = vrot.slane %v7874, 4
        %v7876 = vrot.slane %v325, 7
        %v7877 = vsel %vm7283, %v7875, %v7876
        %v7878 = vrot.slane %v7876, 4
        %v7879 = vrot.slane %v5012, 7
        %v7880 = vsel %vm7283, %v7878, %v7879
        %v7881 = vrot.slane %v7827, 7
        %v7882 = vrot.slane %v7881, 4
        %v7883 = vrot.slane %v328, 7
        %v7884 = vsel %vm7283, %v7882, %v7883
        %v7885 = vrot.slane %v7883, 4
        %v7886 = vrot.slane %v5013, 7
        %v7887 = vsel %vm7283, %v7885, %v7886
        %v7888 = vrot.slane %v7828, 7
        %v7889 = vrot.slane %v7888, 4
        %v7890 = vrot.slane %v331, 7
        %v7891 = vsel %vm7283, %v7889, %v7890
        %v7892 = vrot.slane %v7890, 4
        %v7893 = vrot.slane %v5014, 7
        %v7894 = vsel %vm7283, %v7892, %v7893
        %v7895 = vrot.slane %v7829, 7
        %v7896 = vrot.slane %v7895, 4
        %v7897 = vrot.slane %v334, 7
        %v7898 = vsel %vm7283, %v7896, %v7897
        %v7899 = vrot.slane %v7897, 4
        %v7900 = vrot.slane %v5015, 7
        %v7901 = vsel %vm7283, %v7899, %v7900
        %s7902 = scalar_lea.vmem %s4, 46
        %v7903 = vld [vmem:[%s7902] sm:$0x3]
        %v7904 = vunpack.c.l.b16 %v7849
        %v7905 = vunpack.c.l.b16 %v7852
        %v7906 = vunpack.c.l.b16 %v7856
        %v7907 = vunpack.c.l.b16 %v7859
        %v7908 = vunpack.c.l.b16 %v7863
        %v7909 = vunpack.c.l.b16 %v7866
        %v7910 = vunpack.c.l.b16 %v7870
        %v7911 = vunpack.c.l.b16 %v7873
        %v7912 = vunpack.c.l.b16 %v7877
        %v7913 = vunpack.c.l.b16 %v7880
        %v7914 = vunpack.c.l.b16 %v7884
        %v7915 = vunpack.c.l.b16 %v7887
        %v7916 = vunpack.c.l.b16 %v7891
        %v7917 = vunpack.c.l.b16 %v7894
        %v7918 = vunpack.c.l.b16 %v7898
        %v7919 = vunpack.c.l.b16 %v7901
        %v7920 = vpack.c.b16 %v7905, %v7904
        %v7921 = vpack.c.b16 %v7907, %v7906
        %v7922 = vpack.c.b16 %v7909, %v7908
        %v7923 = vpack.c.b16 %v7911, %v7910
        %v7924 = vpack.c.b16 %v7913, %v7912
        %v7925 = vpack.c.b16 %v7915, %v7914
        %v7926 = vpack.c.b16 %v7917, %v7916
        %v7927 = vpack.c.b16 %v7919, %v7918
        %v7929 = vsel %vm596, %v7920, 0
        %v7932 = vsel %vm596, %v7921, 0
        %v7935 = vsel %vm596, %v7922, 0
        %v7938 = vsel %vm596, %v7923, 0
        %v7941 = vsel %vm596, %v7924, 0
        %v7944 = vsel %vm596, %v7925, 0
        %v7947 = vsel %vm596, %v7926, 0
        %v7950 = vsel %vm596, %v7927, 0
        %v7953 = vsel %vm621, %v7903, 0
        %7955 = vmatprep.subr.bf16.mxu0 0
        %7956 = vmatpush1.bf16.msra.mxu0 0
        %7957 = vmatprep.subr.bf16.mxu0 0
        %7958 = vmatpush1.bf16.msra.mxu0 0
        %7959 = vmatprep.subr.bf16.mxu0 0
        %7960 = vmatpush1.bf16.msra.mxu0 0
        %7961 = vmatprep.subr.bf16.mxu0 0
        %7962 = vmatpush1.bf16.msra.mxu0 0
        %7963 = vmatprep.subr.bf16.mxu0 0
        %7964 = vmatpush1.bf16.msra.mxu0 0
        %7965 = vmatprep.subr.bf16.mxu0 0
        %7966 = vmatpush1.bf16.msra.mxu0 0
        %7967 = vmatprep.subr.bf16.mxu0 0
        %7968 = vmatpush1.bf16.msra.mxu0 0
        %7969 = vmatprep.subr.bf16.mxu0 0
        %7970 = vmatpush1.bf16.msra.mxu0 %v7953
        %7971 = vmatprep.subr.bf16.mxu0 0
        %7972 = vmatpush2.bf16.msra.mxu0 0
        %7973 = vmatprep.subr.bf16.mxu0 0
        %7974 = vmatpush2.bf16.msra.mxu0 0
        %7975 = vmatprep.subr.bf16.mxu0 0
        %7976 = vmatpush2.bf16.msra.mxu0 0
        %7977 = vmatprep.subr.bf16.mxu0 0
        %7978 = vmatpush2.bf16.msra.mxu0 0
        %7979 = vmatprep.subr.bf16.mxu0 0
        %7980 = vmatpush2.bf16.msra.mxu0 0
        %7981 = vmatprep.subr.bf16.mxu0 0
        %7982 = vmatpush2.bf16.msra.mxu0 0
        %7983 = vmatprep.subr.bf16.mxu0 0
        %7984 = vmatpush2.bf16.msra.mxu0 0
        %7985 = vmatprep.subr.bf16.mxu0 0
        %7986 = vmatpush2.bf16.msra.mxu0 0
        %7987 = vmatprep.mubr.bf16.mxu0 0
        %7988 = vmatmul.mubr.bf16.gmra.mxu0 %v7929
        %v7989 = vpop.f32.mrf.mxu0
        %v7990 = vadd.f32 0.0, %v7989
        %v7991 = vpop.f32.mrf.mxu0
        %v7992 = vpop.f32.mrf.mxu0
        %v7993 = vadd.f32 0.0, %v7992
        %v7994 = vpop.f32.mrf.mxu0
        %7995 = vmatprep.mubr.bf16.mxu0 0
        %7996 = vmatmul.mubr.bf16.gmra.mxu0 %v7932
        %v7997 = vpop.f32.mrf.mxu0
        %v7998 = vadd.f32 0.0, %v7997
        %v7999 = vpop.f32.mrf.mxu0
        %v8000 = vpop.f32.mrf.mxu0
        %v8001 = vadd.f32 0.0, %v8000
        %v8002 = vpop.f32.mrf.mxu0
        %8003 = vmatprep.mubr.bf16.mxu0 0
        %8004 = vmatmul.mubr.bf16.gmra.mxu0 %v7935
        %v8005 = vpop.f32.mrf.mxu0
        %v8006 = vadd.f32 0.0, %v8005
        %v8007 = vpop.f32.mrf.mxu0
        %v8008 = vpop.f32.mrf.mxu0
        %v8009 = vadd.f32 0.0, %v8008
        %v8010 = vpop.f32.mrf.mxu0
        %8011 = vmatprep.mubr.bf16.mxu0 0
        %8012 = vmatmul.mubr.bf16.gmra.mxu0 %v7938
        %v8013 = vpop.f32.mrf.mxu0
        %v8014 = vadd.f32 0.0, %v8013
        %v8015 = vpop.f32.mrf.mxu0
        %v8016 = vpop.f32.mrf.mxu0
        %v8017 = vadd.f32 0.0, %v8016
        %v8018 = vpop.f32.mrf.mxu0
        %8019 = vmatprep.mubr.bf16.mxu0 0
        %8020 = vmatmul.mubr.bf16.gmra.mxu0 %v7941
        %v8021 = vpop.f32.mrf.mxu0
        %v8022 = vadd.f32 0.0, %v8021
        %v8023 = vpop.f32.mrf.mxu0
        %v8024 = vpop.f32.mrf.mxu0
        %v8025 = vadd.f32 0.0, %v8024
        %v8026 = vpop.f32.mrf.mxu0
        %8027 = vmatprep.mubr.bf16.mxu0 0
        %8028 = vmatmul.mubr.bf16.gmra.mxu0 %v7944
        %v8029 = vpop.f32.mrf.mxu0
        %v8030 = vadd.f32 0.0, %v8029
        %v8031 = vpop.f32.mrf.mxu0
        %v8032 = vpop.f32.mrf.mxu0
        %v8033 = vadd.f32 0.0, %v8032
        %v8034 = vpop.f32.mrf.mxu0
        %8035 = vmatprep.mubr.bf16.mxu0 0
        %8036 = vmatmul.mubr.bf16.gmra.mxu0 %v7947
        %v8037 = vpop.f32.mrf.mxu0
        %v8038 = vadd.f32 0.0, %v8037
        %v8039 = vpop.f32.mrf.mxu0
        %v8040 = vpop.f32.mrf.mxu0
        %v8041 = vadd.f32 0.0, %v8040
        %v8042 = vpop.f32.mrf.mxu0
        %8043 = vmatprep.mubr.bf16.mxu0 0
        %8044 = vmatmul.mubr.bf16.gmra.mxu0 %v7950
        %v8045 = vpop.f32.mrf.mxu0
        %v8046 = vadd.f32 0.0, %v8045
        %v8047 = vpop.f32.mrf.mxu0
        %v8048 = vpop.f32.mrf.mxu0
        %v8049 = vadd.f32 0.0, %v8048
        %v8050 = vpop.f32.mrf.mxu0
        %8051 = vdwg.mxu0
        %v8052 = vadd.f32 %v7806, %v7990
        %v8053 = vadd.f32 %v7807, %v7993
        %v8054 = vadd.f32 %v7808, %v7998
        %v8055 = vadd.f32 %v7809, %v8001
        %v8056 = vadd.f32 %v7810, %v8006
        %v8057 = vadd.f32 %v7811, %v8009
        %v8058 = vadd.f32 %v7812, %v8014
        %v8059 = vadd.f32 %v7813, %v8017
        %v8060 = vadd.f32 %v7814, %v8022
        %v8061 = vadd.f32 %v7815, %v8025
        %v8062 = vadd.f32 %v7816, %v8030
        %v8063 = vadd.f32 %v7817, %v8033
        %v8064 = vadd.f32 %v7818, %v8038
        %v8065 = vadd.f32 %v7819, %v8041
        %v8066 = vadd.f32 %v7820, %v8046
        %v8067 = vadd.f32 %v7821, %v8049
        %s8068 = sadd.s32 %s307, 6
        %s8069 = smul.u32 %s8068, 3
        %s8070 = smul.addr %s8069, 4
        %s8071 = scalar_lea.vmem %s301, %s8070
        %v8072 = vld [vmem:[%s8071] sm:$0xf]
        %v8073 = vld [vmem:[%s8071 + $0x4] sm:$0xf]
        %v8074 = vld [vmem:[%s8071 + $0xc] sm:$0xf]
        %v8075 = vld [vmem:[%s8071 + $0x10] sm:$0xf]
        %v8076 = vld [vmem:[%s8071 + $0x18] sm:$0xf]
        %v8077 = vld [vmem:[%s8071 + $0x1c] sm:$0xf]
        %v8078 = vld [vmem:[%s8071 + $0x24] sm:$0xf]
        %v8079 = vld [vmem:[%s8071 + $0x28] sm:$0xf]
        %v8080 = vld [vmem:[%s8071 + $0x30] sm:$0xf]
        %v8081 = vld [vmem:[%s8071 + $0x34] sm:$0xf]
        %v8082 = vld [vmem:[%s8071 + $0x3c] sm:$0xf]
        %v8083 = vld [vmem:[%s8071 + $0x40] sm:$0xf]
        %v8084 = vld [vmem:[%s8071 + $0x48] sm:$0xf]
        %v8085 = vld [vmem:[%s8071 + $0x4c] sm:$0xf]
        %v8086 = vld [vmem:[%s8071 + $0x54] sm:$0xf]
        %v8087 = vld [vmem:[%s8071 + $0x58] sm:$0xf]
        %s8088 = scalar_lea.vmem %s4, 48
        %v8089 = vld [vmem:[%s8088] sm:$0x3]
        %v8106 = vunpack.c.l.b16 %v8072
        %v8107 = vunpack.c.l.b16 %v8073
        %v8108 = vunpack.c.l.b16 %v8074
        %v8109 = vunpack.c.l.b16 %v8075
        %v8110 = vunpack.c.l.b16 %v8076
        %v8111 = vunpack.c.l.b16 %v8077
        %v8112 = vunpack.c.l.b16 %v8078
        %v8113 = vunpack.c.l.b16 %v8079
        %v8114 = vunpack.c.l.b16 %v8080
        %v8115 = vunpack.c.l.b16 %v8081
        %v8116 = vunpack.c.l.b16 %v8082
        %v8117 = vunpack.c.l.b16 %v8083
        %v8118 = vunpack.c.l.b16 %v8084
        %v8119 = vunpack.c.l.b16 %v8085
        %v8120 = vunpack.c.l.b16 %v8086
        %v8121 = vunpack.c.l.b16 %v8087
        %v8122 = vpack.c.b16 %v8107, %v8106
        %v8123 = vpack.c.b16 %v8109, %v8108
        %v8124 = vpack.c.b16 %v8111, %v8110
        %v8125 = vpack.c.b16 %v8113, %v8112
        %v8126 = vpack.c.b16 %v8115, %v8114
        %v8127 = vpack.c.b16 %v8117, %v8116
        %v8128 = vpack.c.b16 %v8119, %v8118
        %v8129 = vpack.c.b16 %v8121, %v8120
        %v8131 = vsel %vm596, %v8122, 0
        %v8134 = vsel %vm596, %v8123, 0
        %v8137 = vsel %vm596, %v8124, 0
        %v8140 = vsel %vm596, %v8125, 0
        %v8143 = vsel %vm596, %v8126, 0
        %v8146 = vsel %vm596, %v8127, 0
        %v8149 = vsel %vm596, %v8128, 0
        %v8152 = vsel %vm596, %v8129, 0
        %v8155 = vsel %vm621, %v8089, 0
        %8157 = vmatprep.subr.bf16.mxu0 0
        %8158 = vmatpush1.bf16.msra.mxu0 0
        %8159 = vmatprep.subr.bf16.mxu0 0
        %8160 = vmatpush1.bf16.msra.mxu0 0
        %8161 = vmatprep.subr.bf16.mxu0 0
        %8162 = vmatpush1.bf16.msra.mxu0 0
        %8163 = vmatprep.subr.bf16.mxu0 0
        %8164 = vmatpush1.bf16.msra.mxu0 0
        %8165 = vmatprep.subr.bf16.mxu0 0
        %8166 = vmatpush1.bf16.msra.mxu0 0
        %8167 = vmatprep.subr.bf16.mxu0 0
        %8168 = vmatpush1.bf16.msra.mxu0 0
        %8169 = vmatprep.subr.bf16.mxu0 0
        %8170 = vmatpush1.bf16.msra.mxu0 0
        %8171 = vmatprep.subr.bf16.mxu0 0
        %8172 = vmatpush1.bf16.msra.mxu0 %v8155
        %8173 = vmatprep.subr.bf16.mxu0 0
        %8174 = vmatpush2.bf16.msra.mxu0 0
        %8175 = vmatprep.subr.bf16.mxu0 0
        %8176 = vmatpush2.bf16.msra.mxu0 0
        %8177 = vmatprep.subr.bf16.mxu0 0
        %8178 = vmatpush2.bf16.msra.mxu0 0
        %8179 = vmatprep.subr.bf16.mxu0 0
        %8180 = vmatpush2.bf16.msra.mxu0 0
        %8181 = vmatprep.subr.bf16.mxu0 0
        %8182 = vmatpush2.bf16.msra.mxu0 0
        %8183 = vmatprep.subr.bf16.mxu0 0
        %8184 = vmatpush2.bf16.msra.mxu0 0
        %8185 = vmatprep.subr.bf16.mxu0 0
        %8186 = vmatpush2.bf16.msra.mxu0 0
        %8187 = vmatprep.subr.bf16.mxu0 0
        %8188 = vmatpush2.bf16.msra.mxu0 0
        %8189 = vmatprep.mubr.bf16.mxu0 0
        %8190 = vmatmul.mubr.bf16.gmra.mxu0 %v8131
        %v8191 = vpop.f32.mrf.mxu0
        %v8192 = vadd.f32 0.0, %v8191
        %v8193 = vpop.f32.mrf.mxu0
        %v8194 = vpop.f32.mrf.mxu0
        %v8195 = vadd.f32 0.0, %v8194
        %v8196 = vpop.f32.mrf.mxu0
        %8197 = vmatprep.mubr.bf16.mxu0 0
        %8198 = vmatmul.mubr.bf16.gmra.mxu0 %v8134
        %v8199 = vpop.f32.mrf.mxu0
        %v8200 = vadd.f32 0.0, %v8199
        %v8201 = vpop.f32.mrf.mxu0
        %v8202 = vpop.f32.mrf.mxu0
        %v8203 = vadd.f32 0.0, %v8202
        %v8204 = vpop.f32.mrf.mxu0
        %8205 = vmatprep.mubr.bf16.mxu0 0
        %8206 = vmatmul.mubr.bf16.gmra.mxu0 %v8137
        %v8207 = vpop.f32.mrf.mxu0
        %v8208 = vadd.f32 0.0, %v8207
        %v8209 = vpop.f32.mrf.mxu0
        %v8210 = vpop.f32.mrf.mxu0
        %v8211 = vadd.f32 0.0, %v8210
        %v8212 = vpop.f32.mrf.mxu0
        %8213 = vmatprep.mubr.bf16.mxu0 0
        %8214 = vmatmul.mubr.bf16.gmra.mxu0 %v8140
        %v8215 = vpop.f32.mrf.mxu0
        %v8216 = vadd.f32 0.0, %v8215
        %v8217 = vpop.f32.mrf.mxu0
        %v8218 = vpop.f32.mrf.mxu0
        %v8219 = vadd.f32 0.0, %v8218
        %v8220 = vpop.f32.mrf.mxu0
        %8221 = vmatprep.mubr.bf16.mxu0 0
        %8222 = vmatmul.mubr.bf16.gmra.mxu0 %v8143
        %v8223 = vpop.f32.mrf.mxu0
        %v8224 = vadd.f32 0.0, %v8223
        %v8225 = vpop.f32.mrf.mxu0
        %v8226 = vpop.f32.mrf.mxu0
        %v8227 = vadd.f32 0.0, %v8226
        %v8228 = vpop.f32.mrf.mxu0
        %8229 = vmatprep.mubr.bf16.mxu0 0
        %8230 = vmatmul.mubr.bf16.gmra.mxu0 %v8146
        %v8231 = vpop.f32.mrf.mxu0
        %v8232 = vadd.f32 0.0, %v8231
        %v8233 = vpop.f32.mrf.mxu0
        %v8234 = vpop.f32.mrf.mxu0
        %v8235 = vadd.f32 0.0, %v8234
        %v8236 = vpop.f32.mrf.mxu0
        %8237 = vmatprep.mubr.bf16.mxu0 0
        %8238 = vmatmul.mubr.bf16.gmra.mxu0 %v8149
        %v8239 = vpop.f32.mrf.mxu0
        %v8240 = vadd.f32 0.0, %v8239
        %v8241 = vpop.f32.mrf.mxu0
        %v8242 = vpop.f32.mrf.mxu0
        %v8243 = vadd.f32 0.0, %v8242
        %v8244 = vpop.f32.mrf.mxu0
        %8245 = vmatprep.mubr.bf16.mxu0 0
        %8246 = vmatmul.mubr.bf16.gmra.mxu0 %v8152
        %v8247 = vpop.f32.mrf.mxu0
        %v8248 = vadd.f32 0.0, %v8247
        %v8249 = vpop.f32.mrf.mxu0
        %v8250 = vpop.f32.mrf.mxu0
        %v8251 = vadd.f32 0.0, %v8250
        %v8252 = vpop.f32.mrf.mxu0
        %8253 = vdwg.mxu0
        %v8254 = vadd.f32 %v8052, %v8192
        %v8255 = vadd.f32 %v8053, %v8195
        %v8256 = vadd.f32 %v8054, %v8200
        %v8257 = vadd.f32 %v8055, %v8203
        %v8258 = vadd.f32 %v8056, %v8208
        %v8259 = vadd.f32 %v8057, %v8211
        %v8260 = vadd.f32 %v8058, %v8216
        %v8261 = vadd.f32 %v8059, %v8219
        %v8262 = vadd.f32 %v8060, %v8224
        %v8263 = vadd.f32 %v8061, %v8227
        %v8264 = vadd.f32 %v8062, %v8232
        %v8265 = vadd.f32 %v8063, %v8235
        %v8266 = vadd.f32 %v8064, %v8240
        %v8267 = vadd.f32 %v8065, %v8243
        %v8268 = vadd.f32 %v8066, %v8248
        %v8269 = vadd.f32 %v8067, %v8251
        %v8270 = vld [vmem:[%s8071] sm:$0xe]
        %v8271 = vld [vmem:[%s8071 + $0x4] sm:$0xf]
        %v8272 = vld [vmem:[%s8071 + $0x8] sm:$0x3]
        %v8273 = vld [vmem:[%s8071 + $0xc] sm:$0xe]
        %v8274 = vld [vmem:[%s8071 + $0x10] sm:$0xf]
        %v8275 = vld [vmem:[%s8071 + $0x14] sm:$0x3]
        %v8276 = vld [vmem:[%s8071 + $0x18] sm:$0xe]
        %v8277 = vld [vmem:[%s8071 + $0x1c] sm:$0xf]
        %v8278 = vld [vmem:[%s8071 + $0x20] sm:$0x3]
        %v8279 = vld [vmem:[%s8071 + $0x24] sm:$0xe]
        %v8280 = vld [vmem:[%s8071 + $0x28] sm:$0xf]
        %v8281 = vld [vmem:[%s8071 + $0x2c] sm:$0x3]
        %v8282 = vld [vmem:[%s8071 + $0x30] sm:$0xe]
        %v8283 = vld [vmem:[%s8071 + $0x34] sm:$0xf]
        %v8284 = vld [vmem:[%s8071 + $0x38] sm:$0x3]
        %v8285 = vld [vmem:[%s8071 + $0x3c] sm:$0xe]
        %v8286 = vld [vmem:[%s8071 + $0x40] sm:$0xf]
        %v8287 = vld [vmem:[%s8071 + $0x44] sm:$0x3]
        %v8288 = vld [vmem:[%s8071 + $0x48] sm:$0xe]
        %v8289 = vld [vmem:[%s8071 + $0x4c] sm:$0xf]
        %v8290 = vld [vmem:[%s8071 + $0x50] sm:$0x3]
        %v8291 = vld [vmem:[%s8071 + $0x54] sm:$0xe]
        %v8292 = vld [vmem:[%s8071 + $0x58] sm:$0xf]
        %v8293 = vld [vmem:[%s8071 + $0x5c] sm:$0x3]
        %v8295 = vshrl.u32 %v8270, 16
        %v8297 = vrot.slane %v8295, 5
        %v8298 = vshll.u32 %v8270, 16
        %v8300 = vrot.slane %v8298, 6
        %v8301 = vor.u32 %v8297, %v8300
        %v8302 = vrot.slane %v8301, 4
        %v8304 = vshrl.u32 %v8271, 16
        %v8306 = vrot.slane %v8304, 5
        %v8307 = vshll.u32 %v8271, 16
        %v8309 = vrot.slane %v8307, 6
        %v8310 = vor.u32 %v8306, %v8309
        %v8311 = vsel %vm338, %v8302, %v8310
        %v8312 = vrot.slane %v8310, 4
        %v8314 = vshrl.u32 %v8272, 16
        %v8316 = vrot.slane %v8314, 5
        %v8317 = vshll.u32 %v8272, 16
        %v8319 = vrot.slane %v8317, 6
        %v8320 = vor.u32 %v8316, %v8319
        %v8321 = vsel %vm338, %v8312, %v8320
        %v8323 = vshrl.u32 %v8273, 16
        %v8325 = vrot.slane %v8323, 5
        %v8326 = vshll.u32 %v8273, 16
        %v8328 = vrot.slane %v8326, 6
        %v8329 = vor.u32 %v8325, %v8328
        %v8330 = vrot.slane %v8329, 4
        %v8332 = vshrl.u32 %v8274, 16
        %v8334 = vrot.slane %v8332, 5
        %v8335 = vshll.u32 %v8274, 16
        %v8337 = vrot.slane %v8335, 6
        %v8338 = vor.u32 %v8334, %v8337
        %v8339 = vsel %vm338, %v8330, %v8338
        %v8340 = vrot.slane %v8338, 4
        %v8342 = vshrl.u32 %v8275, 16
        %v8344 = vrot.slane %v8342, 5
        %v8345 = vshll.u32 %v8275, 16
        %v8347 = vrot.slane %v8345, 6
        %v8348 = vor.u32 %v8344, %v8347
        %v8349 = vsel %vm338, %v8340, %v8348
        %v8351 = vshrl.u32 %v8276, 16
        %v8353 = vrot.slane %v8351, 5
        %v8354 = vshll.u32 %v8276, 16
        %v8356 = vrot.slane %v8354, 6
        %v8357 = vor.u32 %v8353, %v8356
        %v8358 = vrot.slane %v8357, 4
        %v8360 = vshrl.u32 %v8277, 16
        %v8362 = vrot.slane %v8360, 5
        %v8363 = vshll.u32 %v8277, 16
        %v8365 = vrot.slane %v8363, 6
        %v8366 = vor.u32 %v8362, %v8365
        %v8367 = vsel %vm338, %v8358, %v8366
        %v8368 = vrot.slane %v8366, 4
        %v8370 = vshrl.u32 %v8278, 16
        %v8372 = vrot.slane %v8370, 5
        %v8373 = vshll.u32 %v8278, 16
        %v8375 = vrot.slane %v8373, 6
        %v8376 = vor.u32 %v8372, %v8375
        %v8377 = vsel %vm338, %v8368, %v8376
        %v8379 = vshrl.u32 %v8279, 16
        %v8381 = vrot.slane %v8379, 5
        %v8382 = vshll.u32 %v8279, 16
        %v8384 = vrot.slane %v8382, 6
        %v8385 = vor.u32 %v8381, %v8384
        %v8386 = vrot.slane %v8385, 4
        %v8388 = vshrl.u32 %v8280, 16
        %v8390 = vrot.slane %v8388, 5
        %v8391 = vshll.u32 %v8280, 16
        %v8393 = vrot.slane %v8391, 6
        %v8394 = vor.u32 %v8390, %v8393
        %v8395 = vsel %vm338, %v8386, %v8394
        %v8396 = vrot.slane %v8394, 4
        %v8398 = vshrl.u32 %v8281, 16
        %v8400 = vrot.slane %v8398, 5
        %v8401 = vshll.u32 %v8281, 16
        %v8403 = vrot.slane %v8401, 6
        %v8404 = vor.u32 %v8400, %v8403
        %v8405 = vsel %vm338, %v8396, %v8404
        %v8407 = vshrl.u32 %v8282, 16
        %v8409 = vrot.slane %v8407, 5
        %v8410 = vshll.u32 %v8282, 16
        %v8412 = vrot.slane %v8410, 6
        %v8413 = vor.u32 %v8409, %v8412
        %v8414 = vrot.slane %v8413, 4
        %v8416 = vshrl.u32 %v8283, 16
        %v8418 = vrot.slane %v8416, 5
        %v8419 = vshll.u32 %v8283, 16
        %v8421 = vrot.slane %v8419, 6
        %v8422 = vor.u32 %v8418, %v8421
        %v8423 = vsel %vm338, %v8414, %v8422
        %v8424 = vrot.slane %v8422, 4
        %v8426 = vshrl.u32 %v8284, 16
        %v8428 = vrot.slane %v8426, 5
        %v8429 = vshll.u32 %v8284, 16
        %v8431 = vrot.slane %v8429, 6
        %v8432 = vor.u32 %v8428, %v8431
        %v8433 = vsel %vm338, %v8424, %v8432
        %v8435 = vshrl.u32 %v8285, 16
        %v8437 = vrot.slane %v8435, 5
        %v8438 = vshll.u32 %v8285, 16
        %v8440 = vrot.slane %v8438, 6
        %v8441 = vor.u32 %v8437, %v8440
        %v8442 = vrot.slane %v8441, 4
        %v8444 = vshrl.u32 %v8286, 16
        %v8446 = vrot.slane %v8444, 5
        %v8447 = vshll.u32 %v8286, 16
        %v8449 = vrot.slane %v8447, 6
        %v8450 = vor.u32 %v8446, %v8449
        %v8451 = vsel %vm338, %v8442, %v8450
        %v8452 = vrot.slane %v8450, 4
        %v8454 = vshrl.u32 %v8287, 16
        %v8456 = vrot.slane %v8454, 5
        %v8457 = vshll.u32 %v8287, 16
        %v8459 = vrot.slane %v8457, 6
        %v8460 = vor.u32 %v8456, %v8459
        %v8461 = vsel %vm338, %v8452, %v8460
        %v8463 = vshrl.u32 %v8288, 16
        %v8465 = vrot.slane %v8463, 5
        %v8466 = vshll.u32 %v8288, 16
        %v8468 = vrot.slane %v8466, 6
        %v8469 = vor.u32 %v8465, %v8468
        %v8470 = vrot.slane %v8469, 4
        %v8472 = vshrl.u32 %v8289, 16
        %v8474 = vrot.slane %v8472, 5
        %v8475 = vshll.u32 %v8289, 16
        %v8477 = vrot.slane %v8475, 6
        %v8478 = vor.u32 %v8474, %v8477
        %v8479 = vsel %vm338, %v8470, %v8478
        %v8480 = vrot.slane %v8478, 4
        %v8482 = vshrl.u32 %v8290, 16
        %v8484 = vrot.slane %v8482, 5
        %v8485 = vshll.u32 %v8290, 16
        %v8487 = vrot.slane %v8485, 6
        %v8488 = vor.u32 %v8484, %v8487
        %v8489 = vsel %vm338, %v8480, %v8488
        %v8491 = vshrl.u32 %v8291, 16
        %v8493 = vrot.slane %v8491, 5
        %v8494 = vshll.u32 %v8291, 16
        %v8496 = vrot.slane %v8494, 6
        %v8497 = vor.u32 %v8493, %v8496
        %v8498 = vrot.slane %v8497, 4
        %v8500 = vshrl.u32 %v8292, 16
        %v8502 = vrot.slane %v8500, 5
        %v8503 = vshll.u32 %v8292, 16
        %v8505 = vrot.slane %v8503, 6
        %v8506 = vor.u32 %v8502, %v8505
        %v8507 = vsel %vm338, %v8498, %v8506
        %v8508 = vrot.slane %v8506, 4
        %v8510 = vshrl.u32 %v8293, 16
        %v8512 = vrot.slane %v8510, 5
        %v8513 = vshll.u32 %v8293, 16
        %v8515 = vrot.slane %v8513, 6
        %v8516 = vor.u32 %v8512, %v8515
        %v8517 = vsel %vm338, %v8508, %v8516
        %s8518 = scalar_lea.vmem %s4, 50
        %v8519 = vld [vmem:[%s8518] sm:$0x3]
        %v8520 = vunpack.c.l.b16 %v8311
        %v8521 = vunpack.c.l.b16 %v8321
        %v8522 = vunpack.c.l.b16 %v8339
        %v8523 = vunpack.c.l.b16 %v8349
        %v8524 = vunpack.c.l.b16 %v8367
        %v8525 = vunpack.c.l.b16 %v8377
        %v8526 = vunpack.c.l.b16 %v8395
        %v8527 = vunpack.c.l.b16 %v8405
        %v8528 = vunpack.c.l.b16 %v8423
        %v8529 = vunpack.c.l.b16 %v8433
        %v8530 = vunpack.c.l.b16 %v8451
        %v8531 = vunpack.c.l.b16 %v8461
        %v8532 = vunpack.c.l.b16 %v8479
        %v8533 = vunpack.c.l.b16 %v8489
        %v8534 = vunpack.c.l.b16 %v8507
        %v8535 = vunpack.c.l.b16 %v8517
        %v8536 = vpack.c.b16 %v8521, %v8520
        %v8537 = vpack.c.b16 %v8523, %v8522
        %v8538 = vpack.c.b16 %v8525, %v8524
        %v8539 = vpack.c.b16 %v8527, %v8526
        %v8540 = vpack.c.b16 %v8529, %v8528
        %v8541 = vpack.c.b16 %v8531, %v8530
        %v8542 = vpack.c.b16 %v8533, %v8532
        %v8543 = vpack.c.b16 %v8535, %v8534
        %v8545 = vsel %vm596, %v8536, 0
        %v8548 = vsel %vm596, %v8537, 0
        %v8551 = vsel %vm596, %v8538, 0
        %v8554 = vsel %vm596, %v8539, 0
        %v8557 = vsel %vm596, %v8540, 0
        %v8560 = vsel %vm596, %v8541, 0
        %v8563 = vsel %vm596, %v8542, 0
        %v8566 = vsel %vm596, %v8543, 0
        %v8569 = vsel %vm621, %v8519, 0
        %8571 = vmatprep.subr.bf16.mxu0 0
        %8572 = vmatpush1.bf16.msra.mxu0 0
        %8573 = vmatprep.subr.bf16.mxu0 0
        %8574 = vmatpush1.bf16.msra.mxu0 0
        %8575 = vmatprep.subr.bf16.mxu0 0
        %8576 = vmatpush1.bf16.msra.mxu0 0
        %8577 = vmatprep.subr.bf16.mxu0 0
        %8578 = vmatpush1.bf16.msra.mxu0 0
        %8579 = vmatprep.subr.bf16.mxu0 0
        %8580 = vmatpush1.bf16.msra.mxu0 0
        %8581 = vmatprep.subr.bf16.mxu0 0
        %8582 = vmatpush1.bf16.msra.mxu0 0
        %8583 = vmatprep.subr.bf16.mxu0 0
        %8584 = vmatpush1.bf16.msra.mxu0 0
        %8585 = vmatprep.subr.bf16.mxu0 0
        %8586 = vmatpush1.bf16.msra.mxu0 %v8569
        %8587 = vmatprep.subr.bf16.mxu0 0
        %8588 = vmatpush2.bf16.msra.mxu0 0
        %8589 = vmatprep.subr.bf16.mxu0 0
        %8590 = vmatpush2.bf16.msra.mxu0 0
        %8591 = vmatprep.subr.bf16.mxu0 0
        %8592 = vmatpush2.bf16.msra.mxu0 0
        %8593 = vmatprep.subr.bf16.mxu0 0
        %8594 = vmatpush2.bf16.msra.mxu0 0
        %8595 = vmatprep.subr.bf16.mxu0 0
        %8596 = vmatpush2.bf16.msra.mxu0 0
        %8597 = vmatprep.subr.bf16.mxu0 0
        %8598 = vmatpush2.bf16.msra.mxu0 0
        %8599 = vmatprep.subr.bf16.mxu0 0
        %8600 = vmatpush2.bf16.msra.mxu0 0
        %8601 = vmatprep.subr.bf16.mxu0 0
        %8602 = vmatpush2.bf16.msra.mxu0 0
        %8603 = vmatprep.mubr.bf16.mxu0 0
        %8604 = vmatmul.mubr.bf16.gmra.mxu0 %v8545
        %v8605 = vpop.f32.mrf.mxu0
        %v8606 = vadd.f32 0.0, %v8605
        %v8607 = vpop.f32.mrf.mxu0
        %v8608 = vpop.f32.mrf.mxu0
        %v8609 = vadd.f32 0.0, %v8608
        %v8610 = vpop.f32.mrf.mxu0
        %8611 = vmatprep.mubr.bf16.mxu0 0
        %8612 = vmatmul.mubr.bf16.gmra.mxu0 %v8548
        %v8613 = vpop.f32.mrf.mxu0
        %v8614 = vadd.f32 0.0, %v8613
        %v8615 = vpop.f32.mrf.mxu0
        %v8616 = vpop.f32.mrf.mxu0
        %v8617 = vadd.f32 0.0, %v8616
        %v8618 = vpop.f32.mrf.mxu0
        %8619 = vmatprep.mubr.bf16.mxu0 0
        %8620 = vmatmul.mubr.bf16.gmra.mxu0 %v8551
        %v8621 = vpop.f32.mrf.mxu0
        %v8622 = vadd.f32 0.0, %v8621
        %v8623 = vpop.f32.mrf.mxu0
        %v8624 = vpop.f32.mrf.mxu0
        %v8625 = vadd.f32 0.0, %v8624
        %v8626 = vpop.f32.mrf.mxu0
        %8627 = vmatprep.mubr.bf16.mxu0 0
        %8628 = vmatmul.mubr.bf16.gmra.mxu0 %v8554
        %v8629 = vpop.f32.mrf.mxu0
        %v8630 = vadd.f32 0.0, %v8629
        %v8631 = vpop.f32.mrf.mxu0
        %v8632 = vpop.f32.mrf.mxu0
        %v8633 = vadd.f32 0.0, %v8632
        %v8634 = vpop.f32.mrf.mxu0
        %8635 = vmatprep.mubr.bf16.mxu0 0
        %8636 = vmatmul.mubr.bf16.gmra.mxu0 %v8557
        %v8637 = vpop.f32.mrf.mxu0
        %v8638 = vadd.f32 0.0, %v8637
        %v8639 = vpop.f32.mrf.mxu0
        %v8640 = vpop.f32.mrf.mxu0
        %v8641 = vadd.f32 0.0, %v8640
        %v8642 = vpop.f32.mrf.mxu0
        %8643 = vmatprep.mubr.bf16.mxu0 0
        %8644 = vmatmul.mubr.bf16.gmra.mxu0 %v8560
        %v8645 = vpop.f32.mrf.mxu0
        %v8646 = vadd.f32 0.0, %v8645
        %v8647 = vpop.f32.mrf.mxu0
        %v8648 = vpop.f32.mrf.mxu0
        %v8649 = vadd.f32 0.0, %v8648
        %v8650 = vpop.f32.mrf.mxu0
        %8651 = vmatprep.mubr.bf16.mxu0 0
        %8652 = vmatmul.mubr.bf16.gmra.mxu0 %v8563
        %v8653 = vpop.f32.mrf.mxu0
        %v8654 = vadd.f32 0.0, %v8653
        %v8655 = vpop.f32.mrf.mxu0
        %v8656 = vpop.f32.mrf.mxu0
        %v8657 = vadd.f32 0.0, %v8656
        %v8658 = vpop.f32.mrf.mxu0
        %8659 = vmatprep.mubr.bf16.mxu0 0
        %8660 = vmatmul.mubr.bf16.gmra.mxu0 %v8566
        %v8661 = vpop.f32.mrf.mxu0
        %v8662 = vadd.f32 0.0, %v8661
        %v8663 = vpop.f32.mrf.mxu0
        %v8664 = vpop.f32.mrf.mxu0
        %v8665 = vadd.f32 0.0, %v8664
        %v8666 = vpop.f32.mrf.mxu0
        %8667 = vdwg.mxu0
        %v8668 = vadd.f32 %v8254, %v8606
        %v8669 = vadd.f32 %v8255, %v8609
        %v8670 = vadd.f32 %v8256, %v8614
        %v8671 = vadd.f32 %v8257, %v8617
        %v8672 = vadd.f32 %v8258, %v8622
        %v8673 = vadd.f32 %v8259, %v8625
        %v8674 = vadd.f32 %v8260, %v8630
        %v8675 = vadd.f32 %v8261, %v8633
        %v8676 = vadd.f32 %v8262, %v8638
        %v8677 = vadd.f32 %v8263, %v8641
        %v8678 = vadd.f32 %v8264, %v8646
        %v8679 = vadd.f32 %v8265, %v8649
        %v8680 = vadd.f32 %v8266, %v8654
        %v8681 = vadd.f32 %v8267, %v8657
        %v8682 = vadd.f32 %v8268, %v8662
        %v8683 = vadd.f32 %v8269, %v8665
        %v8684 = vld [vmem:[%s8071] sm:$0x8]
        %v8685 = vld [vmem:[%s8071 + $0x8] sm:$0x7]
        %v8686 = vld [vmem:[%s8071 + $0xc] sm:$0x8]
        %v8687 = vld [vmem:[%s8071 + $0x14] sm:$0x7]
        %v8688 = vld [vmem:[%s8071 + $0x18] sm:$0x8]
        %v8689 = vld [vmem:[%s8071 + $0x20] sm:$0x7]
        %v8690 = vld [vmem:[%s8071 + $0x24] sm:$0x8]
        %v8691 = vld [vmem:[%s8071 + $0x2c] sm:$0x7]
        %v8692 = vld [vmem:[%s8071 + $0x30] sm:$0x8]
        %v8693 = vld [vmem:[%s8071 + $0x38] sm:$0x7]
        %v8694 = vld [vmem:[%s8071 + $0x3c] sm:$0x8]
        %v8695 = vld [vmem:[%s8071 + $0x44] sm:$0x7]
        %v8696 = vld [vmem:[%s8071 + $0x48] sm:$0x8]
        %v8697 = vld [vmem:[%s8071 + $0x50] sm:$0x7]
        %v8698 = vld [vmem:[%s8071 + $0x54] sm:$0x8]
        %v8699 = vld [vmem:[%s8071 + $0x5c] sm:$0x7]
        %v8724 = vrot.slane %v8684, 7
        %v8725 = vrot.slane %v8724, 4
        %v8726 = vrot.slane %v8271, 7
        %v8727 = vsel %vm7283, %v8725, %v8726
        %v8728 = vrot.slane %v8726, 4
        %v8729 = vrot.slane %v8685, 7
        %v8730 = vsel %vm7283, %v8728, %v8729
        %v8731 = vrot.slane %v8686, 7
        %v8732 = vrot.slane %v8731, 4
        %v8733 = vrot.slane %v8274, 7
        %v8734 = vsel %vm7283, %v8732, %v8733
        %v8735 = vrot.slane %v8733, 4
        %v8736 = vrot.slane %v8687, 7
        %v8737 = vsel %vm7283, %v8735, %v8736
        %v8738 = vrot.slane %v8688, 7
        %v8739 = vrot.slane %v8738, 4
        %v8740 = vrot.slane %v8277, 7
        %v8741 = vsel %vm7283, %v8739, %v8740
        %v8742 = vrot.slane %v8740, 4
        %v8743 = vrot.slane %v8689, 7
        %v8744 = vsel %vm7283, %v8742, %v8743
        %v8745 = vrot.slane %v8690, 7
        %v8746 = vrot.slane %v8745, 4
        %v8747 = vrot.slane %v8280, 7
        %v8748 = vsel %vm7283, %v8746, %v8747
        %v8749 = vrot.slane %v8747, 4
        %v8750 = vrot.slane %v8691, 7
        %v8751 = vsel %vm7283, %v8749, %v8750
        %v8752 = vrot.slane %v8692, 7
        %v8753 = vrot.slane %v8752, 4
        %v8754 = vrot.slane %v8283, 7
        %v8755 = vsel %vm7283, %v8753, %v8754
        %v8756 = vrot.slane %v8754, 4
        %v8757 = vrot.slane %v8693, 7
        %v8758 = vsel %vm7283, %v8756, %v8757
        %v8759 = vrot.slane %v8694, 7
        %v8760 = vrot.slane %v8759, 4
        %v8761 = vrot.slane %v8286, 7
        %v8762 = vsel %vm7283, %v8760, %v8761
        %v8763 = vrot.slane %v8761, 4
        %v8764 = vrot.slane %v8695, 7
        %v8765 = vsel %vm7283, %v8763, %v8764
        %v8766 = vrot.slane %v8696, 7
        %v8767 = vrot.slane %v8766, 4
        %v8768 = vrot.slane %v8289, 7
        %v8769 = vsel %vm7283, %v8767, %v8768
        %v8770 = vrot.slane %v8768, 4
        %v8771 = vrot.slane %v8697, 7
        %v8772 = vsel %vm7283, %v8770, %v8771
        %v8773 = vrot.slane %v8698, 7
        %v8774 = vrot.slane %v8773, 4
        %v8775 = vrot.slane %v8292, 7
        %v8776 = vsel %vm7283, %v8774, %v8775
        %v8777 = vrot.slane %v8775, 4
        %v8778 = vrot.slane %v8699, 7
        %v8779 = vsel %vm7283, %v8777, %v8778
        %s8780 = scalar_lea.vmem %s4, 52
        %v8781 = vld [vmem:[%s8780] sm:$0x3]
        %v8782 = vunpack.c.l.b16 %v8727
        %v8783 = vunpack.c.l.b16 %v8730
        %v8784 = vunpack.c.l.b16 %v8734
        %v8785 = vunpack.c.l.b16 %v8737
        %v8786 = vunpack.c.l.b16 %v8741
        %v8787 = vunpack.c.l.b16 %v8744
        %v8788 = vunpack.c.l.b16 %v8748
        %v8789 = vunpack.c.l.b16 %v8751
        %v8790 = vunpack.c.l.b16 %v8755
        %v8791 = vunpack.c.l.b16 %v8758
        %v8792 = vunpack.c.l.b16 %v8762
        %v8793 = vunpack.c.l.b16 %v8765
        %v8794 = vunpack.c.l.b16 %v8769
        %v8795 = vunpack.c.l.b16 %v8772
        %v8796 = vunpack.c.l.b16 %v8776
        %v8797 = vunpack.c.l.b16 %v8779
        %v8798 = vpack.c.b16 %v8783, %v8782
        %v8799 = vpack.c.b16 %v8785, %v8784
        %v8800 = vpack.c.b16 %v8787, %v8786
        %v8801 = vpack.c.b16 %v8789, %v8788
        %v8802 = vpack.c.b16 %v8791, %v8790
        %v8803 = vpack.c.b16 %v8793, %v8792
        %v8804 = vpack.c.b16 %v8795, %v8794
        %v8805 = vpack.c.b16 %v8797, %v8796
        %v8807 = vsel %vm596, %v8798, 0
        %v8810 = vsel %vm596, %v8799, 0
        %v8813 = vsel %vm596, %v8800, 0
        %v8816 = vsel %vm596, %v8801, 0
        %v8819 = vsel %vm596, %v8802, 0
        %v8822 = vsel %vm596, %v8803, 0
        %v8825 = vsel %vm596, %v8804, 0
        %v8828 = vsel %vm596, %v8805, 0
        %v8831 = vsel %vm621, %v8781, 0
        %8833 = vmatprep.subr.bf16.mxu0 0
        %8834 = vmatpush1.bf16.msra.mxu0 0
        %8835 = vmatprep.subr.bf16.mxu0 0
        %8836 = vmatpush1.bf16.msra.mxu0 0
        %8837 = vmatprep.subr.bf16.mxu0 0
        %8838 = vmatpush1.bf16.msra.mxu0 0
        %8839 = vmatprep.subr.bf16.mxu0 0
        %8840 = vmatpush1.bf16.msra.mxu0 0
        %8841 = vmatprep.subr.bf16.mxu0 0
        %8842 = vmatpush1.bf16.msra.mxu0 0
        %8843 = vmatprep.subr.bf16.mxu0 0
        %8844 = vmatpush1.bf16.msra.mxu0 0
        %8845 = vmatprep.subr.bf16.mxu0 0
        %8846 = vmatpush1.bf16.msra.mxu0 0
        %8847 = vmatprep.subr.bf16.mxu0 0
        %8848 = vmatpush1.bf16.msra.mxu0 %v8831
        %8849 = vmatprep.subr.bf16.mxu0 0
        %8850 = vmatpush2.bf16.msra.mxu0 0
        %8851 = vmatprep.subr.bf16.mxu0 0
        %8852 = vmatpush2.bf16.msra.mxu0 0
        %8853 = vmatprep.subr.bf16.mxu0 0
        %8854 = vmatpush2.bf16.msra.mxu0 0
        %8855 = vmatprep.subr.bf16.mxu0 0
        %8856 = vmatpush2.bf16.msra.mxu0 0
        %8857 = vmatprep.subr.bf16.mxu0 0
        %8858 = vmatpush2.bf16.msra.mxu0 0
        %8859 = vmatprep.subr.bf16.mxu0 0
        %8860 = vmatpush2.bf16.msra.mxu0 0
        %8861 = vmatprep.subr.bf16.mxu0 0
        %8862 = vmatpush2.bf16.msra.mxu0 0
        %8863 = vmatprep.subr.bf16.mxu0 0
        %8864 = vmatpush2.bf16.msra.mxu0 0
        %8865 = vmatprep.mubr.bf16.mxu0 0
        %8866 = vmatmul.mubr.bf16.gmra.mxu0 %v8807
        %v8867 = vpop.f32.mrf.mxu0
        %v8868 = vadd.f32 0.0, %v8867
        %v8869 = vpop.f32.mrf.mxu0
        %v8870 = vpop.f32.mrf.mxu0
        %v8871 = vadd.f32 0.0, %v8870
        %v8872 = vpop.f32.mrf.mxu0
        %8873 = vmatprep.mubr.bf16.mxu0 0
        %8874 = vmatmul.mubr.bf16.gmra.mxu0 %v8810
        %v8875 = vpop.f32.mrf.mxu0
        %v8876 = vadd.f32 0.0, %v8875
        %v8877 = vpop.f32.mrf.mxu0
        %v8878 = vpop.f32.mrf.mxu0
        %v8879 = vadd.f32 0.0, %v8878
        %v8880 = vpop.f32.mrf.mxu0
        %8881 = vmatprep.mubr.bf16.mxu0 0
        %8882 = vmatmul.mubr.bf16.gmra.mxu0 %v8813
        %v8883 = vpop.f32.mrf.mxu0
        %v8884 = vadd.f32 0.0, %v8883
        %v8885 = vpop.f32.mrf.mxu0
        %v8886 = vpop.f32.mrf.mxu0
        %v8887 = vadd.f32 0.0, %v8886
        %v8888 = vpop.f32.mrf.mxu0
        %8889 = vmatprep.mubr.bf16.mxu0 0
        %8890 = vmatmul.mubr.bf16.gmra.mxu0 %v8816
        %v8891 = vpop.f32.mrf.mxu0
        %v8892 = vadd.f32 0.0, %v8891
        %v8893 = vpop.f32.mrf.mxu0
        %v8894 = vpop.f32.mrf.mxu0
        %v8895 = vadd.f32 0.0, %v8894
        %v8896 = vpop.f32.mrf.mxu0
        %8897 = vmatprep.mubr.bf16.mxu0 0
        %8898 = vmatmul.mubr.bf16.gmra.mxu0 %v8819
        %v8899 = vpop.f32.mrf.mxu0
        %v8900 = vadd.f32 0.0, %v8899
        %v8901 = vpop.f32.mrf.mxu0
        %v8902 = vpop.f32.mrf.mxu0
        %v8903 = vadd.f32 0.0, %v8902
        %v8904 = vpop.f32.mrf.mxu0
        %8905 = vmatprep.mubr.bf16.mxu0 0
        %8906 = vmatmul.mubr.bf16.gmra.mxu0 %v8822
        %v8907 = vpop.f32.mrf.mxu0
        %v8908 = vadd.f32 0.0, %v8907
        %v8909 = vpop.f32.mrf.mxu0
        %v8910 = vpop.f32.mrf.mxu0
        %v8911 = vadd.f32 0.0, %v8910
        %v8912 = vpop.f32.mrf.mxu0
        %8913 = vmatprep.mubr.bf16.mxu0 0
        %8914 = vmatmul.mubr.bf16.gmra.mxu0 %v8825
        %v8915 = vpop.f32.mrf.mxu0
        %v8916 = vadd.f32 0.0, %v8915
        %v8917 = vpop.f32.mrf.mxu0
        %v8918 = vpop.f32.mrf.mxu0
        %v8919 = vadd.f32 0.0, %v8918
        %v8920 = vpop.f32.mrf.mxu0
        %8921 = vmatprep.mubr.bf16.mxu0 0
        %8922 = vmatmul.mubr.bf16.gmra.mxu0 %v8828
        %v8923 = vpop.f32.mrf.mxu0
        %v8924 = vadd.f32 0.0, %v8923
        %v8925 = vpop.f32.mrf.mxu0
        %v8926 = vpop.f32.mrf.mxu0
        %v8927 = vadd.f32 0.0, %v8926
        %v8928 = vpop.f32.mrf.mxu0
        %8929 = vdwg.mxu0
        %v8930 = vadd.f32 %v8668, %v8868
        %v8931 = vadd.f32 %v8669, %v8871
        %v8932 = vadd.f32 %v8670, %v8876
        %v8933 = vadd.f32 %v8671, %v8879
        %v8934 = vadd.f32 %v8672, %v8884
        %v8935 = vadd.f32 %v8673, %v8887
        %v8936 = vadd.f32 %v8674, %v8892
        %v8937 = vadd.f32 %v8675, %v8895
        %v8938 = vadd.f32 %v8676, %v8900
        %v8939 = vadd.f32 %v8677, %v8903
        %v8940 = vadd.f32 %v8678, %v8908
        %v8941 = vadd.f32 %v8679, %v8911
        %v8942 = vadd.f32 %v8680, %v8916
        %v8943 = vadd.f32 %v8681, %v8919
        %v8944 = vadd.f32 %v8682, %v8924
        %v8945 = vadd.f32 %v8683, %v8927
        %s8946 = scalar_lea.vmem %s5, 2
        %v8947 = vld [vmem:[%s8946] sm:$0x1]
        %s8948 = scalar_lea.vmem %s6, 12
        %v8949 = vld [vmem:[%s8948] sm:$0xf]
        %v8951 = vlaneseq
        %v8952 = vshrl.u32 %v8951, 7
        %v8953 = vsub.s32 0, %v8952
        %v8954 = vrot.slane %v8947, %v8953
        %v8956 = vadd.f32 %v8930, %v8954
        %v8957 = vadd.f32 %v8931, %v8954
        %v8958 = vadd.f32 %v8932, %v8954
        %v8959 = vadd.f32 %v8933, %v8954
        %v8960 = vadd.f32 %v8934, %v8954
        %v8961 = vadd.f32 %v8935, %v8954
        %v8962 = vadd.f32 %v8936, %v8954
        %v8963 = vadd.f32 %v8937, %v8954
        %v8964 = vadd.f32 %v8938, %v8954
        %v8965 = vadd.f32 %v8939, %v8954
        %v8966 = vadd.f32 %v8940, %v8954
        %v8967 = vadd.f32 %v8941, %v8954
        %v8968 = vadd.f32 %v8942, %v8954
        %v8969 = vadd.f32 %v8943, %v8954
        %v8970 = vadd.f32 %v8944, %v8954
        %v8971 = vadd.f32 %v8945, %v8954
        %v8972 = vmax.f32 %v8956, 0.0
        %v8973 = vmax.f32 %v8957, 0.0
        %v8974 = vmax.f32 %v8958, 0.0
        %v8975 = vmax.f32 %v8959, 0.0
        %v8976 = vmax.f32 %v8960, 0.0
        %v8977 = vmax.f32 %v8961, 0.0
        %v8978 = vmax.f32 %v8962, 0.0
        %v8979 = vmax.f32 %v8963, 0.0
        %v8980 = vmax.f32 %v8964, 0.0
        %v8981 = vmax.f32 %v8965, 0.0
        %v8982 = vmax.f32 %v8966, 0.0
        %v8983 = vmax.f32 %v8967, 0.0
        %v8984 = vmax.f32 %v8968, 0.0
        %v8985 = vmax.f32 %v8969, 0.0
        %v8986 = vmax.f32 %v8970, 0.0
        %v8987 = vmax.f32 %v8971, 0.0
        %v8988 = vpack.c.bf16 %v8973, %v8972
        %v8989 = vpack.c.bf16 %v8975, %v8974
        %v8990 = vpack.c.bf16 %v8977, %v8976
        %v8991 = vpack.c.bf16 %v8979, %v8978
        %v8992 = vpack.c.bf16 %v8981, %v8980
        %v8993 = vpack.c.bf16 %v8983, %v8982
        %v8994 = vpack.c.bf16 %v8985, %v8984
        %v8995 = vpack.c.bf16 %v8987, %v8986
        %v8997 = vsel %vm3222, %v8988, 0
        %v9000 = vsel %vm3222, %v8989, 0
        %v9003 = vsel %vm3222, %v8990, 0
        %v9006 = vsel %vm3222, %v8991, 0
        %v9009 = vsel %vm3222, %v8992, 0
        %v9012 = vsel %vm3222, %v8993, 0
        %v9015 = vsel %vm3222, %v8994, 0
        %v9018 = vsel %vm3222, %v8995, 0
        %v9021 = vsel %vm3247, %v8949, 0
        %9023 = vmatprep.subr.bf16.mxu0 0
        %9024 = vmatpush1.bf16.msra.mxu0 0
        %9025 = vmatprep.subr.bf16.mxu0 0
        %9026 = vmatpush1.bf16.msra.mxu0 0
        %9027 = vmatprep.subr.bf16.mxu0 0
        %9028 = vmatpush1.bf16.msra.mxu0 0
        %9029 = vmatprep.subr.bf16.mxu0 0
        %9030 = vmatpush1.bf16.msra.mxu0 0
        %9031 = vmatprep.subr.bf16.mxu0 0
        %9032 = vmatpush1.bf16.msra.mxu0 0
        %9033 = vmatprep.subr.bf16.mxu0 0
        %9034 = vmatpush1.bf16.msra.mxu0 0
        %9035 = vmatprep.subr.bf16.mxu0 0
        %9036 = vmatpush1.bf16.msra.mxu0 0
        %9037 = vmatprep.subr.bf16.mxu0 0
        %9038 = vmatpush1.bf16.msra.mxu0 %v9021
        %9039 = vmatprep.subr.bf16.mxu0 0
        %9040 = vmatpush2.bf16.msra.mxu0 0
        %9041 = vmatprep.subr.bf16.mxu0 0
        %9042 = vmatpush2.bf16.msra.mxu0 0
        %9043 = vmatprep.subr.bf16.mxu0 0
        %9044 = vmatpush2.bf16.msra.mxu0 0
        %9045 = vmatprep.subr.bf16.mxu0 0
        %9046 = vmatpush2.bf16.msra.mxu0 0
        %9047 = vmatprep.subr.bf16.mxu0 0
        %9048 = vmatpush2.bf16.msra.mxu0 0
        %9049 = vmatprep.subr.bf16.mxu0 0
        %9050 = vmatpush2.bf16.msra.mxu0 0
        %9051 = vmatprep.subr.bf16.mxu0 0
        %9052 = vmatpush2.bf16.msra.mxu0 0
        %9053 = vmatprep.subr.bf16.mxu0 0
        %9054 = vmatpush2.bf16.msra.mxu0 0
        %9055 = vmatprep.mubr.bf16.mxu0 0
        %9056 = vmatmul.mubr.bf16.gmra.mxu0 %v8997
        %v9057 = vpop.f32.mrf.mxu0
        %v9058 = vadd.f32 0.0, %v9057
        %v9059 = vpop.f32.mrf.mxu0
        %v9060 = vpop.f32.mrf.mxu0
        %v9061 = vadd.f32 0.0, %v9060
        %v9062 = vpop.f32.mrf.mxu0
        %9063 = vmatprep.mubr.bf16.mxu0 0
        %9064 = vmatmul.mubr.bf16.gmra.mxu0 %v9000
        %v9065 = vpop.f32.mrf.mxu0
        %v9066 = vadd.f32 0.0, %v9065
        %v9067 = vpop.f32.mrf.mxu0
        %v9068 = vpop.f32.mrf.mxu0
        %v9069 = vadd.f32 0.0, %v9068
        %v9070 = vpop.f32.mrf.mxu0
        %9071 = vmatprep.mubr.bf16.mxu0 0
        %9072 = vmatmul.mubr.bf16.gmra.mxu0 %v9003
        %v9073 = vpop.f32.mrf.mxu0
        %v9074 = vadd.f32 0.0, %v9073
        %v9075 = vpop.f32.mrf.mxu0
        %v9076 = vpop.f32.mrf.mxu0
        %v9077 = vadd.f32 0.0, %v9076
        %v9078 = vpop.f32.mrf.mxu0
        %9079 = vmatprep.mubr.bf16.mxu0 0
        %9080 = vmatmul.mubr.bf16.gmra.mxu0 %v9006
        %v9081 = vpop.f32.mrf.mxu0
        %v9082 = vadd.f32 0.0, %v9081
        %v9083 = vpop.f32.mrf.mxu0
        %v9084 = vpop.f32.mrf.mxu0
        %v9085 = vadd.f32 0.0, %v9084
        %v9086 = vpop.f32.mrf.mxu0
        %9087 = vmatprep.mubr.bf16.mxu0 0
        %9088 = vmatmul.mubr.bf16.gmra.mxu0 %v9009
        %v9089 = vpop.f32.mrf.mxu0
        %v9090 = vadd.f32 0.0, %v9089
        %v9091 = vpop.f32.mrf.mxu0
        %v9092 = vpop.f32.mrf.mxu0
        %v9093 = vadd.f32 0.0, %v9092
        %v9094 = vpop.f32.mrf.mxu0
        %9095 = vmatprep.mubr.bf16.mxu0 0
        %9096 = vmatmul.mubr.bf16.gmra.mxu0 %v9012
        %v9097 = vpop.f32.mrf.mxu0
        %v9098 = vadd.f32 0.0, %v9097
        %v9099 = vpop.f32.mrf.mxu0
        %v9100 = vpop.f32.mrf.mxu0
        %v9101 = vadd.f32 0.0, %v9100
        %v9102 = vpop.f32.mrf.mxu0
        %9103 = vmatprep.mubr.bf16.mxu0 0
        %9104 = vmatmul.mubr.bf16.gmra.mxu0 %v9015
        %v9105 = vpop.f32.mrf.mxu0
        %v9106 = vadd.f32 0.0, %v9105
        %v9107 = vpop.f32.mrf.mxu0
        %v9108 = vpop.f32.mrf.mxu0
        %v9109 = vadd.f32 0.0, %v9108
        %v9110 = vpop.f32.mrf.mxu0
        %9111 = vmatprep.mubr.bf16.mxu0 0
        %9112 = vmatmul.mubr.bf16.gmra.mxu0 %v9018
        %v9113 = vpop.f32.mrf.mxu0
        %v9114 = vadd.f32 0.0, %v9113
        %v9115 = vpop.f32.mrf.mxu0
        %v9116 = vpop.f32.mrf.mxu0
        %v9117 = vadd.f32 0.0, %v9116
        %v9118 = vpop.f32.mrf.mxu0
        %9119 = vdwg.mxu0
        %v9120 = vadd.f32 %v6658, %v9058
        %v9121 = vadd.f32 %v6659, %v9061
        %v9122 = vadd.f32 %v6660, %v9066
        %v9123 = vadd.f32 %v6661, %v9069
        %v9124 = vadd.f32 %v6662, %v9074
        %v9125 = vadd.f32 %v6663, %v9077
        %v9126 = vadd.f32 %v6664, %v9082
        %v9127 = vadd.f32 %v6665, %v9085
        %v9128 = vadd.f32 %v6666, %v9090
        %v9129 = vadd.f32 %v6667, %v9093
        %v9130 = vadd.f32 %v6668, %v9098
        %v9131 = vadd.f32 %v6669, %v9101
        %v9132 = vadd.f32 %v6670, %v9106
        %v9133 = vadd.f32 %v6671, %v9109
        %v9134 = vadd.f32 %v6672, %v9114
        %v9135 = vadd.f32 %v6673, %v9117
        %v9136 = vld [vmem:[%s304] sm:$0x1]
        %v9138 = vlaneseq
        %v9139 = vshrl.u32 %v9138, 7
        %v9140 = vsub.s32 0, %v9139
        %v9141 = vrot.slane %v9136, %v9140
        %v9143 = vadd.f32 %v9120, %v9141
        %v9144 = vadd.f32 %v9121, %v9141
        %v9145 = vadd.f32 %v9122, %v9141
        %v9146 = vadd.f32 %v9123, %v9141
        %v9147 = vadd.f32 %v9124, %v9141
        %v9148 = vadd.f32 %v9125, %v9141
        %v9149 = vadd.f32 %v9126, %v9141
        %v9150 = vadd.f32 %v9127, %v9141
        %v9151 = vadd.f32 %v9128, %v9141
        %v9152 = vadd.f32 %v9129, %v9141
        %v9153 = vadd.f32 %v9130, %v9141
        %v9154 = vadd.f32 %v9131, %v9141
        %v9155 = vadd.f32 %v9132, %v9141
        %v9156 = vadd.f32 %v9133, %v9141
        %v9157 = vadd.f32 %v9134, %v9141
        %v9158 = vadd.f32 %v9135, %v9141
        %v9159 = vmax.f32 %v9143, 0.0
        %v9160 = vmax.f32 %v9144, 0.0
        %v9161 = vmax.f32 %v9145, 0.0
        %v9162 = vmax.f32 %v9146, 0.0
        %v9163 = vmax.f32 %v9147, 0.0
        %v9164 = vmax.f32 %v9148, 0.0
        %v9165 = vmax.f32 %v9149, 0.0
        %v9166 = vmax.f32 %v9150, 0.0
        %v9167 = vmax.f32 %v9151, 0.0
        %v9168 = vmax.f32 %v9152, 0.0
        %v9169 = vmax.f32 %v9153, 0.0
        %v9170 = vmax.f32 %v9154, 0.0
        %v9171 = vmax.f32 %v9155, 0.0
        %v9172 = vmax.f32 %v9156, 0.0
        %v9173 = vmax.f32 %v9157, 0.0
        %v9174 = vmax.f32 %v9158, 0.0
        %9175 = vst [vmem:[%s296] sm:$0xff] %v9159
        %9176 = vst [vmem:[%s296 + $0x8] sm:$0xff] %v9160
        %9177 = vst [vmem:[%s296 + $0x10] sm:$0xff] %v9161
        %9178 = vst [vmem:[%s296 + $0x18] sm:$0xff] %v9162
        %9179 = vst [vmem:[%s296 + $0x20] sm:$0xff] %v9163
        %9180 = vst [vmem:[%s296 + $0x28] sm:$0xff] %v9164
        %9181 = vst [vmem:[%s296 + $0x30] sm:$0xff] %v9165
        %9182 = vst [vmem:[%s296 + $0x38] sm:$0xff] %v9166
        %9183 = vst [vmem:[%s296 + $0x40] sm:$0xff] %v9167
        %9184 = vst [vmem:[%s296 + $0x48] sm:$0xff] %v9168
        %9185 = vst [vmem:[%s296 + $0x50] sm:$0xff] %v9169
        %9186 = vst [vmem:[%s296 + $0x58] sm:$0xff] %v9170
        %9187 = vst [vmem:[%s296 + $0x60] sm:$0xff] %v9171
        %9188 = vst [vmem:[%s296 + $0x68] sm:$0xff] %v9172
        %9189 = vst [vmem:[%s296 + $0x70] sm:$0xff] %v9173
        %9190 = vst [vmem:[%s296 + $0x78] sm:$0xff] %v9174
        %s9191 = sand.u32 %s200, 1
        %s9192 = scalar_lea.sflag [#allocation3], %s9191
        %s9193 = sand.u32 %s200, 1
        %s9194 = smul.addr %s9193, 128
        %s9195 = scalar_lea.vmem [#allocation2], %s9194
        // Predicated region
        $region49: #{tpu_custom_call.1} parent=47 // pred_check
          %p9196 = pneg %p210
        $region50: #{tpu_custom_call.1} parent=47 // pred_check_branch
          %9198 = sbr.rel (%p9196) target = $region52
        $region51: #{tpu_custom_call.1} parent=47 // pred_region
          %s9199 = smul.u32 16, %s26
          %s9201 = ssub.s32 2048, 2048
          %9202 = vsyncadd %s9192, %s9201
          %s9203 = smul.addr %s25, 32
          %s9204 = sadd.s32 %s9199, %s9203
          %s9205 = smul.addr %s9204, 128
          %s9206 = scalar_lea.hbm %s7, %s9205
          %s9207 = sshll.u32 %s9195, 4
          %s9208 = int_to_ptr.vmem [resolvable:$true] %s9207
          %9213 = dma.vmem_to_hbm [thread:$0]  %s9208, 2048, %s9206, %s9192, 128, 128, 8
        $region52: #{tpu_custom_call.1} parent=47 // pred_fallthru
          _
      $region48: #{tpu_custom_call.1} parent=5 // pred_fallthru
        _
      %p9214 = scmp.le.s32.totalorder 2, %s16
      // Predicated region
      $region53: #{tpu_custom_call.1} parent=5 // pred_check
        %p9215 = pneg %p9214
      $region54: #{tpu_custom_call.1} parent=5 // pred_check_branch
        %9217 = sbr.rel (%p9215) target = $region56
      $region55: #{tpu_custom_call.1} parent=5 // pred_region
        %s9218 = ssub.s32 %s16, 2
        // Predicated region
        $region57: #{tpu_custom_call.1} parent=55 // pred_check
          %p9219 = pneg %p216
        $region58: #{tpu_custom_call.1} parent=55 // pred_check_branch
          %9221 = sbr.rel (%p9219) target = $region60
        $region59: #{tpu_custom_call.1} parent=55 // pred_region
          %s9222 = sand.u32 %s201, 1
          %s9223 = scalar_lea.sflag [#allocation3], %s9222
          %s9224 = sand.u32 %s201, 1
          %s9225 = smul.addr %s9224, 128
          %s9226 = scalar_lea.vmem [#allocation2], %s9225
          %9227 = dma.done %s9223, 2048
        $region60: #{tpu_custom_call.1} parent=55 // pred_fallthru
          _
      $region56: #{tpu_custom_call.1} parent=5 // pred_fallthru
        _
    $region6: #{tpu_custom_call.1} parent=1 // loop_footer
      %s20 = sadd.s32 1, %s16
    $region7: #{tpu_custom_call.1} parent=1 // loop_footer_branch
      %15 = sbr.rel target = $region3
    $region8: #{tpu_custom_call.1} parent=1 // loop_exit
      _
    %9228 = vsyncpa [#allocation3], 1
    %s9229 = scalar_lea.sflag [#allocation3], 1
    %9230 = vsyncpa %s9229, 1

</llo_original>
